<compile_context>
chip_gen: v7x
topology: tpu7x:2x2x1
jax: 0.10.0
libtpu: 0.0.40
codegen_flags: <defaults>
</compile_context>

<pallas_src>
import functools

import jax
import jax.numpy as jnp
from jax import lax
from jax.experimental import pallas as pl
from jax.experimental.pallas import tpu as pltpu


# ----------------------------- Pallas kernel -------------------------------

def _fused_bilstm_layer(xw_scr, mask_ref, wh_ref, S, B, H, y_scr=None):
    """One bidirectional LSTM layer with fwd/bwd fused per loop iteration.

    xw_scr[t, :, 0:4H]  = x_t @ Wx_fwd + (b_ih_fwd + b_hh_fwd)
    xw_scr[t, :, 4H:8H] = x_t @ Wx_bwd + (b_ih_bwd + b_hh_bwd)
    wh_ref is the block-diagonal recurrent weight [2H, 8H]
      (rows 0:H -> cols 0:4H = Wh_fwd, rows H:2H -> cols 4H:8H = Wh_bwd).

    Returns the final combined hidden state [B, 2H] ([fwd | bwd]); optionally
    stores the per-step outputs into y_scr [S, B, 2H] (fwd lanes 0:H, bwd H:2H).
    """
    zeros = jnp.zeros((B, 2 * H), jnp.float32)

    def step(i, carry):
        hc, cc = carry                                    # [B, 2H] each
        tb = S - 1 - i

        # Single 256-lane recurrent matmul for both directions.
        hx = jnp.dot(hc, wh_ref[...], preferred_element_type=jnp.float32)  # [B, 8H]
        gf = xw_scr[i, :, 0:4 * H] + hx[:, 0:4 * H]       # fwd gates  (i,f,g,o)
        gb = xw_scr[tb, :, 4 * H:8 * H] + hx[:, 4 * H:8 * H]  # bwd gates

        def half(g, c_old):
            ig = jax.nn.sigmoid(g[:, 0:H])
            fg = jax.nn.sigmoid(g[:, H:2 * H])
            gg = jnp.tanh(g[:, 2 * H:3 * H])
            og = jax.nn.sigmoid(g[:, 3 * H:4 * H])
            c_new = fg * c_old + ig * gg
            h_new = og * jnp.tanh(c_new)
            return h_new, c_new

        hf_new, cf_new = half(gf, cc[:, 0:H])
        hb_new, cb_new = half(gb, cc[:, H:2 * H])

        # pack_padded_sequence semantics: freeze state on padded steps.
        mf = mask_ref[i] > 0.0                            # [B, 1] bool
        mb = mask_ref[tb] > 0.0
        hf = jnp.where(mf, hf_new, hc[:, 0:H])
        cf = jnp.where(mf, cf_new, cc[:, 0:H])
        hb = jnp.where(mb, hb_new, hc[:, H:2 * H])
        cb = jnp.where(mb, cb_new, cc[:, H:2 * H])

        if y_scr is not None:                             # layer-0 outputs
            y_scr[i, :, 0:H] = hf
            y_scr[tb, :, H:2 * H] = hb

        return (jnp.concatenate([hf, hb], axis=-1),
                jnp.concatenate([cf, cb], axis=-1))

    hc, _ = lax.fori_loop(0, S, step, (zeros, zeros), unroll=True)
    return hc


def _jsmal_kernel(x_ref, mask_ref,
                  wx0_ref, b0_ref, wh0_ref,
                  wx1_ref, b1_ref, wh1_ref,
                  fcw_ref, fcb_ref,
                  out_ref,
                  xw_scr, y0_scr,
                  *, S, B, H):
    # ----- layer-0 input projections, hoisted off the recurrent chain ------
    def proj0(t, _):
        xw_scr[t] = (jnp.dot(x_ref[t], wx0_ref[...],
                             preferred_element_type=jnp.float32) + b0_ref[...])
        return 0
    lax.fori_loop(0, S, proj0, 0, unroll=True)

    # ----- layer 0: fused fwd+bwd recurrence, outputs -> y0_scr -------------
    _fused_bilstm_layer(xw_scr, mask_ref, wh0_ref, S, B, H, y_scr=y0_scr)

    # NOTE: inter-layer nn.LSTM dropout (p=0.5) is identity in eval mode.

    # ----- layer-1 input projections (reuse xw_scr) -------------------------
    def proj1(t, _):
        xw_scr[t] = (jnp.dot(y0_scr[t], wx1_ref[...],
                             preferred_element_type=jnp.float32) + b1_ref[...])
        return 0
    lax.fori_loop(0, S, proj1, 0, unroll=True)

    # ----- layer 1: fused fwd+bwd recurrence; final hidden only -------------
    hidden = _fused_bilstm_layer(xw_scr, mask_ref, wh1_ref, S, B, H)  # [B, 2H]

    # cat(hidden[2], hidden[3]) -> dropout (identity, eval) -> fc
    out_ref[...] = (jnp.dot(hidden, fcw_ref[...],
                            preferred_element_type=jnp.float32) + fcb_ref[...])


# ------------------------------ wrapper -------------------------------------

def _block_diag(wf, wb):
    """[H,4H],[H,4H] -> [2H,8H] block-diagonal (fwd cols 0:4H, bwd 4H:8H)."""
    h, g = wf.shape
    z = jnp.zeros((h, g), wf.dtype)
    return jnp.concatenate([jnp.concatenate([wf, z], axis=1),
                            jnp.concatenate([z, wb], axis=1)], axis=0)


def js_mal_catcher_forward(embedded, lengths, params):
    """embedded: [S, B, E] f32, lengths: [B] i32 -> [B, 1] f32 logits."""
    S, B, E = embedded.shape
    H = params["wh0f"].shape[0]

    # validity mask replicating pack_padded_sequence: 1.0 while t < length[b]
    mask = (jnp.arange(S)[:, None] < lengths[None, :]).astype(jnp.float32)
    mask = mask[:, :, None]                                   # [S, B, 1]

    # Pack weights once: combined input weights ([in, 8H], fwd|bwd) with
    # folded biases, and block-diagonal recurrent weights ([2H, 8H]).
    wx0 = jnp.concatenate([params["wx0f"], params["wx0b"]], axis=1)   # [E, 8H]
    b0 = jnp.concatenate([params["b0f"], params["b0b"]], axis=1)      # [1, 8H]
    wh0 = _block_diag(params["wh0f"], params["wh0b"])                 # [2H, 8H]
    wx1 = jnp.concatenate([params["wx1f"], params["wx1b"]], axis=1)   # [2H, 8H]
    b1 = jnp.concatenate([params["b1f"], params["b1b"]], axis=1)      # [1, 8H]
    wh1 = _block_diag(params["wh1f"], params["wh1b"])                 # [2H, 8H]

    args = [embedded, mask, wx0, b0, wh0, wx1, b1, wh1,
            params["fcw"], params["fcb"]]

    vmem_spec = pl.BlockSpec(memory_space=pltpu.MemorySpace.VMEM)
    kernel = functools.partial(_jsmal_kernel, S=S, B=B, H=H)

    return pl.pallas_call(
        kernel,
        out_shape=jax.ShapeDtypeStruct((B, 1), jnp.float32),
        in_specs=[vmem_spec] * len(args),
        out_specs=vmem_spec,
        scratch_shapes=[
            pltpu.VMEM((S, B, 8 * H), jnp.float32),  # hoisted input projections
            pltpu.VMEM((S, B, 2 * H), jnp.float32),  # merged layer-0 outputs
        ],
        compiler_params=pltpu.CompilerParams(
            vmem_limit_bytes=32 * 1024 * 1024),
    )(*args)


# ------------------------- deterministic params ------------------------------

def init_params(key, E, H):
    ks = jax.random.split(key, 14)
    s = 1.0 / jnp.sqrt(jnp.float32(H))

    def u(k, shape):
        return jax.random.uniform(k, shape, jnp.float32, -s, s)

    # weights stored pre-transposed ([in, 4H], [H, 4H]); biases are b_ih+b_hh.
    return {
        "wx0f": u(ks[0], (E, 4 * H)), "wh0f": u(ks[1], (H, 4 * H)), "b0f": u(ks[2], (1, 4 * H)),
        "wx0b": u(ks[3], (E, 4 * H)), "wh0b": u(ks[4], (H, 4 * H)), "b0b": u(ks[5], (1, 4 * H)),
        "wx1f": u(ks[6], (2 * H, 4 * H)), "wh1f": u(ks[7], (H, 4 * H)), "b1f": u(ks[8], (1, 4 * H)),
        "wx1b": u(ks[9], (2 * H, 4 * H)), "wh1b": u(ks[10], (H, 4 * H)), "b1b": u(ks[11], (1, 4 * H)),
        "fcw": u(ks[12], (2 * H, 1)), "fcb": u(ks[13], (1, 1)),
    }


# --------------------------- pure-JAX reference ------------------------------

def reference_forward(embedded, lengths, params):
    S, B, E = embedded.shape
    H = params["wh0f"].shape[0]
    mask = (jnp.arange(S)[:, None] < lengths[None, :]).astype(jnp.float32)[:, :, None]

    def cell(x_t, h, c, wx, wh, b):
        gates = x_t @ wx + h @ wh + b
        i, f, g, o = jnp.split(gates, 4, axis=1)
        c_new = jax.nn.sigmoid(f) * c + jax.nn.sigmoid(i) * jnp.tanh(g)
        h_new = jax.nn.sigmoid(o) * jnp.tanh(c_new)
        return h_new, c_new

    def run(inputs, wx, wh, b, reverse):
        h = jnp.zeros((B, H), jnp.float32)
        c = jnp.zeros((B, H), jnp.float32)
        outs = [None] * S
        ts = range(S - 1, -1, -1) if reverse else range(S)
        for t in ts:
            hn, cn = cell(inputs[t], h, c, wx, wh, b)
            m = mask[t]
            h = m * hn + (1.0 - m) * h
            c = m * cn + (1.0 - m) * c
            outs[t] = h
        return jnp.stack(outs, 0), h

    o0f, _ = run(embedded, params["wx0f"], params["wh0f"], params["b0f"], False)
    o0b, _ = run(embedded, params["wx0b"], params["wh0b"], params["b0b"], True)
    inp1 = jnp.concatenate([o0f, o0b], axis=-1)
    _, h2f = run(inp1, params["wx1f"], params["wh1f"], params["b1f"], False)
    _, h2b = run(inp1, params["wx1b"], params["wh1b"], params["b1b"], True)
    hidden = jnp.concatenate([h2f, h2b], axis=-1)
    return hidden @ params["fcw"] + params["fcb"]


# --------------------------------- main --------------------------------------

if __name__ == "__main__":
    B, S, E, H, VOCAB = 2, 8, 16, 32, 50   # small shapes (hidden_dim scaled down)

    key = jax.random.PRNGKey(0)
    k_emb, k_tok, k_par = jax.random.split(key, 3)

    # embedding table + integer token ids (stand-in for word2idx tokenization)
    emb_table = jax.random.normal(k_emb, (VOCAB, E), jnp.float32)
    tokens = jax.random.randint(k_tok, (B, S), 0, VOCAB)       # [B, S] padded ids
    lengths = jnp.array([8, 5], jnp.int32)                     # text_lengths

    params = init_params(k_par, E, H)

    # glue (plain JAX): embedding lookup + permute [B,S] -> [S,B] -> [S,B,E]
    embedded = emb_table[tokens].transpose(1, 0, 2).astype(jnp.float32)

    out = js_mal_catcher_forward(embedded, lengths, params)
    out = jax.block_until_ready(out)

    ref = reference_forward(embedded, lengths, params)
    assert out.shape == (B, 1)
    assert jnp.allclose(out, ref, atol=1e-4, rtol=1e-4), (out, ref)

    print("KERNEL_OK")
</pallas_src>

<mosaic_0001>
module attributes {stable_mosaic.version = 11 : i64} {
  func.func @_jsmal_kernel(%arg0: memref<8x2x16xf32, #tpu.memory_space<vmem>>, %arg1: memref<8x2x1xf32, #tpu.memory_space<vmem>>, %arg2: memref<16x256xf32, #tpu.memory_space<vmem>>, %arg3: memref<1x256xf32, #tpu.memory_space<vmem>>, %arg4: memref<64x256xf32, #tpu.memory_space<vmem>>, %arg5: memref<64x256xf32, #tpu.memory_space<vmem>>, %arg6: memref<1x256xf32, #tpu.memory_space<vmem>>, %arg7: memref<64x256xf32, #tpu.memory_space<vmem>>, %arg8: memref<64x1xf32, #tpu.memory_space<vmem>>, %arg9: memref<1x1xf32, #tpu.memory_space<vmem>>, %arg10: memref<2x1xf32, #tpu.memory_space<vmem>>, %arg11: memref<8x2x256xf32, #tpu.memory_space<vmem>>, %arg12: memref<8x2x64xf32, #tpu.memory_space<vmem>>) attributes {dimension_semantics = [], scalar_prefetch = 0 : i64, scratch_operands = 2 : i64, tpu.core_type = #tpu.core_type<tc>} {
    %c0_i32 = arith.constant 0 : i32
    %0 = arith.index_cast %c0_i32 : i32 to index
    %c0 = arith.constant 0 : index
    %c0_0 = arith.constant 0 : index
    %1 = vector.load %arg0[%0, %c0, %c0_0] : memref<8x2x16xf32, #tpu.memory_space<vmem>>, vector<1x2x16xf32>
    %2 = vector.shape_cast %1 : vector<1x2x16xf32> to vector<2x16xf32>
    %c0_1 = arith.constant 0 : index
    %c0_2 = arith.constant 0 : index
    %3 = vector.load %arg2[%c0_1, %c0_2] : memref<16x256xf32, #tpu.memory_space<vmem>>, vector<16x256xf32>
    %cst = arith.constant dense<0.000000e+00> : vector<2x256xf32>
    %4 = tpu.matmul %2, %3, %cst {dimension_numbers = #tpu.dot_dimension_numbers<[1], [0], [0], [1], [0, 0, 1, 1], [], []>} : vector<2x16xf32>, vector<16x256xf32>, vector<2x256xf32> -> vector<2x256xf32>
    %c0_3 = arith.constant 0 : index
    %c0_4 = arith.constant 0 : index
    %5 = vector.load %arg3[%c0_3, %c0_4] : memref<1x256xf32, #tpu.memory_space<vmem>>, vector<1x256xf32>
    %6 = vector.broadcast %5 : vector<1x256xf32> to vector<2x256xf32>
    %7 = arith.addf %4, %6 : vector<2x256xf32>
    %8 = arith.index_cast %c0_i32 : i32 to index
    %c0_5 = arith.constant 0 : index
    %c0_6 = arith.constant 0 : index
    %9 = vector.load %arg11[%8, %c0_5, %c0_6] : memref<8x2x256xf32, #tpu.memory_space<vmem>>, vector<1x2x256xf32>
    %10 = vector.shape_cast %9 : vector<1x2x256xf32> to vector<2x256xf32>
    %11 = vector.shape_cast %7 : vector<2x256xf32> to vector<1x2x256xf32>
    tpu.vector_store %arg11[%8, %c0_5, %c0_6], %11 {strides = array<i32>} : memref<8x2x256xf32, #tpu.memory_space<vmem>>, vector<1x2x256xf32>,
    %c1_i32 = arith.constant 1 : i32
    %12 = arith.index_cast %c1_i32 : i32 to index
    %c0_7 = arith.constant 0 : index
    %c0_8 = arith.constant 0 : index
    %13 = vector.load %arg0[%12, %c0_7, %c0_8] : memref<8x2x16xf32, #tpu.memory_space<vmem>>, vector<1x2x16xf32>
    %14 = vector.shape_cast %13 : vector<1x2x16xf32> to vector<2x16xf32>
    %c0_9 = arith.constant 0 : index
    %c0_10 = arith.constant 0 : index
    %15 = vector.load %arg2[%c0_9, %c0_10] : memref<16x256xf32, #tpu.memory_space<vmem>>, vector<16x256xf32>
    %cst_11 = arith.constant dense<0.000000e+00> : vector<2x256xf32>
    %16 = tpu.matmul %14, %15, %cst_11 {dimension_numbers = #tpu.dot_dimension_numbers<[1], [0], [0], [1], [0, 0, 1, 1], [], []>} : vector<2x16xf32>, vector<16x256xf32>, vector<2x256xf32> -> vector<2x256xf32>
    %c0_12 = arith.constant 0 : index
    %c0_13 = arith.constant 0 : index
    %17 = vector.load %arg3[%c0_12, %c0_13] : memref<1x256xf32, #tpu.memory_space<vmem>>, vector<1x256xf32>
    %18 = vector.broadcast %17 : vector<1x256xf32> to vector<2x256xf32>
    %19 = arith.addf %16, %18 : vector<2x256xf32>
    %20 = arith.index_cast %c1_i32 : i32 to index
    %c0_14 = arith.constant 0 : index
    %c0_15 = arith.constant 0 : index
    %21 = vector.load %arg11[%20, %c0_14, %c0_15] : memref<8x2x256xf32, #tpu.memory_space<vmem>>, vector<1x2x256xf32>
    %22 = vector.shape_cast %21 : vector<1x2x256xf32> to vector<2x256xf32>
    %23 = vector.shape_cast %19 : vector<2x256xf32> to vector<1x2x256xf32>
    tpu.vector_store %arg11[%20, %c0_14, %c0_15], %23 {strides = array<i32>} : memref<8x2x256xf32, #tpu.memory_space<vmem>>, vector<1x2x256xf32>,
    %c2_i32 = arith.constant 2 : i32
    %24 = arith.index_cast %c2_i32 : i32 to index
    %c0_16 = arith.constant 0 : index
    %c0_17 = arith.constant 0 : index
    %25 = vector.load %arg0[%24, %c0_16, %c0_17] : memref<8x2x16xf32, #tpu.memory_space<vmem>>, vector<1x2x16xf32>
    %26 = vector.shape_cast %25 : vector<1x2x16xf32> to vector<2x16xf32>
    %c0_18 = arith.constant 0 : index
    %c0_19 = arith.constant 0 : index
    %27 = vector.load %arg2[%c0_18, %c0_19] : memref<16x256xf32, #tpu.memory_space<vmem>>, vector<16x256xf32>
    %cst_20 = arith.constant dense<0.000000e+00> : vector<2x256xf32>
    %28 = tpu.matmul %26, %27, %cst_20 {dimension_numbers = #tpu.dot_dimension_numbers<[1], [0], [0], [1], [0, 0, 1, 1], [], []>} : vector<2x16xf32>, vector<16x256xf32>, vector<2x256xf32> -> vector<2x256xf32>
    %c0_21 = arith.constant 0 : index
    %c0_22 = arith.constant 0 : index
    %29 = vector.load %arg3[%c0_21, %c0_22] : memref<1x256xf32, #tpu.memory_space<vmem>>, vector<1x256xf32>
    %30 = vector.broadcast %29 : vector<1x256xf32> to vector<2x256xf32>
    %31 = arith.addf %28, %30 : vector<2x256xf32>
    %32 = arith.index_cast %c2_i32 : i32 to index
    %c0_23 = arith.constant 0 : index
    %c0_24 = arith.constant 0 : index
    %33 = vector.load %arg11[%32, %c0_23, %c0_24] : memref<8x2x256xf32, #tpu.memory_space<vmem>>, vector<1x2x256xf32>
    %34 = vector.shape_cast %33 : vector<1x2x256xf32> to vector<2x256xf32>
    %35 = vector.shape_cast %31 : vector<2x256xf32> to vector<1x2x256xf32>
    tpu.vector_store %arg11[%32, %c0_23, %c0_24], %35 {strides = array<i32>} : memref<8x2x256xf32, #tpu.memory_space<vmem>>, vector<1x2x256xf32>,
    %c3_i32 = arith.constant 3 : i32
    %36 = arith.index_cast %c3_i32 : i32 to index
    %c0_25 = arith.constant 0 : index
    %c0_26 = arith.constant 0 : index
    %37 = vector.load %arg0[%36, %c0_25, %c0_26] : memref<8x2x16xf32, #tpu.memory_space<vmem>>, vector<1x2x16xf32>
    %38 = vector.shape_cast %37 : vector<1x2x16xf32> to vector<2x16xf32>
    %c0_27 = arith.constant 0 : index
    %c0_28 = arith.constant 0 : index
    %39 = vector.load %arg2[%c0_27, %c0_28] : memref<16x256xf32, #tpu.memory_space<vmem>>, vector<16x256xf32>
    %cst_29 = arith.constant dense<0.000000e+00> : vector<2x256xf32>
    %40 = tpu.matmul %38, %39, %cst_29 {dimension_numbers = #tpu.dot_dimension_numbers<[1], [0], [0], [1], [0, 0, 1, 1], [], []>} : vector<2x16xf32>, vector<16x256xf32>, vector<2x256xf32> -> vector<2x256xf32>
    %c0_30 = arith.constant 0 : index
    %c0_31 = arith.constant 0 : index
    %41 = vector.load %arg3[%c0_30, %c0_31] : memref<1x256xf32, #tpu.memory_space<vmem>>, vector<1x256xf32>
    %42 = vector.broadcast %41 : vector<1x256xf32> to vector<2x256xf32>
    %43 = arith.addf %40, %42 : vector<2x256xf32>
    %44 = arith.index_cast %c3_i32 : i32 to index
    %c0_32 = arith.constant 0 : index
    %c0_33 = arith.constant 0 : index
    %45 = vector.load %arg11[%44, %c0_32, %c0_33] : memref<8x2x256xf32, #tpu.memory_space<vmem>>, vector<1x2x256xf32>
    %46 = vector.shape_cast %45 : vector<1x2x256xf32> to vector<2x256xf32>
    %47 = vector.shape_cast %43 : vector<2x256xf32> to vector<1x2x256xf32>
    tpu.vector_store %arg11[%44, %c0_32, %c0_33], %47 {strides = array<i32>} : memref<8x2x256xf32, #tpu.memory_space<vmem>>, vector<1x2x256xf32>,
    %c4_i32 = arith.constant 4 : i32
    %48 = arith.index_cast %c4_i32 : i32 to index
    %c0_34 = arith.constant 0 : index
    %c0_35 = arith.constant 0 : index
    %49 = vector.load %arg0[%48, %c0_34, %c0_35] : memref<8x2x16xf32, #tpu.memory_space<vmem>>, vector<1x2x16xf32>
    %50 = vector.shape_cast %49 : vector<1x2x16xf32> to vector<2x16xf32>
    %c0_36 = arith.constant 0 : index
    %c0_37 = arith.constant 0 : index
    %51 = vector.load %arg2[%c0_36, %c0_37] : memref<16x256xf32, #tpu.memory_space<vmem>>, vector<16x256xf32>
    %cst_38 = arith.constant dense<0.000000e+00> : vector<2x256xf32>
    %52 = tpu.matmul %50, %51, %cst_38 {dimension_numbers = #tpu.dot_dimension_numbers<[1], [0], [0], [1], [0, 0, 1, 1], [], []>} : vector<2x16xf32>, vector<16x256xf32>, vector<2x256xf32> -> vector<2x256xf32>
    %c0_39 = arith.constant 0 : index
    %c0_40 = arith.constant 0 : index
    %53 = vector.load %arg3[%c0_39, %c0_40] : memref<1x256xf32, #tpu.memory_space<vmem>>, vector<1x256xf32>
    %54 = vector.broadcast %53 : vector<1x256xf32> to vector<2x256xf32>
    %55 = arith.addf %52, %54 : vector<2x256xf32>
    %56 = arith.index_cast %c4_i32 : i32 to index
    %c0_41 = arith.constant 0 : index
    %c0_42 = arith.constant 0 : index
    %57 = vector.load %arg11[%56, %c0_41, %c0_42] : memref<8x2x256xf32, #tpu.memory_space<vmem>>, vector<1x2x256xf32>
    %58 = vector.shape_cast %57 : vector<1x2x256xf32> to vector<2x256xf32>
    %59 = vector.shape_cast %55 : vector<2x256xf32> to vector<1x2x256xf32>
    tpu.vector_store %arg11[%56, %c0_41, %c0_42], %59 {strides = array<i32>} : memref<8x2x256xf32, #tpu.memory_space<vmem>>, vector<1x2x256xf32>,
    %c5_i32 = arith.constant 5 : i32
    %60 = arith.index_cast %c5_i32 : i32 to index
    %c0_43 = arith.constant 0 : index
    %c0_44 = arith.constant 0 : index
    %61 = vector.load %arg0[%60, %c0_43, %c0_44] : memref<8x2x16xf32, #tpu.memory_space<vmem>>, vector<1x2x16xf32>
    %62 = vector.shape_cast %61 : vector<1x2x16xf32> to vector<2x16xf32>
    %c0_45 = arith.constant 0 : index
    %c0_46 = arith.constant 0 : index
    %63 = vector.load %arg2[%c0_45, %c0_46] : memref<16x256xf32, #tpu.memory_space<vmem>>, vector<16x256xf32>
    %cst_47 = arith.constant dense<0.000000e+00> : vector<2x256xf32>
    %64 = tpu.matmul %62, %63, %cst_47 {dimension_numbers = #tpu.dot_dimension_numbers<[1], [0], [0], [1], [0, 0, 1, 1], [], []>} : vector<2x16xf32>, vector<16x256xf32>, vector<2x256xf32> -> vector<2x256xf32>
    %c0_48 = arith.constant 0 : index
    %c0_49 = arith.constant 0 : index
    %65 = vector.load %arg3[%c0_48, %c0_49] : memref<1x256xf32, #tpu.memory_space<vmem>>, vector<1x256xf32>
    %66 = vector.broadcast %65 : vector<1x256xf32> to vector<2x256xf32>
    %67 = arith.addf %64, %66 : vector<2x256xf32>
    %68 = arith.index_cast %c5_i32 : i32 to index
    %c0_50 = arith.constant 0 : index
    %c0_51 = arith.constant 0 : index
    %69 = vector.load %arg11[%68, %c0_50, %c0_51] : memref<8x2x256xf32, #tpu.memory_space<vmem>>, vector<1x2x256xf32>
    %70 = vector.shape_cast %69 : vector<1x2x256xf32> to vector<2x256xf32>
    %71 = vector.shape_cast %67 : vector<2x256xf32> to vector<1x2x256xf32>
    tpu.vector_store %arg11[%68, %c0_50, %c0_51], %71 {strides = array<i32>} : memref<8x2x256xf32, #tpu.memory_space<vmem>>, vector<1x2x256xf32>,
    %c6_i32 = arith.constant 6 : i32
    %72 = arith.index_cast %c6_i32 : i32 to index
    %c0_52 = arith.constant 0 : index
    %c0_53 = arith.constant 0 : index
    %73 = vector.load %arg0[%72, %c0_52, %c0_53] : memref<8x2x16xf32, #tpu.memory_space<vmem>>, vector<1x2x16xf32>
    %74 = vector.shape_cast %73 : vector<1x2x16xf32> to vector<2x16xf32>
    %c0_54 = arith.constant 0 : index
    %c0_55 = arith.constant 0 : index
    %75 = vector.load %arg2[%c0_54, %c0_55] : memref<16x256xf32, #tpu.memory_space<vmem>>, vector<16x256xf32>
    %cst_56 = arith.constant dense<0.000000e+00> : vector<2x256xf32>
    %76 = tpu.matmul %74, %75, %cst_56 {dimension_numbers = #tpu.dot_dimension_numbers<[1], [0], [0], [1], [0, 0, 1, 1], [], []>} : vector<2x16xf32>, vector<16x256xf32>, vector<2x256xf32> -> vector<2x256xf32>
    %c0_57 = arith.constant 0 : index
    %c0_58 = arith.constant 0 : index
    %77 = vector.load %arg3[%c0_57, %c0_58] : memref<1x256xf32, #tpu.memory_space<vmem>>, vector<1x256xf32>
    %78 = vector.broadcast %77 : vector<1x256xf32> to vector<2x256xf32>
    %79 = arith.addf %76, %78 : vector<2x256xf32>
    %80 = arith.index_cast %c6_i32 : i32 to index
    %c0_59 = arith.constant 0 : index
    %c0_60 = arith.constant 0 : index
    %81 = vector.load %arg11[%80, %c0_59, %c0_60] : memref<8x2x256xf32, #tpu.memory_space<vmem>>, vector<1x2x256xf32>
    %82 = vector.shape_cast %81 : vector<1x2x256xf32> to vector<2x256xf32>
    %83 = vector.shape_cast %79 : vector<2x256xf32> to vector<1x2x256xf32>
    tpu.vector_store %arg11[%80, %c0_59, %c0_60], %83 {strides = array<i32>} : memref<8x2x256xf32, #tpu.memory_space<vmem>>, vector<1x2x256xf32>,
    %c7_i32 = arith.constant 7 : i32
    %84 = arith.index_cast %c7_i32 : i32 to index
    %c0_61 = arith.constant 0 : index
    %c0_62 = arith.constant 0 : index
    %85 = vector.load %arg0[%84, %c0_61, %c0_62] : memref<8x2x16xf32, #tpu.memory_space<vmem>>, vector<1x2x16xf32>
    %86 = vector.shape_cast %85 : vector<1x2x16xf32> to vector<2x16xf32>
    %c0_63 = arith.constant 0 : index
    %c0_64 = arith.constant 0 : index
    %87 = vector.load %arg2[%c0_63, %c0_64] : memref<16x256xf32, #tpu.memory_space<vmem>>, vector<16x256xf32>
    %cst_65 = arith.constant dense<0.000000e+00> : vector<2x256xf32>
    %88 = tpu.matmul %86, %87, %cst_65 {dimension_numbers = #tpu.dot_dimension_numbers<[1], [0], [0], [1], [0, 0, 1, 1], [], []>} : vector<2x16xf32>, vector<16x256xf32>, vector<2x256xf32> -> vector<2x256xf32>
    %c0_66 = arith.constant 0 : index
    %c0_67 = arith.constant 0 : index
    %89 = vector.load %arg3[%c0_66, %c0_67] : memref<1x256xf32, #tpu.memory_space<vmem>>, vector<1x256xf32>
    %90 = vector.broadcast %89 : vector<1x256xf32> to vector<2x256xf32>
    %91 = arith.addf %88, %90 : vector<2x256xf32>
    %92 = arith.index_cast %c7_i32 : i32 to index
    %c0_68 = arith.constant 0 : index
    %c0_69 = arith.constant 0 : index
    %93 = vector.load %arg11[%92, %c0_68, %c0_69] : memref<8x2x256xf32, #tpu.memory_space<vmem>>, vector<1x2x256xf32>
    %94 = vector.shape_cast %93 : vector<1x2x256xf32> to vector<2x256xf32>
    %95 = vector.shape_cast %91 : vector<2x256xf32> to vector<1x2x256xf32>
    tpu.vector_store %arg11[%92, %c0_68, %c0_69], %95 {strides = array<i32>} : memref<8x2x256xf32, #tpu.memory_space<vmem>>, vector<1x2x256xf32>,
    %c8_i32 = arith.constant 8 : i32
    %cst_70 = arith.constant 0.000000e+00 : f32
    %96 = vector.broadcast %cst_70 : f32 to vector<2x64xf32>
    %c0_i32_71 = arith.constant 0 : i32
    %c7_i32_72 = arith.constant 7 : i32
    %97 = arith.subi %c7_i32_72, %c0_i32_71 : i32
    %c0_73 = arith.constant 0 : index
    %c0_74 = arith.constant 0 : index
    %98 = vector.load %arg4[%c0_73, %c0_74] : memref<64x256xf32, #tpu.memory_space<vmem>>, vector<64x256xf32>
    %cst_75 = arith.constant dense<0.000000e+00> : vector<2x256xf32>
    %99 = tpu.matmul %96, %98, %cst_75 {dimension_numbers = #tpu.dot_dimension_numbers<[1], [0], [0], [1], [0, 0, 1, 1], [], []>} : vector<2x64xf32>, vector<64x256xf32>, vector<2x256xf32> -> vector<2x256xf32>
    %100 = arith.index_cast %c0_i32_71 : i32 to index
    %c0_76 = arith.constant 0 : index
    %c0_77 = arith.constant 0 : index
    %101 = vector.load %arg11[%100, %c0_76, %c0_77] : memref<8x2x256xf32, #tpu.memory_space<vmem>>, vector<1x2x128xf32>
    %102 = vector.shape_cast %101 : vector<1x2x128xf32> to vector<2x128xf32>
    %103 = vector.extract_strided_slice %99 {offsets = [0, 0], sizes = [2, 128], strides = [1, 1]} : vector<2x256xf32> to vector<2x128xf32>
    %104 = arith.addf %102, %103 : vector<2x128xf32>
    %105 = arith.index_cast %97 : i32 to index
    %c0_78 = arith.constant 0 : index
    %c128 = arith.constant 128 : index
    %106 = vector.load %arg11[%105, %c0_78, %c128] : memref<8x2x256xf32, #tpu.memory_space<vmem>>, vector<1x2x128xf32>
    %107 = vector.shape_cast %106 : vector<1x2x128xf32> to vector<2x128xf32>
    %108 = vector.extract_strided_slice %99 {offsets = [0, 128], sizes = [2, 128], strides = [1, 1]} : vector<2x256xf32> to vector<2x128xf32>
    %109 = arith.addf %107, %108 : vector<2x128xf32>
    %110 = vector.extract_strided_slice %96 {offsets = [0, 0], sizes = [2, 32], strides = [1, 1]} : vector<2x64xf32> to vector<2x32xf32>
    %111 = vector.extract_strided_slice %104 {offsets = [0, 0], sizes = [2, 32], strides = [1, 1]} : vector<2x128xf32> to vector<2x32xf32>
    %112 = arith.negf %111 : vector<2x32xf32>
    %113 = math.exp %112 : vector<2x32xf32>
    %cst_79 = arith.constant 1.000000e+00 : f32
    %114 = vector.broadcast %cst_79 : f32 to vector<2x32xf32>
    %115 = arith.addf %114, %113 : vector<2x32xf32>
    %116 = arith.divf %114, %115 : vector<2x32xf32>
    %117 = vector.extract_strided_slice %104 {offsets = [0, 32], sizes = [2, 32], strides = [1, 1]} : vector<2x128xf32> to vector<2x32xf32>
    %118 = arith.negf %117 : vector<2x32xf32>
    %119 = math.exp %118 : vector<2x32xf32>
    %cst_80 = arith.constant 1.000000e+00 : f32
    %120 = vector.broadcast %cst_80 : f32 to vector<2x32xf32>
    %121 = arith.addf %120, %119 : vector<2x32xf32>
    %122 = arith.divf %120, %121 : vector<2x32xf32>
    %123 = vector.extract_strided_slice %104 {offsets = [0, 64], sizes = [2, 32], strides = [1, 1]} : vector<2x128xf32> to vector<2x32xf32>
    %124 = math.tanh %123 : vector<2x32xf32>
    %125 = vector.extract_strided_slice %104 {offsets = [0, 96], sizes = [2, 32], strides = [1, 1]} : vector<2x128xf32> to vector<2x32xf32>
    %126 = arith.negf %125 : vector<2x32xf32>
    %127 = math.exp %126 : vector<2x32xf32>
    %cst_81 = arith.constant 1.000000e+00 : f32
    %128 = vector.broadcast %cst_81 : f32 to vector<2x32xf32>
    %129 = arith.addf %128, %127 : vector<2x32xf32>
    %130 = arith.divf %128, %129 : vector<2x32xf32>
    %131 = arith.mulf %122, %110 : vector<2x32xf32>
    %132 = arith.mulf %116, %124 : vector<2x32xf32>
    %133 = arith.addf %131, %132 : vector<2x32xf32>
    %134 = math.tanh %133 : vector<2x32xf32>
    %135 = arith.mulf %130, %134 : vector<2x32xf32>
    %136 = vector.extract_strided_slice %96 {offsets = [0, 32], sizes = [2, 32], strides = [1, 1]} : vector<2x64xf32> to vector<2x32xf32>
    %137 = vector.extract_strided_slice %109 {offsets = [0, 0], sizes = [2, 32], strides = [1, 1]} : vector<2x128xf32> to vector<2x32xf32>
    %138 = arith.negf %137 : vector<2x32xf32>
    %139 = math.exp %138 : vector<2x32xf32>
    %cst_82 = arith.constant 1.000000e+00 : f32
    %140 = vector.broadcast %cst_82 : f32 to vector<2x32xf32>
    %141 = arith.addf %140, %139 : vector<2x32xf32>
    %142 = arith.divf %140, %141 : vector<2x32xf32>
    %143 = vector.extract_strided_slice %109 {offsets = [0, 32], sizes = [2, 32], strides = [1, 1]} : vector<2x128xf32> to vector<2x32xf32>
    %144 = arith.negf %143 : vector<2x32xf32>
    %145 = math.exp %144 : vector<2x32xf32>
    %cst_83 = arith.constant 1.000000e+00 : f32
    %146 = vector.broadcast %cst_83 : f32 to vector<2x32xf32>
    %147 = arith.addf %146, %145 : vector<2x32xf32>
    %148 = arith.divf %146, %147 : vector<2x32xf32>
    %149 = vector.extract_strided_slice %109 {offsets = [0, 64], sizes = [2, 32], strides = [1, 1]} : vector<2x128xf32> to vector<2x32xf32>
    %150 = math.tanh %149 : vector<2x32xf32>
    %151 = vector.extract_strided_slice %109 {offsets = [0, 96], sizes = [2, 32], strides = [1, 1]} : vector<2x128xf32> to vector<2x32xf32>
    %152 = arith.negf %151 : vector<2x32xf32>
    %153 = math.exp %152 : vector<2x32xf32>
    %cst_84 = arith.constant 1.000000e+00 : f32
    %154 = vector.broadcast %cst_84 : f32 to vector<2x32xf32>
    %155 = arith.addf %154, %153 : vector<2x32xf32>
    %156 = arith.divf %154, %155 : vector<2x32xf32>
    %157 = arith.mulf %148, %136 : vector<2x32xf32>
    %158 = arith.mulf %142, %150 : vector<2x32xf32>
    %159 = arith.addf %157, %158 : vector<2x32xf32>
    %160 = math.tanh %159 : vector<2x32xf32>
    %161 = arith.mulf %156, %160 : vector<2x32xf32>
    %162 = arith.index_cast %c0_i32_71 : i32 to index
    %c0_85 = arith.constant 0 : index
    %c0_86 = arith.constant 0 : index
    %163 = vector.load %arg1[%162, %c0_85, %c0_86] : memref<8x2x1xf32, #tpu.memory_space<vmem>>, vector<1x2x1xf32>
    %164 = vector.shape_cast %163 : vector<1x2x1xf32> to vector<2x1xf32>
    %cst_87 = arith.constant 0.000000e+00 : f32
    %165 = vector.broadcast %cst_87 : f32 to vector<2x1xf32>
    %166 = arith.cmpf ogt, %164, %165 : vector<2x1xf32>
    %167 = arith.index_cast %97 : i32 to index
    %c0_88 = arith.constant 0 : index
    %c0_89 = arith.constant 0 : index
    %168 = vector.load %arg1[%167, %c0_88, %c0_89] : memref<8x2x1xf32, #tpu.memory_space<vmem>>, vector<1x2x1xf32>
    %169 = vector.shape_cast %168 : vector<1x2x1xf32> to vector<2x1xf32>
    %cst_90 = arith.constant 0.000000e+00 : f32
    %170 = vector.broadcast %cst_90 : f32 to vector<2x1xf32>
    %171 = arith.cmpf ogt, %169, %170 : vector<2x1xf32>
    %172 = vector.extract_strided_slice %96 {offsets = [0, 0], sizes = [2, 32], strides = [1, 1]} : vector<2x64xf32> to vector<2x32xf32>
    %173 = vector.shape_cast %166 : vector<2x1xi1> to vector<2x1xi1>
    %174 = vector.broadcast %173 : vector<2x1xi1> to vector<2x32xi1>
    %175 = arith.select %174, %135, %172 : vector<2x32xi1>, vector<2x32xf32>
    %176 = vector.extract_strided_slice %96 {offsets = [0, 0], sizes = [2, 32], strides = [1, 1]} : vector<2x64xf32> to vector<2x32xf32>
    %177 = vector.shape_cast %166 : vector<2x1xi1> to vector<2x1xi1>
    %178 = vector.broadcast %177 : vector<2x1xi1> to vector<2x32xi1>
    %179 = arith.select %178, %133, %176 : vector<2x32xi1>, vector<2x32xf32>
    %180 = vector.extract_strided_slice %96 {offsets = [0, 32], sizes = [2, 32], strides = [1, 1]} : vector<2x64xf32> to vector<2x32xf32>
    %181 = vector.shape_cast %171 : vector<2x1xi1> to vector<2x1xi1>
    %182 = vector.broadcast %181 : vector<2x1xi1> to vector<2x32xi1>
    %183 = arith.select %182, %161, %180 : vector<2x32xi1>, vector<2x32xf32>
    %184 = vector.extract_strided_slice %96 {offsets = [0, 32], sizes = [2, 32], strides = [1, 1]} : vector<2x64xf32> to vector<2x32xf32>
    %185 = vector.shape_cast %171 : vector<2x1xi1> to vector<2x1xi1>
    %186 = vector.broadcast %185 : vector<2x1xi1> to vector<2x32xi1>
    %187 = arith.select %186, %159, %184 : vector<2x32xi1>, vector<2x32xf32>
    %188 = arith.index_cast %c0_i32_71 : i32 to index
    %c0_91 = arith.constant 0 : index
    %c0_92 = arith.constant 0 : index
    %189 = vector.load %arg12[%188, %c0_91, %c0_92] : memref<8x2x64xf32, #tpu.memory_space<vmem>>, vector<1x2x32xf32>
    %190 = vector.shape_cast %189 : vector<1x2x32xf32> to vector<2x32xf32>
    %191 = vector.shape_cast %175 : vector<2x32xf32> to vector<1x2x32xf32>
    tpu.vector_store %arg12[%188, %c0_91, %c0_92], %191 {strides = array<i32>} : memref<8x2x64xf32, #tpu.memory_space<vmem>>, vector<1x2x32xf32>,
    %192 = arith.index_cast %97 : i32 to index
    %c0_93 = arith.constant 0 : index
    %c32 = arith.constant 32 : index
    %193 = vector.load %arg12[%192, %c0_93, %c32] : memref<8x2x64xf32, #tpu.memory_space<vmem>>, vector<1x2x32xf32>
    %194 = vector.shape_cast %193 : vector<1x2x32xf32> to vector<2x32xf32>
    %195 = vector.shape_cast %183 : vector<2x32xf32> to vector<1x2x32xf32>
    tpu.vector_store %arg12[%192, %c0_93, %c32], %195 {strides = array<i32>} : memref<8x2x64xf32, #tpu.memory_space<vmem>>, vector<1x2x32xf32>,
    %196 = tpu.concatenate %175, %183 in 1 : vector<2x32xf32>, vector<2x32xf32> -> vector<2x64xf32>
    %197 = tpu.concatenate %179, %187 in 1 : vector<2x32xf32>, vector<2x32xf32> -> vector<2x64xf32>
    %c1_i32_94 = arith.constant 1 : i32
    %c7_i32_95 = arith.constant 7 : i32
    %198 = arith.subi %c7_i32_95, %c1_i32_94 : i32
    %c0_96 = arith.constant 0 : index
    %c0_97 = arith.constant 0 : index
    %199 = vector.load %arg4[%c0_96, %c0_97] : memref<64x256xf32, #tpu.memory_space<vmem>>, vector<64x256xf32>
    %cst_98 = arith.constant dense<0.000000e+00> : vector<2x256xf32>
    %200 = tpu.matmul %196, %199, %cst_98 {dimension_numbers = #tpu.dot_dimension_numbers<[1], [0], [0], [1], [0, 0, 1, 1], [], []>} : vector<2x64xf32>, vector<64x256xf32>, vector<2x256xf32> -> vector<2x256xf32>
    %201 = arith.index_cast %c1_i32_94 : i32 to index
    %c0_99 = arith.constant 0 : index
    %c0_100 = arith.constant 0 : index
    %202 = vector.load %arg11[%201, %c0_99, %c0_100] : memref<8x2x256xf32, #tpu.memory_space<vmem>>, vector<1x2x128xf32>
    %203 = vector.shape_cast %202 : vector<1x2x128xf32> to vector<2x128xf32>
    %204 = vector.extract_strided_slice %200 {offsets = [0, 0], sizes = [2, 128], strides = [1, 1]} : vector<2x256xf32> to vector<2x128xf32>
    %205 = arith.addf %203, %204 : vector<2x128xf32>
    %206 = arith.index_cast %198 : i32 to index
    %c0_101 = arith.constant 0 : index
    %c128_102 = arith.constant 128 : index
    %207 = vector.load %arg11[%206, %c0_101, %c128_102] : memref<8x2x256xf32, #tpu.memory_space<vmem>>, vector<1x2x128xf32>
    %208 = vector.shape_cast %207 : vector<1x2x128xf32> to vector<2x128xf32>
    %209 = vector.extract_strided_slice %200 {offsets = [0, 128], sizes = [2, 128], strides = [1, 1]} : vector<2x256xf32> to vector<2x128xf32>
    %210 = arith.addf %208, %209 : vector<2x128xf32>
    %211 = vector.extract_strided_slice %197 {offsets = [0, 0], sizes = [2, 32], strides = [1, 1]} : vector<2x64xf32> to vector<2x32xf32>
    %212 = vector.extract_strided_slice %205 {offsets = [0, 0], sizes = [2, 32], strides = [1, 1]} : vector<2x128xf32> to vector<2x32xf32>
    %213 = arith.negf %212 : vector<2x32xf32>
    %214 = math.exp %213 : vector<2x32xf32>
    %cst_103 = arith.constant 1.000000e+00 : f32
    %215 = vector.broadcast %cst_103 : f32 to vector<2x32xf32>
    %216 = arith.addf %215, %214 : vector<2x32xf32>
    %217 = arith.divf %215, %216 : vector<2x32xf32>
    %218 = vector.extract_strided_slice %205 {offsets = [0, 32], sizes = [2, 32], strides = [1, 1]} : vector<2x128xf32> to vector<2x32xf32>
    %219 = arith.negf %218 : vector<2x32xf32>
    %220 = math.exp %219 : vector<2x32xf32>
    %cst_104 = arith.constant 1.000000e+00 : f32
    %221 = vector.broadcast %cst_104 : f32 to vector<2x32xf32>
    %222 = arith.addf %221, %220 : vector<2x32xf32>
    %223 = arith.divf %221, %222 : vector<2x32xf32>
    %224 = vector.extract_strided_slice %205 {offsets = [0, 64], sizes = [2, 32], strides = [1, 1]} : vector<2x128xf32> to vector<2x32xf32>
    %225 = math.tanh %224 : vector<2x32xf32>
    %226 = vector.extract_strided_slice %205 {offsets = [0, 96], sizes = [2, 32], strides = [1, 1]} : vector<2x128xf32> to vector<2x32xf32>
    %227 = arith.negf %226 : vector<2x32xf32>
    %228 = math.exp %227 : vector<2x32xf32>
    %cst_105 = arith.constant 1.000000e+00 : f32
    %229 = vector.broadcast %cst_105 : f32 to vector<2x32xf32>
    %230 = arith.addf %229, %228 : vector<2x32xf32>
    %231 = arith.divf %229, %230 : vector<2x32xf32>
    %232 = arith.mulf %223, %211 : vector<2x32xf32>
    %233 = arith.mulf %217, %225 : vector<2x32xf32>
    %234 = arith.addf %232, %233 : vector<2x32xf32>
    %235 = math.tanh %234 : vector<2x32xf32>
    %236 = arith.mulf %231, %235 : vector<2x32xf32>
    %237 = vector.extract_strided_slice %197 {offsets = [0, 32], sizes = [2, 32], strides = [1, 1]} : vector<2x64xf32> to vector<2x32xf32>
    %238 = vector.extract_strided_slice %210 {offsets = [0, 0], sizes = [2, 32], strides = [1, 1]} : vector<2x128xf32> to vector<2x32xf32>
    %239 = arith.negf %238 : vector<2x32xf32>
    %240 = math.exp %239 : vector<2x32xf32>
    %cst_106 = arith.constant 1.000000e+00 : f32
    %241 = vector.broadcast %cst_106 : f32 to vector<2x32xf32>
    %242 = arith.addf %241, %240 : vector<2x32xf32>
    %243 = arith.divf %241, %242 : vector<2x32xf32>
    %244 = vector.extract_strided_slice %210 {offsets = [0, 32], sizes = [2, 32], strides = [1, 1]} : vector<2x128xf32> to vector<2x32xf32>
    %245 = arith.negf %244 : vector<2x32xf32>
    %246 = math.exp %245 : vector<2x32xf32>
    %cst_107 = arith.constant 1.000000e+00 : f32
    %247 = vector.broadcast %cst_107 : f32 to vector<2x32xf32>
    %248 = arith.addf %247, %246 : vector<2x32xf32>
    %249 = arith.divf %247, %248 : vector<2x32xf32>
    %250 = vector.extract_strided_slice %210 {offsets = [0, 64], sizes = [2, 32], strides = [1, 1]} : vector<2x128xf32> to vector<2x32xf32>
    %251 = math.tanh %250 : vector<2x32xf32>
    %252 = vector.extract_strided_slice %210 {offsets = [0, 96], sizes = [2, 32], strides = [1, 1]} : vector<2x128xf32> to vector<2x32xf32>
    %253 = arith.negf %252 : vector<2x32xf32>
    %254 = math.exp %253 : vector<2x32xf32>
    %cst_108 = arith.constant 1.000000e+00 : f32
    %255 = vector.broadcast %cst_108 : f32 to vector<2x32xf32>
    %256 = arith.addf %255, %254 : vector<2x32xf32>
    %257 = arith.divf %255, %256 : vector<2x32xf32>
    %258 = arith.mulf %249, %237 : vector<2x32xf32>
    %259 = arith.mulf %243, %251 : vector<2x32xf32>
    %260 = arith.addf %258, %259 : vector<2x32xf32>
    %261 = math.tanh %260 : vector<2x32xf32>
    %262 = arith.mulf %257, %261 : vector<2x32xf32>
    %263 = arith.index_cast %c1_i32_94 : i32 to index
    %c0_109 = arith.constant 0 : index
    %c0_110 = arith.constant 0 : index
    %264 = vector.load %arg1[%263, %c0_109, %c0_110] : memref<8x2x1xf32, #tpu.memory_space<vmem>>, vector<1x2x1xf32>
    %265 = vector.shape_cast %264 : vector<1x2x1xf32> to vector<2x1xf32>
    %cst_111 = arith.constant 0.000000e+00 : f32
    %266 = vector.broadcast %cst_111 : f32 to vector<2x1xf32>
    %267 = arith.cmpf ogt, %265, %266 : vector<2x1xf32>
    %268 = arith.index_cast %198 : i32 to index
    %c0_112 = arith.constant 0 : index
    %c0_113 = arith.constant 0 : index
    %269 = vector.load %arg1[%268, %c0_112, %c0_113] : memref<8x2x1xf32, #tpu.memory_space<vmem>>, vector<1x2x1xf32>
    %270 = vector.shape_cast %269 : vector<1x2x1xf32> to vector<2x1xf32>
    %cst_114 = arith.constant 0.000000e+00 : f32
    %271 = vector.broadcast %cst_114 : f32 to vector<2x1xf32>
    %272 = arith.cmpf ogt, %270, %271 : vector<2x1xf32>
    %273 = vector.extract_strided_slice %196 {offsets = [0, 0], sizes = [2, 32], strides = [1, 1]} : vector<2x64xf32> to vector<2x32xf32>
    %274 = vector.shape_cast %267 : vector<2x1xi1> to vector<2x1xi1>
    %275 = vector.broadcast %274 : vector<2x1xi1> to vector<2x32xi1>
    %276 = arith.select %275, %236, %273 : vector<2x32xi1>, vector<2x32xf32>
    %277 = vector.extract_strided_slice %197 {offsets = [0, 0], sizes = [2, 32], strides = [1, 1]} : vector<2x64xf32> to vector<2x32xf32>
    %278 = vector.shape_cast %267 : vector<2x1xi1> to vector<2x1xi1>
    %279 = vector.broadcast %278 : vector<2x1xi1> to vector<2x32xi1>
    %280 = arith.select %279, %234, %277 : vector<2x32xi1>, vector<2x32xf32>
    %281 = vector.extract_strided_slice %196 {offsets = [0, 32], sizes = [2, 32], strides = [1, 1]} : vector<2x64xf32> to vector<2x32xf32>
    %282 = vector.shape_cast %272 : vector<2x1xi1> to vector<2x1xi1>
    %283 = vector.broadcast %282 : vector<2x1xi1> to vector<2x32xi1>
    %284 = arith.select %283, %262, %281 : vector<2x32xi1>, vector<2x32xf32>
    %285 = vector.extract_strided_slice %197 {offsets = [0, 32], sizes = [2, 32], strides = [1, 1]} : vector<2x64xf32> to vector<2x32xf32>
    %286 = vector.shape_cast %272 : vector<2x1xi1> to vector<2x1xi1>
    %287 = vector.broadcast %286 : vector<2x1xi1> to vector<2x32xi1>
    %288 = arith.select %287, %260, %285 : vector<2x32xi1>, vector<2x32xf32>
    %289 = arith.index_cast %c1_i32_94 : i32 to index
    %c0_115 = arith.constant 0 : index
    %c0_116 = arith.constant 0 : index
    %290 = vector.load %arg12[%289, %c0_115, %c0_116] : memref<8x2x64xf32, #tpu.memory_space<vmem>>, vector<1x2x32xf32>
    %291 = vector.shape_cast %290 : vector<1x2x32xf32> to vector<2x32xf32>
    %292 = vector.shape_cast %276 : vector<2x32xf32> to vector<1x2x32xf32>
    tpu.vector_store %arg12[%289, %c0_115, %c0_116], %292 {strides = array<i32>} : memref<8x2x64xf32, #tpu.memory_space<vmem>>, vector<1x2x32xf32>,
    %293 = arith.index_cast %198 : i32 to index
    %c0_117 = arith.constant 0 : index
    %c32_118 = arith.constant 32 : index
    %294 = vector.load %arg12[%293, %c0_117, %c32_118] : memref<8x2x64xf32, #tpu.memory_space<vmem>>, vector<1x2x32xf32>
    %295 = vector.shape_cast %294 : vector<1x2x32xf32> to vector<2x32xf32>
    %296 = vector.shape_cast %284 : vector<2x32xf32> to vector<1x2x32xf32>
    tpu.vector_store %arg12[%293, %c0_117, %c32_118], %296 {strides = array<i32>} : memref<8x2x64xf32, #tpu.memory_space<vmem>>, vector<1x2x32xf32>,
    %297 = tpu.concatenate %276, %284 in 1 : vector<2x32xf32>, vector<2x32xf32> -> vector<2x64xf32>
    %298 = tpu.concatenate %280, %288 in 1 : vector<2x32xf32>, vector<2x32xf32> -> vector<2x64xf32>
    %c2_i32_119 = arith.constant 2 : i32
    %c7_i32_120 = arith.constant 7 : i32
    %299 = arith.subi %c7_i32_120, %c2_i32_119 : i32
    %c0_121 = arith.constant 0 : index
    %c0_122 = arith.constant 0 : index
    %300 = vector.load %arg4[%c0_121, %c0_122] : memref<64x256xf32, #tpu.memory_space<vmem>>, vector<64x256xf32>
    %cst_123 = arith.constant dense<0.000000e+00> : vector<2x256xf32>
    %301 = tpu.matmul %297, %300, %cst_123 {dimension_numbers = #tpu.dot_dimension_numbers<[1], [0], [0], [1], [0, 0, 1, 1], [], []>} : vector<2x64xf32>, vector<64x256xf32>, vector<2x256xf32> -> vector<2x256xf32>
    %302 = arith.index_cast %c2_i32_119 : i32 to index
    %c0_124 = arith.constant 0 : index
    %c0_125 = arith.constant 0 : index
    %303 = vector.load %arg11[%302, %c0_124, %c0_125] : memref<8x2x256xf32, #tpu.memory_space<vmem>>, vector<1x2x128xf32>
    %304 = vector.shape_cast %303 : vector<1x2x128xf32> to vector<2x128xf32>
    %305 = vector.extract_strided_slice %301 {offsets = [0, 0], sizes = [2, 128], strides = [1, 1]} : vector<2x256xf32> to vector<2x128xf32>
    %306 = arith.addf %304, %305 : vector<2x128xf32>
    %307 = arith.index_cast %299 : i32 to index
    %c0_126 = arith.constant 0 : index
    %c128_127 = arith.constant 128 : index
    %308 = vector.load %arg11[%307, %c0_126, %c128_127] : memref<8x2x256xf32, #tpu.memory_space<vmem>>, vector<1x2x128xf32>
    %309 = vector.shape_cast %308 : vector<1x2x128xf32> to vector<2x128xf32>
    %310 = vector.extract_strided_slice %301 {offsets = [0, 128], sizes = [2, 128], strides = [1, 1]} : vector<2x256xf32> to vector<2x128xf32>
    %311 = arith.addf %309, %310 : vector<2x128xf32>
    %312 = vector.extract_strided_slice %298 {offsets = [0, 0], sizes = [2, 32], strides = [1, 1]} : vector<2x64xf32> to vector<2x32xf32>
    %313 = vector.extract_strided_slice %306 {offsets = [0, 0], sizes = [2, 32], strides = [1, 1]} : vector<2x128xf32> to vector<2x32xf32>
    %314 = arith.negf %313 : vector<2x32xf32>
    %315 = math.exp %314 : vector<2x32xf32>
    %cst_128 = arith.constant 1.000000e+00 : f32
    %316 = vector.broadcast %cst_128 : f32 to vector<2x32xf32>
    %317 = arith.addf %316, %315 : vector<2x32xf32>
    %318 = arith.divf %316, %317 : vector<2x32xf32>
    %319 = vector.extract_strided_slice %306 {offsets = [0, 32], sizes = [2, 32], strides = [1, 1]} : vector<2x128xf32> to vector<2x32xf32>
    %320 = arith.negf %319 : vector<2x32xf32>
    %321 = math.exp %320 : vector<2x32xf32>
    %cst_129 = arith.constant 1.000000e+00 : f32
    %322 = vector.broadcast %cst_129 : f32 to vector<2x32xf32>
    %323 = arith.addf %322, %321 : vector<2x32xf32>
    %324 = arith.divf %322, %323 : vector<2x32xf32>
    %325 = vector.extract_strided_slice %306 {offsets = [0, 64], sizes = [2, 32], strides = [1, 1]} : vector<2x128xf32> to vector<2x32xf32>
    %326 = math.tanh %325 : vector<2x32xf32>
    %327 = vector.extract_strided_slice %306 {offsets = [0, 96], sizes = [2, 32], strides = [1, 1]} : vector<2x128xf32> to vector<2x32xf32>
    %328 = arith.negf %327 : vector<2x32xf32>
    %329 = math.exp %328 : vector<2x32xf32>
    %cst_130 = arith.constant 1.000000e+00 : f32
    %330 = vector.broadcast %cst_130 : f32 to vector<2x32xf32>
    %331 = arith.addf %330, %329 : vector<2x32xf32>
    %332 = arith.divf %330, %331 : vector<2x32xf32>
    %333 = arith.mulf %324, %312 : vector<2x32xf32>
    %334 = arith.mulf %318, %326 : vector<2x32xf32>
    %335 = arith.addf %333, %334 : vector<2x32xf32>
    %336 = math.tanh %335 : vector<2x32xf32>
    %337 = arith.mulf %332, %336 : vector<2x32xf32>
    %338 = vector.extract_strided_slice %298 {offsets = [0, 32], sizes = [2, 32], strides = [1, 1]} : vector<2x64xf32> to vector<2x32xf32>
    %339 = vector.extract_strided_slice %311 {offsets = [0, 0], sizes = [2, 32], strides = [1, 1]} : vector<2x128xf32> to vector<2x32xf32>
    %340 = arith.negf %339 : vector<2x32xf32>
    %341 = math.exp %340 : vector<2x32xf32>
    %cst_131 = arith.constant 1.000000e+00 : f32
    %342 = vector.broadcast %cst_131 : f32 to vector<2x32xf32>
    %343 = arith.addf %342, %341 : vector<2x32xf32>
    %344 = arith.divf %342, %343 : vector<2x32xf32>
    %345 = vector.extract_strided_slice %311 {offsets = [0, 32], sizes = [2, 32], strides = [1, 1]} : vector<2x128xf32> to vector<2x32xf32>
    %346 = arith.negf %345 : vector<2x32xf32>
    %347 = math.exp %346 : vector<2x32xf32>
    %cst_132 = arith.constant 1.000000e+00 : f32
    %348 = vector.broadcast %cst_132 : f32 to vector<2x32xf32>
    %349 = arith.addf %348, %347 : vector<2x32xf32>
    %350 = arith.divf %348, %349 : vector<2x32xf32>
    %351 = vector.extract_strided_slice %311 {offsets = [0, 64], sizes = [2, 32], strides = [1, 1]} : vector<2x128xf32> to vector<2x32xf32>
    %352 = math.tanh %351 : vector<2x32xf32>
    %353 = vector.extract_strided_slice %311 {offsets = [0, 96], sizes = [2, 32], strides = [1, 1]} : vector<2x128xf32> to vector<2x32xf32>
    %354 = arith.negf %353 : vector<2x32xf32>
    %355 = math.exp %354 : vector<2x32xf32>
    %cst_133 = arith.constant 1.000000e+00 : f32
    %356 = vector.broadcast %cst_133 : f32 to vector<2x32xf32>
    %357 = arith.addf %356, %355 : vector<2x32xf32>
    %358 = arith.divf %356, %357 : vector<2x32xf32>
    %359 = arith.mulf %350, %338 : vector<2x32xf32>
    %360 = arith.mulf %344, %352 : vector<2x32xf32>
    %361 = arith.addf %359, %360 : vector<2x32xf32>
    %362 = math.tanh %361 : vector<2x32xf32>
    %363 = arith.mulf %358, %362 : vector<2x32xf32>
    %364 = arith.index_cast %c2_i32_119 : i32 to index
    %c0_134 = arith.constant 0 : index
    %c0_135 = arith.constant 0 : index
    %365 = vector.load %arg1[%364, %c0_134, %c0_135] : memref<8x2x1xf32, #tpu.memory_space<vmem>>, vector<1x2x1xf32>
    %366 = vector.shape_cast %365 : vector<1x2x1xf32> to vector<2x1xf32>
    %cst_136 = arith.constant 0.000000e+00 : f32
    %367 = vector.broadcast %cst_136 : f32 to vector<2x1xf32>
    %368 = arith.cmpf ogt, %366, %367 : vector<2x1xf32>
    %369 = arith.index_cast %299 : i32 to index
    %c0_137 = arith.constant 0 : index
    %c0_138 = arith.constant 0 : index
    %370 = vector.load %arg1[%369, %c0_137, %c0_138] : memref<8x2x1xf32, #tpu.memory_space<vmem>>, vector<1x2x1xf32>
    %371 = vector.shape_cast %370 : vector<1x2x1xf32> to vector<2x1xf32>
    %cst_139 = arith.constant 0.000000e+00 : f32
    %372 = vector.broadcast %cst_139 : f32 to vector<2x1xf32>
    %373 = arith.cmpf ogt, %371, %372 : vector<2x1xf32>
    %374 = vector.extract_strided_slice %297 {offsets = [0, 0], sizes = [2, 32], strides = [1, 1]} : vector<2x64xf32> to vector<2x32xf32>
    %375 = vector.shape_cast %368 : vector<2x1xi1> to vector<2x1xi1>
    %376 = vector.broadcast %375 : vector<2x1xi1> to vector<2x32xi1>
    %377 = arith.select %376, %337, %374 : vector<2x32xi1>, vector<2x32xf32>
    %378 = vector.extract_strided_slice %298 {offsets = [0, 0], sizes = [2, 32], strides = [1, 1]} : vector<2x64xf32> to vector<2x32xf32>
    %379 = vector.shape_cast %368 : vector<2x1xi1> to vector<2x1xi1>
    %380 = vector.broadcast %379 : vector<2x1xi1> to vector<2x32xi1>
    %381 = arith.select %380, %335, %378 : vector<2x32xi1>, vector<2x32xf32>
    %382 = vector.extract_strided_slice %297 {offsets = [0, 32], sizes = [2, 32], strides = [1, 1]} : vector<2x64xf32> to vector<2x32xf32>
    %383 = vector.shape_cast %373 : vector<2x1xi1> to vector<2x1xi1>
    %384 = vector.broadcast %383 : vector<2x1xi1> to vector<2x32xi1>
    %385 = arith.select %384, %363, %382 : vector<2x32xi1>, vector<2x32xf32>
    %386 = vector.extract_strided_slice %298 {offsets = [0, 32], sizes = [2, 32], strides = [1, 1]} : vector<2x64xf32> to vector<2x32xf32>
    %387 = vector.shape_cast %373 : vector<2x1xi1> to vector<2x1xi1>
    %388 = vector.broadcast %387 : vector<2x1xi1> to vector<2x32xi1>
    %389 = arith.select %388, %361, %386 : vector<2x32xi1>, vector<2x32xf32>
    %390 = arith.index_cast %c2_i32_119 : i32 to index
    %c0_140 = arith.constant 0 : index
    %c0_141 = arith.constant 0 : index
    %391 = vector.load %arg12[%390, %c0_140, %c0_141] : memref<8x2x64xf32, #tpu.memory_space<vmem>>, vector<1x2x32xf32>
    %392 = vector.shape_cast %391 : vector<1x2x32xf32> to vector<2x32xf32>
    %393 = vector.shape_cast %377 : vector<2x32xf32> to vector<1x2x32xf32>
    tpu.vector_store %arg12[%390, %c0_140, %c0_141], %393 {strides = array<i32>} : memref<8x2x64xf32, #tpu.memory_space<vmem>>, vector<1x2x32xf32>,
    %394 = arith.index_cast %299 : i32 to index
    %c0_142 = arith.constant 0 : index
    %c32_143 = arith.constant 32 : index
    %395 = vector.load %arg12[%394, %c0_142, %c32_143] : memref<8x2x64xf32, #tpu.memory_space<vmem>>, vector<1x2x32xf32>
    %396 = vector.shape_cast %395 : vector<1x2x32xf32> to vector<2x32xf32>
    %397 = vector.shape_cast %385 : vector<2x32xf32> to vector<1x2x32xf32>
    tpu.vector_store %arg12[%394, %c0_142, %c32_143], %397 {strides = array<i32>} : memref<8x2x64xf32, #tpu.memory_space<vmem>>, vector<1x2x32xf32>,
    %398 = tpu.concatenate %377, %385 in 1 : vector<2x32xf32>, vector<2x32xf32> -> vector<2x64xf32>
    %399 = tpu.concatenate %381, %389 in 1 : vector<2x32xf32>, vector<2x32xf32> -> vector<2x64xf32>
    %c3_i32_144 = arith.constant 3 : i32
    %c7_i32_145 = arith.constant 7 : i32
    %400 = arith.subi %c7_i32_145, %c3_i32_144 : i32
    %c0_146 = arith.constant 0 : index
    %c0_147 = arith.constant 0 : index
    %401 = vector.load %arg4[%c0_146, %c0_147] : memref<64x256xf32, #tpu.memory_space<vmem>>, vector<64x256xf32>
    %cst_148 = arith.constant dense<0.000000e+00> : vector<2x256xf32>
    %402 = tpu.matmul %398, %401, %cst_148 {dimension_numbers = #tpu.dot_dimension_numbers<[1], [0], [0], [1], [0, 0, 1, 1], [], []>} : vector<2x64xf32>, vector<64x256xf32>, vector<2x256xf32> -> vector<2x256xf32>
    %403 = arith.index_cast %c3_i32_144 : i32 to index
    %c0_149 = arith.constant 0 : index
    %c0_150 = arith.constant 0 : index
    %404 = vector.load %arg11[%403, %c0_149, %c0_150] : memref<8x2x256xf32, #tpu.memory_space<vmem>>, vector<1x2x128xf32>
    %405 = vector.shape_cast %404 : vector<1x2x128xf32> to vector<2x128xf32>
    %406 = vector.extract_strided_slice %402 {offsets = [0, 0], sizes = [2, 128], strides = [1, 1]} : vector<2x256xf32> to vector<2x128xf32>
    %407 = arith.addf %405, %406 : vector<2x128xf32>
    %408 = arith.index_cast %400 : i32 to index
    %c0_151 = arith.constant 0 : index
    %c128_152 = arith.constant 128 : index
    %409 = vector.load %arg11[%408, %c0_151, %c128_152] : memref<8x2x256xf32, #tpu.memory_space<vmem>>, vector<1x2x128xf32>
    %410 = vector.shape_cast %409 : vector<1x2x128xf32> to vector<2x128xf32>
    %411 = vector.extract_strided_slice %402 {offsets = [0, 128], sizes = [2, 128], strides = [1, 1]} : vector<2x256xf32> to vector<2x128xf32>
    %412 = arith.addf %410, %411 : vector<2x128xf32>
    %413 = vector.extract_strided_slice %399 {offsets = [0, 0], sizes = [2, 32], strides = [1, 1]} : vector<2x64xf32> to vector<2x32xf32>
    %414 = vector.extract_strided_slice %407 {offsets = [0, 0], sizes = [2, 32], strides = [1, 1]} : vector<2x128xf32> to vector<2x32xf32>
    %415 = arith.negf %414 : vector<2x32xf32>
    %416 = math.exp %415 : vector<2x32xf32>
    %cst_153 = arith.constant 1.000000e+00 : f32
    %417 = vector.broadcast %cst_153 : f32 to vector<2x32xf32>
    %418 = arith.addf %417, %416 : vector<2x32xf32>
    %419 = arith.divf %417, %418 : vector<2x32xf32>
    %420 = vector.extract_strided_slice %407 {offsets = [0, 32], sizes = [2, 32], strides = [1, 1]} : vector<2x128xf32> to vector<2x32xf32>
    %421 = arith.negf %420 : vector<2x32xf32>
    %422 = math.exp %421 : vector<2x32xf32>
    %cst_154 = arith.constant 1.000000e+00 : f32
    %423 = vector.broadcast %cst_154 : f32 to vector<2x32xf32>
    %424 = arith.addf %423, %422 : vector<2x32xf32>
    %425 = arith.divf %423, %424 : vector<2x32xf32>
    %426 = vector.extract_strided_slice %407 {offsets = [0, 64], sizes = [2, 32], strides = [1, 1]} : vector<2x128xf32> to vector<2x32xf32>
    %427 = math.tanh %426 : vector<2x32xf32>
    %428 = vector.extract_strided_slice %407 {offsets = [0, 96], sizes = [2, 32], strides = [1, 1]} : vector<2x128xf32> to vector<2x32xf32>
    %429 = arith.negf %428 : vector<2x32xf32>
    %430 = math.exp %429 : vector<2x32xf32>
    %cst_155 = arith.constant 1.000000e+00 : f32
    %431 = vector.broadcast %cst_155 : f32 to vector<2x32xf32>
    %432 = arith.addf %431, %430 : vector<2x32xf32>
    %433 = arith.divf %431, %432 : vector<2x32xf32>
    %434 = arith.mulf %425, %413 : vector<2x32xf32>
    %435 = arith.mulf %419, %427 : vector<2x32xf32>
    %436 = arith.addf %434, %435 : vector<2x32xf32>
    %437 = math.tanh %436 : vector<2x32xf32>
    %438 = arith.mulf %433, %437 : vector<2x32xf32>
    %439 = vector.extract_strided_slice %399 {offsets = [0, 32], sizes = [2, 32], strides = [1, 1]} : vector<2x64xf32> to vector<2x32xf32>
    %440 = vector.extract_strided_slice %412 {offsets = [0, 0], sizes = [2, 32], strides = [1, 1]} : vector<2x128xf32> to vector<2x32xf32>
    %441 = arith.negf %440 : vector<2x32xf32>
    %442 = math.exp %441 : vector<2x32xf32>
    %cst_156 = arith.constant 1.000000e+00 : f32
    %443 = vector.broadcast %cst_156 : f32 to vector<2x32xf32>
    %444 = arith.addf %443, %442 : vector<2x32xf32>
    %445 = arith.divf %443, %444 : vector<2x32xf32>
    %446 = vector.extract_strided_slice %412 {offsets = [0, 32], sizes = [2, 32], strides = [1, 1]} : vector<2x128xf32> to vector<2x32xf32>
    %447 = arith.negf %446 : vector<2x32xf32>
    %448 = math.exp %447 : vector<2x32xf32>
    %cst_157 = arith.constant 1.000000e+00 : f32
    %449 = vector.broadcast %cst_157 : f32 to vector<2x32xf32>
    %450 = arith.addf %449, %448 : vector<2x32xf32>
    %451 = arith.divf %449, %450 : vector<2x32xf32>
    %452 = vector.extract_strided_slice %412 {offsets = [0, 64], sizes = [2, 32], strides = [1, 1]} : vector<2x128xf32> to vector<2x32xf32>
    %453 = math.tanh %452 : vector<2x32xf32>
    %454 = vector.extract_strided_slice %412 {offsets = [0, 96], sizes = [2, 32], strides = [1, 1]} : vector<2x128xf32> to vector<2x32xf32>
    %455 = arith.negf %454 : vector<2x32xf32>
    %456 = math.exp %455 : vector<2x32xf32>
    %cst_158 = arith.constant 1.000000e+00 : f32
    %457 = vector.broadcast %cst_158 : f32 to vector<2x32xf32>
    %458 = arith.addf %457, %456 : vector<2x32xf32>
    %459 = arith.divf %457, %458 : vector<2x32xf32>
    %460 = arith.mulf %451, %439 : vector<2x32xf32>
    %461 = arith.mulf %445, %453 : vector<2x32xf32>
    %462 = arith.addf %460, %461 : vector<2x32xf32>
    %463 = math.tanh %462 : vector<2x32xf32>
    %464 = arith.mulf %459, %463 : vector<2x32xf32>
    %465 = arith.index_cast %c3_i32_144 : i32 to index
    %c0_159 = arith.constant 0 : index
    %c0_160 = arith.constant 0 : index
    %466 = vector.load %arg1[%465, %c0_159, %c0_160] : memref<8x2x1xf32, #tpu.memory_space<vmem>>, vector<1x2x1xf32>
    %467 = vector.shape_cast %466 : vector<1x2x1xf32> to vector<2x1xf32>
    %cst_161 = arith.constant 0.000000e+00 : f32
    %468 = vector.broadcast %cst_161 : f32 to vector<2x1xf32>
    %469 = arith.cmpf ogt, %467, %468 : vector<2x1xf32>
    %470 = arith.index_cast %400 : i32 to index
    %c0_162 = arith.constant 0 : index
    %c0_163 = arith.constant 0 : index
    %471 = vector.load %arg1[%470, %c0_162, %c0_163] : memref<8x2x1xf32, #tpu.memory_space<vmem>>, vector<1x2x1xf32>
    %472 = vector.shape_cast %471 : vector<1x2x1xf32> to vector<2x1xf32>
    %cst_164 = arith.constant 0.000000e+00 : f32
    %473 = vector.broadcast %cst_164 : f32 to vector<2x1xf32>
    %474 = arith.cmpf ogt, %472, %473 : vector<2x1xf32>
    %475 = vector.extract_strided_slice %398 {offsets = [0, 0], sizes = [2, 32], strides = [1, 1]} : vector<2x64xf32> to vector<2x32xf32>
    %476 = vector.shape_cast %469 : vector<2x1xi1> to vector<2x1xi1>
    %477 = vector.broadcast %476 : vector<2x1xi1> to vector<2x32xi1>
    %478 = arith.select %477, %438, %475 : vector<2x32xi1>, vector<2x32xf32>
    %479 = vector.extract_strided_slice %399 {offsets = [0, 0], sizes = [2, 32], strides = [1, 1]} : vector<2x64xf32> to vector<2x32xf32>
    %480 = vector.shape_cast %469 : vector<2x1xi1> to vector<2x1xi1>
    %481 = vector.broadcast %480 : vector<2x1xi1> to vector<2x32xi1>
    %482 = arith.select %481, %436, %479 : vector<2x32xi1>, vector<2x32xf32>
    %483 = vector.extract_strided_slice %398 {offsets = [0, 32], sizes = [2, 32], strides = [1, 1]} : vector<2x64xf32> to vector<2x32xf32>
    %484 = vector.shape_cast %474 : vector<2x1xi1> to vector<2x1xi1>
    %485 = vector.broadcast %484 : vector<2x1xi1> to vector<2x32xi1>
    %486 = arith.select %485, %464, %483 : vector<2x32xi1>, vector<2x32xf32>
    %487 = vector.extract_strided_slice %399 {offsets = [0, 32], sizes = [2, 32], strides = [1, 1]} : vector<2x64xf32> to vector<2x32xf32>
    %488 = vector.shape_cast %474 : vector<2x1xi1> to vector<2x1xi1>
    %489 = vector.broadcast %488 : vector<2x1xi1> to vector<2x32xi1>
    %490 = arith.select %489, %462, %487 : vector<2x32xi1>, vector<2x32xf32>
    %491 = arith.index_cast %c3_i32_144 : i32 to index
    %c0_165 = arith.constant 0 : index
    %c0_166 = arith.constant 0 : index
    %492 = vector.load %arg12[%491, %c0_165, %c0_166] : memref<8x2x64xf32, #tpu.memory_space<vmem>>, vector<1x2x32xf32>
    %493 = vector.shape_cast %492 : vector<1x2x32xf32> to vector<2x32xf32>
    %494 = vector.shape_cast %478 : vector<2x32xf32> to vector<1x2x32xf32>
    tpu.vector_store %arg12[%491, %c0_165, %c0_166], %494 {strides = array<i32>} : memref<8x2x64xf32, #tpu.memory_space<vmem>>, vector<1x2x32xf32>,
    %495 = arith.index_cast %400 : i32 to index
    %c0_167 = arith.constant 0 : index
    %c32_168 = arith.constant 32 : index
    %496 = vector.load %arg12[%495, %c0_167, %c32_168] : memref<8x2x64xf32, #tpu.memory_space<vmem>>, vector<1x2x32xf32>
    %497 = vector.shape_cast %496 : vector<1x2x32xf32> to vector<2x32xf32>
    %498 = vector.shape_cast %486 : vector<2x32xf32> to vector<1x2x32xf32>
    tpu.vector_store %arg12[%495, %c0_167, %c32_168], %498 {strides = array<i32>} : memref<8x2x64xf32, #tpu.memory_space<vmem>>, vector<1x2x32xf32>,
    %499 = tpu.concatenate %478, %486 in 1 : vector<2x32xf32>, vector<2x32xf32> -> vector<2x64xf32>
    %500 = tpu.concatenate %482, %490 in 1 : vector<2x32xf32>, vector<2x32xf32> -> vector<2x64xf32>
    %c4_i32_169 = arith.constant 4 : i32
    %c7_i32_170 = arith.constant 7 : i32
    %501 = arith.subi %c7_i32_170, %c4_i32_169 : i32
    %c0_171 = arith.constant 0 : index
    %c0_172 = arith.constant 0 : index
    %502 = vector.load %arg4[%c0_171, %c0_172] : memref<64x256xf32, #tpu.memory_space<vmem>>, vector<64x256xf32>
    %cst_173 = arith.constant dense<0.000000e+00> : vector<2x256xf32>
    %503 = tpu.matmul %499, %502, %cst_173 {dimension_numbers = #tpu.dot_dimension_numbers<[1], [0], [0], [1], [0, 0, 1, 1], [], []>} : vector<2x64xf32>, vector<64x256xf32>, vector<2x256xf32> -> vector<2x256xf32>
    %504 = arith.index_cast %c4_i32_169 : i32 to index
    %c0_174 = arith.constant 0 : index
    %c0_175 = arith.constant 0 : index
    %505 = vector.load %arg11[%504, %c0_174, %c0_175] : memref<8x2x256xf32, #tpu.memory_space<vmem>>, vector<1x2x128xf32>
    %506 = vector.shape_cast %505 : vector<1x2x128xf32> to vector<2x128xf32>
    %507 = vector.extract_strided_slice %503 {offsets = [0, 0], sizes = [2, 128], strides = [1, 1]} : vector<2x256xf32> to vector<2x128xf32>
    %508 = arith.addf %506, %507 : vector<2x128xf32>
    %509 = arith.index_cast %501 : i32 to index
    %c0_176 = arith.constant 0 : index
    %c128_177 = arith.constant 128 : index
    %510 = vector.load %arg11[%509, %c0_176, %c128_177] : memref<8x2x256xf32, #tpu.memory_space<vmem>>, vector<1x2x128xf32>
    %511 = vector.shape_cast %510 : vector<1x2x128xf32> to vector<2x128xf32>
    %512 = vector.extract_strided_slice %503 {offsets = [0, 128], sizes = [2, 128], strides = [1, 1]} : vector<2x256xf32> to vector<2x128xf32>
    %513 = arith.addf %511, %512 : vector<2x128xf32>
    %514 = vector.extract_strided_slice %500 {offsets = [0, 0], sizes = [2, 32], strides = [1, 1]} : vector<2x64xf32> to vector<2x32xf32>
    %515 = vector.extract_strided_slice %508 {offsets = [0, 0], sizes = [2, 32], strides = [1, 1]} : vector<2x128xf32> to vector<2x32xf32>
    %516 = arith.negf %515 : vector<2x32xf32>
    %517 = math.exp %516 : vector<2x32xf32>
    %cst_178 = arith.constant 1.000000e+00 : f32
    %518 = vector.broadcast %cst_178 : f32 to vector<2x32xf32>
    %519 = arith.addf %518, %517 : vector<2x32xf32>
    %520 = arith.divf %518, %519 : vector<2x32xf32>
    %521 = vector.extract_strided_slice %508 {offsets = [0, 32], sizes = [2, 32], strides = [1, 1]} : vector<2x128xf32> to vector<2x32xf32>
    %522 = arith.negf %521 : vector<2x32xf32>
    %523 = math.exp %522 : vector<2x32xf32>
    %cst_179 = arith.constant 1.000000e+00 : f32
    %524 = vector.broadcast %cst_179 : f32 to vector<2x32xf32>
    %525 = arith.addf %524, %523 : vector<2x32xf32>
    %526 = arith.divf %524, %525 : vector<2x32xf32>
    %527 = vector.extract_strided_slice %508 {offsets = [0, 64], sizes = [2, 32], strides = [1, 1]} : vector<2x128xf32> to vector<2x32xf32>
    %528 = math.tanh %527 : vector<2x32xf32>
    %529 = vector.extract_strided_slice %508 {offsets = [0, 96], sizes = [2, 32], strides = [1, 1]} : vector<2x128xf32> to vector<2x32xf32>
    %530 = arith.negf %529 : vector<2x32xf32>
    %531 = math.exp %530 : vector<2x32xf32>
    %cst_180 = arith.constant 1.000000e+00 : f32
    %532 = vector.broadcast %cst_180 : f32 to vector<2x32xf32>
    %533 = arith.addf %532, %531 : vector<2x32xf32>
    %534 = arith.divf %532, %533 : vector<2x32xf32>
    %535 = arith.mulf %526, %514 : vector<2x32xf32>
    %536 = arith.mulf %520, %528 : vector<2x32xf32>
    %537 = arith.addf %535, %536 : vector<2x32xf32>
    %538 = math.tanh %537 : vector<2x32xf32>
    %539 = arith.mulf %534, %538 : vector<2x32xf32>
    %540 = vector.extract_strided_slice %500 {offsets = [0, 32], sizes = [2, 32], strides = [1, 1]} : vector<2x64xf32> to vector<2x32xf32>
    %541 = vector.extract_strided_slice %513 {offsets = [0, 0], sizes = [2, 32], strides = [1, 1]} : vector<2x128xf32> to vector<2x32xf32>
    %542 = arith.negf %541 : vector<2x32xf32>
    %543 = math.exp %542 : vector<2x32xf32>
    %cst_181 = arith.constant 1.000000e+00 : f32
    %544 = vector.broadcast %cst_181 : f32 to vector<2x32xf32>
    %545 = arith.addf %544, %543 : vector<2x32xf32>
    %546 = arith.divf %544, %545 : vector<2x32xf32>
    %547 = vector.extract_strided_slice %513 {offsets = [0, 32], sizes = [2, 32], strides = [1, 1]} : vector<2x128xf32> to vector<2x32xf32>
    %548 = arith.negf %547 : vector<2x32xf32>
    %549 = math.exp %548 : vector<2x32xf32>
    %cst_182 = arith.constant 1.000000e+00 : f32
    %550 = vector.broadcast %cst_182 : f32 to vector<2x32xf32>
    %551 = arith.addf %550, %549 : vector<2x32xf32>
    %552 = arith.divf %550, %551 : vector<2x32xf32>
    %553 = vector.extract_strided_slice %513 {offsets = [0, 64], sizes = [2, 32], strides = [1, 1]} : vector<2x128xf32> to vector<2x32xf32>
    %554 = math.tanh %553 : vector<2x32xf32>
    %555 = vector.extract_strided_slice %513 {offsets = [0, 96], sizes = [2, 32], strides = [1, 1]} : vector<2x128xf32> to vector<2x32xf32>
    %556 = arith.negf %555 : vector<2x32xf32>
    %557 = math.exp %556 : vector<2x32xf32>
    %cst_183 = arith.constant 1.000000e+00 : f32
    %558 = vector.broadcast %cst_183 : f32 to vector<2x32xf32>
    %559 = arith.addf %558, %557 : vector<2x32xf32>
    %560 = arith.divf %558, %559 : vector<2x32xf32>
    %561 = arith.mulf %552, %540 : vector<2x32xf32>
    %562 = arith.mulf %546, %554 : vector<2x32xf32>
    %563 = arith.addf %561, %562 : vector<2x32xf32>
    %564 = math.tanh %563 : vector<2x32xf32>
    %565 = arith.mulf %560, %564 : vector<2x32xf32>
    %566 = arith.index_cast %c4_i32_169 : i32 to index
    %c0_184 = arith.constant 0 : index
    %c0_185 = arith.constant 0 : index
    %567 = vector.load %arg1[%566, %c0_184, %c0_185] : memref<8x2x1xf32, #tpu.memory_space<vmem>>, vector<1x2x1xf32>
    %568 = vector.shape_cast %567 : vector<1x2x1xf32> to vector<2x1xf32>
    %cst_186 = arith.constant 0.000000e+00 : f32
    %569 = vector.broadcast %cst_186 : f32 to vector<2x1xf32>
    %570 = arith.cmpf ogt, %568, %569 : vector<2x1xf32>
    %571 = arith.index_cast %501 : i32 to index
    %c0_187 = arith.constant 0 : index
    %c0_188 = arith.constant 0 : index
    %572 = vector.load %arg1[%571, %c0_187, %c0_188] : memref<8x2x1xf32, #tpu.memory_space<vmem>>, vector<1x2x1xf32>
    %573 = vector.shape_cast %572 : vector<1x2x1xf32> to vector<2x1xf32>
    %cst_189 = arith.constant 0.000000e+00 : f32
    %574 = vector.broadcast %cst_189 : f32 to vector<2x1xf32>
    %575 = arith.cmpf ogt, %573, %574 : vector<2x1xf32>
    %576 = vector.extract_strided_slice %499 {offsets = [0, 0], sizes = [2, 32], strides = [1, 1]} : vector<2x64xf32> to vector<2x32xf32>
    %577 = vector.shape_cast %570 : vector<2x1xi1> to vector<2x1xi1>
    %578 = vector.broadcast %577 : vector<2x1xi1> to vector<2x32xi1>
    %579 = arith.select %578, %539, %576 : vector<2x32xi1>, vector<2x32xf32>
    %580 = vector.extract_strided_slice %500 {offsets = [0, 0], sizes = [2, 32], strides = [1, 1]} : vector<2x64xf32> to vector<2x32xf32>
    %581 = vector.shape_cast %570 : vector<2x1xi1> to vector<2x1xi1>
    %582 = vector.broadcast %581 : vector<2x1xi1> to vector<2x32xi1>
    %583 = arith.select %582, %537, %580 : vector<2x32xi1>, vector<2x32xf32>
    %584 = vector.extract_strided_slice %499 {offsets = [0, 32], sizes = [2, 32], strides = [1, 1]} : vector<2x64xf32> to vector<2x32xf32>
    %585 = vector.shape_cast %575 : vector<2x1xi1> to vector<2x1xi1>
    %586 = vector.broadcast %585 : vector<2x1xi1> to vector<2x32xi1>
    %587 = arith.select %586, %565, %584 : vector<2x32xi1>, vector<2x32xf32>
    %588 = vector.extract_strided_slice %500 {offsets = [0, 32], sizes = [2, 32], strides = [1, 1]} : vector<2x64xf32> to vector<2x32xf32>
    %589 = vector.shape_cast %575 : vector<2x1xi1> to vector<2x1xi1>
    %590 = vector.broadcast %589 : vector<2x1xi1> to vector<2x32xi1>
    %591 = arith.select %590, %563, %588 : vector<2x32xi1>, vector<2x32xf32>
    %592 = arith.index_cast %c4_i32_169 : i32 to index
    %c0_190 = arith.constant 0 : index
    %c0_191 = arith.constant 0 : index
    %593 = vector.load %arg12[%592, %c0_190, %c0_191] : memref<8x2x64xf32, #tpu.memory_space<vmem>>, vector<1x2x32xf32>
    %594 = vector.shape_cast %593 : vector<1x2x32xf32> to vector<2x32xf32>
    %595 = vector.shape_cast %579 : vector<2x32xf32> to vector<1x2x32xf32>
    tpu.vector_store %arg12[%592, %c0_190, %c0_191], %595 {strides = array<i32>} : memref<8x2x64xf32, #tpu.memory_space<vmem>>, vector<1x2x32xf32>,
    %596 = arith.index_cast %501 : i32 to index
    %c0_192 = arith.constant 0 : index
    %c32_193 = arith.constant 32 : index
    %597 = vector.load %arg12[%596, %c0_192, %c32_193] : memref<8x2x64xf32, #tpu.memory_space<vmem>>, vector<1x2x32xf32>
    %598 = vector.shape_cast %597 : vector<1x2x32xf32> to vector<2x32xf32>
    %599 = vector.shape_cast %587 : vector<2x32xf32> to vector<1x2x32xf32>
    tpu.vector_store %arg12[%596, %c0_192, %c32_193], %599 {strides = array<i32>} : memref<8x2x64xf32, #tpu.memory_space<vmem>>, vector<1x2x32xf32>,
    %600 = tpu.concatenate %579, %587 in 1 : vector<2x32xf32>, vector<2x32xf32> -> vector<2x64xf32>
    %601 = tpu.concatenate %583, %591 in 1 : vector<2x32xf32>, vector<2x32xf32> -> vector<2x64xf32>
    %c5_i32_194 = arith.constant 5 : i32
    %c7_i32_195 = arith.constant 7 : i32
    %602 = arith.subi %c7_i32_195, %c5_i32_194 : i32
    %c0_196 = arith.constant 0 : index
    %c0_197 = arith.constant 0 : index
    %603 = vector.load %arg4[%c0_196, %c0_197] : memref<64x256xf32, #tpu.memory_space<vmem>>, vector<64x256xf32>
    %cst_198 = arith.constant dense<0.000000e+00> : vector<2x256xf32>
    %604 = tpu.matmul %600, %603, %cst_198 {dimension_numbers = #tpu.dot_dimension_numbers<[1], [0], [0], [1], [0, 0, 1, 1], [], []>} : vector<2x64xf32>, vector<64x256xf32>, vector<2x256xf32> -> vector<2x256xf32>
    %605 = arith.index_cast %c5_i32_194 : i32 to index
    %c0_199 = arith.constant 0 : index
    %c0_200 = arith.constant 0 : index
    %606 = vector.load %arg11[%605, %c0_199, %c0_200] : memref<8x2x256xf32, #tpu.memory_space<vmem>>, vector<1x2x128xf32>
    %607 = vector.shape_cast %606 : vector<1x2x128xf32> to vector<2x128xf32>
    %608 = vector.extract_strided_slice %604 {offsets = [0, 0], sizes = [2, 128], strides = [1, 1]} : vector<2x256xf32> to vector<2x128xf32>
    %609 = arith.addf %607, %608 : vector<2x128xf32>
    %610 = arith.index_cast %602 : i32 to index
    %c0_201 = arith.constant 0 : index
    %c128_202 = arith.constant 128 : index
    %611 = vector.load %arg11[%610, %c0_201, %c128_202] : memref<8x2x256xf32, #tpu.memory_space<vmem>>, vector<1x2x128xf32>
    %612 = vector.shape_cast %611 : vector<1x2x128xf32> to vector<2x128xf32>
    %613 = vector.extract_strided_slice %604 {offsets = [0, 128], sizes = [2, 128], strides = [1, 1]} : vector<2x256xf32> to vector<2x128xf32>
    %614 = arith.addf %612, %613 : vector<2x128xf32>
    %615 = vector.extract_strided_slice %601 {offsets = [0, 0], sizes = [2, 32], strides = [1, 1]} : vector<2x64xf32> to vector<2x32xf32>
    %616 = vector.extract_strided_slice %609 {offsets = [0, 0], sizes = [2, 32], strides = [1, 1]} : vector<2x128xf32> to vector<2x32xf32>
    %617 = arith.negf %616 : vector<2x32xf32>
    %618 = math.exp %617 : vector<2x32xf32>
    %cst_203 = arith.constant 1.000000e+00 : f32
    %619 = vector.broadcast %cst_203 : f32 to vector<2x32xf32>
    %620 = arith.addf %619, %618 : vector<2x32xf32>
    %621 = arith.divf %619, %620 : vector<2x32xf32>
    %622 = vector.extract_strided_slice %609 {offsets = [0, 32], sizes = [2, 32], strides = [1, 1]} : vector<2x128xf32> to vector<2x32xf32>
    %623 = arith.negf %622 : vector<2x32xf32>
    %624 = math.exp %623 : vector<2x32xf32>
    %cst_204 = arith.constant 1.000000e+00 : f32
    %625 = vector.broadcast %cst_204 : f32 to vector<2x32xf32>
    %626 = arith.addf %625, %624 : vector<2x32xf32>
    %627 = arith.divf %625, %626 : vector<2x32xf32>
    %628 = vector.extract_strided_slice %609 {offsets = [0, 64], sizes = [2, 32], strides = [1, 1]} : vector<2x128xf32> to vector<2x32xf32>
    %629 = math.tanh %628 : vector<2x32xf32>
    %630 = vector.extract_strided_slice %609 {offsets = [0, 96], sizes = [2, 32], strides = [1, 1]} : vector<2x128xf32> to vector<2x32xf32>
    %631 = arith.negf %630 : vector<2x32xf32>
    %632 = math.exp %631 : vector<2x32xf32>
    %cst_205 = arith.constant 1.000000e+00 : f32
    %633 = vector.broadcast %cst_205 : f32 to vector<2x32xf32>
    %634 = arith.addf %633, %632 : vector<2x32xf32>
    %635 = arith.divf %633, %634 : vector<2x32xf32>
    %636 = arith.mulf %627, %615 : vector<2x32xf32>
    %637 = arith.mulf %621, %629 : vector<2x32xf32>
    %638 = arith.addf %636, %637 : vector<2x32xf32>
    %639 = math.tanh %638 : vector<2x32xf32>
    %640 = arith.mulf %635, %639 : vector<2x32xf32>
    %641 = vector.extract_strided_slice %601 {offsets = [0, 32], sizes = [2, 32], strides = [1, 1]} : vector<2x64xf32> to vector<2x32xf32>
    %642 = vector.extract_strided_slice %614 {offsets = [0, 0], sizes = [2, 32], strides = [1, 1]} : vector<2x128xf32> to vector<2x32xf32>
    %643 = arith.negf %642 : vector<2x32xf32>
    %644 = math.exp %643 : vector<2x32xf32>
    %cst_206 = arith.constant 1.000000e+00 : f32
    %645 = vector.broadcast %cst_206 : f32 to vector<2x32xf32>
    %646 = arith.addf %645, %644 : vector<2x32xf32>
    %647 = arith.divf %645, %646 : vector<2x32xf32>
    %648 = vector.extract_strided_slice %614 {offsets = [0, 32], sizes = [2, 32], strides = [1, 1]} : vector<2x128xf32> to vector<2x32xf32>
    %649 = arith.negf %648 : vector<2x32xf32>
    %650 = math.exp %649 : vector<2x32xf32>
    %cst_207 = arith.constant 1.000000e+00 : f32
    %651 = vector.broadcast %cst_207 : f32 to vector<2x32xf32>
    %652 = arith.addf %651, %650 : vector<2x32xf32>
    %653 = arith.divf %651, %652 : vector<2x32xf32>
    %654 = vector.extract_strided_slice %614 {offsets = [0, 64], sizes = [2, 32], strides = [1, 1]} : vector<2x128xf32> to vector<2x32xf32>
    %655 = math.tanh %654 : vector<2x32xf32>
    %656 = vector.extract_strided_slice %614 {offsets = [0, 96], sizes = [2, 32], strides = [1, 1]} : vector<2x128xf32> to vector<2x32xf32>
    %657 = arith.negf %656 : vector<2x32xf32>
    %658 = math.exp %657 : vector<2x32xf32>
    %cst_208 = arith.constant 1.000000e+00 : f32
    %659 = vector.broadcast %cst_208 : f32 to vector<2x32xf32>
    %660 = arith.addf %659, %658 : vector<2x32xf32>
    %661 = arith.divf %659, %660 : vector<2x32xf32>
    %662 = arith.mulf %653, %641 : vector<2x32xf32>
    %663 = arith.mulf %647, %655 : vector<2x32xf32>
    %664 = arith.addf %662, %663 : vector<2x32xf32>
    %665 = math.tanh %664 : vector<2x32xf32>
    %666 = arith.mulf %661, %665 : vector<2x32xf32>
    %667 = arith.index_cast %c5_i32_194 : i32 to index
    %c0_209 = arith.constant 0 : index
    %c0_210 = arith.constant 0 : index
    %668 = vector.load %arg1[%667, %c0_209, %c0_210] : memref<8x2x1xf32, #tpu.memory_space<vmem>>, vector<1x2x1xf32>
    %669 = vector.shape_cast %668 : vector<1x2x1xf32> to vector<2x1xf32>
    %cst_211 = arith.constant 0.000000e+00 : f32
    %670 = vector.broadcast %cst_211 : f32 to vector<2x1xf32>
    %671 = arith.cmpf ogt, %669, %670 : vector<2x1xf32>
    %672 = arith.index_cast %602 : i32 to index
    %c0_212 = arith.constant 0 : index
    %c0_213 = arith.constant 0 : index
    %673 = vector.load %arg1[%672, %c0_212, %c0_213] : memref<8x2x1xf32, #tpu.memory_space<vmem>>, vector<1x2x1xf32>
    %674 = vector.shape_cast %673 : vector<1x2x1xf32> to vector<2x1xf32>
    %cst_214 = arith.constant 0.000000e+00 : f32
    %675 = vector.broadcast %cst_214 : f32 to vector<2x1xf32>
    %676 = arith.cmpf ogt, %674, %675 : vector<2x1xf32>
    %677 = vector.extract_strided_slice %600 {offsets = [0, 0], sizes = [2, 32], strides = [1, 1]} : vector<2x64xf32> to vector<2x32xf32>
    %678 = vector.shape_cast %671 : vector<2x1xi1> to vector<2x1xi1>
    %679 = vector.broadcast %678 : vector<2x1xi1> to vector<2x32xi1>
    %680 = arith.select %679, %640, %677 : vector<2x32xi1>, vector<2x32xf32>
    %681 = vector.extract_strided_slice %601 {offsets = [0, 0], sizes = [2, 32], strides = [1, 1]} : vector<2x64xf32> to vector<2x32xf32>
    %682 = vector.shape_cast %671 : vector<2x1xi1> to vector<2x1xi1>
    %683 = vector.broadcast %682 : vector<2x1xi1> to vector<2x32xi1>
    %684 = arith.select %683, %638, %681 : vector<2x32xi1>, vector<2x32xf32>
    %685 = vector.extract_strided_slice %600 {offsets = [0, 32], sizes = [2, 32], strides = [1, 1]} : vector<2x64xf32> to vector<2x32xf32>
    %686 = vector.shape_cast %676 : vector<2x1xi1> to vector<2x1xi1>
    %687 = vector.broadcast %686 : vector<2x1xi1> to vector<2x32xi1>
    %688 = arith.select %687, %666, %685 : vector<2x32xi1>, vector<2x32xf32>
    %689 = vector.extract_strided_slice %601 {offsets = [0, 32], sizes = [2, 32], strides = [1, 1]} : vector<2x64xf32> to vector<2x32xf32>
    %690 = vector.shape_cast %676 : vector<2x1xi1> to vector<2x1xi1>
    %691 = vector.broadcast %690 : vector<2x1xi1> to vector<2x32xi1>
    %692 = arith.select %691, %664, %689 : vector<2x32xi1>, vector<2x32xf32>
    %693 = arith.index_cast %c5_i32_194 : i32 to index
    %c0_215 = arith.constant 0 : index
    %c0_216 = arith.constant 0 : index
    %694 = vector.load %arg12[%693, %c0_215, %c0_216] : memref<8x2x64xf32, #tpu.memory_space<vmem>>, vector<1x2x32xf32>
    %695 = vector.shape_cast %694 : vector<1x2x32xf32> to vector<2x32xf32>
    %696 = vector.shape_cast %680 : vector<2x32xf32> to vector<1x2x32xf32>
    tpu.vector_store %arg12[%693, %c0_215, %c0_216], %696 {strides = array<i32>} : memref<8x2x64xf32, #tpu.memory_space<vmem>>, vector<1x2x32xf32>,
    %697 = arith.index_cast %602 : i32 to index
    %c0_217 = arith.constant 0 : index
    %c32_218 = arith.constant 32 : index
    %698 = vector.load %arg12[%697, %c0_217, %c32_218] : memref<8x2x64xf32, #tpu.memory_space<vmem>>, vector<1x2x32xf32>
    %699 = vector.shape_cast %698 : vector<1x2x32xf32> to vector<2x32xf32>
    %700 = vector.shape_cast %688 : vector<2x32xf32> to vector<1x2x32xf32>
    tpu.vector_store %arg12[%697, %c0_217, %c32_218], %700 {strides = array<i32>} : memref<8x2x64xf32, #tpu.memory_space<vmem>>, vector<1x2x32xf32>,
    %701 = tpu.concatenate %680, %688 in 1 : vector<2x32xf32>, vector<2x32xf32> -> vector<2x64xf32>
    %702 = tpu.concatenate %684, %692 in 1 : vector<2x32xf32>, vector<2x32xf32> -> vector<2x64xf32>
    %c6_i32_219 = arith.constant 6 : i32
    %c7_i32_220 = arith.constant 7 : i32
    %703 = arith.subi %c7_i32_220, %c6_i32_219 : i32
    %c0_221 = arith.constant 0 : index
    %c0_222 = arith.constant 0 : index
    %704 = vector.load %arg4[%c0_221, %c0_222] : memref<64x256xf32, #tpu.memory_space<vmem>>, vector<64x256xf32>
    %cst_223 = arith.constant dense<0.000000e+00> : vector<2x256xf32>
    %705 = tpu.matmul %701, %704, %cst_223 {dimension_numbers = #tpu.dot_dimension_numbers<[1], [0], [0], [1], [0, 0, 1, 1], [], []>} : vector<2x64xf32>, vector<64x256xf32>, vector<2x256xf32> -> vector<2x256xf32>
    %706 = arith.index_cast %c6_i32_219 : i32 to index
    %c0_224 = arith.constant 0 : index
    %c0_225 = arith.constant 0 : index
    %707 = vector.load %arg11[%706, %c0_224, %c0_225] : memref<8x2x256xf32, #tpu.memory_space<vmem>>, vector<1x2x128xf32>
    %708 = vector.shape_cast %707 : vector<1x2x128xf32> to vector<2x128xf32>
    %709 = vector.extract_strided_slice %705 {offsets = [0, 0], sizes = [2, 128], strides = [1, 1]} : vector<2x256xf32> to vector<2x128xf32>
    %710 = arith.addf %708, %709 : vector<2x128xf32>
    %711 = arith.index_cast %703 : i32 to index
    %c0_226 = arith.constant 0 : index
    %c128_227 = arith.constant 128 : index
    %712 = vector.load %arg11[%711, %c0_226, %c128_227] : memref<8x2x256xf32, #tpu.memory_space<vmem>>, vector<1x2x128xf32>
    %713 = vector.shape_cast %712 : vector<1x2x128xf32> to vector<2x128xf32>
    %714 = vector.extract_strided_slice %705 {offsets = [0, 128], sizes = [2, 128], strides = [1, 1]} : vector<2x256xf32> to vector<2x128xf32>
    %715 = arith.addf %713, %714 : vector<2x128xf32>
    %716 = vector.extract_strided_slice %702 {offsets = [0, 0], sizes = [2, 32], strides = [1, 1]} : vector<2x64xf32> to vector<2x32xf32>
    %717 = vector.extract_strided_slice %710 {offsets = [0, 0], sizes = [2, 32], strides = [1, 1]} : vector<2x128xf32> to vector<2x32xf32>
    %718 = arith.negf %717 : vector<2x32xf32>
    %719 = math.exp %718 : vector<2x32xf32>
    %cst_228 = arith.constant 1.000000e+00 : f32
    %720 = vector.broadcast %cst_228 : f32 to vector<2x32xf32>
    %721 = arith.addf %720, %719 : vector<2x32xf32>
    %722 = arith.divf %720, %721 : vector<2x32xf32>
    %723 = vector.extract_strided_slice %710 {offsets = [0, 32], sizes = [2, 32], strides = [1, 1]} : vector<2x128xf32> to vector<2x32xf32>
    %724 = arith.negf %723 : vector<2x32xf32>
    %725 = math.exp %724 : vector<2x32xf32>
    %cst_229 = arith.constant 1.000000e+00 : f32
    %726 = vector.broadcast %cst_229 : f32 to vector<2x32xf32>
    %727 = arith.addf %726, %725 : vector<2x32xf32>
    %728 = arith.divf %726, %727 : vector<2x32xf32>
    %729 = vector.extract_strided_slice %710 {offsets = [0, 64], sizes = [2, 32], strides = [1, 1]} : vector<2x128xf32> to vector<2x32xf32>
    %730 = math.tanh %729 : vector<2x32xf32>
    %731 = vector.extract_strided_slice %710 {offsets = [0, 96], sizes = [2, 32], strides = [1, 1]} : vector<2x128xf32> to vector<2x32xf32>
    %732 = arith.negf %731 : vector<2x32xf32>
    %733 = math.exp %732 : vector<2x32xf32>
    %cst_230 = arith.constant 1.000000e+00 : f32
    %734 = vector.broadcast %cst_230 : f32 to vector<2x32xf32>
    %735 = arith.addf %734, %733 : vector<2x32xf32>
    %736 = arith.divf %734, %735 : vector<2x32xf32>
    %737 = arith.mulf %728, %716 : vector<2x32xf32>
    %738 = arith.mulf %722, %730 : vector<2x32xf32>
    %739 = arith.addf %737, %738 : vector<2x32xf32>
    %740 = math.tanh %739 : vector<2x32xf32>
    %741 = arith.mulf %736, %740 : vector<2x32xf32>
    %742 = vector.extract_strided_slice %702 {offsets = [0, 32], sizes = [2, 32], strides = [1, 1]} : vector<2x64xf32> to vector<2x32xf32>
    %743 = vector.extract_strided_slice %715 {offsets = [0, 0], sizes = [2, 32], strides = [1, 1]} : vector<2x128xf32> to vector<2x32xf32>
    %744 = arith.negf %743 : vector<2x32xf32>
    %745 = math.exp %744 : vector<2x32xf32>
    %cst_231 = arith.constant 1.000000e+00 : f32
    %746 = vector.broadcast %cst_231 : f32 to vector<2x32xf32>
    %747 = arith.addf %746, %745 : vector<2x32xf32>
    %748 = arith.divf %746, %747 : vector<2x32xf32>
    %749 = vector.extract_strided_slice %715 {offsets = [0, 32], sizes = [2, 32], strides = [1, 1]} : vector<2x128xf32> to vector<2x32xf32>
    %750 = arith.negf %749 : vector<2x32xf32>
    %751 = math.exp %750 : vector<2x32xf32>
    %cst_232 = arith.constant 1.000000e+00 : f32
    %752 = vector.broadcast %cst_232 : f32 to vector<2x32xf32>
    %753 = arith.addf %752, %751 : vector<2x32xf32>
    %754 = arith.divf %752, %753 : vector<2x32xf32>
    %755 = vector.extract_strided_slice %715 {offsets = [0, 64], sizes = [2, 32], strides = [1, 1]} : vector<2x128xf32> to vector<2x32xf32>
    %756 = math.tanh %755 : vector<2x32xf32>
    %757 = vector.extract_strided_slice %715 {offsets = [0, 96], sizes = [2, 32], strides = [1, 1]} : vector<2x128xf32> to vector<2x32xf32>
    %758 = arith.negf %757 : vector<2x32xf32>
    %759 = math.exp %758 : vector<2x32xf32>
    %cst_233 = arith.constant 1.000000e+00 : f32
    %760 = vector.broadcast %cst_233 : f32 to vector<2x32xf32>
    %761 = arith.addf %760, %759 : vector<2x32xf32>
    %762 = arith.divf %760, %761 : vector<2x32xf32>
    %763 = arith.mulf %754, %742 : vector<2x32xf32>
    %764 = arith.mulf %748, %756 : vector<2x32xf32>
    %765 = arith.addf %763, %764 : vector<2x32xf32>
    %766 = math.tanh %765 : vector<2x32xf32>
    %767 = arith.mulf %762, %766 : vector<2x32xf32>
    %768 = arith.index_cast %c6_i32_219 : i32 to index
    %c0_234 = arith.constant 0 : index
    %c0_235 = arith.constant 0 : index
    %769 = vector.load %arg1[%768, %c0_234, %c0_235] : memref<8x2x1xf32, #tpu.memory_space<vmem>>, vector<1x2x1xf32>
    %770 = vector.shape_cast %769 : vector<1x2x1xf32> to vector<2x1xf32>
    %cst_236 = arith.constant 0.000000e+00 : f32
    %771 = vector.broadcast %cst_236 : f32 to vector<2x1xf32>
    %772 = arith.cmpf ogt, %770, %771 : vector<2x1xf32>
    %773 = arith.index_cast %703 : i32 to index
    %c0_237 = arith.constant 0 : index
    %c0_238 = arith.constant 0 : index
    %774 = vector.load %arg1[%773, %c0_237, %c0_238] : memref<8x2x1xf32, #tpu.memory_space<vmem>>, vector<1x2x1xf32>
    %775 = vector.shape_cast %774 : vector<1x2x1xf32> to vector<2x1xf32>
    %cst_239 = arith.constant 0.000000e+00 : f32
    %776 = vector.broadcast %cst_239 : f32 to vector<2x1xf32>
    %777 = arith.cmpf ogt, %775, %776 : vector<2x1xf32>
    %778 = vector.extract_strided_slice %701 {offsets = [0, 0], sizes = [2, 32], strides = [1, 1]} : vector<2x64xf32> to vector<2x32xf32>
    %779 = vector.shape_cast %772 : vector<2x1xi1> to vector<2x1xi1>
    %780 = vector.broadcast %779 : vector<2x1xi1> to vector<2x32xi1>
    %781 = arith.select %780, %741, %778 : vector<2x32xi1>, vector<2x32xf32>
    %782 = vector.extract_strided_slice %702 {offsets = [0, 0], sizes = [2, 32], strides = [1, 1]} : vector<2x64xf32> to vector<2x32xf32>
    %783 = vector.shape_cast %772 : vector<2x1xi1> to vector<2x1xi1>
    %784 = vector.broadcast %783 : vector<2x1xi1> to vector<2x32xi1>
    %785 = arith.select %784, %739, %782 : vector<2x32xi1>, vector<2x32xf32>
    %786 = vector.extract_strided_slice %701 {offsets = [0, 32], sizes = [2, 32], strides = [1, 1]} : vector<2x64xf32> to vector<2x32xf32>
    %787 = vector.shape_cast %777 : vector<2x1xi1> to vector<2x1xi1>
    %788 = vector.broadcast %787 : vector<2x1xi1> to vector<2x32xi1>
    %789 = arith.select %788, %767, %786 : vector<2x32xi1>, vector<2x32xf32>
    %790 = vector.extract_strided_slice %702 {offsets = [0, 32], sizes = [2, 32], strides = [1, 1]} : vector<2x64xf32> to vector<2x32xf32>
    %791 = vector.shape_cast %777 : vector<2x1xi1> to vector<2x1xi1>
    %792 = vector.broadcast %791 : vector<2x1xi1> to vector<2x32xi1>
    %793 = arith.select %792, %765, %790 : vector<2x32xi1>, vector<2x32xf32>
    %794 = arith.index_cast %c6_i32_219 : i32 to index
    %c0_240 = arith.constant 0 : index
    %c0_241 = arith.constant 0 : index
    %795 = vector.load %arg12[%794, %c0_240, %c0_241] : memref<8x2x64xf32, #tpu.memory_space<vmem>>, vector<1x2x32xf32>
    %796 = vector.shape_cast %795 : vector<1x2x32xf32> to vector<2x32xf32>
    %797 = vector.shape_cast %781 : vector<2x32xf32> to vector<1x2x32xf32>
    tpu.vector_store %arg12[%794, %c0_240, %c0_241], %797 {strides = array<i32>} : memref<8x2x64xf32, #tpu.memory_space<vmem>>, vector<1x2x32xf32>,
    %798 = arith.index_cast %703 : i32 to index
    %c0_242 = arith.constant 0 : index
    %c32_243 = arith.constant 32 : index
    %799 = vector.load %arg12[%798, %c0_242, %c32_243] : memref<8x2x64xf32, #tpu.memory_space<vmem>>, vector<1x2x32xf32>
    %800 = vector.shape_cast %799 : vector<1x2x32xf32> to vector<2x32xf32>
    %801 = vector.shape_cast %789 : vector<2x32xf32> to vector<1x2x32xf32>
    tpu.vector_store %arg12[%798, %c0_242, %c32_243], %801 {strides = array<i32>} : memref<8x2x64xf32, #tpu.memory_space<vmem>>, vector<1x2x32xf32>,
    %802 = tpu.concatenate %781, %789 in 1 : vector<2x32xf32>, vector<2x32xf32> -> vector<2x64xf32>
    %803 = tpu.concatenate %785, %793 in 1 : vector<2x32xf32>, vector<2x32xf32> -> vector<2x64xf32>
    %c7_i32_244 = arith.constant 7 : i32
    %c7_i32_245 = arith.constant 7 : i32
    %804 = arith.subi %c7_i32_245, %c7_i32_244 : i32
    %c0_246 = arith.constant 0 : index
    %c0_247 = arith.constant 0 : index
    %805 = vector.load %arg4[%c0_246, %c0_247] : memref<64x256xf32, #tpu.memory_space<vmem>>, vector<64x256xf32>
    %cst_248 = arith.constant dense<0.000000e+00> : vector<2x256xf32>
    %806 = tpu.matmul %802, %805, %cst_248 {dimension_numbers = #tpu.dot_dimension_numbers<[1], [0], [0], [1], [0, 0, 1, 1], [], []>} : vector<2x64xf32>, vector<64x256xf32>, vector<2x256xf32> -> vector<2x256xf32>
    %807 = arith.index_cast %c7_i32_244 : i32 to index
    %c0_249 = arith.constant 0 : index
    %c0_250 = arith.constant 0 : index
    %808 = vector.load %arg11[%807, %c0_249, %c0_250] : memref<8x2x256xf32, #tpu.memory_space<vmem>>, vector<1x2x128xf32>
    %809 = vector.shape_cast %808 : vector<1x2x128xf32> to vector<2x128xf32>
    %810 = vector.extract_strided_slice %806 {offsets = [0, 0], sizes = [2, 128], strides = [1, 1]} : vector<2x256xf32> to vector<2x128xf32>
    %811 = arith.addf %809, %810 : vector<2x128xf32>
    %812 = arith.index_cast %804 : i32 to index
    %c0_251 = arith.constant 0 : index
    %c128_252 = arith.constant 128 : index
    %813 = vector.load %arg11[%812, %c0_251, %c128_252] : memref<8x2x256xf32, #tpu.memory_space<vmem>>, vector<1x2x128xf32>
    %814 = vector.shape_cast %813 : vector<1x2x128xf32> to vector<2x128xf32>
    %815 = vector.extract_strided_slice %806 {offsets = [0, 128], sizes = [2, 128], strides = [1, 1]} : vector<2x256xf32> to vector<2x128xf32>
    %816 = arith.addf %814, %815 : vector<2x128xf32>
    %817 = vector.extract_strided_slice %803 {offsets = [0, 0], sizes = [2, 32], strides = [1, 1]} : vector<2x64xf32> to vector<2x32xf32>
    %818 = vector.extract_strided_slice %811 {offsets = [0, 0], sizes = [2, 32], strides = [1, 1]} : vector<2x128xf32> to vector<2x32xf32>
    %819 = arith.negf %818 : vector<2x32xf32>
    %820 = math.exp %819 : vector<2x32xf32>
    %cst_253 = arith.constant 1.000000e+00 : f32
    %821 = vector.broadcast %cst_253 : f32 to vector<2x32xf32>
    %822 = arith.addf %821, %820 : vector<2x32xf32>
    %823 = arith.divf %821, %822 : vector<2x32xf32>
    %824 = vector.extract_strided_slice %811 {offsets = [0, 32], sizes = [2, 32], strides = [1, 1]} : vector<2x128xf32> to vector<2x32xf32>
    %825 = arith.negf %824 : vector<2x32xf32>
    %826 = math.exp %825 : vector<2x32xf32>
    %cst_254 = arith.constant 1.000000e+00 : f32
    %827 = vector.broadcast %cst_254 : f32 to vector<2x32xf32>
    %828 = arith.addf %827, %826 : vector<2x32xf32>
    %829 = arith.divf %827, %828 : vector<2x32xf32>
    %830 = vector.extract_strided_slice %811 {offsets = [0, 64], sizes = [2, 32], strides = [1, 1]} : vector<2x128xf32> to vector<2x32xf32>
    %831 = math.tanh %830 : vector<2x32xf32>
    %832 = vector.extract_strided_slice %811 {offsets = [0, 96], sizes = [2, 32], strides = [1, 1]} : vector<2x128xf32> to vector<2x32xf32>
    %833 = arith.negf %832 : vector<2x32xf32>
    %834 = math.exp %833 : vector<2x32xf32>
    %cst_255 = arith.constant 1.000000e+00 : f32
    %835 = vector.broadcast %cst_255 : f32 to vector<2x32xf32>
    %836 = arith.addf %835, %834 : vector<2x32xf32>
    %837 = arith.divf %835, %836 : vector<2x32xf32>
    %838 = arith.mulf %829, %817 : vector<2x32xf32>
    %839 = arith.mulf %823, %831 : vector<2x32xf32>
    %840 = arith.addf %838, %839 : vector<2x32xf32>
    %841 = math.tanh %840 : vector<2x32xf32>
    %842 = arith.mulf %837, %841 : vector<2x32xf32>
    %843 = vector.extract_strided_slice %803 {offsets = [0, 32], sizes = [2, 32], strides = [1, 1]} : vector<2x64xf32> to vector<2x32xf32>
    %844 = vector.extract_strided_slice %816 {offsets = [0, 0], sizes = [2, 32], strides = [1, 1]} : vector<2x128xf32> to vector<2x32xf32>
    %845 = arith.negf %844 : vector<2x32xf32>
    %846 = math.exp %845 : vector<2x32xf32>
    %cst_256 = arith.constant 1.000000e+00 : f32
    %847 = vector.broadcast %cst_256 : f32 to vector<2x32xf32>
    %848 = arith.addf %847, %846 : vector<2x32xf32>
    %849 = arith.divf %847, %848 : vector<2x32xf32>
    %850 = vector.extract_strided_slice %816 {offsets = [0, 32], sizes = [2, 32], strides = [1, 1]} : vector<2x128xf32> to vector<2x32xf32>
    %851 = arith.negf %850 : vector<2x32xf32>
    %852 = math.exp %851 : vector<2x32xf32>
    %cst_257 = arith.constant 1.000000e+00 : f32
    %853 = vector.broadcast %cst_257 : f32 to vector<2x32xf32>
    %854 = arith.addf %853, %852 : vector<2x32xf32>
    %855 = arith.divf %853, %854 : vector<2x32xf32>
    %856 = vector.extract_strided_slice %816 {offsets = [0, 64], sizes = [2, 32], strides = [1, 1]} : vector<2x128xf32> to vector<2x32xf32>
    %857 = math.tanh %856 : vector<2x32xf32>
    %858 = vector.extract_strided_slice %816 {offsets = [0, 96], sizes = [2, 32], strides = [1, 1]} : vector<2x128xf32> to vector<2x32xf32>
    %859 = arith.negf %858 : vector<2x32xf32>
    %860 = math.exp %859 : vector<2x32xf32>
    %cst_258 = arith.constant 1.000000e+00 : f32
    %861 = vector.broadcast %cst_258 : f32 to vector<2x32xf32>
    %862 = arith.addf %861, %860 : vector<2x32xf32>
    %863 = arith.divf %861, %862 : vector<2x32xf32>
    %864 = arith.mulf %855, %843 : vector<2x32xf32>
    %865 = arith.mulf %849, %857 : vector<2x32xf32>
    %866 = arith.addf %864, %865 : vector<2x32xf32>
    %867 = math.tanh %866 : vector<2x32xf32>
    %868 = arith.mulf %863, %867 : vector<2x32xf32>
    %869 = arith.index_cast %c7_i32_244 : i32 to index
    %c0_259 = arith.constant 0 : index
    %c0_260 = arith.constant 0 : index
    %870 = vector.load %arg1[%869, %c0_259, %c0_260] : memref<8x2x1xf32, #tpu.memory_space<vmem>>, vector<1x2x1xf32>
    %871 = vector.shape_cast %870 : vector<1x2x1xf32> to vector<2x1xf32>
    %cst_261 = arith.constant 0.000000e+00 : f32
    %872 = vector.broadcast %cst_261 : f32 to vector<2x1xf32>
    %873 = arith.cmpf ogt, %871, %872 : vector<2x1xf32>
    %874 = arith.index_cast %804 : i32 to index
    %c0_262 = arith.constant 0 : index
    %c0_263 = arith.constant 0 : index
    %875 = vector.load %arg1[%874, %c0_262, %c0_263] : memref<8x2x1xf32, #tpu.memory_space<vmem>>, vector<1x2x1xf32>
    %876 = vector.shape_cast %875 : vector<1x2x1xf32> to vector<2x1xf32>
    %cst_264 = arith.constant 0.000000e+00 : f32
    %877 = vector.broadcast %cst_264 : f32 to vector<2x1xf32>
    %878 = arith.cmpf ogt, %876, %877 : vector<2x1xf32>
    %879 = vector.extract_strided_slice %802 {offsets = [0, 0], sizes = [2, 32], strides = [1, 1]} : vector<2x64xf32> to vector<2x32xf32>
    %880 = vector.shape_cast %873 : vector<2x1xi1> to vector<2x1xi1>
    %881 = vector.broadcast %880 : vector<2x1xi1> to vector<2x32xi1>
    %882 = arith.select %881, %842, %879 : vector<2x32xi1>, vector<2x32xf32>
    %883 = vector.extract_strided_slice %803 {offsets = [0, 0], sizes = [2, 32], strides = [1, 1]} : vector<2x64xf32> to vector<2x32xf32>
    %884 = vector.shape_cast %873 : vector<2x1xi1> to vector<2x1xi1>
    %885 = vector.broadcast %884 : vector<2x1xi1> to vector<2x32xi1>
    %886 = arith.select %885, %840, %883 : vector<2x32xi1>, vector<2x32xf32>
    %887 = vector.extract_strided_slice %802 {offsets = [0, 32], sizes = [2, 32], strides = [1, 1]} : vector<2x64xf32> to vector<2x32xf32>
    %888 = vector.shape_cast %878 : vector<2x1xi1> to vector<2x1xi1>
    %889 = vector.broadcast %888 : vector<2x1xi1> to vector<2x32xi1>
    %890 = arith.select %889, %868, %887 : vector<2x32xi1>, vector<2x32xf32>
    %891 = vector.extract_strided_slice %803 {offsets = [0, 32], sizes = [2, 32], strides = [1, 1]} : vector<2x64xf32> to vector<2x32xf32>
    %892 = vector.shape_cast %878 : vector<2x1xi1> to vector<2x1xi1>
    %893 = vector.broadcast %892 : vector<2x1xi1> to vector<2x32xi1>
    %894 = arith.select %893, %866, %891 : vector<2x32xi1>, vector<2x32xf32>
    %895 = arith.index_cast %c7_i32_244 : i32 to index
    %c0_265 = arith.constant 0 : index
    %c0_266 = arith.constant 0 : index
    %896 = vector.load %arg12[%895, %c0_265, %c0_266] : memref<8x2x64xf32, #tpu.memory_space<vmem>>, vector<1x2x32xf32>
    %897 = vector.shape_cast %896 : vector<1x2x32xf32> to vector<2x32xf32>
    %898 = vector.shape_cast %882 : vector<2x32xf32> to vector<1x2x32xf32>
    tpu.vector_store %arg12[%895, %c0_265, %c0_266], %898 {strides = array<i32>} : memref<8x2x64xf32, #tpu.memory_space<vmem>>, vector<1x2x32xf32>,
    %899 = arith.index_cast %804 : i32 to index
    %c0_267 = arith.constant 0 : index
    %c32_268 = arith.constant 32 : index
    %900 = vector.load %arg12[%899, %c0_267, %c32_268] : memref<8x2x64xf32, #tpu.memory_space<vmem>>, vector<1x2x32xf32>
    %901 = vector.shape_cast %900 : vector<1x2x32xf32> to vector<2x32xf32>
    %902 = vector.shape_cast %890 : vector<2x32xf32> to vector<1x2x32xf32>
    tpu.vector_store %arg12[%899, %c0_267, %c32_268], %902 {strides = array<i32>} : memref<8x2x64xf32, #tpu.memory_space<vmem>>, vector<1x2x32xf32>,
    %903 = tpu.concatenate %882, %890 in 1 : vector<2x32xf32>, vector<2x32xf32> -> vector<2x64xf32>
    %904 = tpu.concatenate %886, %894 in 1 : vector<2x32xf32>, vector<2x32xf32> -> vector<2x64xf32>
    %c8_i32_269 = arith.constant 8 : i32
    %c0_i32_270 = arith.constant 0 : i32
    %905 = arith.index_cast %c0_i32_270 : i32 to index
    %c0_271 = arith.constant 0 : index
    %c0_272 = arith.constant 0 : index
    %906 = vector.load %arg12[%905, %c0_271, %c0_272] : memref<8x2x64xf32, #tpu.memory_space<vmem>>, vector<1x2x64xf32>
    %907 = vector.shape_cast %906 : vector<1x2x64xf32> to vector<2x64xf32>
    %c0_273 = arith.constant 0 : index
    %c0_274 = arith.constant 0 : index
    %908 = vector.load %arg5[%c0_273, %c0_274] : memref<64x256xf32, #tpu.memory_space<vmem>>, vector<64x256xf32>
    %cst_275 = arith.constant dense<0.000000e+00> : vector<2x256xf32>
    %909 = tpu.matmul %907, %908, %cst_275 {dimension_numbers = #tpu.dot_dimension_numbers<[1], [0], [0], [1], [0, 0, 1, 1], [], []>} : vector<2x64xf32>, vector<64x256xf32>, vector<2x256xf32> -> vector<2x256xf32>
    %c0_276 = arith.constant 0 : index
    %c0_277 = arith.constant 0 : index
    %910 = vector.load %arg6[%c0_276, %c0_277] : memref<1x256xf32, #tpu.memory_space<vmem>>, vector<1x256xf32>
    %911 = vector.broadcast %910 : vector<1x256xf32> to vector<2x256xf32>
    %912 = arith.addf %909, %911 : vector<2x256xf32>
    %913 = arith.index_cast %c0_i32_270 : i32 to index
    %c0_278 = arith.constant 0 : index
    %c0_279 = arith.constant 0 : index
    %914 = vector.load %arg11[%913, %c0_278, %c0_279] : memref<8x2x256xf32, #tpu.memory_space<vmem>>, vector<1x2x256xf32>
    %915 = vector.shape_cast %914 : vector<1x2x256xf32> to vector<2x256xf32>
    %916 = vector.shape_cast %912 : vector<2x256xf32> to vector<1x2x256xf32>
    tpu.vector_store %arg11[%913, %c0_278, %c0_279], %916 {strides = array<i32>} : memref<8x2x256xf32, #tpu.memory_space<vmem>>, vector<1x2x256xf32>,
    %c1_i32_280 = arith.constant 1 : i32
    %917 = arith.index_cast %c1_i32_280 : i32 to index
    %c0_281 = arith.constant 0 : index
    %c0_282 = arith.constant 0 : index
    %918 = vector.load %arg12[%917, %c0_281, %c0_282] : memref<8x2x64xf32, #tpu.memory_space<vmem>>, vector<1x2x64xf32>
    %919 = vector.shape_cast %918 : vector<1x2x64xf32> to vector<2x64xf32>
    %c0_283 = arith.constant 0 : index
    %c0_284 = arith.constant 0 : index
    %920 = vector.load %arg5[%c0_283, %c0_284] : memref<64x256xf32, #tpu.memory_space<vmem>>, vector<64x256xf32>
    %cst_285 = arith.constant dense<0.000000e+00> : vector<2x256xf32>
    %921 = tpu.matmul %919, %920, %cst_285 {dimension_numbers = #tpu.dot_dimension_numbers<[1], [0], [0], [1], [0, 0, 1, 1], [], []>} : vector<2x64xf32>, vector<64x256xf32>, vector<2x256xf32> -> vector<2x256xf32>
    %c0_286 = arith.constant 0 : index
    %c0_287 = arith.constant 0 : index
    %922 = vector.load %arg6[%c0_286, %c0_287] : memref<1x256xf32, #tpu.memory_space<vmem>>, vector<1x256xf32>
    %923 = vector.broadcast %922 : vector<1x256xf32> to vector<2x256xf32>
    %924 = arith.addf %921, %923 : vector<2x256xf32>
    %925 = arith.index_cast %c1_i32_280 : i32 to index
    %c0_288 = arith.constant 0 : index
    %c0_289 = arith.constant 0 : index
    %926 = vector.load %arg11[%925, %c0_288, %c0_289] : memref<8x2x256xf32, #tpu.memory_space<vmem>>, vector<1x2x256xf32>
    %927 = vector.shape_cast %926 : vector<1x2x256xf32> to vector<2x256xf32>
    %928 = vector.shape_cast %924 : vector<2x256xf32> to vector<1x2x256xf32>
    tpu.vector_store %arg11[%925, %c0_288, %c0_289], %928 {strides = array<i32>} : memref<8x2x256xf32, #tpu.memory_space<vmem>>, vector<1x2x256xf32>,
    %c2_i32_290 = arith.constant 2 : i32
    %929 = arith.index_cast %c2_i32_290 : i32 to index
    %c0_291 = arith.constant 0 : index
    %c0_292 = arith.constant 0 : index
    %930 = vector.load %arg12[%929, %c0_291, %c0_292] : memref<8x2x64xf32, #tpu.memory_space<vmem>>, vector<1x2x64xf32>
    %931 = vector.shape_cast %930 : vector<1x2x64xf32> to vector<2x64xf32>
    %c0_293 = arith.constant 0 : index
    %c0_294 = arith.constant 0 : index
    %932 = vector.load %arg5[%c0_293, %c0_294] : memref<64x256xf32, #tpu.memory_space<vmem>>, vector<64x256xf32>
    %cst_295 = arith.constant dense<0.000000e+00> : vector<2x256xf32>
    %933 = tpu.matmul %931, %932, %cst_295 {dimension_numbers = #tpu.dot_dimension_numbers<[1], [0], [0], [1], [0, 0, 1, 1], [], []>} : vector<2x64xf32>, vector<64x256xf32>, vector<2x256xf32> -> vector<2x256xf32>
    %c0_296 = arith.constant 0 : index
    %c0_297 = arith.constant 0 : index
    %934 = vector.load %arg6[%c0_296, %c0_297] : memref<1x256xf32, #tpu.memory_space<vmem>>, vector<1x256xf32>
    %935 = vector.broadcast %934 : vector<1x256xf32> to vector<2x256xf32>
    %936 = arith.addf %933, %935 : vector<2x256xf32>
    %937 = arith.index_cast %c2_i32_290 : i32 to index
    %c0_298 = arith.constant 0 : index
    %c0_299 = arith.constant 0 : index
    %938 = vector.load %arg11[%937, %c0_298, %c0_299] : memref<8x2x256xf32, #tpu.memory_space<vmem>>, vector<1x2x256xf32>
    %939 = vector.shape_cast %938 : vector<1x2x256xf32> to vector<2x256xf32>
    %940 = vector.shape_cast %936 : vector<2x256xf32> to vector<1x2x256xf32>
    tpu.vector_store %arg11[%937, %c0_298, %c0_299], %940 {strides = array<i32>} : memref<8x2x256xf32, #tpu.memory_space<vmem>>, vector<1x2x256xf32>,
    %c3_i32_300 = arith.constant 3 : i32
    %941 = arith.index_cast %c3_i32_300 : i32 to index
    %c0_301 = arith.constant 0 : index
    %c0_302 = arith.constant 0 : index
    %942 = vector.load %arg12[%941, %c0_301, %c0_302] : memref<8x2x64xf32, #tpu.memory_space<vmem>>, vector<1x2x64xf32>
    %943 = vector.shape_cast %942 : vector<1x2x64xf32> to vector<2x64xf32>
    %c0_303 = arith.constant 0 : index
    %c0_304 = arith.constant 0 : index
    %944 = vector.load %arg5[%c0_303, %c0_304] : memref<64x256xf32, #tpu.memory_space<vmem>>, vector<64x256xf32>
    %cst_305 = arith.constant dense<0.000000e+00> : vector<2x256xf32>
    %945 = tpu.matmul %943, %944, %cst_305 {dimension_numbers = #tpu.dot_dimension_numbers<[1], [0], [0], [1], [0, 0, 1, 1], [], []>} : vector<2x64xf32>, vector<64x256xf32>, vector<2x256xf32> -> vector<2x256xf32>
    %c0_306 = arith.constant 0 : index
    %c0_307 = arith.constant 0 : index
    %946 = vector.load %arg6[%c0_306, %c0_307] : memref<1x256xf32, #tpu.memory_space<vmem>>, vector<1x256xf32>
    %947 = vector.broadcast %946 : vector<1x256xf32> to vector<2x256xf32>
    %948 = arith.addf %945, %947 : vector<2x256xf32>
    %949 = arith.index_cast %c3_i32_300 : i32 to index
    %c0_308 = arith.constant 0 : index
    %c0_309 = arith.constant 0 : index
    %950 = vector.load %arg11[%949, %c0_308, %c0_309] : memref<8x2x256xf32, #tpu.memory_space<vmem>>, vector<1x2x256xf32>
    %951 = vector.shape_cast %950 : vector<1x2x256xf32> to vector<2x256xf32>
    %952 = vector.shape_cast %948 : vector<2x256xf32> to vector<1x2x256xf32>
    tpu.vector_store %arg11[%949, %c0_308, %c0_309], %952 {strides = array<i32>} : memref<8x2x256xf32, #tpu.memory_space<vmem>>, vector<1x2x256xf32>,
    %c4_i32_310 = arith.constant 4 : i32
    %953 = arith.index_cast %c4_i32_310 : i32 to index
    %c0_311 = arith.constant 0 : index
    %c0_312 = arith.constant 0 : index
    %954 = vector.load %arg12[%953, %c0_311, %c0_312] : memref<8x2x64xf32, #tpu.memory_space<vmem>>, vector<1x2x64xf32>
    %955 = vector.shape_cast %954 : vector<1x2x64xf32> to vector<2x64xf32>
    %c0_313 = arith.constant 0 : index
    %c0_314 = arith.constant 0 : index
    %956 = vector.load %arg5[%c0_313, %c0_314] : memref<64x256xf32, #tpu.memory_space<vmem>>, vector<64x256xf32>
    %cst_315 = arith.constant dense<0.000000e+00> : vector<2x256xf32>
    %957 = tpu.matmul %955, %956, %cst_315 {dimension_numbers = #tpu.dot_dimension_numbers<[1], [0], [0], [1], [0, 0, 1, 1], [], []>} : vector<2x64xf32>, vector<64x256xf32>, vector<2x256xf32> -> vector<2x256xf32>
    %c0_316 = arith.constant 0 : index
    %c0_317 = arith.constant 0 : index
    %958 = vector.load %arg6[%c0_316, %c0_317] : memref<1x256xf32, #tpu.memory_space<vmem>>, vector<1x256xf32>
    %959 = vector.broadcast %958 : vector<1x256xf32> to vector<2x256xf32>
    %960 = arith.addf %957, %959 : vector<2x256xf32>
    %961 = arith.index_cast %c4_i32_310 : i32 to index
    %c0_318 = arith.constant 0 : index
    %c0_319 = arith.constant 0 : index
    %962 = vector.load %arg11[%961, %c0_318, %c0_319] : memref<8x2x256xf32, #tpu.memory_space<vmem>>, vector<1x2x256xf32>
    %963 = vector.shape_cast %962 : vector<1x2x256xf32> to vector<2x256xf32>
    %964 = vector.shape_cast %960 : vector<2x256xf32> to vector<1x2x256xf32>
    tpu.vector_store %arg11[%961, %c0_318, %c0_319], %964 {strides = array<i32>} : memref<8x2x256xf32, #tpu.memory_space<vmem>>, vector<1x2x256xf32>,
    %c5_i32_320 = arith.constant 5 : i32
    %965 = arith.index_cast %c5_i32_320 : i32 to index
    %c0_321 = arith.constant 0 : index
    %c0_322 = arith.constant 0 : index
    %966 = vector.load %arg12[%965, %c0_321, %c0_322] : memref<8x2x64xf32, #tpu.memory_space<vmem>>, vector<1x2x64xf32>
    %967 = vector.shape_cast %966 : vector<1x2x64xf32> to vector<2x64xf32>
    %c0_323 = arith.constant 0 : index
    %c0_324 = arith.constant 0 : index
    %968 = vector.load %arg5[%c0_323, %c0_324] : memref<64x256xf32, #tpu.memory_space<vmem>>, vector<64x256xf32>
    %cst_325 = arith.constant dense<0.000000e+00> : vector<2x256xf32>
    %969 = tpu.matmul %967, %968, %cst_325 {dimension_numbers = #tpu.dot_dimension_numbers<[1], [0], [0], [1], [0, 0, 1, 1], [], []>} : vector<2x64xf32>, vector<64x256xf32>, vector<2x256xf32> -> vector<2x256xf32>
    %c0_326 = arith.constant 0 : index
    %c0_327 = arith.constant 0 : index
    %970 = vector.load %arg6[%c0_326, %c0_327] : memref<1x256xf32, #tpu.memory_space<vmem>>, vector<1x256xf32>
    %971 = vector.broadcast %970 : vector<1x256xf32> to vector<2x256xf32>
    %972 = arith.addf %969, %971 : vector<2x256xf32>
    %973 = arith.index_cast %c5_i32_320 : i32 to index
    %c0_328 = arith.constant 0 : index
    %c0_329 = arith.constant 0 : index
    %974 = vector.load %arg11[%973, %c0_328, %c0_329] : memref<8x2x256xf32, #tpu.memory_space<vmem>>, vector<1x2x256xf32>
    %975 = vector.shape_cast %974 : vector<1x2x256xf32> to vector<2x256xf32>
    %976 = vector.shape_cast %972 : vector<2x256xf32> to vector<1x2x256xf32>
    tpu.vector_store %arg11[%973, %c0_328, %c0_329], %976 {strides = array<i32>} : memref<8x2x256xf32, #tpu.memory_space<vmem>>, vector<1x2x256xf32>,
    %c6_i32_330 = arith.constant 6 : i32
    %977 = arith.index_cast %c6_i32_330 : i32 to index
    %c0_331 = arith.constant 0 : index
    %c0_332 = arith.constant 0 : index
    %978 = vector.load %arg12[%977, %c0_331, %c0_332] : memref<8x2x64xf32, #tpu.memory_space<vmem>>, vector<1x2x64xf32>
    %979 = vector.shape_cast %978 : vector<1x2x64xf32> to vector<2x64xf32>
    %c0_333 = arith.constant 0 : index
    %c0_334 = arith.constant 0 : index
    %980 = vector.load %arg5[%c0_333, %c0_334] : memref<64x256xf32, #tpu.memory_space<vmem>>, vector<64x256xf32>
    %cst_335 = arith.constant dense<0.000000e+00> : vector<2x256xf32>
    %981 = tpu.matmul %979, %980, %cst_335 {dimension_numbers = #tpu.dot_dimension_numbers<[1], [0], [0], [1], [0, 0, 1, 1], [], []>} : vector<2x64xf32>, vector<64x256xf32>, vector<2x256xf32> -> vector<2x256xf32>
    %c0_336 = arith.constant 0 : index
    %c0_337 = arith.constant 0 : index
    %982 = vector.load %arg6[%c0_336, %c0_337] : memref<1x256xf32, #tpu.memory_space<vmem>>, vector<1x256xf32>
    %983 = vector.broadcast %982 : vector<1x256xf32> to vector<2x256xf32>
    %984 = arith.addf %981, %983 : vector<2x256xf32>
    %985 = arith.index_cast %c6_i32_330 : i32 to index
    %c0_338 = arith.constant 0 : index
    %c0_339 = arith.constant 0 : index
    %986 = vector.load %arg11[%985, %c0_338, %c0_339] : memref<8x2x256xf32, #tpu.memory_space<vmem>>, vector<1x2x256xf32>
    %987 = vector.shape_cast %986 : vector<1x2x256xf32> to vector<2x256xf32>
    %988 = vector.shape_cast %984 : vector<2x256xf32> to vector<1x2x256xf32>
    tpu.vector_store %arg11[%985, %c0_338, %c0_339], %988 {strides = array<i32>} : memref<8x2x256xf32, #tpu.memory_space<vmem>>, vector<1x2x256xf32>,
    %c7_i32_340 = arith.constant 7 : i32
    %989 = arith.index_cast %c7_i32_340 : i32 to index
    %c0_341 = arith.constant 0 : index
    %c0_342 = arith.constant 0 : index
    %990 = vector.load %arg12[%989, %c0_341, %c0_342] : memref<8x2x64xf32, #tpu.memory_space<vmem>>, vector<1x2x64xf32>
    %991 = vector.shape_cast %990 : vector<1x2x64xf32> to vector<2x64xf32>
    %c0_343 = arith.constant 0 : index
    %c0_344 = arith.constant 0 : index
    %992 = vector.load %arg5[%c0_343, %c0_344] : memref<64x256xf32, #tpu.memory_space<vmem>>, vector<64x256xf32>
    %cst_345 = arith.constant dense<0.000000e+00> : vector<2x256xf32>
    %993 = tpu.matmul %991, %992, %cst_345 {dimension_numbers = #tpu.dot_dimension_numbers<[1], [0], [0], [1], [0, 0, 1, 1], [], []>} : vector<2x64xf32>, vector<64x256xf32>, vector<2x256xf32> -> vector<2x256xf32>
    %c0_346 = arith.constant 0 : index
    %c0_347 = arith.constant 0 : index
    %994 = vector.load %arg6[%c0_346, %c0_347] : memref<1x256xf32, #tpu.memory_space<vmem>>, vector<1x256xf32>
    %995 = vector.broadcast %994 : vector<1x256xf32> to vector<2x256xf32>
    %996 = arith.addf %993, %995 : vector<2x256xf32>
    %997 = arith.index_cast %c7_i32_340 : i32 to index
    %c0_348 = arith.constant 0 : index
    %c0_349 = arith.constant 0 : index
    %998 = vector.load %arg11[%997, %c0_348, %c0_349] : memref<8x2x256xf32, #tpu.memory_space<vmem>>, vector<1x2x256xf32>
    %999 = vector.shape_cast %998 : vector<1x2x256xf32> to vector<2x256xf32>
    %1000 = vector.shape_cast %996 : vector<2x256xf32> to vector<1x2x256xf32>
    tpu.vector_store %arg11[%997, %c0_348, %c0_349], %1000 {strides = array<i32>} : memref<8x2x256xf32, #tpu.memory_space<vmem>>, vector<1x2x256xf32>,
    %c8_i32_350 = arith.constant 8 : i32
    %cst_351 = arith.constant 0.000000e+00 : f32
    %1001 = vector.broadcast %cst_351 : f32 to vector<2x64xf32>
    %c0_i32_352 = arith.constant 0 : i32
    %c7_i32_353 = arith.constant 7 : i32
    %1002 = arith.subi %c7_i32_353, %c0_i32_352 : i32
    %c0_354 = arith.constant 0 : index
    %c0_355 = arith.constant 0 : index
    %1003 = vector.load %arg7[%c0_354, %c0_355] : memref<64x256xf32, #tpu.memory_space<vmem>>, vector<64x256xf32>
    %cst_356 = arith.constant dense<0.000000e+00> : vector<2x256xf32>
    %1004 = tpu.matmul %1001, %1003, %cst_356 {dimension_numbers = #tpu.dot_dimension_numbers<[1], [0], [0], [1], [0, 0, 1, 1], [], []>} : vector<2x64xf32>, vector<64x256xf32>, vector<2x256xf32> -> vector<2x256xf32>
    %1005 = arith.index_cast %c0_i32_352 : i32 to index
    %c0_357 = arith.constant 0 : index
    %c0_358 = arith.constant 0 : index
    %1006 = vector.load %arg11[%1005, %c0_357, %c0_358] : memref<8x2x256xf32, #tpu.memory_space<vmem>>, vector<1x2x128xf32>
    %1007 = vector.shape_cast %1006 : vector<1x2x128xf32> to vector<2x128xf32>
    %1008 = vector.extract_strided_slice %1004 {offsets = [0, 0], sizes = [2, 128], strides = [1, 1]} : vector<2x256xf32> to vector<2x128xf32>
    %1009 = arith.addf %1007, %1008 : vector<2x128xf32>
    %1010 = arith.index_cast %1002 : i32 to index
    %c0_359 = arith.constant 0 : index
    %c128_360 = arith.constant 128 : index
    %1011 = vector.load %arg11[%1010, %c0_359, %c128_360] : memref<8x2x256xf32, #tpu.memory_space<vmem>>, vector<1x2x128xf32>
    %1012 = vector.shape_cast %1011 : vector<1x2x128xf32> to vector<2x128xf32>
    %1013 = vector.extract_strided_slice %1004 {offsets = [0, 128], sizes = [2, 128], strides = [1, 1]} : vector<2x256xf32> to vector<2x128xf32>
    %1014 = arith.addf %1012, %1013 : vector<2x128xf32>
    %1015 = vector.extract_strided_slice %1001 {offsets = [0, 0], sizes = [2, 32], strides = [1, 1]} : vector<2x64xf32> to vector<2x32xf32>
    %1016 = vector.extract_strided_slice %1009 {offsets = [0, 0], sizes = [2, 32], strides = [1, 1]} : vector<2x128xf32> to vector<2x32xf32>
    %1017 = arith.negf %1016 : vector<2x32xf32>
    %1018 = math.exp %1017 : vector<2x32xf32>
    %cst_361 = arith.constant 1.000000e+00 : f32
    %1019 = vector.broadcast %cst_361 : f32 to vector<2x32xf32>
    %1020 = arith.addf %1019, %1018 : vector<2x32xf32>
    %1021 = arith.divf %1019, %1020 : vector<2x32xf32>
    %1022 = vector.extract_strided_slice %1009 {offsets = [0, 32], sizes = [2, 32], strides = [1, 1]} : vector<2x128xf32> to vector<2x32xf32>
    %1023 = arith.negf %1022 : vector<2x32xf32>
    %1024 = math.exp %1023 : vector<2x32xf32>
    %cst_362 = arith.constant 1.000000e+00 : f32
    %1025 = vector.broadcast %cst_362 : f32 to vector<2x32xf32>
    %1026 = arith.addf %1025, %1024 : vector<2x32xf32>
    %1027 = arith.divf %1025, %1026 : vector<2x32xf32>
    %1028 = vector.extract_strided_slice %1009 {offsets = [0, 64], sizes = [2, 32], strides = [1, 1]} : vector<2x128xf32> to vector<2x32xf32>
    %1029 = math.tanh %1028 : vector<2x32xf32>
    %1030 = vector.extract_strided_slice %1009 {offsets = [0, 96], sizes = [2, 32], strides = [1, 1]} : vector<2x128xf32> to vector<2x32xf32>
    %1031 = arith.negf %1030 : vector<2x32xf32>
    %1032 = math.exp %1031 : vector<2x32xf32>
    %cst_363 = arith.constant 1.000000e+00 : f32
    %1033 = vector.broadcast %cst_363 : f32 to vector<2x32xf32>
    %1034 = arith.addf %1033, %1032 : vector<2x32xf32>
    %1035 = arith.divf %1033, %1034 : vector<2x32xf32>
    %1036 = arith.mulf %1027, %1015 : vector<2x32xf32>
    %1037 = arith.mulf %1021, %1029 : vector<2x32xf32>
    %1038 = arith.addf %1036, %1037 : vector<2x32xf32>
    %1039 = math.tanh %1038 : vector<2x32xf32>
    %1040 = arith.mulf %1035, %1039 : vector<2x32xf32>
    %1041 = vector.extract_strided_slice %1001 {offsets = [0, 32], sizes = [2, 32], strides = [1, 1]} : vector<2x64xf32> to vector<2x32xf32>
    %1042 = vector.extract_strided_slice %1014 {offsets = [0, 0], sizes = [2, 32], strides = [1, 1]} : vector<2x128xf32> to vector<2x32xf32>
    %1043 = arith.negf %1042 : vector<2x32xf32>
    %1044 = math.exp %1043 : vector<2x32xf32>
    %cst_364 = arith.constant 1.000000e+00 : f32
    %1045 = vector.broadcast %cst_364 : f32 to vector<2x32xf32>
    %1046 = arith.addf %1045, %1044 : vector<2x32xf32>
    %1047 = arith.divf %1045, %1046 : vector<2x32xf32>
    %1048 = vector.extract_strided_slice %1014 {offsets = [0, 32], sizes = [2, 32], strides = [1, 1]} : vector<2x128xf32> to vector<2x32xf32>
    %1049 = arith.negf %1048 : vector<2x32xf32>
    %1050 = math.exp %1049 : vector<2x32xf32>
    %cst_365 = arith.constant 1.000000e+00 : f32
    %1051 = vector.broadcast %cst_365 : f32 to vector<2x32xf32>
    %1052 = arith.addf %1051, %1050 : vector<2x32xf32>
    %1053 = arith.divf %1051, %1052 : vector<2x32xf32>
    %1054 = vector.extract_strided_slice %1014 {offsets = [0, 64], sizes = [2, 32], strides = [1, 1]} : vector<2x128xf32> to vector<2x32xf32>
    %1055 = math.tanh %1054 : vector<2x32xf32>
    %1056 = vector.extract_strided_slice %1014 {offsets = [0, 96], sizes = [2, 32], strides = [1, 1]} : vector<2x128xf32> to vector<2x32xf32>
    %1057 = arith.negf %1056 : vector<2x32xf32>
    %1058 = math.exp %1057 : vector<2x32xf32>
    %cst_366 = arith.constant 1.000000e+00 : f32
    %1059 = vector.broadcast %cst_366 : f32 to vector<2x32xf32>
    %1060 = arith.addf %1059, %1058 : vector<2x32xf32>
    %1061 = arith.divf %1059, %1060 : vector<2x32xf32>
    %1062 = arith.mulf %1053, %1041 : vector<2x32xf32>
    %1063 = arith.mulf %1047, %1055 : vector<2x32xf32>
    %1064 = arith.addf %1062, %1063 : vector<2x32xf32>
    %1065 = math.tanh %1064 : vector<2x32xf32>
    %1066 = arith.mulf %1061, %1065 : vector<2x32xf32>
    %1067 = arith.index_cast %c0_i32_352 : i32 to index
    %c0_367 = arith.constant 0 : index
    %c0_368 = arith.constant 0 : index
    %1068 = vector.load %arg1[%1067, %c0_367, %c0_368] : memref<8x2x1xf32, #tpu.memory_space<vmem>>, vector<1x2x1xf32>
    %1069 = vector.shape_cast %1068 : vector<1x2x1xf32> to vector<2x1xf32>
    %cst_369 = arith.constant 0.000000e+00 : f32
    %1070 = vector.broadcast %cst_369 : f32 to vector<2x1xf32>
    %1071 = arith.cmpf ogt, %1069, %1070 : vector<2x1xf32>
    %1072 = arith.index_cast %1002 : i32 to index
    %c0_370 = arith.constant 0 : index
    %c0_371 = arith.constant 0 : index
    %1073 = vector.load %arg1[%1072, %c0_370, %c0_371] : memref<8x2x1xf32, #tpu.memory_space<vmem>>, vector<1x2x1xf32>
    %1074 = vector.shape_cast %1073 : vector<1x2x1xf32> to vector<2x1xf32>
    %cst_372 = arith.constant 0.000000e+00 : f32
    %1075 = vector.broadcast %cst_372 : f32 to vector<2x1xf32>
    %1076 = arith.cmpf ogt, %1074, %1075 : vector<2x1xf32>
    %1077 = vector.extract_strided_slice %1001 {offsets = [0, 0], sizes = [2, 32], strides = [1, 1]} : vector<2x64xf32> to vector<2x32xf32>
    %1078 = vector.shape_cast %1071 : vector<2x1xi1> to vector<2x1xi1>
    %1079 = vector.broadcast %1078 : vector<2x1xi1> to vector<2x32xi1>
    %1080 = arith.select %1079, %1040, %1077 : vector<2x32xi1>, vector<2x32xf32>
    %1081 = vector.extract_strided_slice %1001 {offsets = [0, 0], sizes = [2, 32], strides = [1, 1]} : vector<2x64xf32> to vector<2x32xf32>
    %1082 = vector.shape_cast %1071 : vector<2x1xi1> to vector<2x1xi1>
    %1083 = vector.broadcast %1082 : vector<2x1xi1> to vector<2x32xi1>
    %1084 = arith.select %1083, %1038, %1081 : vector<2x32xi1>, vector<2x32xf32>
    %1085 = vector.extract_strided_slice %1001 {offsets = [0, 32], sizes = [2, 32], strides = [1, 1]} : vector<2x64xf32> to vector<2x32xf32>
    %1086 = vector.shape_cast %1076 : vector<2x1xi1> to vector<2x1xi1>
    %1087 = vector.broadcast %1086 : vector<2x1xi1> to vector<2x32xi1>
    %1088 = arith.select %1087, %1066, %1085 : vector<2x32xi1>, vector<2x32xf32>
    %1089 = vector.extract_strided_slice %1001 {offsets = [0, 32], sizes = [2, 32], strides = [1, 1]} : vector<2x64xf32> to vector<2x32xf32>
    %1090 = vector.shape_cast %1076 : vector<2x1xi1> to vector<2x1xi1>
    %1091 = vector.broadcast %1090 : vector<2x1xi1> to vector<2x32xi1>
    %1092 = arith.select %1091, %1064, %1089 : vector<2x32xi1>, vector<2x32xf32>
    %1093 = tpu.concatenate %1080, %1088 in 1 : vector<2x32xf32>, vector<2x32xf32> -> vector<2x64xf32>
    %1094 = tpu.concatenate %1084, %1092 in 1 : vector<2x32xf32>, vector<2x32xf32> -> vector<2x64xf32>
    %c1_i32_373 = arith.constant 1 : i32
    %c7_i32_374 = arith.constant 7 : i32
    %1095 = arith.subi %c7_i32_374, %c1_i32_373 : i32
    %c0_375 = arith.constant 0 : index
    %c0_376 = arith.constant 0 : index
    %1096 = vector.load %arg7[%c0_375, %c0_376] : memref<64x256xf32, #tpu.memory_space<vmem>>, vector<64x256xf32>
    %cst_377 = arith.constant dense<0.000000e+00> : vector<2x256xf32>
    %1097 = tpu.matmul %1093, %1096, %cst_377 {dimension_numbers = #tpu.dot_dimension_numbers<[1], [0], [0], [1], [0, 0, 1, 1], [], []>} : vector<2x64xf32>, vector<64x256xf32>, vector<2x256xf32> -> vector<2x256xf32>
    %1098 = arith.index_cast %c1_i32_373 : i32 to index
    %c0_378 = arith.constant 0 : index
    %c0_379 = arith.constant 0 : index
    %1099 = vector.load %arg11[%1098, %c0_378, %c0_379] : memref<8x2x256xf32, #tpu.memory_space<vmem>>, vector<1x2x128xf32>
    %1100 = vector.shape_cast %1099 : vector<1x2x128xf32> to vector<2x128xf32>
    %1101 = vector.extract_strided_slice %1097 {offsets = [0, 0], sizes = [2, 128], strides = [1, 1]} : vector<2x256xf32> to vector<2x128xf32>
    %1102 = arith.addf %1100, %1101 : vector<2x128xf32>
    %1103 = arith.index_cast %1095 : i32 to index
    %c0_380 = arith.constant 0 : index
    %c128_381 = arith.constant 128 : index
    %1104 = vector.load %arg11[%1103, %c0_380, %c128_381] : memref<8x2x256xf32, #tpu.memory_space<vmem>>, vector<1x2x128xf32>
    %1105 = vector.shape_cast %1104 : vector<1x2x128xf32> to vector<2x128xf32>
    %1106 = vector.extract_strided_slice %1097 {offsets = [0, 128], sizes = [2, 128], strides = [1, 1]} : vector<2x256xf32> to vector<2x128xf32>
    %1107 = arith.addf %1105, %1106 : vector<2x128xf32>
    %1108 = vector.extract_strided_slice %1094 {offsets = [0, 0], sizes = [2, 32], strides = [1, 1]} : vector<2x64xf32> to vector<2x32xf32>
    %1109 = vector.extract_strided_slice %1102 {offsets = [0, 0], sizes = [2, 32], strides = [1, 1]} : vector<2x128xf32> to vector<2x32xf32>
    %1110 = arith.negf %1109 : vector<2x32xf32>
    %1111 = math.exp %1110 : vector<2x32xf32>
    %cst_382 = arith.constant 1.000000e+00 : f32
    %1112 = vector.broadcast %cst_382 : f32 to vector<2x32xf32>
    %1113 = arith.addf %1112, %1111 : vector<2x32xf32>
    %1114 = arith.divf %1112, %1113 : vector<2x32xf32>
    %1115 = vector.extract_strided_slice %1102 {offsets = [0, 32], sizes = [2, 32], strides = [1, 1]} : vector<2x128xf32> to vector<2x32xf32>
    %1116 = arith.negf %1115 : vector<2x32xf32>
    %1117 = math.exp %1116 : vector<2x32xf32>
    %cst_383 = arith.constant 1.000000e+00 : f32
    %1118 = vector.broadcast %cst_383 : f32 to vector<2x32xf32>
    %1119 = arith.addf %1118, %1117 : vector<2x32xf32>
    %1120 = arith.divf %1118, %1119 : vector<2x32xf32>
    %1121 = vector.extract_strided_slice %1102 {offsets = [0, 64], sizes = [2, 32], strides = [1, 1]} : vector<2x128xf32> to vector<2x32xf32>
    %1122 = math.tanh %1121 : vector<2x32xf32>
    %1123 = vector.extract_strided_slice %1102 {offsets = [0, 96], sizes = [2, 32], strides = [1, 1]} : vector<2x128xf32> to vector<2x32xf32>
    %1124 = arith.negf %1123 : vector<2x32xf32>
    %1125 = math.exp %1124 : vector<2x32xf32>
    %cst_384 = arith.constant 1.000000e+00 : f32
    %1126 = vector.broadcast %cst_384 : f32 to vector<2x32xf32>
    %1127 = arith.addf %1126, %1125 : vector<2x32xf32>
    %1128 = arith.divf %1126, %1127 : vector<2x32xf32>
    %1129 = arith.mulf %1120, %1108 : vector<2x32xf32>
    %1130 = arith.mulf %1114, %1122 : vector<2x32xf32>
    %1131 = arith.addf %1129, %1130 : vector<2x32xf32>
    %1132 = math.tanh %1131 : vector<2x32xf32>
    %1133 = arith.mulf %1128, %1132 : vector<2x32xf32>
    %1134 = vector.extract_strided_slice %1094 {offsets = [0, 32], sizes = [2, 32], strides = [1, 1]} : vector<2x64xf32> to vector<2x32xf32>
    %1135 = vector.extract_strided_slice %1107 {offsets = [0, 0], sizes = [2, 32], strides = [1, 1]} : vector<2x128xf32> to vector<2x32xf32>
    %1136 = arith.negf %1135 : vector<2x32xf32>
    %1137 = math.exp %1136 : vector<2x32xf32>
    %cst_385 = arith.constant 1.000000e+00 : f32
    %1138 = vector.broadcast %cst_385 : f32 to vector<2x32xf32>
    %1139 = arith.addf %1138, %1137 : vector<2x32xf32>
    %1140 = arith.divf %1138, %1139 : vector<2x32xf32>
    %1141 = vector.extract_strided_slice %1107 {offsets = [0, 32], sizes = [2, 32], strides = [1, 1]} : vector<2x128xf32> to vector<2x32xf32>
    %1142 = arith.negf %1141 : vector<2x32xf32>
    %1143 = math.exp %1142 : vector<2x32xf32>
    %cst_386 = arith.constant 1.000000e+00 : f32
    %1144 = vector.broadcast %cst_386 : f32 to vector<2x32xf32>
    %1145 = arith.addf %1144, %1143 : vector<2x32xf32>
    %1146 = arith.divf %1144, %1145 : vector<2x32xf32>
    %1147 = vector.extract_strided_slice %1107 {offsets = [0, 64], sizes = [2, 32], strides = [1, 1]} : vector<2x128xf32> to vector<2x32xf32>
    %1148 = math.tanh %1147 : vector<2x32xf32>
    %1149 = vector.extract_strided_slice %1107 {offsets = [0, 96], sizes = [2, 32], strides = [1, 1]} : vector<2x128xf32> to vector<2x32xf32>
    %1150 = arith.negf %1149 : vector<2x32xf32>
    %1151 = math.exp %1150 : vector<2x32xf32>
    %cst_387 = arith.constant 1.000000e+00 : f32
    %1152 = vector.broadcast %cst_387 : f32 to vector<2x32xf32>
    %1153 = arith.addf %1152, %1151 : vector<2x32xf32>
    %1154 = arith.divf %1152, %1153 : vector<2x32xf32>
    %1155 = arith.mulf %1146, %1134 : vector<2x32xf32>
    %1156 = arith.mulf %1140, %1148 : vector<2x32xf32>
    %1157 = arith.addf %1155, %1156 : vector<2x32xf32>
    %1158 = math.tanh %1157 : vector<2x32xf32>
    %1159 = arith.mulf %1154, %1158 : vector<2x32xf32>
    %1160 = arith.index_cast %c1_i32_373 : i32 to index
    %c0_388 = arith.constant 0 : index
    %c0_389 = arith.constant 0 : index
    %1161 = vector.load %arg1[%1160, %c0_388, %c0_389] : memref<8x2x1xf32, #tpu.memory_space<vmem>>, vector<1x2x1xf32>
    %1162 = vector.shape_cast %1161 : vector<1x2x1xf32> to vector<2x1xf32>
    %cst_390 = arith.constant 0.000000e+00 : f32
    %1163 = vector.broadcast %cst_390 : f32 to vector<2x1xf32>
    %1164 = arith.cmpf ogt, %1162, %1163 : vector<2x1xf32>
    %1165 = arith.index_cast %1095 : i32 to index
    %c0_391 = arith.constant 0 : index
    %c0_392 = arith.constant 0 : index
    %1166 = vector.load %arg1[%1165, %c0_391, %c0_392] : memref<8x2x1xf32, #tpu.memory_space<vmem>>, vector<1x2x1xf32>
    %1167 = vector.shape_cast %1166 : vector<1x2x1xf32> to vector<2x1xf32>
    %cst_393 = arith.constant 0.000000e+00 : f32
    %1168 = vector.broadcast %cst_393 : f32 to vector<2x1xf32>
    %1169 = arith.cmpf ogt, %1167, %1168 : vector<2x1xf32>
    %1170 = vector.extract_strided_slice %1093 {offsets = [0, 0], sizes = [2, 32], strides = [1, 1]} : vector<2x64xf32> to vector<2x32xf32>
    %1171 = vector.shape_cast %1164 : vector<2x1xi1> to vector<2x1xi1>
    %1172 = vector.broadcast %1171 : vector<2x1xi1> to vector<2x32xi1>
    %1173 = arith.select %1172, %1133, %1170 : vector<2x32xi1>, vector<2x32xf32>
    %1174 = vector.extract_strided_slice %1094 {offsets = [0, 0], sizes = [2, 32], strides = [1, 1]} : vector<2x64xf32> to vector<2x32xf32>
    %1175 = vector.shape_cast %1164 : vector<2x1xi1> to vector<2x1xi1>
    %1176 = vector.broadcast %1175 : vector<2x1xi1> to vector<2x32xi1>
    %1177 = arith.select %1176, %1131, %1174 : vector<2x32xi1>, vector<2x32xf32>
    %1178 = vector.extract_strided_slice %1093 {offsets = [0, 32], sizes = [2, 32], strides = [1, 1]} : vector<2x64xf32> to vector<2x32xf32>
    %1179 = vector.shape_cast %1169 : vector<2x1xi1> to vector<2x1xi1>
    %1180 = vector.broadcast %1179 : vector<2x1xi1> to vector<2x32xi1>
    %1181 = arith.select %1180, %1159, %1178 : vector<2x32xi1>, vector<2x32xf32>
    %1182 = vector.extract_strided_slice %1094 {offsets = [0, 32], sizes = [2, 32], strides = [1, 1]} : vector<2x64xf32> to vector<2x32xf32>
    %1183 = vector.shape_cast %1169 : vector<2x1xi1> to vector<2x1xi1>
    %1184 = vector.broadcast %1183 : vector<2x1xi1> to vector<2x32xi1>
    %1185 = arith.select %1184, %1157, %1182 : vector<2x32xi1>, vector<2x32xf32>
    %1186 = tpu.concatenate %1173, %1181 in 1 : vector<2x32xf32>, vector<2x32xf32> -> vector<2x64xf32>
    %1187 = tpu.concatenate %1177, %1185 in 1 : vector<2x32xf32>, vector<2x32xf32> -> vector<2x64xf32>
    %c2_i32_394 = arith.constant 2 : i32
    %c7_i32_395 = arith.constant 7 : i32
    %1188 = arith.subi %c7_i32_395, %c2_i32_394 : i32
    %c0_396 = arith.constant 0 : index
    %c0_397 = arith.constant 0 : index
    %1189 = vector.load %arg7[%c0_396, %c0_397] : memref<64x256xf32, #tpu.memory_space<vmem>>, vector<64x256xf32>
    %cst_398 = arith.constant dense<0.000000e+00> : vector<2x256xf32>
    %1190 = tpu.matmul %1186, %1189, %cst_398 {dimension_numbers = #tpu.dot_dimension_numbers<[1], [0], [0], [1], [0, 0, 1, 1], [], []>} : vector<2x64xf32>, vector<64x256xf32>, vector<2x256xf32> -> vector<2x256xf32>
    %1191 = arith.index_cast %c2_i32_394 : i32 to index
    %c0_399 = arith.constant 0 : index
    %c0_400 = arith.constant 0 : index
    %1192 = vector.load %arg11[%1191, %c0_399, %c0_400] : memref<8x2x256xf32, #tpu.memory_space<vmem>>, vector<1x2x128xf32>
    %1193 = vector.shape_cast %1192 : vector<1x2x128xf32> to vector<2x128xf32>
    %1194 = vector.extract_strided_slice %1190 {offsets = [0, 0], sizes = [2, 128], strides = [1, 1]} : vector<2x256xf32> to vector<2x128xf32>
    %1195 = arith.addf %1193, %1194 : vector<2x128xf32>
    %1196 = arith.index_cast %1188 : i32 to index
    %c0_401 = arith.constant 0 : index
    %c128_402 = arith.constant 128 : index
    %1197 = vector.load %arg11[%1196, %c0_401, %c128_402] : memref<8x2x256xf32, #tpu.memory_space<vmem>>, vector<1x2x128xf32>
    %1198 = vector.shape_cast %1197 : vector<1x2x128xf32> to vector<2x128xf32>
    %1199 = vector.extract_strided_slice %1190 {offsets = [0, 128], sizes = [2, 128], strides = [1, 1]} : vector<2x256xf32> to vector<2x128xf32>
    %1200 = arith.addf %1198, %1199 : vector<2x128xf32>
    %1201 = vector.extract_strided_slice %1187 {offsets = [0, 0], sizes = [2, 32], strides = [1, 1]} : vector<2x64xf32> to vector<2x32xf32>
    %1202 = vector.extract_strided_slice %1195 {offsets = [0, 0], sizes = [2, 32], strides = [1, 1]} : vector<2x128xf32> to vector<2x32xf32>
    %1203 = arith.negf %1202 : vector<2x32xf32>
    %1204 = math.exp %1203 : vector<2x32xf32>
    %cst_403 = arith.constant 1.000000e+00 : f32
    %1205 = vector.broadcast %cst_403 : f32 to vector<2x32xf32>
    %1206 = arith.addf %1205, %1204 : vector<2x32xf32>
    %1207 = arith.divf %1205, %1206 : vector<2x32xf32>
    %1208 = vector.extract_strided_slice %1195 {offsets = [0, 32], sizes = [2, 32], strides = [1, 1]} : vector<2x128xf32> to vector<2x32xf32>
    %1209 = arith.negf %1208 : vector<2x32xf32>
    %1210 = math.exp %1209 : vector<2x32xf32>
    %cst_404 = arith.constant 1.000000e+00 : f32
    %1211 = vector.broadcast %cst_404 : f32 to vector<2x32xf32>
    %1212 = arith.addf %1211, %1210 : vector<2x32xf32>
    %1213 = arith.divf %1211, %1212 : vector<2x32xf32>
    %1214 = vector.extract_strided_slice %1195 {offsets = [0, 64], sizes = [2, 32], strides = [1, 1]} : vector<2x128xf32> to vector<2x32xf32>
    %1215 = math.tanh %1214 : vector<2x32xf32>
    %1216 = vector.extract_strided_slice %1195 {offsets = [0, 96], sizes = [2, 32], strides = [1, 1]} : vector<2x128xf32> to vector<2x32xf32>
    %1217 = arith.negf %1216 : vector<2x32xf32>
    %1218 = math.exp %1217 : vector<2x32xf32>
    %cst_405 = arith.constant 1.000000e+00 : f32
    %1219 = vector.broadcast %cst_405 : f32 to vector<2x32xf32>
    %1220 = arith.addf %1219, %1218 : vector<2x32xf32>
    %1221 = arith.divf %1219, %1220 : vector<2x32xf32>
    %1222 = arith.mulf %1213, %1201 : vector<2x32xf32>
    %1223 = arith.mulf %1207, %1215 : vector<2x32xf32>
    %1224 = arith.addf %1222, %1223 : vector<2x32xf32>
    %1225 = math.tanh %1224 : vector<2x32xf32>
    %1226 = arith.mulf %1221, %1225 : vector<2x32xf32>
    %1227 = vector.extract_strided_slice %1187 {offsets = [0, 32], sizes = [2, 32], strides = [1, 1]} : vector<2x64xf32> to vector<2x32xf32>
    %1228 = vector.extract_strided_slice %1200 {offsets = [0, 0], sizes = [2, 32], strides = [1, 1]} : vector<2x128xf32> to vector<2x32xf32>
    %1229 = arith.negf %1228 : vector<2x32xf32>
    %1230 = math.exp %1229 : vector<2x32xf32>
    %cst_406 = arith.constant 1.000000e+00 : f32
    %1231 = vector.broadcast %cst_406 : f32 to vector<2x32xf32>
    %1232 = arith.addf %1231, %1230 : vector<2x32xf32>
    %1233 = arith.divf %1231, %1232 : vector<2x32xf32>
    %1234 = vector.extract_strided_slice %1200 {offsets = [0, 32], sizes = [2, 32], strides = [1, 1]} : vector<2x128xf32> to vector<2x32xf32>
    %1235 = arith.negf %1234 : vector<2x32xf32>
    %1236 = math.exp %1235 : vector<2x32xf32>
    %cst_407 = arith.constant 1.000000e+00 : f32
    %1237 = vector.broadcast %cst_407 : f32 to vector<2x32xf32>
    %1238 = arith.addf %1237, %1236 : vector<2x32xf32>
    %1239 = arith.divf %1237, %1238 : vector<2x32xf32>
    %1240 = vector.extract_strided_slice %1200 {offsets = [0, 64], sizes = [2, 32], strides = [1, 1]} : vector<2x128xf32> to vector<2x32xf32>
    %1241 = math.tanh %1240 : vector<2x32xf32>
    %1242 = vector.extract_strided_slice %1200 {offsets = [0, 96], sizes = [2, 32], strides = [1, 1]} : vector<2x128xf32> to vector<2x32xf32>
    %1243 = arith.negf %1242 : vector<2x32xf32>
    %1244 = math.exp %1243 : vector<2x32xf32>
    %cst_408 = arith.constant 1.000000e+00 : f32
    %1245 = vector.broadcast %cst_408 : f32 to vector<2x32xf32>
    %1246 = arith.addf %1245, %1244 : vector<2x32xf32>
    %1247 = arith.divf %1245, %1246 : vector<2x32xf32>
    %1248 = arith.mulf %1239, %1227 : vector<2x32xf32>
    %1249 = arith.mulf %1233, %1241 : vector<2x32xf32>
    %1250 = arith.addf %1248, %1249 : vector<2x32xf32>
    %1251 = math.tanh %1250 : vector<2x32xf32>
    %1252 = arith.mulf %1247, %1251 : vector<2x32xf32>
    %1253 = arith.index_cast %c2_i32_394 : i32 to index
    %c0_409 = arith.constant 0 : index
    %c0_410 = arith.constant 0 : index
    %1254 = vector.load %arg1[%1253, %c0_409, %c0_410] : memref<8x2x1xf32, #tpu.memory_space<vmem>>, vector<1x2x1xf32>
    %1255 = vector.shape_cast %1254 : vector<1x2x1xf32> to vector<2x1xf32>
    %cst_411 = arith.constant 0.000000e+00 : f32
    %1256 = vector.broadcast %cst_411 : f32 to vector<2x1xf32>
    %1257 = arith.cmpf ogt, %1255, %1256 : vector<2x1xf32>
    %1258 = arith.index_cast %1188 : i32 to index
    %c0_412 = arith.constant 0 : index
    %c0_413 = arith.constant 0 : index
    %1259 = vector.load %arg1[%1258, %c0_412, %c0_413] : memref<8x2x1xf32, #tpu.memory_space<vmem>>, vector<1x2x1xf32>
    %1260 = vector.shape_cast %1259 : vector<1x2x1xf32> to vector<2x1xf32>
    %cst_414 = arith.constant 0.000000e+00 : f32
    %1261 = vector.broadcast %cst_414 : f32 to vector<2x1xf32>
    %1262 = arith.cmpf ogt, %1260, %1261 : vector<2x1xf32>
    %1263 = vector.extract_strided_slice %1186 {offsets = [0, 0], sizes = [2, 32], strides = [1, 1]} : vector<2x64xf32> to vector<2x32xf32>
    %1264 = vector.shape_cast %1257 : vector<2x1xi1> to vector<2x1xi1>
    %1265 = vector.broadcast %1264 : vector<2x1xi1> to vector<2x32xi1>
    %1266 = arith.select %1265, %1226, %1263 : vector<2x32xi1>, vector<2x32xf32>
    %1267 = vector.extract_strided_slice %1187 {offsets = [0, 0], sizes = [2, 32], strides = [1, 1]} : vector<2x64xf32> to vector<2x32xf32>
    %1268 = vector.shape_cast %1257 : vector<2x1xi1> to vector<2x1xi1>
    %1269 = vector.broadcast %1268 : vector<2x1xi1> to vector<2x32xi1>
    %1270 = arith.select %1269, %1224, %1267 : vector<2x32xi1>, vector<2x32xf32>
    %1271 = vector.extract_strided_slice %1186 {offsets = [0, 32], sizes = [2, 32], strides = [1, 1]} : vector<2x64xf32> to vector<2x32xf32>
    %1272 = vector.shape_cast %1262 : vector<2x1xi1> to vector<2x1xi1>
    %1273 = vector.broadcast %1272 : vector<2x1xi1> to vector<2x32xi1>
    %1274 = arith.select %1273, %1252, %1271 : vector<2x32xi1>, vector<2x32xf32>
    %1275 = vector.extract_strided_slice %1187 {offsets = [0, 32], sizes = [2, 32], strides = [1, 1]} : vector<2x64xf32> to vector<2x32xf32>
    %1276 = vector.shape_cast %1262 : vector<2x1xi1> to vector<2x1xi1>
    %1277 = vector.broadcast %1276 : vector<2x1xi1> to vector<2x32xi1>
    %1278 = arith.select %1277, %1250, %1275 : vector<2x32xi1>, vector<2x32xf32>
    %1279 = tpu.concatenate %1266, %1274 in 1 : vector<2x32xf32>, vector<2x32xf32> -> vector<2x64xf32>
    %1280 = tpu.concatenate %1270, %1278 in 1 : vector<2x32xf32>, vector<2x32xf32> -> vector<2x64xf32>
    %c3_i32_415 = arith.constant 3 : i32
    %c7_i32_416 = arith.constant 7 : i32
    %1281 = arith.subi %c7_i32_416, %c3_i32_415 : i32
    %c0_417 = arith.constant 0 : index
    %c0_418 = arith.constant 0 : index
    %1282 = vector.load %arg7[%c0_417, %c0_418] : memref<64x256xf32, #tpu.memory_space<vmem>>, vector<64x256xf32>
    %cst_419 = arith.constant dense<0.000000e+00> : vector<2x256xf32>
    %1283 = tpu.matmul %1279, %1282, %cst_419 {dimension_numbers = #tpu.dot_dimension_numbers<[1], [0], [0], [1], [0, 0, 1, 1], [], []>} : vector<2x64xf32>, vector<64x256xf32>, vector<2x256xf32> -> vector<2x256xf32>
    %1284 = arith.index_cast %c3_i32_415 : i32 to index
    %c0_420 = arith.constant 0 : index
    %c0_421 = arith.constant 0 : index
    %1285 = vector.load %arg11[%1284, %c0_420, %c0_421] : memref<8x2x256xf32, #tpu.memory_space<vmem>>, vector<1x2x128xf32>
    %1286 = vector.shape_cast %1285 : vector<1x2x128xf32> to vector<2x128xf32>
    %1287 = vector.extract_strided_slice %1283 {offsets = [0, 0], sizes = [2, 128], strides = [1, 1]} : vector<2x256xf32> to vector<2x128xf32>
    %1288 = arith.addf %1286, %1287 : vector<2x128xf32>
    %1289 = arith.index_cast %1281 : i32 to index
    %c0_422 = arith.constant 0 : index
    %c128_423 = arith.constant 128 : index
    %1290 = vector.load %arg11[%1289, %c0_422, %c128_423] : memref<8x2x256xf32, #tpu.memory_space<vmem>>, vector<1x2x128xf32>
    %1291 = vector.shape_cast %1290 : vector<1x2x128xf32> to vector<2x128xf32>
    %1292 = vector.extract_strided_slice %1283 {offsets = [0, 128], sizes = [2, 128], strides = [1, 1]} : vector<2x256xf32> to vector<2x128xf32>
    %1293 = arith.addf %1291, %1292 : vector<2x128xf32>
    %1294 = vector.extract_strided_slice %1280 {offsets = [0, 0], sizes = [2, 32], strides = [1, 1]} : vector<2x64xf32> to vector<2x32xf32>
    %1295 = vector.extract_strided_slice %1288 {offsets = [0, 0], sizes = [2, 32], strides = [1, 1]} : vector<2x128xf32> to vector<2x32xf32>
    %1296 = arith.negf %1295 : vector<2x32xf32>
    %1297 = math.exp %1296 : vector<2x32xf32>
    %cst_424 = arith.constant 1.000000e+00 : f32
    %1298 = vector.broadcast %cst_424 : f32 to vector<2x32xf32>
    %1299 = arith.addf %1298, %1297 : vector<2x32xf32>
    %1300 = arith.divf %1298, %1299 : vector<2x32xf32>
    %1301 = vector.extract_strided_slice %1288 {offsets = [0, 32], sizes = [2, 32], strides = [1, 1]} : vector<2x128xf32> to vector<2x32xf32>
    %1302 = arith.negf %1301 : vector<2x32xf32>
    %1303 = math.exp %1302 : vector<2x32xf32>
    %cst_425 = arith.constant 1.000000e+00 : f32
    %1304 = vector.broadcast %cst_425 : f32 to vector<2x32xf32>
    %1305 = arith.addf %1304, %1303 : vector<2x32xf32>
    %1306 = arith.divf %1304, %1305 : vector<2x32xf32>
    %1307 = vector.extract_strided_slice %1288 {offsets = [0, 64], sizes = [2, 32], strides = [1, 1]} : vector<2x128xf32> to vector<2x32xf32>
    %1308 = math.tanh %1307 : vector<2x32xf32>
    %1309 = vector.extract_strided_slice %1288 {offsets = [0, 96], sizes = [2, 32], strides = [1, 1]} : vector<2x128xf32> to vector<2x32xf32>
    %1310 = arith.negf %1309 : vector<2x32xf32>
    %1311 = math.exp %1310 : vector<2x32xf32>
    %cst_426 = arith.constant 1.000000e+00 : f32
    %1312 = vector.broadcast %cst_426 : f32 to vector<2x32xf32>
    %1313 = arith.addf %1312, %1311 : vector<2x32xf32>
    %1314 = arith.divf %1312, %1313 : vector<2x32xf32>
    %1315 = arith.mulf %1306, %1294 : vector<2x32xf32>
    %1316 = arith.mulf %1300, %1308 : vector<2x32xf32>
    %1317 = arith.addf %1315, %1316 : vector<2x32xf32>
    %1318 = math.tanh %1317 : vector<2x32xf32>
    %1319 = arith.mulf %1314, %1318 : vector<2x32xf32>
    %1320 = vector.extract_strided_slice %1280 {offsets = [0, 32], sizes = [2, 32], strides = [1, 1]} : vector<2x64xf32> to vector<2x32xf32>
    %1321 = vector.extract_strided_slice %1293 {offsets = [0, 0], sizes = [2, 32], strides = [1, 1]} : vector<2x128xf32> to vector<2x32xf32>
    %1322 = arith.negf %1321 : vector<2x32xf32>
    %1323 = math.exp %1322 : vector<2x32xf32>
    %cst_427 = arith.constant 1.000000e+00 : f32
    %1324 = vector.broadcast %cst_427 : f32 to vector<2x32xf32>
    %1325 = arith.addf %1324, %1323 : vector<2x32xf32>
    %1326 = arith.divf %1324, %1325 : vector<2x32xf32>
    %1327 = vector.extract_strided_slice %1293 {offsets = [0, 32], sizes = [2, 32], strides = [1, 1]} : vector<2x128xf32> to vector<2x32xf32>
    %1328 = arith.negf %1327 : vector<2x32xf32>
    %1329 = math.exp %1328 : vector<2x32xf32>
    %cst_428 = arith.constant 1.000000e+00 : f32
    %1330 = vector.broadcast %cst_428 : f32 to vector<2x32xf32>
    %1331 = arith.addf %1330, %1329 : vector<2x32xf32>
    %1332 = arith.divf %1330, %1331 : vector<2x32xf32>
    %1333 = vector.extract_strided_slice %1293 {offsets = [0, 64], sizes = [2, 32], strides = [1, 1]} : vector<2x128xf32> to vector<2x32xf32>
    %1334 = math.tanh %1333 : vector<2x32xf32>
    %1335 = vector.extract_strided_slice %1293 {offsets = [0, 96], sizes = [2, 32], strides = [1, 1]} : vector<2x128xf32> to vector<2x32xf32>
    %1336 = arith.negf %1335 : vector<2x32xf32>
    %1337 = math.exp %1336 : vector<2x32xf32>
    %cst_429 = arith.constant 1.000000e+00 : f32
    %1338 = vector.broadcast %cst_429 : f32 to vector<2x32xf32>
    %1339 = arith.addf %1338, %1337 : vector<2x32xf32>
    %1340 = arith.divf %1338, %1339 : vector<2x32xf32>
    %1341 = arith.mulf %1332, %1320 : vector<2x32xf32>
    %1342 = arith.mulf %1326, %1334 : vector<2x32xf32>
    %1343 = arith.addf %1341, %1342 : vector<2x32xf32>
    %1344 = math.tanh %1343 : vector<2x32xf32>
    %1345 = arith.mulf %1340, %1344 : vector<2x32xf32>
    %1346 = arith.index_cast %c3_i32_415 : i32 to index
    %c0_430 = arith.constant 0 : index
    %c0_431 = arith.constant 0 : index
    %1347 = vector.load %arg1[%1346, %c0_430, %c0_431] : memref<8x2x1xf32, #tpu.memory_space<vmem>>, vector<1x2x1xf32>
    %1348 = vector.shape_cast %1347 : vector<1x2x1xf32> to vector<2x1xf32>
    %cst_432 = arith.constant 0.000000e+00 : f32
    %1349 = vector.broadcast %cst_432 : f32 to vector<2x1xf32>
    %1350 = arith.cmpf ogt, %1348, %1349 : vector<2x1xf32>
    %1351 = arith.index_cast %1281 : i32 to index
    %c0_433 = arith.constant 0 : index
    %c0_434 = arith.constant 0 : index
    %1352 = vector.load %arg1[%1351, %c0_433, %c0_434] : memref<8x2x1xf32, #tpu.memory_space<vmem>>, vector<1x2x1xf32>
    %1353 = vector.shape_cast %1352 : vector<1x2x1xf32> to vector<2x1xf32>
    %cst_435 = arith.constant 0.000000e+00 : f32
    %1354 = vector.broadcast %cst_435 : f32 to vector<2x1xf32>
    %1355 = arith.cmpf ogt, %1353, %1354 : vector<2x1xf32>
    %1356 = vector.extract_strided_slice %1279 {offsets = [0, 0], sizes = [2, 32], strides = [1, 1]} : vector<2x64xf32> to vector<2x32xf32>
    %1357 = vector.shape_cast %1350 : vector<2x1xi1> to vector<2x1xi1>
    %1358 = vector.broadcast %1357 : vector<2x1xi1> to vector<2x32xi1>
    %1359 = arith.select %1358, %1319, %1356 : vector<2x32xi1>, vector<2x32xf32>
    %1360 = vector.extract_strided_slice %1280 {offsets = [0, 0], sizes = [2, 32], strides = [1, 1]} : vector<2x64xf32> to vector<2x32xf32>
    %1361 = vector.shape_cast %1350 : vector<2x1xi1> to vector<2x1xi1>
    %1362 = vector.broadcast %1361 : vector<2x1xi1> to vector<2x32xi1>
    %1363 = arith.select %1362, %1317, %1360 : vector<2x32xi1>, vector<2x32xf32>
    %1364 = vector.extract_strided_slice %1279 {offsets = [0, 32], sizes = [2, 32], strides = [1, 1]} : vector<2x64xf32> to vector<2x32xf32>
    %1365 = vector.shape_cast %1355 : vector<2x1xi1> to vector<2x1xi1>
    %1366 = vector.broadcast %1365 : vector<2x1xi1> to vector<2x32xi1>
    %1367 = arith.select %1366, %1345, %1364 : vector<2x32xi1>, vector<2x32xf32>
    %1368 = vector.extract_strided_slice %1280 {offsets = [0, 32], sizes = [2, 32], strides = [1, 1]} : vector<2x64xf32> to vector<2x32xf32>
    %1369 = vector.shape_cast %1355 : vector<2x1xi1> to vector<2x1xi1>
    %1370 = vector.broadcast %1369 : vector<2x1xi1> to vector<2x32xi1>
    %1371 = arith.select %1370, %1343, %1368 : vector<2x32xi1>, vector<2x32xf32>
    %1372 = tpu.concatenate %1359, %1367 in 1 : vector<2x32xf32>, vector<2x32xf32> -> vector<2x64xf32>
    %1373 = tpu.concatenate %1363, %1371 in 1 : vector<2x32xf32>, vector<2x32xf32> -> vector<2x64xf32>
    %c4_i32_436 = arith.constant 4 : i32
    %c7_i32_437 = arith.constant 7 : i32
    %1374 = arith.subi %c7_i32_437, %c4_i32_436 : i32
    %c0_438 = arith.constant 0 : index
    %c0_439 = arith.constant 0 : index
    %1375 = vector.load %arg7[%c0_438, %c0_439] : memref<64x256xf32, #tpu.memory_space<vmem>>, vector<64x256xf32>
    %cst_440 = arith.constant dense<0.000000e+00> : vector<2x256xf32>
    %1376 = tpu.matmul %1372, %1375, %cst_440 {dimension_numbers = #tpu.dot_dimension_numbers<[1], [0], [0], [1], [0, 0, 1, 1], [], []>} : vector<2x64xf32>, vector<64x256xf32>, vector<2x256xf32> -> vector<2x256xf32>
    %1377 = arith.index_cast %c4_i32_436 : i32 to index
    %c0_441 = arith.constant 0 : index
    %c0_442 = arith.constant 0 : index
    %1378 = vector.load %arg11[%1377, %c0_441, %c0_442] : memref<8x2x256xf32, #tpu.memory_space<vmem>>, vector<1x2x128xf32>
    %1379 = vector.shape_cast %1378 : vector<1x2x128xf32> to vector<2x128xf32>
    %1380 = vector.extract_strided_slice %1376 {offsets = [0, 0], sizes = [2, 128], strides = [1, 1]} : vector<2x256xf32> to vector<2x128xf32>
    %1381 = arith.addf %1379, %1380 : vector<2x128xf32>
    %1382 = arith.index_cast %1374 : i32 to index
    %c0_443 = arith.constant 0 : index
    %c128_444 = arith.constant 128 : index
    %1383 = vector.load %arg11[%1382, %c0_443, %c128_444] : memref<8x2x256xf32, #tpu.memory_space<vmem>>, vector<1x2x128xf32>
    %1384 = vector.shape_cast %1383 : vector<1x2x128xf32> to vector<2x128xf32>
    %1385 = vector.extract_strided_slice %1376 {offsets = [0, 128], sizes = [2, 128], strides = [1, 1]} : vector<2x256xf32> to vector<2x128xf32>
    %1386 = arith.addf %1384, %1385 : vector<2x128xf32>
    %1387 = vector.extract_strided_slice %1373 {offsets = [0, 0], sizes = [2, 32], strides = [1, 1]} : vector<2x64xf32> to vector<2x32xf32>
    %1388 = vector.extract_strided_slice %1381 {offsets = [0, 0], sizes = [2, 32], strides = [1, 1]} : vector<2x128xf32> to vector<2x32xf32>
    %1389 = arith.negf %1388 : vector<2x32xf32>
    %1390 = math.exp %1389 : vector<2x32xf32>
    %cst_445 = arith.constant 1.000000e+00 : f32
    %1391 = vector.broadcast %cst_445 : f32 to vector<2x32xf32>
    %1392 = arith.addf %1391, %1390 : vector<2x32xf32>
    %1393 = arith.divf %1391, %1392 : vector<2x32xf32>
    %1394 = vector.extract_strided_slice %1381 {offsets = [0, 32], sizes = [2, 32], strides = [1, 1]} : vector<2x128xf32> to vector<2x32xf32>
    %1395 = arith.negf %1394 : vector<2x32xf32>
    %1396 = math.exp %1395 : vector<2x32xf32>
    %cst_446 = arith.constant 1.000000e+00 : f32
    %1397 = vector.broadcast %cst_446 : f32 to vector<2x32xf32>
    %1398 = arith.addf %1397, %1396 : vector<2x32xf32>
    %1399 = arith.divf %1397, %1398 : vector<2x32xf32>
    %1400 = vector.extract_strided_slice %1381 {offsets = [0, 64], sizes = [2, 32], strides = [1, 1]} : vector<2x128xf32> to vector<2x32xf32>
    %1401 = math.tanh %1400 : vector<2x32xf32>
    %1402 = vector.extract_strided_slice %1381 {offsets = [0, 96], sizes = [2, 32], strides = [1, 1]} : vector<2x128xf32> to vector<2x32xf32>
    %1403 = arith.negf %1402 : vector<2x32xf32>
    %1404 = math.exp %1403 : vector<2x32xf32>
    %cst_447 = arith.constant 1.000000e+00 : f32
    %1405 = vector.broadcast %cst_447 : f32 to vector<2x32xf32>
    %1406 = arith.addf %1405, %1404 : vector<2x32xf32>
    %1407 = arith.divf %1405, %1406 : vector<2x32xf32>
    %1408 = arith.mulf %1399, %1387 : vector<2x32xf32>
    %1409 = arith.mulf %1393, %1401 : vector<2x32xf32>
    %1410 = arith.addf %1408, %1409 : vector<2x32xf32>
    %1411 = math.tanh %1410 : vector<2x32xf32>
    %1412 = arith.mulf %1407, %1411 : vector<2x32xf32>
    %1413 = vector.extract_strided_slice %1373 {offsets = [0, 32], sizes = [2, 32], strides = [1, 1]} : vector<2x64xf32> to vector<2x32xf32>
    %1414 = vector.extract_strided_slice %1386 {offsets = [0, 0], sizes = [2, 32], strides = [1, 1]} : vector<2x128xf32> to vector<2x32xf32>
    %1415 = arith.negf %1414 : vector<2x32xf32>
    %1416 = math.exp %1415 : vector<2x32xf32>
    %cst_448 = arith.constant 1.000000e+00 : f32
    %1417 = vector.broadcast %cst_448 : f32 to vector<2x32xf32>
    %1418 = arith.addf %1417, %1416 : vector<2x32xf32>
    %1419 = arith.divf %1417, %1418 : vector<2x32xf32>
    %1420 = vector.extract_strided_slice %1386 {offsets = [0, 32], sizes = [2, 32], strides = [1, 1]} : vector<2x128xf32> to vector<2x32xf32>
    %1421 = arith.negf %1420 : vector<2x32xf32>
    %1422 = math.exp %1421 : vector<2x32xf32>
    %cst_449 = arith.constant 1.000000e+00 : f32
    %1423 = vector.broadcast %cst_449 : f32 to vector<2x32xf32>
    %1424 = arith.addf %1423, %1422 : vector<2x32xf32>
    %1425 = arith.divf %1423, %1424 : vector<2x32xf32>
    %1426 = vector.extract_strided_slice %1386 {offsets = [0, 64], sizes = [2, 32], strides = [1, 1]} : vector<2x128xf32> to vector<2x32xf32>
    %1427 = math.tanh %1426 : vector<2x32xf32>
    %1428 = vector.extract_strided_slice %1386 {offsets = [0, 96], sizes = [2, 32], strides = [1, 1]} : vector<2x128xf32> to vector<2x32xf32>
    %1429 = arith.negf %1428 : vector<2x32xf32>
    %1430 = math.exp %1429 : vector<2x32xf32>
    %cst_450 = arith.constant 1.000000e+00 : f32
    %1431 = vector.broadcast %cst_450 : f32 to vector<2x32xf32>
    %1432 = arith.addf %1431, %1430 : vector<2x32xf32>
    %1433 = arith.divf %1431, %1432 : vector<2x32xf32>
    %1434 = arith.mulf %1425, %1413 : vector<2x32xf32>
    %1435 = arith.mulf %1419, %1427 : vector<2x32xf32>
    %1436 = arith.addf %1434, %1435 : vector<2x32xf32>
    %1437 = math.tanh %1436 : vector<2x32xf32>
    %1438 = arith.mulf %1433, %1437 : vector<2x32xf32>
    %1439 = arith.index_cast %c4_i32_436 : i32 to index
    %c0_451 = arith.constant 0 : index
    %c0_452 = arith.constant 0 : index
    %1440 = vector.load %arg1[%1439, %c0_451, %c0_452] : memref<8x2x1xf32, #tpu.memory_space<vmem>>, vector<1x2x1xf32>
    %1441 = vector.shape_cast %1440 : vector<1x2x1xf32> to vector<2x1xf32>
    %cst_453 = arith.constant 0.000000e+00 : f32
    %1442 = vector.broadcast %cst_453 : f32 to vector<2x1xf32>
    %1443 = arith.cmpf ogt, %1441, %1442 : vector<2x1xf32>
    %1444 = arith.index_cast %1374 : i32 to index
    %c0_454 = arith.constant 0 : index
    %c0_455 = arith.constant 0 : index
    %1445 = vector.load %arg1[%1444, %c0_454, %c0_455] : memref<8x2x1xf32, #tpu.memory_space<vmem>>, vector<1x2x1xf32>
    %1446 = vector.shape_cast %1445 : vector<1x2x1xf32> to vector<2x1xf32>
    %cst_456 = arith.constant 0.000000e+00 : f32
    %1447 = vector.broadcast %cst_456 : f32 to vector<2x1xf32>
    %1448 = arith.cmpf ogt, %1446, %1447 : vector<2x1xf32>
    %1449 = vector.extract_strided_slice %1372 {offsets = [0, 0], sizes = [2, 32], strides = [1, 1]} : vector<2x64xf32> to vector<2x32xf32>
    %1450 = vector.shape_cast %1443 : vector<2x1xi1> to vector<2x1xi1>
    %1451 = vector.broadcast %1450 : vector<2x1xi1> to vector<2x32xi1>
    %1452 = arith.select %1451, %1412, %1449 : vector<2x32xi1>, vector<2x32xf32>
    %1453 = vector.extract_strided_slice %1373 {offsets = [0, 0], sizes = [2, 32], strides = [1, 1]} : vector<2x64xf32> to vector<2x32xf32>
    %1454 = vector.shape_cast %1443 : vector<2x1xi1> to vector<2x1xi1>
    %1455 = vector.broadcast %1454 : vector<2x1xi1> to vector<2x32xi1>
    %1456 = arith.select %1455, %1410, %1453 : vector<2x32xi1>, vector<2x32xf32>
    %1457 = vector.extract_strided_slice %1372 {offsets = [0, 32], sizes = [2, 32], strides = [1, 1]} : vector<2x64xf32> to vector<2x32xf32>
    %1458 = vector.shape_cast %1448 : vector<2x1xi1> to vector<2x1xi1>
    %1459 = vector.broadcast %1458 : vector<2x1xi1> to vector<2x32xi1>
    %1460 = arith.select %1459, %1438, %1457 : vector<2x32xi1>, vector<2x32xf32>
    %1461 = vector.extract_strided_slice %1373 {offsets = [0, 32], sizes = [2, 32], strides = [1, 1]} : vector<2x64xf32> to vector<2x32xf32>
    %1462 = vector.shape_cast %1448 : vector<2x1xi1> to vector<2x1xi1>
    %1463 = vector.broadcast %1462 : vector<2x1xi1> to vector<2x32xi1>
    %1464 = arith.select %1463, %1436, %1461 : vector<2x32xi1>, vector<2x32xf32>
    %1465 = tpu.concatenate %1452, %1460 in 1 : vector<2x32xf32>, vector<2x32xf32> -> vector<2x64xf32>
    %1466 = tpu.concatenate %1456, %1464 in 1 : vector<2x32xf32>, vector<2x32xf32> -> vector<2x64xf32>
    %c5_i32_457 = arith.constant 5 : i32
    %c7_i32_458 = arith.constant 7 : i32
    %1467 = arith.subi %c7_i32_458, %c5_i32_457 : i32
    %c0_459 = arith.constant 0 : index
    %c0_460 = arith.constant 0 : index
    %1468 = vector.load %arg7[%c0_459, %c0_460] : memref<64x256xf32, #tpu.memory_space<vmem>>, vector<64x256xf32>
    %cst_461 = arith.constant dense<0.000000e+00> : vector<2x256xf32>
    %1469 = tpu.matmul %1465, %1468, %cst_461 {dimension_numbers = #tpu.dot_dimension_numbers<[1], [0], [0], [1], [0, 0, 1, 1], [], []>} : vector<2x64xf32>, vector<64x256xf32>, vector<2x256xf32> -> vector<2x256xf32>
    %1470 = arith.index_cast %c5_i32_457 : i32 to index
    %c0_462 = arith.constant 0 : index
    %c0_463 = arith.constant 0 : index
    %1471 = vector.load %arg11[%1470, %c0_462, %c0_463] : memref<8x2x256xf32, #tpu.memory_space<vmem>>, vector<1x2x128xf32>
    %1472 = vector.shape_cast %1471 : vector<1x2x128xf32> to vector<2x128xf32>
    %1473 = vector.extract_strided_slice %1469 {offsets = [0, 0], sizes = [2, 128], strides = [1, 1]} : vector<2x256xf32> to vector<2x128xf32>
    %1474 = arith.addf %1472, %1473 : vector<2x128xf32>
    %1475 = arith.index_cast %1467 : i32 to index
    %c0_464 = arith.constant 0 : index
    %c128_465 = arith.constant 128 : index
    %1476 = vector.load %arg11[%1475, %c0_464, %c128_465] : memref<8x2x256xf32, #tpu.memory_space<vmem>>, vector<1x2x128xf32>
    %1477 = vector.shape_cast %1476 : vector<1x2x128xf32> to vector<2x128xf32>
    %1478 = vector.extract_strided_slice %1469 {offsets = [0, 128], sizes = [2, 128], strides = [1, 1]} : vector<2x256xf32> to vector<2x128xf32>
    %1479 = arith.addf %1477, %1478 : vector<2x128xf32>
    %1480 = vector.extract_strided_slice %1466 {offsets = [0, 0], sizes = [2, 32], strides = [1, 1]} : vector<2x64xf32> to vector<2x32xf32>
    %1481 = vector.extract_strided_slice %1474 {offsets = [0, 0], sizes = [2, 32], strides = [1, 1]} : vector<2x128xf32> to vector<2x32xf32>
    %1482 = arith.negf %1481 : vector<2x32xf32>
    %1483 = math.exp %1482 : vector<2x32xf32>
    %cst_466 = arith.constant 1.000000e+00 : f32
    %1484 = vector.broadcast %cst_466 : f32 to vector<2x32xf32>
    %1485 = arith.addf %1484, %1483 : vector<2x32xf32>
    %1486 = arith.divf %1484, %1485 : vector<2x32xf32>
    %1487 = vector.extract_strided_slice %1474 {offsets = [0, 32], sizes = [2, 32], strides = [1, 1]} : vector<2x128xf32> to vector<2x32xf32>
    %1488 = arith.negf %1487 : vector<2x32xf32>
    %1489 = math.exp %1488 : vector<2x32xf32>
    %cst_467 = arith.constant 1.000000e+00 : f32
    %1490 = vector.broadcast %cst_467 : f32 to vector<2x32xf32>
    %1491 = arith.addf %1490, %1489 : vector<2x32xf32>
    %1492 = arith.divf %1490, %1491 : vector<2x32xf32>
    %1493 = vector.extract_strided_slice %1474 {offsets = [0, 64], sizes = [2, 32], strides = [1, 1]} : vector<2x128xf32> to vector<2x32xf32>
    %1494 = math.tanh %1493 : vector<2x32xf32>
    %1495 = vector.extract_strided_slice %1474 {offsets = [0, 96], sizes = [2, 32], strides = [1, 1]} : vector<2x128xf32> to vector<2x32xf32>
    %1496 = arith.negf %1495 : vector<2x32xf32>
    %1497 = math.exp %1496 : vector<2x32xf32>
    %cst_468 = arith.constant 1.000000e+00 : f32
    %1498 = vector.broadcast %cst_468 : f32 to vector<2x32xf32>
    %1499 = arith.addf %1498, %1497 : vector<2x32xf32>
    %1500 = arith.divf %1498, %1499 : vector<2x32xf32>
    %1501 = arith.mulf %1492, %1480 : vector<2x32xf32>
    %1502 = arith.mulf %1486, %1494 : vector<2x32xf32>
    %1503 = arith.addf %1501, %1502 : vector<2x32xf32>
    %1504 = math.tanh %1503 : vector<2x32xf32>
    %1505 = arith.mulf %1500, %1504 : vector<2x32xf32>
    %1506 = vector.extract_strided_slice %1466 {offsets = [0, 32], sizes = [2, 32], strides = [1, 1]} : vector<2x64xf32> to vector<2x32xf32>
    %1507 = vector.extract_strided_slice %1479 {offsets = [0, 0], sizes = [2, 32], strides = [1, 1]} : vector<2x128xf32> to vector<2x32xf32>
    %1508 = arith.negf %1507 : vector<2x32xf32>
    %1509 = math.exp %1508 : vector<2x32xf32>
    %cst_469 = arith.constant 1.000000e+00 : f32
    %1510 = vector.broadcast %cst_469 : f32 to vector<2x32xf32>
    %1511 = arith.addf %1510, %1509 : vector<2x32xf32>
    %1512 = arith.divf %1510, %1511 : vector<2x32xf32>
    %1513 = vector.extract_strided_slice %1479 {offsets = [0, 32], sizes = [2, 32], strides = [1, 1]} : vector<2x128xf32> to vector<2x32xf32>
    %1514 = arith.negf %1513 : vector<2x32xf32>
    %1515 = math.exp %1514 : vector<2x32xf32>
    %cst_470 = arith.constant 1.000000e+00 : f32
    %1516 = vector.broadcast %cst_470 : f32 to vector<2x32xf32>
    %1517 = arith.addf %1516, %1515 : vector<2x32xf32>
    %1518 = arith.divf %1516, %1517 : vector<2x32xf32>
    %1519 = vector.extract_strided_slice %1479 {offsets = [0, 64], sizes = [2, 32], strides = [1, 1]} : vector<2x128xf32> to vector<2x32xf32>
    %1520 = math.tanh %1519 : vector<2x32xf32>
    %1521 = vector.extract_strided_slice %1479 {offsets = [0, 96], sizes = [2, 32], strides = [1, 1]} : vector<2x128xf32> to vector<2x32xf32>
    %1522 = arith.negf %1521 : vector<2x32xf32>
    %1523 = math.exp %1522 : vector<2x32xf32>
    %cst_471 = arith.constant 1.000000e+00 : f32
    %1524 = vector.broadcast %cst_471 : f32 to vector<2x32xf32>
    %1525 = arith.addf %1524, %1523 : vector<2x32xf32>
    %1526 = arith.divf %1524, %1525 : vector<2x32xf32>
    %1527 = arith.mulf %1518, %1506 : vector<2x32xf32>
    %1528 = arith.mulf %1512, %1520 : vector<2x32xf32>
    %1529 = arith.addf %1527, %1528 : vector<2x32xf32>
    %1530 = math.tanh %1529 : vector<2x32xf32>
    %1531 = arith.mulf %1526, %1530 : vector<2x32xf32>
    %1532 = arith.index_cast %c5_i32_457 : i32 to index
    %c0_472 = arith.constant 0 : index
    %c0_473 = arith.constant 0 : index
    %1533 = vector.load %arg1[%1532, %c0_472, %c0_473] : memref<8x2x1xf32, #tpu.memory_space<vmem>>, vector<1x2x1xf32>
    %1534 = vector.shape_cast %1533 : vector<1x2x1xf32> to vector<2x1xf32>
    %cst_474 = arith.constant 0.000000e+00 : f32
    %1535 = vector.broadcast %cst_474 : f32 to vector<2x1xf32>
    %1536 = arith.cmpf ogt, %1534, %1535 : vector<2x1xf32>
    %1537 = arith.index_cast %1467 : i32 to index
    %c0_475 = arith.constant 0 : index
    %c0_476 = arith.constant 0 : index
    %1538 = vector.load %arg1[%1537, %c0_475, %c0_476] : memref<8x2x1xf32, #tpu.memory_space<vmem>>, vector<1x2x1xf32>
    %1539 = vector.shape_cast %1538 : vector<1x2x1xf32> to vector<2x1xf32>
    %cst_477 = arith.constant 0.000000e+00 : f32
    %1540 = vector.broadcast %cst_477 : f32 to vector<2x1xf32>
    %1541 = arith.cmpf ogt, %1539, %1540 : vector<2x1xf32>
    %1542 = vector.extract_strided_slice %1465 {offsets = [0, 0], sizes = [2, 32], strides = [1, 1]} : vector<2x64xf32> to vector<2x32xf32>
    %1543 = vector.shape_cast %1536 : vector<2x1xi1> to vector<2x1xi1>
    %1544 = vector.broadcast %1543 : vector<2x1xi1> to vector<2x32xi1>
    %1545 = arith.select %1544, %1505, %1542 : vector<2x32xi1>, vector<2x32xf32>
    %1546 = vector.extract_strided_slice %1466 {offsets = [0, 0], sizes = [2, 32], strides = [1, 1]} : vector<2x64xf32> to vector<2x32xf32>
    %1547 = vector.shape_cast %1536 : vector<2x1xi1> to vector<2x1xi1>
    %1548 = vector.broadcast %1547 : vector<2x1xi1> to vector<2x32xi1>
    %1549 = arith.select %1548, %1503, %1546 : vector<2x32xi1>, vector<2x32xf32>
    %1550 = vector.extract_strided_slice %1465 {offsets = [0, 32], sizes = [2, 32], strides = [1, 1]} : vector<2x64xf32> to vector<2x32xf32>
    %1551 = vector.shape_cast %1541 : vector<2x1xi1> to vector<2x1xi1>
    %1552 = vector.broadcast %1551 : vector<2x1xi1> to vector<2x32xi1>
    %1553 = arith.select %1552, %1531, %1550 : vector<2x32xi1>, vector<2x32xf32>
    %1554 = vector.extract_strided_slice %1466 {offsets = [0, 32], sizes = [2, 32], strides = [1, 1]} : vector<2x64xf32> to vector<2x32xf32>
    %1555 = vector.shape_cast %1541 : vector<2x1xi1> to vector<2x1xi1>
    %1556 = vector.broadcast %1555 : vector<2x1xi1> to vector<2x32xi1>
    %1557 = arith.select %1556, %1529, %1554 : vector<2x32xi1>, vector<2x32xf32>
    %1558 = tpu.concatenate %1545, %1553 in 1 : vector<2x32xf32>, vector<2x32xf32> -> vector<2x64xf32>
    %1559 = tpu.concatenate %1549, %1557 in 1 : vector<2x32xf32>, vector<2x32xf32> -> vector<2x64xf32>
    %c6_i32_478 = arith.constant 6 : i32
    %c7_i32_479 = arith.constant 7 : i32
    %1560 = arith.subi %c7_i32_479, %c6_i32_478 : i32
    %c0_480 = arith.constant 0 : index
    %c0_481 = arith.constant 0 : index
    %1561 = vector.load %arg7[%c0_480, %c0_481] : memref<64x256xf32, #tpu.memory_space<vmem>>, vector<64x256xf32>
    %cst_482 = arith.constant dense<0.000000e+00> : vector<2x256xf32>
    %1562 = tpu.matmul %1558, %1561, %cst_482 {dimension_numbers = #tpu.dot_dimension_numbers<[1], [0], [0], [1], [0, 0, 1, 1], [], []>} : vector<2x64xf32>, vector<64x256xf32>, vector<2x256xf32> -> vector<2x256xf32>
    %1563 = arith.index_cast %c6_i32_478 : i32 to index
    %c0_483 = arith.constant 0 : index
    %c0_484 = arith.constant 0 : index
    %1564 = vector.load %arg11[%1563, %c0_483, %c0_484] : memref<8x2x256xf32, #tpu.memory_space<vmem>>, vector<1x2x128xf32>
    %1565 = vector.shape_cast %1564 : vector<1x2x128xf32> to vector<2x128xf32>
    %1566 = vector.extract_strided_slice %1562 {offsets = [0, 0], sizes = [2, 128], strides = [1, 1]} : vector<2x256xf32> to vector<2x128xf32>
    %1567 = arith.addf %1565, %1566 : vector<2x128xf32>
    %1568 = arith.index_cast %1560 : i32 to index
    %c0_485 = arith.constant 0 : index
    %c128_486 = arith.constant 128 : index
    %1569 = vector.load %arg11[%1568, %c0_485, %c128_486] : memref<8x2x256xf32, #tpu.memory_space<vmem>>, vector<1x2x128xf32>
    %1570 = vector.shape_cast %1569 : vector<1x2x128xf32> to vector<2x128xf32>
    %1571 = vector.extract_strided_slice %1562 {offsets = [0, 128], sizes = [2, 128], strides = [1, 1]} : vector<2x256xf32> to vector<2x128xf32>
    %1572 = arith.addf %1570, %1571 : vector<2x128xf32>
    %1573 = vector.extract_strided_slice %1559 {offsets = [0, 0], sizes = [2, 32], strides = [1, 1]} : vector<2x64xf32> to vector<2x32xf32>
    %1574 = vector.extract_strided_slice %1567 {offsets = [0, 0], sizes = [2, 32], strides = [1, 1]} : vector<2x128xf32> to vector<2x32xf32>
    %1575 = arith.negf %1574 : vector<2x32xf32>
    %1576 = math.exp %1575 : vector<2x32xf32>
    %cst_487 = arith.constant 1.000000e+00 : f32
    %1577 = vector.broadcast %cst_487 : f32 to vector<2x32xf32>
    %1578 = arith.addf %1577, %1576 : vector<2x32xf32>
    %1579 = arith.divf %1577, %1578 : vector<2x32xf32>
    %1580 = vector.extract_strided_slice %1567 {offsets = [0, 32], sizes = [2, 32], strides = [1, 1]} : vector<2x128xf32> to vector<2x32xf32>
    %1581 = arith.negf %1580 : vector<2x32xf32>
    %1582 = math.exp %1581 : vector<2x32xf32>
    %cst_488 = arith.constant 1.000000e+00 : f32
    %1583 = vector.broadcast %cst_488 : f32 to vector<2x32xf32>
    %1584 = arith.addf %1583, %1582 : vector<2x32xf32>
    %1585 = arith.divf %1583, %1584 : vector<2x32xf32>
    %1586 = vector.extract_strided_slice %1567 {offsets = [0, 64], sizes = [2, 32], strides = [1, 1]} : vector<2x128xf32> to vector<2x32xf32>
    %1587 = math.tanh %1586 : vector<2x32xf32>
    %1588 = vector.extract_strided_slice %1567 {offsets = [0, 96], sizes = [2, 32], strides = [1, 1]} : vector<2x128xf32> to vector<2x32xf32>
    %1589 = arith.negf %1588 : vector<2x32xf32>
    %1590 = math.exp %1589 : vector<2x32xf32>
    %cst_489 = arith.constant 1.000000e+00 : f32
    %1591 = vector.broadcast %cst_489 : f32 to vector<2x32xf32>
    %1592 = arith.addf %1591, %1590 : vector<2x32xf32>
    %1593 = arith.divf %1591, %1592 : vector<2x32xf32>
    %1594 = arith.mulf %1585, %1573 : vector<2x32xf32>
    %1595 = arith.mulf %1579, %1587 : vector<2x32xf32>
    %1596 = arith.addf %1594, %1595 : vector<2x32xf32>
    %1597 = math.tanh %1596 : vector<2x32xf32>
    %1598 = arith.mulf %1593, %1597 : vector<2x32xf32>
    %1599 = vector.extract_strided_slice %1559 {offsets = [0, 32], sizes = [2, 32], strides = [1, 1]} : vector<2x64xf32> to vector<2x32xf32>
    %1600 = vector.extract_strided_slice %1572 {offsets = [0, 0], sizes = [2, 32], strides = [1, 1]} : vector<2x128xf32> to vector<2x32xf32>
    %1601 = arith.negf %1600 : vector<2x32xf32>
    %1602 = math.exp %1601 : vector<2x32xf32>
    %cst_490 = arith.constant 1.000000e+00 : f32
    %1603 = vector.broadcast %cst_490 : f32 to vector<2x32xf32>
    %1604 = arith.addf %1603, %1602 : vector<2x32xf32>
    %1605 = arith.divf %1603, %1604 : vector<2x32xf32>
    %1606 = vector.extract_strided_slice %1572 {offsets = [0, 32], sizes = [2, 32], strides = [1, 1]} : vector<2x128xf32> to vector<2x32xf32>
    %1607 = arith.negf %1606 : vector<2x32xf32>
    %1608 = math.exp %1607 : vector<2x32xf32>
    %cst_491 = arith.constant 1.000000e+00 : f32
    %1609 = vector.broadcast %cst_491 : f32 to vector<2x32xf32>
    %1610 = arith.addf %1609, %1608 : vector<2x32xf32>
    %1611 = arith.divf %1609, %1610 : vector<2x32xf32>
    %1612 = vector.extract_strided_slice %1572 {offsets = [0, 64], sizes = [2, 32], strides = [1, 1]} : vector<2x128xf32> to vector<2x32xf32>
    %1613 = math.tanh %1612 : vector<2x32xf32>
    %1614 = vector.extract_strided_slice %1572 {offsets = [0, 96], sizes = [2, 32], strides = [1, 1]} : vector<2x128xf32> to vector<2x32xf32>
    %1615 = arith.negf %1614 : vector<2x32xf32>
    %1616 = math.exp %1615 : vector<2x32xf32>
    %cst_492 = arith.constant 1.000000e+00 : f32
    %1617 = vector.broadcast %cst_492 : f32 to vector<2x32xf32>
    %1618 = arith.addf %1617, %1616 : vector<2x32xf32>
    %1619 = arith.divf %1617, %1618 : vector<2x32xf32>
    %1620 = arith.mulf %1611, %1599 : vector<2x32xf32>
    %1621 = arith.mulf %1605, %1613 : vector<2x32xf32>
    %1622 = arith.addf %1620, %1621 : vector<2x32xf32>
    %1623 = math.tanh %1622 : vector<2x32xf32>
    %1624 = arith.mulf %1619, %1623 : vector<2x32xf32>
    %1625 = arith.index_cast %c6_i32_478 : i32 to index
    %c0_493 = arith.constant 0 : index
    %c0_494 = arith.constant 0 : index
    %1626 = vector.load %arg1[%1625, %c0_493, %c0_494] : memref<8x2x1xf32, #tpu.memory_space<vmem>>, vector<1x2x1xf32>
    %1627 = vector.shape_cast %1626 : vector<1x2x1xf32> to vector<2x1xf32>
    %cst_495 = arith.constant 0.000000e+00 : f32
    %1628 = vector.broadcast %cst_495 : f32 to vector<2x1xf32>
    %1629 = arith.cmpf ogt, %1627, %1628 : vector<2x1xf32>
    %1630 = arith.index_cast %1560 : i32 to index
    %c0_496 = arith.constant 0 : index
    %c0_497 = arith.constant 0 : index
    %1631 = vector.load %arg1[%1630, %c0_496, %c0_497] : memref<8x2x1xf32, #tpu.memory_space<vmem>>, vector<1x2x1xf32>
    %1632 = vector.shape_cast %1631 : vector<1x2x1xf32> to vector<2x1xf32>
    %cst_498 = arith.constant 0.000000e+00 : f32
    %1633 = vector.broadcast %cst_498 : f32 to vector<2x1xf32>
    %1634 = arith.cmpf ogt, %1632, %1633 : vector<2x1xf32>
    %1635 = vector.extract_strided_slice %1558 {offsets = [0, 0], sizes = [2, 32], strides = [1, 1]} : vector<2x64xf32> to vector<2x32xf32>
    %1636 = vector.shape_cast %1629 : vector<2x1xi1> to vector<2x1xi1>
    %1637 = vector.broadcast %1636 : vector<2x1xi1> to vector<2x32xi1>
    %1638 = arith.select %1637, %1598, %1635 : vector<2x32xi1>, vector<2x32xf32>
    %1639 = vector.extract_strided_slice %1559 {offsets = [0, 0], sizes = [2, 32], strides = [1, 1]} : vector<2x64xf32> to vector<2x32xf32>
    %1640 = vector.shape_cast %1629 : vector<2x1xi1> to vector<2x1xi1>
    %1641 = vector.broadcast %1640 : vector<2x1xi1> to vector<2x32xi1>
    %1642 = arith.select %1641, %1596, %1639 : vector<2x32xi1>, vector<2x32xf32>
    %1643 = vector.extract_strided_slice %1558 {offsets = [0, 32], sizes = [2, 32], strides = [1, 1]} : vector<2x64xf32> to vector<2x32xf32>
    %1644 = vector.shape_cast %1634 : vector<2x1xi1> to vector<2x1xi1>
    %1645 = vector.broadcast %1644 : vector<2x1xi1> to vector<2x32xi1>
    %1646 = arith.select %1645, %1624, %1643 : vector<2x32xi1>, vector<2x32xf32>
    %1647 = vector.extract_strided_slice %1559 {offsets = [0, 32], sizes = [2, 32], strides = [1, 1]} : vector<2x64xf32> to vector<2x32xf32>
    %1648 = vector.shape_cast %1634 : vector<2x1xi1> to vector<2x1xi1>
    %1649 = vector.broadcast %1648 : vector<2x1xi1> to vector<2x32xi1>
    %1650 = arith.select %1649, %1622, %1647 : vector<2x32xi1>, vector<2x32xf32>
    %1651 = tpu.concatenate %1638, %1646 in 1 : vector<2x32xf32>, vector<2x32xf32> -> vector<2x64xf32>
    %1652 = tpu.concatenate %1642, %1650 in 1 : vector<2x32xf32>, vector<2x32xf32> -> vector<2x64xf32>
    %c7_i32_499 = arith.constant 7 : i32
    %c7_i32_500 = arith.constant 7 : i32
    %1653 = arith.subi %c7_i32_500, %c7_i32_499 : i32
    %c0_501 = arith.constant 0 : index
    %c0_502 = arith.constant 0 : index
    %1654 = vector.load %arg7[%c0_501, %c0_502] : memref<64x256xf32, #tpu.memory_space<vmem>>, vector<64x256xf32>
    %cst_503 = arith.constant dense<0.000000e+00> : vector<2x256xf32>
    %1655 = tpu.matmul %1651, %1654, %cst_503 {dimension_numbers = #tpu.dot_dimension_numbers<[1], [0], [0], [1], [0, 0, 1, 1], [], []>} : vector<2x64xf32>, vector<64x256xf32>, vector<2x256xf32> -> vector<2x256xf32>
    %1656 = arith.index_cast %c7_i32_499 : i32 to index
    %c0_504 = arith.constant 0 : index
    %c0_505 = arith.constant 0 : index
    %1657 = vector.load %arg11[%1656, %c0_504, %c0_505] : memref<8x2x256xf32, #tpu.memory_space<vmem>>, vector<1x2x128xf32>
    %1658 = vector.shape_cast %1657 : vector<1x2x128xf32> to vector<2x128xf32>
    %1659 = vector.extract_strided_slice %1655 {offsets = [0, 0], sizes = [2, 128], strides = [1, 1]} : vector<2x256xf32> to vector<2x128xf32>
    %1660 = arith.addf %1658, %1659 : vector<2x128xf32>
    %1661 = arith.index_cast %1653 : i32 to index
    %c0_506 = arith.constant 0 : index
    %c128_507 = arith.constant 128 : index
    %1662 = vector.load %arg11[%1661, %c0_506, %c128_507] : memref<8x2x256xf32, #tpu.memory_space<vmem>>, vector<1x2x128xf32>
    %1663 = vector.shape_cast %1662 : vector<1x2x128xf32> to vector<2x128xf32>
    %1664 = vector.extract_strided_slice %1655 {offsets = [0, 128], sizes = [2, 128], strides = [1, 1]} : vector<2x256xf32> to vector<2x128xf32>
    %1665 = arith.addf %1663, %1664 : vector<2x128xf32>
    %1666 = vector.extract_strided_slice %1652 {offsets = [0, 0], sizes = [2, 32], strides = [1, 1]} : vector<2x64xf32> to vector<2x32xf32>
    %1667 = vector.extract_strided_slice %1660 {offsets = [0, 0], sizes = [2, 32], strides = [1, 1]} : vector<2x128xf32> to vector<2x32xf32>
    %1668 = arith.negf %1667 : vector<2x32xf32>
    %1669 = math.exp %1668 : vector<2x32xf32>
    %cst_508 = arith.constant 1.000000e+00 : f32
    %1670 = vector.broadcast %cst_508 : f32 to vector<2x32xf32>
    %1671 = arith.addf %1670, %1669 : vector<2x32xf32>
    %1672 = arith.divf %1670, %1671 : vector<2x32xf32>
    %1673 = vector.extract_strided_slice %1660 {offsets = [0, 32], sizes = [2, 32], strides = [1, 1]} : vector<2x128xf32> to vector<2x32xf32>
    %1674 = arith.negf %1673 : vector<2x32xf32>
    %1675 = math.exp %1674 : vector<2x32xf32>
    %cst_509 = arith.constant 1.000000e+00 : f32
    %1676 = vector.broadcast %cst_509 : f32 to vector<2x32xf32>
    %1677 = arith.addf %1676, %1675 : vector<2x32xf32>
    %1678 = arith.divf %1676, %1677 : vector<2x32xf32>
    %1679 = vector.extract_strided_slice %1660 {offsets = [0, 64], sizes = [2, 32], strides = [1, 1]} : vector<2x128xf32> to vector<2x32xf32>
    %1680 = math.tanh %1679 : vector<2x32xf32>
    %1681 = vector.extract_strided_slice %1660 {offsets = [0, 96], sizes = [2, 32], strides = [1, 1]} : vector<2x128xf32> to vector<2x32xf32>
    %1682 = arith.negf %1681 : vector<2x32xf32>
    %1683 = math.exp %1682 : vector<2x32xf32>
    %cst_510 = arith.constant 1.000000e+00 : f32
    %1684 = vector.broadcast %cst_510 : f32 to vector<2x32xf32>
    %1685 = arith.addf %1684, %1683 : vector<2x32xf32>
    %1686 = arith.divf %1684, %1685 : vector<2x32xf32>
    %1687 = arith.mulf %1678, %1666 : vector<2x32xf32>
    %1688 = arith.mulf %1672, %1680 : vector<2x32xf32>
    %1689 = arith.addf %1687, %1688 : vector<2x32xf32>
    %1690 = math.tanh %1689 : vector<2x32xf32>
    %1691 = arith.mulf %1686, %1690 : vector<2x32xf32>
    %1692 = vector.extract_strided_slice %1652 {offsets = [0, 32], sizes = [2, 32], strides = [1, 1]} : vector<2x64xf32> to vector<2x32xf32>
    %1693 = vector.extract_strided_slice %1665 {offsets = [0, 0], sizes = [2, 32], strides = [1, 1]} : vector<2x128xf32> to vector<2x32xf32>
    %1694 = arith.negf %1693 : vector<2x32xf32>
    %1695 = math.exp %1694 : vector<2x32xf32>
    %cst_511 = arith.constant 1.000000e+00 : f32
    %1696 = vector.broadcast %cst_511 : f32 to vector<2x32xf32>
    %1697 = arith.addf %1696, %1695 : vector<2x32xf32>
    %1698 = arith.divf %1696, %1697 : vector<2x32xf32>
    %1699 = vector.extract_strided_slice %1665 {offsets = [0, 32], sizes = [2, 32], strides = [1, 1]} : vector<2x128xf32> to vector<2x32xf32>
    %1700 = arith.negf %1699 : vector<2x32xf32>
    %1701 = math.exp %1700 : vector<2x32xf32>
    %cst_512 = arith.constant 1.000000e+00 : f32
    %1702 = vector.broadcast %cst_512 : f32 to vector<2x32xf32>
    %1703 = arith.addf %1702, %1701 : vector<2x32xf32>
    %1704 = arith.divf %1702, %1703 : vector<2x32xf32>
    %1705 = vector.extract_strided_slice %1665 {offsets = [0, 64], sizes = [2, 32], strides = [1, 1]} : vector<2x128xf32> to vector<2x32xf32>
    %1706 = math.tanh %1705 : vector<2x32xf32>
    %1707 = vector.extract_strided_slice %1665 {offsets = [0, 96], sizes = [2, 32], strides = [1, 1]} : vector<2x128xf32> to vector<2x32xf32>
    %1708 = arith.negf %1707 : vector<2x32xf32>
    %1709 = math.exp %1708 : vector<2x32xf32>
    %cst_513 = arith.constant 1.000000e+00 : f32
    %1710 = vector.broadcast %cst_513 : f32 to vector<2x32xf32>
    %1711 = arith.addf %1710, %1709 : vector<2x32xf32>
    %1712 = arith.divf %1710, %1711 : vector<2x32xf32>
    %1713 = arith.mulf %1704, %1692 : vector<2x32xf32>
    %1714 = arith.mulf %1698, %1706 : vector<2x32xf32>
    %1715 = arith.addf %1713, %1714 : vector<2x32xf32>
    %1716 = math.tanh %1715 : vector<2x32xf32>
    %1717 = arith.mulf %1712, %1716 : vector<2x32xf32>
    %1718 = arith.index_cast %c7_i32_499 : i32 to index
    %c0_514 = arith.constant 0 : index
    %c0_515 = arith.constant 0 : index
    %1719 = vector.load %arg1[%1718, %c0_514, %c0_515] : memref<8x2x1xf32, #tpu.memory_space<vmem>>, vector<1x2x1xf32>
    %1720 = vector.shape_cast %1719 : vector<1x2x1xf32> to vector<2x1xf32>
    %cst_516 = arith.constant 0.000000e+00 : f32
    %1721 = vector.broadcast %cst_516 : f32 to vector<2x1xf32>
    %1722 = arith.cmpf ogt, %1720, %1721 : vector<2x1xf32>
    %1723 = arith.index_cast %1653 : i32 to index
    %c0_517 = arith.constant 0 : index
    %c0_518 = arith.constant 0 : index
    %1724 = vector.load %arg1[%1723, %c0_517, %c0_518] : memref<8x2x1xf32, #tpu.memory_space<vmem>>, vector<1x2x1xf32>
    %1725 = vector.shape_cast %1724 : vector<1x2x1xf32> to vector<2x1xf32>
    %cst_519 = arith.constant 0.000000e+00 : f32
    %1726 = vector.broadcast %cst_519 : f32 to vector<2x1xf32>
    %1727 = arith.cmpf ogt, %1725, %1726 : vector<2x1xf32>
    %1728 = vector.extract_strided_slice %1651 {offsets = [0, 0], sizes = [2, 32], strides = [1, 1]} : vector<2x64xf32> to vector<2x32xf32>
    %1729 = vector.shape_cast %1722 : vector<2x1xi1> to vector<2x1xi1>
    %1730 = vector.broadcast %1729 : vector<2x1xi1> to vector<2x32xi1>
    %1731 = arith.select %1730, %1691, %1728 : vector<2x32xi1>, vector<2x32xf32>
    %1732 = vector.extract_strided_slice %1652 {offsets = [0, 0], sizes = [2, 32], strides = [1, 1]} : vector<2x64xf32> to vector<2x32xf32>
    %1733 = vector.shape_cast %1722 : vector<2x1xi1> to vector<2x1xi1>
    %1734 = vector.broadcast %1733 : vector<2x1xi1> to vector<2x32xi1>
    %1735 = arith.select %1734, %1689, %1732 : vector<2x32xi1>, vector<2x32xf32>
    %1736 = vector.extract_strided_slice %1651 {offsets = [0, 32], sizes = [2, 32], strides = [1, 1]} : vector<2x64xf32> to vector<2x32xf32>
    %1737 = vector.shape_cast %1727 : vector<2x1xi1> to vector<2x1xi1>
    %1738 = vector.broadcast %1737 : vector<2x1xi1> to vector<2x32xi1>
    %1739 = arith.select %1738, %1717, %1736 : vector<2x32xi1>, vector<2x32xf32>
    %1740 = vector.extract_strided_slice %1652 {offsets = [0, 32], sizes = [2, 32], strides = [1, 1]} : vector<2x64xf32> to vector<2x32xf32>
    %1741 = vector.shape_cast %1727 : vector<2x1xi1> to vector<2x1xi1>
    %1742 = vector.broadcast %1741 : vector<2x1xi1> to vector<2x32xi1>
    %1743 = arith.select %1742, %1715, %1740 : vector<2x32xi1>, vector<2x32xf32>
    %1744 = tpu.concatenate %1731, %1739 in 1 : vector<2x32xf32>, vector<2x32xf32> -> vector<2x64xf32>
    %1745 = tpu.concatenate %1735, %1743 in 1 : vector<2x32xf32>, vector<2x32xf32> -> vector<2x64xf32>
    %c8_i32_520 = arith.constant 8 : i32
    %c0_521 = arith.constant 0 : index
    %c0_522 = arith.constant 0 : index
    %1746 = vector.load %arg8[%c0_521, %c0_522] : memref<64x1xf32, #tpu.memory_space<vmem>>, vector<64x1xf32>
    %cst_523 = arith.constant dense<0.000000e+00> : vector<2x1xf32>
    %1747 = tpu.matmul %1744, %1746, %cst_523 {dimension_numbers = #tpu.dot_dimension_numbers<[1], [0], [0], [1], [0, 0, 1, 1], [], []>} : vector<2x64xf32>, vector<64x1xf32>, vector<2x1xf32> -> vector<2x1xf32>
    %c0_524 = arith.constant 0 : index
    %c0_525 = arith.constant 0 : index
    %1748 = vector.load %arg9[%c0_524, %c0_525] : memref<1x1xf32, #tpu.memory_space<vmem>>, vector<1x1xf32>
    %1749 = vector.broadcast %1748 : vector<1x1xf32> to vector<2x1xf32>
    %1750 = arith.addf %1747, %1749 : vector<2x1xf32>
    %c0_526 = arith.constant 0 : index
    %c0_527 = arith.constant 0 : index
    %1751 = vector.load %arg10[%c0_526, %c0_527] : memref<2x1xf32, #tpu.memory_space<vmem>>, vector<2x1xf32>
    tpu.vector_store %arg10[%c0_526, %c0_527], %1750 {strides = array<i32>} : memref<2x1xf32, #tpu.memory_space<vmem>>, vector<2x1xf32>,
    return
  }
}

</mosaic_0001>

<llo_original>
// kernel: tpu_custom_call.1
$region0: #{tpu_custom_call.1}
  #allocation0 [shape = 'u32[]', space=smem, size = 0x4, offset = 0x4, fixed_abs, tag = 'smem constant byte address 0x4 - core index']
  #allocation1 [shape = 'u32[144,128]{1,0:T(1,128)}', space=vmem, size = 0x12000, scoped, tag = 'internal scratch']
  #allocation2 [shape = 'f32[8,2,256]{2,1,0:T(2,128)}', space=vmem, size = 0x4000, scoped, tag = 'scratch operand']
  #allocation3 [shape = 'f32[8,2,64]{2,1,0:T(2,128)}', space=vmem, size = 0x2000, scoped, tag = 'scratch operand']
  #allocation4 [shape = 'f32[1,1]{1,0:T(1,128)S(1)}', space=vmem, size = 0x200, scoped, tag = 'scoped memory for tpu_custom_call.1']
  %s0 = inlined_call_operand.vmem [shape: f32[8,2,16], index: 0, kind: input, shape index: {}]
  %s1 = inlined_call_operand.vmem [shape: f32[8,2,1], index: 1, kind: input, shape index: {}]
  %s2 = inlined_call_operand.vmem [shape: f32[16,256], index: 2, kind: input, shape index: {}]
  %s3 = inlined_call_operand.vmem [shape: f32[1,256], index: 3, kind: input, shape index: {}]
  %s4 = inlined_call_operand.hbm [shape: f32[64,256], index: 4, kind: input, shape index: {}]
  %s5 = inlined_call_operand.hbm [shape: f32[64,256], index: 5, kind: input, shape index: {}]
  %s6 = inlined_call_operand.vmem [shape: f32[1,256], index: 6, kind: input, shape index: {}]
  %s7 = inlined_call_operand.hbm [shape: f32[64,256], index: 7, kind: input, shape index: {}]
  %s8 = inlined_call_operand.vmem [shape: f32[64,1], index: 8, kind: input, shape index: {}]
  %s9 = inlined_call_operand.<no memory space> [shape: f32[1,1], index: 9, kind: input, shape index: {}]
  %s10 = inlined_call_operand.vmem [shape: f32[2,1], index: 10, kind: output, shape index: {}]
  %s11 = sld [smem:[#allocation0]]
  $region62: #{tpu_custom_call.1} parent=0
    _
  %s13 = ssub.s32 1, %s11
  %s14 = scalar_select 0, %s13, %s11
  %v15 = vstv %s9
  %16 = vst [vmem:[#allocation4] sm:$0x1] %v15
  $region1: #{tpu_custom_call.1} parent=0
    #allocation5 [shape = 'u8[65536]{0}', space=vmem, size = 0x10000, scoped, tag = 'input window, operand 4, single buffered']
    #allocation6 [shape = 's32[1]{0}', space=sflag, size = 0x4, scoped, tag = 'scoped memory for tpu_custom_call.1']
    #allocation7 [shape = 'u8[65536]{0}', space=vmem, size = 0x10000, scoped, tag = 'input window, operand 5, single buffered']
    #allocation8 [shape = 's32[1]{0}', space=sflag, size = 0x4, scoped, tag = 'scoped memory for tpu_custom_call.1']
    #allocation9 [shape = 'u8[65536]{0}', space=vmem, size = 0x10000, scoped, tag = 'input window, operand 7, single buffered']
    %17 = vsyncpa [#allocation6], 0
    %18 = vsyncpa [#allocation8], 0
    // Predicated region
    $region2: #{tpu_custom_call.1} parent=1 // pred_check
      _
    $region3: #{tpu_custom_call.1} parent=1 // pred_check_branch
      %20 = sbr.rel (0) target = $region5
    $region4: #{tpu_custom_call.1} parent=1 // pred_region
      _
    $region5: #{tpu_custom_call.1} parent=1 // pred_fallthru
      _
    // Predicated region
    $region6: #{tpu_custom_call.1} parent=1 // pred_check
      _
    $region7: #{tpu_custom_call.1} parent=1 // pred_check_branch
      %22 = sbr.rel (0) target = $region9
    $region8: #{tpu_custom_call.1} parent=1 // pred_region
      _
    $region9: #{tpu_custom_call.1} parent=1 // pred_fallthru
      _
    // Predicated region
    $region10: #{tpu_custom_call.1} parent=1 // pred_check
      _
    $region11: #{tpu_custom_call.1} parent=1 // pred_check_branch
      %24 = sbr.rel (0) target = $region13
    $region12: #{tpu_custom_call.1} parent=1 // pred_region
      _
    $region13: #{tpu_custom_call.1} parent=1 // pred_fallthru
      _
    // Predicated region
    $region14: #{tpu_custom_call.1} parent=1 // pred_check
      _
    $region15: #{tpu_custom_call.1} parent=1 // pred_check_branch
      %26 = sbr.rel (0) target = $region17
    $region16: #{tpu_custom_call.1} parent=1 // pred_region
      _
    $region17: #{tpu_custom_call.1} parent=1 // pred_fallthru
      _
    // Predicated region
    $region18: #{tpu_custom_call.1} parent=1 // pred_check
      _
    $region19: #{tpu_custom_call.1} parent=1 // pred_check_branch
      %28 = sbr.rel (0) target = $region21
    $region20: #{tpu_custom_call.1} parent=1 // pred_region
      %s30 = ssub.s32 2048, 2048
      %31 = vsyncadd [#allocation6], %s30
      %s32 = sshll.u32 [#allocation5], 4
      %s33 = int_to_ptr.vmem [resolvable:$true] %s32
      %38 = dma.hbm_to_vmem [thread:$0]  %s4, 2048, %s33, [#allocation6], 256, 256, 16
    $region21: #{tpu_custom_call.1} parent=1 // pred_fallthru
      _
    // Predicated region
    $region22: #{tpu_custom_call.1} parent=1 // pred_check
      _
    $region23: #{tpu_custom_call.1} parent=1 // pred_check_branch
      %40 = sbr.rel (0) target = $region25
    $region24: #{tpu_custom_call.1} parent=1 // pred_region
      %s42 = ssub.s32 2048, 2048
      %43 = vsyncadd [#allocation8], %s42
      %s44 = sshll.u32 [#allocation7], 4
      %s45 = int_to_ptr.vmem [resolvable:$true] %s44
      %50 = dma.hbm_to_vmem [thread:$0]  %s5, 2048, %s45, [#allocation8], 256, 256, 16
    $region25: #{tpu_custom_call.1} parent=1 // pred_fallthru
      _
    // Predicated region
    $region26: #{tpu_custom_call.1} parent=1 // pred_check
      _
    $region27: #{tpu_custom_call.1} parent=1 // pred_check_branch
      %52 = sbr.rel (0) target = $region29
    $region28: #{tpu_custom_call.1} parent=1 // pred_region
      _
    $region29: #{tpu_custom_call.1} parent=1 // pred_fallthru
      _
    // Predicated region
    $region30: #{tpu_custom_call.1} parent=1 // pred_check
      _
    $region31: #{tpu_custom_call.1} parent=1 // pred_check_branch
      %54 = sbr.rel (0) target = $region33
    $region32: #{tpu_custom_call.1} parent=1 // pred_region
      %s56 = ssub.s32 2048, 2048
      %57 = vsyncadd [#allocation8], %s56
      %s58 = sshll.u32 [#allocation9], 4
      %s59 = int_to_ptr.vmem [resolvable:$true] %s58
      %64 = dma.hbm_to_vmem [thread:$0]  %s7, 2048, %s59, [#allocation8], 256, 256, 16
    $region33: #{tpu_custom_call.1} parent=1 // pred_fallthru
      _
    // Predicated region
    $region34: #{tpu_custom_call.1} parent=1 // pred_check
      _
    $region35: #{tpu_custom_call.1} parent=1 // pred_check_branch
      %66 = sbr.rel (0) target = $region37
    $region36: #{tpu_custom_call.1} parent=1 // pred_region
      _
    $region37: #{tpu_custom_call.1} parent=1 // pred_fallthru
      _
    // Predicated region
    $region38: #{tpu_custom_call.1} parent=1 // pred_check
      _
    $region39: #{tpu_custom_call.1} parent=1 // pred_check_branch
      %68 = sbr.rel (0) target = $region41
    $region40: #{tpu_custom_call.1} parent=1 // pred_region
      _
    $region41: #{tpu_custom_call.1} parent=1 // pred_fallthru
      _
    // Predicated region
    $region42: #{tpu_custom_call.1} parent=1 // pred_check
      _
    $region43: #{tpu_custom_call.1} parent=1 // pred_check_branch
      %70 = sbr.rel (0) target = $region45
    $region44: #{tpu_custom_call.1} parent=1 // pred_region
      %71 = dma.done [#allocation6], 2048
    $region45: #{tpu_custom_call.1} parent=1 // pred_fallthru
      _
    // Predicated region
    $region46: #{tpu_custom_call.1} parent=1 // pred_check
      _
    $region47: #{tpu_custom_call.1} parent=1 // pred_check_branch
      %73 = sbr.rel (0) target = $region49
    $region48: #{tpu_custom_call.1} parent=1 // pred_region
      %74 = dma.done [#allocation8], 2048
    $region49: #{tpu_custom_call.1} parent=1 // pred_fallthru
      _
    // Predicated region
    $region50: #{tpu_custom_call.1} parent=1 // pred_check
      _
    $region51: #{tpu_custom_call.1} parent=1 // pred_check_branch
      %76 = sbr.rel (0) target = $region53
    $region52: #{tpu_custom_call.1} parent=1 // pred_region
      %77 = dma.done [#allocation8], 2048
    $region53: #{tpu_custom_call.1} parent=1 // pred_fallthru
      _
    %v78 = vld [vmem:[%s0] sm:$0x3]
    %v79 = vld [vmem:[%s2] sm:$0xff]
    %v80 = vld [vmem:[%s2 + $0x8] sm:$0xff]
    %v81 = vld [vmem:[%s2 + $0x10] sm:$0xff]
    %v82 = vld [vmem:[%s2 + $0x18] sm:$0xff]
    %v83 = vld [vmem:[%s3] sm:$0x3]
    %v85 = vlaneseq
    %v86 = vshrl.u32 %v85, 7
    %v87 = vsub.s32 0, %v86
    %v88 = vrot.slane %v83, %v87
    %v89 = vlaneseq
    %v90 = vshrl.u32 %v89, 7
    %v91 = vsub.s32 1, %v90
    %v92 = vrot.slane %v83, %v91
    %vm95 = vcmask 130048
    %v97 = vsel %vm95, %v78, 0
    %99 = vmatprep.subr.mxu0 %v80
    %100 = vmatpush1.msra.mxu0 %v79
    %101 = vmatprep.subr.mxu0 %v82
    %102 = vmatpush1.msra.mxu0 %v81
    %103 = vmatprep.subr.mxu0 0.0
    %104 = vmatpush1.msra.mxu0 0.0
    %105 = vmatprep.subr.mxu0 0.0
    %106 = vmatpush1.msra.mxu0 0.0
    %107 = vmatprep.subr.mxu0 0.0
    %108 = vmatpush1.msra.mxu0 0.0
    %109 = vmatprep.subr.mxu0 0.0
    %110 = vmatpush1.msra.mxu0 0.0
    %111 = vmatprep.subr.mxu0 0.0
    %112 = vmatpush1.msra.mxu0 0.0
    %113 = vmatprep.subr.mxu0 0.0
    %114 = vmatpush1.msra.mxu0 0.0
    %115 = vmatprep.subr.mxu0 0.0
    %116 = vmatpush1.msra.mxu0 0.0
    %117 = vmatprep.subr.mxu0 0.0
    %118 = vmatpush1.msra.mxu0 0.0
    %119 = vmatprep.subr.mxu0 0.0
    %120 = vmatpush1.msra.mxu0 0.0
    %121 = vmatprep.subr.mxu0 0.0
    %122 = vmatpush1.msra.mxu0 0.0
    %123 = vmatprep.subr.mxu0 0.0
    %124 = vmatpush1.msra.mxu0 0.0
    %125 = vmatprep.subr.mxu0 0.0
    %126 = vmatpush1.msra.mxu0 0.0
    %127 = vmatprep.subr.mxu0 0.0
    %128 = vmatpush1.msra.mxu0 0.0
    %129 = vmatprep.subr.mxu0 0.0
    %130 = vmatpush1.msra.mxu0 0.0
    %131 = vmatprep.subr.mxu0 0.0
    %132 = vmatpush1.msra.mxu0 0.0
    %133 = vmatprep.subr.mxu0 0.0
    %134 = vmatpush1.msra.mxu0 0.0
    %135 = vmatprep.subr.mxu0 0.0
    %136 = vmatpush1.msra.mxu0 0.0
    %137 = vmatprep.subr.mxu0 0.0
    %138 = vmatpush1.msra.mxu0 0.0
    %139 = vmatprep.subr.mxu0 0.0
    %140 = vmatpush1.msra.mxu0 0.0
    %141 = vmatprep.subr.mxu0 0.0
    %142 = vmatpush1.msra.mxu0 0.0
    %143 = vmatprep.subr.mxu0 0.0
    %144 = vmatpush1.msra.mxu0 0.0
    %145 = vmatprep.subr.mxu0 0.0
    %146 = vmatpush1.msra.mxu0 0.0
    %147 = vmatprep.subr.mxu0 0.0
    %148 = vmatpush1.msra.mxu0 0.0
    %149 = vmatprep.subr.mxu0 0.0
    %150 = vmatpush1.msra.mxu0 0.0
    %151 = vmatprep.subr.mxu0 0.0
    %152 = vmatpush1.msra.mxu0 0.0
    %153 = vmatprep.subr.mxu0 0.0
    %154 = vmatpush1.msra.mxu0 0.0
    %155 = vmatprep.subr.mxu0 0.0
    %156 = vmatpush1.msra.mxu0 0.0
    %157 = vmatprep.subr.mxu0 0.0
    %158 = vmatpush1.msra.mxu0 0.0
    %159 = vmatprep.subr.mxu0 0.0
    %160 = vmatpush1.msra.mxu0 0.0
    %161 = vmatprep.subr.mxu0 0.0
    %162 = vmatpush1.msra.mxu0 0.0
    %163 = vmatprep.mubr.f32.mxu0 0.0
    %164 = vmatmul.mubr.f32.gmra.mrb[0].mxu0 %v97
    %v165 = vpop.f32.mrb[0].mxu0
    %v166 = vadd.f32 %v88, %v165
    %v167 = vpop.f32.mrb[0].mxu0
    %v168 = vadd.f32 %v92, %v167
    %169 = vdwg.mxu0
    %v172 = vcombine.low %v166, %v168
    %v174 = vunpack.c.l.s4 1983009808
    %v175 = vunpack.c.0.s8 %v174
    %v176 = vlaneseq
    %v177 = vshrl.u32 %v176, 7
    %v178 = vsub.s32 %v175, %v177
    %v179 = vrot.slane %v172, %v178
    %181 = vst [vmem:[#allocation2] sm:$0xf] %v179
    %s182 = scalar_lea.vmem %s0, 2
    %v183 = vld [vmem:[%s182] sm:$0x3]
    %v184 = vld [vmem:[%s2] sm:$0xff]
    %v185 = vld [vmem:[%s2 + $0x8] sm:$0xff]
    %v186 = vld [vmem:[%s2 + $0x10] sm:$0xff]
    %v187 = vld [vmem:[%s2 + $0x18] sm:$0xff]
    %v188 = vld [vmem:[%s3] sm:$0x3]
    %v190 = vlaneseq
    %v191 = vshrl.u32 %v190, 7
    %v192 = vsub.s32 0, %v191
    %v193 = vrot.slane %v188, %v192
    %v194 = vlaneseq
    %v195 = vshrl.u32 %v194, 7
    %v196 = vsub.s32 1, %v195
    %v197 = vrot.slane %v188, %v196
    %v201 = vsel %vm95, %v183, 0
    %203 = vmatprep.subr.mxu0 %v185
    %204 = vmatpush1.msra.mxu0 %v184
    %205 = vmatprep.subr.mxu0 %v187
    %206 = vmatpush1.msra.mxu0 %v186
    %207 = vmatprep.subr.mxu0 0.0
    %208 = vmatpush1.msra.mxu0 0.0
    %209 = vmatprep.subr.mxu0 0.0
    %210 = vmatpush1.msra.mxu0 0.0
    %211 = vmatprep.subr.mxu0 0.0
    %212 = vmatpush1.msra.mxu0 0.0
    %213 = vmatprep.subr.mxu0 0.0
    %214 = vmatpush1.msra.mxu0 0.0
    %215 = vmatprep.subr.mxu0 0.0
    %216 = vmatpush1.msra.mxu0 0.0
    %217 = vmatprep.subr.mxu0 0.0
    %218 = vmatpush1.msra.mxu0 0.0
    %219 = vmatprep.subr.mxu0 0.0
    %220 = vmatpush1.msra.mxu0 0.0
    %221 = vmatprep.subr.mxu0 0.0
    %222 = vmatpush1.msra.mxu0 0.0
    %223 = vmatprep.subr.mxu0 0.0
    %224 = vmatpush1.msra.mxu0 0.0
    %225 = vmatprep.subr.mxu0 0.0
    %226 = vmatpush1.msra.mxu0 0.0
    %227 = vmatprep.subr.mxu0 0.0
    %228 = vmatpush1.msra.mxu0 0.0
    %229 = vmatprep.subr.mxu0 0.0
    %230 = vmatpush1.msra.mxu0 0.0
    %231 = vmatprep.subr.mxu0 0.0
    %232 = vmatpush1.msra.mxu0 0.0
    %233 = vmatprep.subr.mxu0 0.0
    %234 = vmatpush1.msra.mxu0 0.0
    %235 = vmatprep.subr.mxu0 0.0
    %236 = vmatpush1.msra.mxu0 0.0
    %237 = vmatprep.subr.mxu0 0.0
    %238 = vmatpush1.msra.mxu0 0.0
    %239 = vmatprep.subr.mxu0 0.0
    %240 = vmatpush1.msra.mxu0 0.0
    %241 = vmatprep.subr.mxu0 0.0
    %242 = vmatpush1.msra.mxu0 0.0
    %243 = vmatprep.subr.mxu0 0.0
    %244 = vmatpush1.msra.mxu0 0.0
    %245 = vmatprep.subr.mxu0 0.0
    %246 = vmatpush1.msra.mxu0 0.0
    %247 = vmatprep.subr.mxu0 0.0
    %248 = vmatpush1.msra.mxu0 0.0
    %249 = vmatprep.subr.mxu0 0.0
    %250 = vmatpush1.msra.mxu0 0.0
    %251 = vmatprep.subr.mxu0 0.0
    %252 = vmatpush1.msra.mxu0 0.0
    %253 = vmatprep.subr.mxu0 0.0
    %254 = vmatpush1.msra.mxu0 0.0
    %255 = vmatprep.subr.mxu0 0.0
    %256 = vmatpush1.msra.mxu0 0.0
    %257 = vmatprep.subr.mxu0 0.0
    %258 = vmatpush1.msra.mxu0 0.0
    %259 = vmatprep.subr.mxu0 0.0
    %260 = vmatpush1.msra.mxu0 0.0
    %261 = vmatprep.subr.mxu0 0.0
    %262 = vmatpush1.msra.mxu0 0.0
    %263 = vmatprep.subr.mxu0 0.0
    %264 = vmatpush1.msra.mxu0 0.0
    %265 = vmatprep.subr.mxu0 0.0
    %266 = vmatpush1.msra.mxu0 0.0
    %267 = vmatprep.mubr.f32.mxu0 0.0
    %268 = vmatmul.mubr.f32.gmra.mrb[0].mxu0 %v201
    %v269 = vpop.f32.mrb[0].mxu0
    %v270 = vadd.f32 %v193, %v269
    %v271 = vpop.f32.mrb[0].mxu0
    %v272 = vadd.f32 %v197, %v271
    %273 = vdwg.mxu0
    %v276 = vcombine.low %v270, %v272
    %v278 = vunpack.c.l.s4 1983009808
    %v279 = vunpack.c.0.s8 %v278
    %v280 = vlaneseq
    %v281 = vshrl.u32 %v280, 7
    %v282 = vsub.s32 %v279, %v281
    %v283 = vrot.slane %v276, %v282
    %s285 = scalar_lea.vmem [#allocation2], 4
    %286 = vst [vmem:[%s285] sm:$0xf] %v283
    %s287 = scalar_lea.vmem %s0, 4
    %v288 = vld [vmem:[%s287] sm:$0x3]
    %v289 = vld [vmem:[%s2] sm:$0xff]
    %v290 = vld [vmem:[%s2 + $0x8] sm:$0xff]
    %v291 = vld [vmem:[%s2 + $0x10] sm:$0xff]
    %v292 = vld [vmem:[%s2 + $0x18] sm:$0xff]
    %v293 = vld [vmem:[%s3] sm:$0x3]
    %v295 = vlaneseq
    %v296 = vshrl.u32 %v295, 7
    %v297 = vsub.s32 0, %v296
    %v298 = vrot.slane %v293, %v297
    %v299 = vlaneseq
    %v300 = vshrl.u32 %v299, 7
    %v301 = vsub.s32 1, %v300
    %v302 = vrot.slane %v293, %v301
    %v306 = vsel %vm95, %v288, 0
    %308 = vmatprep.subr.mxu0 %v290
    %309 = vmatpush1.msra.mxu0 %v289
    %310 = vmatprep.subr.mxu0 %v292
    %311 = vmatpush1.msra.mxu0 %v291
    %312 = vmatprep.subr.mxu0 0.0
    %313 = vmatpush1.msra.mxu0 0.0
    %314 = vmatprep.subr.mxu0 0.0
    %315 = vmatpush1.msra.mxu0 0.0
    %316 = vmatprep.subr.mxu0 0.0
    %317 = vmatpush1.msra.mxu0 0.0
    %318 = vmatprep.subr.mxu0 0.0
    %319 = vmatpush1.msra.mxu0 0.0
    %320 = vmatprep.subr.mxu0 0.0
    %321 = vmatpush1.msra.mxu0 0.0
    %322 = vmatprep.subr.mxu0 0.0
    %323 = vmatpush1.msra.mxu0 0.0
    %324 = vmatprep.subr.mxu0 0.0
    %325 = vmatpush1.msra.mxu0 0.0
    %326 = vmatprep.subr.mxu0 0.0
    %327 = vmatpush1.msra.mxu0 0.0
    %328 = vmatprep.subr.mxu0 0.0
    %329 = vmatpush1.msra.mxu0 0.0
    %330 = vmatprep.subr.mxu0 0.0
    %331 = vmatpush1.msra.mxu0 0.0
    %332 = vmatprep.subr.mxu0 0.0
    %333 = vmatpush1.msra.mxu0 0.0
    %334 = vmatprep.subr.mxu0 0.0
    %335 = vmatpush1.msra.mxu0 0.0
    %336 = vmatprep.subr.mxu0 0.0
    %337 = vmatpush1.msra.mxu0 0.0
    %338 = vmatprep.subr.mxu0 0.0
    %339 = vmatpush1.msra.mxu0 0.0
    %340 = vmatprep.subr.mxu0 0.0
    %341 = vmatpush1.msra.mxu0 0.0
    %342 = vmatprep.subr.mxu0 0.0
    %343 = vmatpush1.msra.mxu0 0.0
    %344 = vmatprep.subr.mxu0 0.0
    %345 = vmatpush1.msra.mxu0 0.0
    %346 = vmatprep.subr.mxu0 0.0
    %347 = vmatpush1.msra.mxu0 0.0
    %348 = vmatprep.subr.mxu0 0.0
    %349 = vmatpush1.msra.mxu0 0.0
    %350 = vmatprep.subr.mxu0 0.0
    %351 = vmatpush1.msra.mxu0 0.0
    %352 = vmatprep.subr.mxu0 0.0
    %353 = vmatpush1.msra.mxu0 0.0
    %354 = vmatprep.subr.mxu0 0.0
    %355 = vmatpush1.msra.mxu0 0.0
    %356 = vmatprep.subr.mxu0 0.0
    %357 = vmatpush1.msra.mxu0 0.0
    %358 = vmatprep.subr.mxu0 0.0
    %359 = vmatpush1.msra.mxu0 0.0
    %360 = vmatprep.subr.mxu0 0.0
    %361 = vmatpush1.msra.mxu0 0.0
    %362 = vmatprep.subr.mxu0 0.0
    %363 = vmatpush1.msra.mxu0 0.0
    %364 = vmatprep.subr.mxu0 0.0
    %365 = vmatpush1.msra.mxu0 0.0
    %366 = vmatprep.subr.mxu0 0.0
    %367 = vmatpush1.msra.mxu0 0.0
    %368 = vmatprep.subr.mxu0 0.0
    %369 = vmatpush1.msra.mxu0 0.0
    %370 = vmatprep.subr.mxu0 0.0
    %371 = vmatpush1.msra.mxu0 0.0
    %372 = vmatprep.mubr.f32.mxu0 0.0
    %373 = vmatmul.mubr.f32.gmra.mrb[0].mxu0 %v306
    %v374 = vpop.f32.mrb[0].mxu0
    %v375 = vadd.f32 %v298, %v374
    %v376 = vpop.f32.mrb[0].mxu0
    %v377 = vadd.f32 %v302, %v376
    %378 = vdwg.mxu0
    %v381 = vcombine.low %v375, %v377
    %v383 = vunpack.c.l.s4 1983009808
    %v384 = vunpack.c.0.s8 %v383
    %v385 = vlaneseq
    %v386 = vshrl.u32 %v385, 7
    %v387 = vsub.s32 %v384, %v386
    %v388 = vrot.slane %v381, %v387
    %s390 = scalar_lea.vmem [#allocation2], 8
    %391 = vst [vmem:[%s390] sm:$0xf] %v388
    %s392 = scalar_lea.vmem %s0, 6
    %v393 = vld [vmem:[%s392] sm:$0x3]
    %v394 = vld [vmem:[%s2] sm:$0xff]
    %v395 = vld [vmem:[%s2 + $0x8] sm:$0xff]
    %v396 = vld [vmem:[%s2 + $0x10] sm:$0xff]
    %v397 = vld [vmem:[%s2 + $0x18] sm:$0xff]
    %v398 = vld [vmem:[%s3] sm:$0x3]
    %v400 = vlaneseq
    %v401 = vshrl.u32 %v400, 7
    %v402 = vsub.s32 0, %v401
    %v403 = vrot.slane %v398, %v402
    %v404 = vlaneseq
    %v405 = vshrl.u32 %v404, 7
    %v406 = vsub.s32 1, %v405
    %v407 = vrot.slane %v398, %v406
    %v411 = vsel %vm95, %v393, 0
    %413 = vmatprep.subr.mxu0 %v395
    %414 = vmatpush1.msra.mxu0 %v394
    %415 = vmatprep.subr.mxu0 %v397
    %416 = vmatpush1.msra.mxu0 %v396
    %417 = vmatprep.subr.mxu0 0.0
    %418 = vmatpush1.msra.mxu0 0.0
    %419 = vmatprep.subr.mxu0 0.0
    %420 = vmatpush1.msra.mxu0 0.0
    %421 = vmatprep.subr.mxu0 0.0
    %422 = vmatpush1.msra.mxu0 0.0
    %423 = vmatprep.subr.mxu0 0.0
    %424 = vmatpush1.msra.mxu0 0.0
    %425 = vmatprep.subr.mxu0 0.0
    %426 = vmatpush1.msra.mxu0 0.0
    %427 = vmatprep.subr.mxu0 0.0
    %428 = vmatpush1.msra.mxu0 0.0
    %429 = vmatprep.subr.mxu0 0.0
    %430 = vmatpush1.msra.mxu0 0.0
    %431 = vmatprep.subr.mxu0 0.0
    %432 = vmatpush1.msra.mxu0 0.0
    %433 = vmatprep.subr.mxu0 0.0
    %434 = vmatpush1.msra.mxu0 0.0
    %435 = vmatprep.subr.mxu0 0.0
    %436 = vmatpush1.msra.mxu0 0.0
    %437 = vmatprep.subr.mxu0 0.0
    %438 = vmatpush1.msra.mxu0 0.0
    %439 = vmatprep.subr.mxu0 0.0
    %440 = vmatpush1.msra.mxu0 0.0
    %441 = vmatprep.subr.mxu0 0.0
    %442 = vmatpush1.msra.mxu0 0.0
    %443 = vmatprep.subr.mxu0 0.0
    %444 = vmatpush1.msra.mxu0 0.0
    %445 = vmatprep.subr.mxu0 0.0
    %446 = vmatpush1.msra.mxu0 0.0
    %447 = vmatprep.subr.mxu0 0.0
    %448 = vmatpush1.msra.mxu0 0.0
    %449 = vmatprep.subr.mxu0 0.0
    %450 = vmatpush1.msra.mxu0 0.0
    %451 = vmatprep.subr.mxu0 0.0
    %452 = vmatpush1.msra.mxu0 0.0
    %453 = vmatprep.subr.mxu0 0.0
    %454 = vmatpush1.msra.mxu0 0.0
    %455 = vmatprep.subr.mxu0 0.0
    %456 = vmatpush1.msra.mxu0 0.0
    %457 = vmatprep.subr.mxu0 0.0
    %458 = vmatpush1.msra.mxu0 0.0
    %459 = vmatprep.subr.mxu0 0.0
    %460 = vmatpush1.msra.mxu0 0.0
    %461 = vmatprep.subr.mxu0 0.0
    %462 = vmatpush1.msra.mxu0 0.0
    %463 = vmatprep.subr.mxu0 0.0
    %464 = vmatpush1.msra.mxu0 0.0
    %465 = vmatprep.subr.mxu0 0.0
    %466 = vmatpush1.msra.mxu0 0.0
    %467 = vmatprep.subr.mxu0 0.0
    %468 = vmatpush1.msra.mxu0 0.0
    %469 = vmatprep.subr.mxu0 0.0
    %470 = vmatpush1.msra.mxu0 0.0
    %471 = vmatprep.subr.mxu0 0.0
    %472 = vmatpush1.msra.mxu0 0.0
    %473 = vmatprep.subr.mxu0 0.0
    %474 = vmatpush1.msra.mxu0 0.0
    %475 = vmatprep.subr.mxu0 0.0
    %476 = vmatpush1.msra.mxu0 0.0
    %477 = vmatprep.mubr.f32.mxu0 0.0
    %478 = vmatmul.mubr.f32.gmra.mrb[0].mxu0 %v411
    %v479 = vpop.f32.mrb[0].mxu0
    %v480 = vadd.f32 %v403, %v479
    %v481 = vpop.f32.mrb[0].mxu0
    %v482 = vadd.f32 %v407, %v481
    %483 = vdwg.mxu0
    %v486 = vcombine.low %v480, %v482
    %v488 = vunpack.c.l.s4 1983009808
    %v489 = vunpack.c.0.s8 %v488
    %v490 = vlaneseq
    %v491 = vshrl.u32 %v490, 7
    %v492 = vsub.s32 %v489, %v491
    %v493 = vrot.slane %v486, %v492
    %s495 = scalar_lea.vmem [#allocation2], 12
    %496 = vst [vmem:[%s495] sm:$0xf] %v493
    %s497 = scalar_lea.vmem %s0, 8
    %v498 = vld [vmem:[%s497] sm:$0x3]
    %v499 = vld [vmem:[%s2] sm:$0xff]
    %v500 = vld [vmem:[%s2 + $0x8] sm:$0xff]
    %v501 = vld [vmem:[%s2 + $0x10] sm:$0xff]
    %v502 = vld [vmem:[%s2 + $0x18] sm:$0xff]
    %v503 = vld [vmem:[%s3] sm:$0x3]
    %v505 = vlaneseq
    %v506 = vshrl.u32 %v505, 7
    %v507 = vsub.s32 0, %v506
    %v508 = vrot.slane %v503, %v507
    %v509 = vlaneseq
    %v510 = vshrl.u32 %v509, 7
    %v511 = vsub.s32 1, %v510
    %v512 = vrot.slane %v503, %v511
    %v516 = vsel %vm95, %v498, 0
    %518 = vmatprep.subr.mxu0 %v500
    %519 = vmatpush1.msra.mxu0 %v499
    %520 = vmatprep.subr.mxu0 %v502
    %521 = vmatpush1.msra.mxu0 %v501
    %522 = vmatprep.subr.mxu0 0.0
    %523 = vmatpush1.msra.mxu0 0.0
    %524 = vmatprep.subr.mxu0 0.0
    %525 = vmatpush1.msra.mxu0 0.0
    %526 = vmatprep.subr.mxu0 0.0
    %527 = vmatpush1.msra.mxu0 0.0
    %528 = vmatprep.subr.mxu0 0.0
    %529 = vmatpush1.msra.mxu0 0.0
    %530 = vmatprep.subr.mxu0 0.0
    %531 = vmatpush1.msra.mxu0 0.0
    %532 = vmatprep.subr.mxu0 0.0
    %533 = vmatpush1.msra.mxu0 0.0
    %534 = vmatprep.subr.mxu0 0.0
    %535 = vmatpush1.msra.mxu0 0.0
    %536 = vmatprep.subr.mxu0 0.0
    %537 = vmatpush1.msra.mxu0 0.0
    %538 = vmatprep.subr.mxu0 0.0
    %539 = vmatpush1.msra.mxu0 0.0
    %540 = vmatprep.subr.mxu0 0.0
    %541 = vmatpush1.msra.mxu0 0.0
    %542 = vmatprep.subr.mxu0 0.0
    %543 = vmatpush1.msra.mxu0 0.0
    %544 = vmatprep.subr.mxu0 0.0
    %545 = vmatpush1.msra.mxu0 0.0
    %546 = vmatprep.subr.mxu0 0.0
    %547 = vmatpush1.msra.mxu0 0.0
    %548 = vmatprep.subr.mxu0 0.0
    %549 = vmatpush1.msra.mxu0 0.0
    %550 = vmatprep.subr.mxu0 0.0
    %551 = vmatpush1.msra.mxu0 0.0
    %552 = vmatprep.subr.mxu0 0.0
    %553 = vmatpush1.msra.mxu0 0.0
    %554 = vmatprep.subr.mxu0 0.0
    %555 = vmatpush1.msra.mxu0 0.0
    %556 = vmatprep.subr.mxu0 0.0
    %557 = vmatpush1.msra.mxu0 0.0
    %558 = vmatprep.subr.mxu0 0.0
    %559 = vmatpush1.msra.mxu0 0.0
    %560 = vmatprep.subr.mxu0 0.0
    %561 = vmatpush1.msra.mxu0 0.0
    %562 = vmatprep.subr.mxu0 0.0
    %563 = vmatpush1.msra.mxu0 0.0
    %564 = vmatprep.subr.mxu0 0.0
    %565 = vmatpush1.msra.mxu0 0.0
    %566 = vmatprep.subr.mxu0 0.0
    %567 = vmatpush1.msra.mxu0 0.0
    %568 = vmatprep.subr.mxu0 0.0
    %569 = vmatpush1.msra.mxu0 0.0
    %570 = vmatprep.subr.mxu0 0.0
    %571 = vmatpush1.msra.mxu0 0.0
    %572 = vmatprep.subr.mxu0 0.0
    %573 = vmatpush1.msra.mxu0 0.0
    %574 = vmatprep.subr.mxu0 0.0
    %575 = vmatpush1.msra.mxu0 0.0
    %576 = vmatprep.subr.mxu0 0.0
    %577 = vmatpush1.msra.mxu0 0.0
    %578 = vmatprep.subr.mxu0 0.0
    %579 = vmatpush1.msra.mxu0 0.0
    %580 = vmatprep.subr.mxu0 0.0
    %581 = vmatpush1.msra.mxu0 0.0
    %582 = vmatprep.mubr.f32.mxu0 0.0
    %583 = vmatmul.mubr.f32.gmra.mrb[0].mxu0 %v516
    %v584 = vpop.f32.mrb[0].mxu0
    %v585 = vadd.f32 %v508, %v584
    %v586 = vpop.f32.mrb[0].mxu0
    %v587 = vadd.f32 %v512, %v586
    %588 = vdwg.mxu0
    %v591 = vcombine.low %v585, %v587
    %v593 = vunpack.c.l.s4 1983009808
    %v594 = vunpack.c.0.s8 %v593
    %v595 = vlaneseq
    %v596 = vshrl.u32 %v595, 7
    %v597 = vsub.s32 %v594, %v596
    %v598 = vrot.slane %v591, %v597
    %s600 = scalar_lea.vmem [#allocation2], 16
    %601 = vst [vmem:[%s600] sm:$0xf] %v598
    %s602 = scalar_lea.vmem %s0, 10
    %v603 = vld [vmem:[%s602] sm:$0x3]
    %v604 = vld [vmem:[%s2] sm:$0xff]
    %v605 = vld [vmem:[%s2 + $0x8] sm:$0xff]
    %v606 = vld [vmem:[%s2 + $0x10] sm:$0xff]
    %v607 = vld [vmem:[%s2 + $0x18] sm:$0xff]
    %v608 = vld [vmem:[%s3] sm:$0x3]
    %v610 = vlaneseq
    %v611 = vshrl.u32 %v610, 7
    %v612 = vsub.s32 0, %v611
    %v613 = vrot.slane %v608, %v612
    %v614 = vlaneseq
    %v615 = vshrl.u32 %v614, 7
    %v616 = vsub.s32 1, %v615
    %v617 = vrot.slane %v608, %v616
    %v621 = vsel %vm95, %v603, 0
    %623 = vmatprep.subr.mxu0 %v605
    %624 = vmatpush1.msra.mxu0 %v604
    %625 = vmatprep.subr.mxu0 %v607
    %626 = vmatpush1.msra.mxu0 %v606
    %627 = vmatprep.subr.mxu0 0.0
    %628 = vmatpush1.msra.mxu0 0.0
    %629 = vmatprep.subr.mxu0 0.0
    %630 = vmatpush1.msra.mxu0 0.0
    %631 = vmatprep.subr.mxu0 0.0
    %632 = vmatpush1.msra.mxu0 0.0
    %633 = vmatprep.subr.mxu0 0.0
    %634 = vmatpush1.msra.mxu0 0.0
    %635 = vmatprep.subr.mxu0 0.0
    %636 = vmatpush1.msra.mxu0 0.0
    %637 = vmatprep.subr.mxu0 0.0
    %638 = vmatpush1.msra.mxu0 0.0
    %639 = vmatprep.subr.mxu0 0.0
    %640 = vmatpush1.msra.mxu0 0.0
    %641 = vmatprep.subr.mxu0 0.0
    %642 = vmatpush1.msra.mxu0 0.0
    %643 = vmatprep.subr.mxu0 0.0
    %644 = vmatpush1.msra.mxu0 0.0
    %645 = vmatprep.subr.mxu0 0.0
    %646 = vmatpush1.msra.mxu0 0.0
    %647 = vmatprep.subr.mxu0 0.0
    %648 = vmatpush1.msra.mxu0 0.0
    %649 = vmatprep.subr.mxu0 0.0
    %650 = vmatpush1.msra.mxu0 0.0
    %651 = vmatprep.subr.mxu0 0.0
    %652 = vmatpush1.msra.mxu0 0.0
    %653 = vmatprep.subr.mxu0 0.0
    %654 = vmatpush1.msra.mxu0 0.0
    %655 = vmatprep.subr.mxu0 0.0
    %656 = vmatpush1.msra.mxu0 0.0
    %657 = vmatprep.subr.mxu0 0.0
    %658 = vmatpush1.msra.mxu0 0.0
    %659 = vmatprep.subr.mxu0 0.0
    %660 = vmatpush1.msra.mxu0 0.0
    %661 = vmatprep.subr.mxu0 0.0
    %662 = vmatpush1.msra.mxu0 0.0
    %663 = vmatprep.subr.mxu0 0.0
    %664 = vmatpush1.msra.mxu0 0.0
    %665 = vmatprep.subr.mxu0 0.0
    %666 = vmatpush1.msra.mxu0 0.0
    %667 = vmatprep.subr.mxu0 0.0
    %668 = vmatpush1.msra.mxu0 0.0
    %669 = vmatprep.subr.mxu0 0.0
    %670 = vmatpush1.msra.mxu0 0.0
    %671 = vmatprep.subr.mxu0 0.0
    %672 = vmatpush1.msra.mxu0 0.0
    %673 = vmatprep.subr.mxu0 0.0
    %674 = vmatpush1.msra.mxu0 0.0
    %675 = vmatprep.subr.mxu0 0.0
    %676 = vmatpush1.msra.mxu0 0.0
    %677 = vmatprep.subr.mxu0 0.0
    %678 = vmatpush1.msra.mxu0 0.0
    %679 = vmatprep.subr.mxu0 0.0
    %680 = vmatpush1.msra.mxu0 0.0
    %681 = vmatprep.subr.mxu0 0.0
    %682 = vmatpush1.msra.mxu0 0.0
    %683 = vmatprep.subr.mxu0 0.0
    %684 = vmatpush1.msra.mxu0 0.0
    %685 = vmatprep.subr.mxu0 0.0
    %686 = vmatpush1.msra.mxu0 0.0
    %687 = vmatprep.mubr.f32.mxu0 0.0
    %688 = vmatmul.mubr.f32.gmra.mrb[0].mxu0 %v621
    %v689 = vpop.f32.mrb[0].mxu0
    %v690 = vadd.f32 %v613, %v689
    %v691 = vpop.f32.mrb[0].mxu0
    %v692 = vadd.f32 %v617, %v691
    %693 = vdwg.mxu0
    %v696 = vcombine.low %v690, %v692
    %v698 = vunpack.c.l.s4 1983009808
    %v699 = vunpack.c.0.s8 %v698
    %v700 = vlaneseq
    %v701 = vshrl.u32 %v700, 7
    %v702 = vsub.s32 %v699, %v701
    %v703 = vrot.slane %v696, %v702
    %s705 = scalar_lea.vmem [#allocation2], 20
    %706 = vst [vmem:[%s705] sm:$0xf] %v703
    %s707 = scalar_lea.vmem %s0, 12
    %v708 = vld [vmem:[%s707] sm:$0x3]
    %v709 = vld [vmem:[%s2] sm:$0xff]
    %v710 = vld [vmem:[%s2 + $0x8] sm:$0xff]
    %v711 = vld [vmem:[%s2 + $0x10] sm:$0xff]
    %v712 = vld [vmem:[%s2 + $0x18] sm:$0xff]
    %v713 = vld [vmem:[%s3] sm:$0x3]
    %v715 = vlaneseq
    %v716 = vshrl.u32 %v715, 7
    %v717 = vsub.s32 0, %v716
    %v718 = vrot.slane %v713, %v717
    %v719 = vlaneseq
    %v720 = vshrl.u32 %v719, 7
    %v721 = vsub.s32 1, %v720
    %v722 = vrot.slane %v713, %v721
    %v726 = vsel %vm95, %v708, 0
    %728 = vmatprep.subr.mxu0 %v710
    %729 = vmatpush1.msra.mxu0 %v709
    %730 = vmatprep.subr.mxu0 %v712
    %731 = vmatpush1.msra.mxu0 %v711
    %732 = vmatprep.subr.mxu0 0.0
    %733 = vmatpush1.msra.mxu0 0.0
    %734 = vmatprep.subr.mxu0 0.0
    %735 = vmatpush1.msra.mxu0 0.0
    %736 = vmatprep.subr.mxu0 0.0
    %737 = vmatpush1.msra.mxu0 0.0
    %738 = vmatprep.subr.mxu0 0.0
    %739 = vmatpush1.msra.mxu0 0.0
    %740 = vmatprep.subr.mxu0 0.0
    %741 = vmatpush1.msra.mxu0 0.0
    %742 = vmatprep.subr.mxu0 0.0
    %743 = vmatpush1.msra.mxu0 0.0
    %744 = vmatprep.subr.mxu0 0.0
    %745 = vmatpush1.msra.mxu0 0.0
    %746 = vmatprep.subr.mxu0 0.0
    %747 = vmatpush1.msra.mxu0 0.0
    %748 = vmatprep.subr.mxu0 0.0
    %749 = vmatpush1.msra.mxu0 0.0
    %750 = vmatprep.subr.mxu0 0.0
    %751 = vmatpush1.msra.mxu0 0.0
    %752 = vmatprep.subr.mxu0 0.0
    %753 = vmatpush1.msra.mxu0 0.0
    %754 = vmatprep.subr.mxu0 0.0
    %755 = vmatpush1.msra.mxu0 0.0
    %756 = vmatprep.subr.mxu0 0.0
    %757 = vmatpush1.msra.mxu0 0.0
    %758 = vmatprep.subr.mxu0 0.0
    %759 = vmatpush1.msra.mxu0 0.0
    %760 = vmatprep.subr.mxu0 0.0
    %761 = vmatpush1.msra.mxu0 0.0
    %762 = vmatprep.subr.mxu0 0.0
    %763 = vmatpush1.msra.mxu0 0.0
    %764 = vmatprep.subr.mxu0 0.0
    %765 = vmatpush1.msra.mxu0 0.0
    %766 = vmatprep.subr.mxu0 0.0
    %767 = vmatpush1.msra.mxu0 0.0
    %768 = vmatprep.subr.mxu0 0.0
    %769 = vmatpush1.msra.mxu0 0.0
    %770 = vmatprep.subr.mxu0 0.0
    %771 = vmatpush1.msra.mxu0 0.0
    %772 = vmatprep.subr.mxu0 0.0
    %773 = vmatpush1.msra.mxu0 0.0
    %774 = vmatprep.subr.mxu0 0.0
    %775 = vmatpush1.msra.mxu0 0.0
    %776 = vmatprep.subr.mxu0 0.0
    %777 = vmatpush1.msra.mxu0 0.0
    %778 = vmatprep.subr.mxu0 0.0
    %779 = vmatpush1.msra.mxu0 0.0
    %780 = vmatprep.subr.mxu0 0.0
    %781 = vmatpush1.msra.mxu0 0.0
    %782 = vmatprep.subr.mxu0 0.0
    %783 = vmatpush1.msra.mxu0 0.0
    %784 = vmatprep.subr.mxu0 0.0
    %785 = vmatpush1.msra.mxu0 0.0
    %786 = vmatprep.subr.mxu0 0.0
    %787 = vmatpush1.msra.mxu0 0.0
    %788 = vmatprep.subr.mxu0 0.0
    %789 = vmatpush1.msra.mxu0 0.0
    %790 = vmatprep.subr.mxu0 0.0
    %791 = vmatpush1.msra.mxu0 0.0
    %792 = vmatprep.mubr.f32.mxu0 0.0
    %793 = vmatmul.mubr.f32.gmra.mrb[0].mxu0 %v726
    %v794 = vpop.f32.mrb[0].mxu0
    %v795 = vadd.f32 %v718, %v794
    %v796 = vpop.f32.mrb[0].mxu0
    %v797 = vadd.f32 %v722, %v796
    %798 = vdwg.mxu0
    %v801 = vcombine.low %v795, %v797
    %v803 = vunpack.c.l.s4 1983009808
    %v804 = vunpack.c.0.s8 %v803
    %v805 = vlaneseq
    %v806 = vshrl.u32 %v805, 7
    %v807 = vsub.s32 %v804, %v806
    %v808 = vrot.slane %v801, %v807
    %s810 = scalar_lea.vmem [#allocation2], 24
    %811 = vst [vmem:[%s810] sm:$0xf] %v808
    %s812 = scalar_lea.vmem %s0, 14
    %v813 = vld [vmem:[%s812] sm:$0x3]
    %v814 = vld [vmem:[%s2] sm:$0xff]
    %v815 = vld [vmem:[%s2 + $0x8] sm:$0xff]
    %v816 = vld [vmem:[%s2 + $0x10] sm:$0xff]
    %v817 = vld [vmem:[%s2 + $0x18] sm:$0xff]
    %v818 = vld [vmem:[%s3] sm:$0x3]
    %v820 = vlaneseq
    %v821 = vshrl.u32 %v820, 7
    %v822 = vsub.s32 0, %v821
    %v823 = vrot.slane %v818, %v822
    %v824 = vlaneseq
    %v825 = vshrl.u32 %v824, 7
    %v826 = vsub.s32 1, %v825
    %v827 = vrot.slane %v818, %v826
    %v831 = vsel %vm95, %v813, 0
    %833 = vmatprep.subr.mxu0 %v815
    %834 = vmatpush1.msra.mxu0 %v814
    %835 = vmatprep.subr.mxu0 %v817
    %836 = vmatpush1.msra.mxu0 %v816
    %837 = vmatprep.subr.mxu0 0.0
    %838 = vmatpush1.msra.mxu0 0.0
    %839 = vmatprep.subr.mxu0 0.0
    %840 = vmatpush1.msra.mxu0 0.0
    %841 = vmatprep.subr.mxu0 0.0
    %842 = vmatpush1.msra.mxu0 0.0
    %843 = vmatprep.subr.mxu0 0.0
    %844 = vmatpush1.msra.mxu0 0.0
    %845 = vmatprep.subr.mxu0 0.0
    %846 = vmatpush1.msra.mxu0 0.0
    %847 = vmatprep.subr.mxu0 0.0
    %848 = vmatpush1.msra.mxu0 0.0
    %849 = vmatprep.subr.mxu0 0.0
    %850 = vmatpush1.msra.mxu0 0.0
    %851 = vmatprep.subr.mxu0 0.0
    %852 = vmatpush1.msra.mxu0 0.0
    %853 = vmatprep.subr.mxu0 0.0
    %854 = vmatpush1.msra.mxu0 0.0
    %855 = vmatprep.subr.mxu0 0.0
    %856 = vmatpush1.msra.mxu0 0.0
    %857 = vmatprep.subr.mxu0 0.0
    %858 = vmatpush1.msra.mxu0 0.0
    %859 = vmatprep.subr.mxu0 0.0
    %860 = vmatpush1.msra.mxu0 0.0
    %861 = vmatprep.subr.mxu0 0.0
    %862 = vmatpush1.msra.mxu0 0.0
    %863 = vmatprep.subr.mxu0 0.0
    %864 = vmatpush1.msra.mxu0 0.0
    %865 = vmatprep.subr.mxu0 0.0
    %866 = vmatpush1.msra.mxu0 0.0
    %867 = vmatprep.subr.mxu0 0.0
    %868 = vmatpush1.msra.mxu0 0.0
    %869 = vmatprep.subr.mxu0 0.0
    %870 = vmatpush1.msra.mxu0 0.0
    %871 = vmatprep.subr.mxu0 0.0
    %872 = vmatpush1.msra.mxu0 0.0
    %873 = vmatprep.subr.mxu0 0.0
    %874 = vmatpush1.msra.mxu0 0.0
    %875 = vmatprep.subr.mxu0 0.0
    %876 = vmatpush1.msra.mxu0 0.0
    %877 = vmatprep.subr.mxu0 0.0
    %878 = vmatpush1.msra.mxu0 0.0
    %879 = vmatprep.subr.mxu0 0.0
    %880 = vmatpush1.msra.mxu0 0.0
    %881 = vmatprep.subr.mxu0 0.0
    %882 = vmatpush1.msra.mxu0 0.0
    %883 = vmatprep.subr.mxu0 0.0
    %884 = vmatpush1.msra.mxu0 0.0
    %885 = vmatprep.subr.mxu0 0.0
    %886 = vmatpush1.msra.mxu0 0.0
    %887 = vmatprep.subr.mxu0 0.0
    %888 = vmatpush1.msra.mxu0 0.0
    %889 = vmatprep.subr.mxu0 0.0
    %890 = vmatpush1.msra.mxu0 0.0
    %891 = vmatprep.subr.mxu0 0.0
    %892 = vmatpush1.msra.mxu0 0.0
    %893 = vmatprep.subr.mxu0 0.0
    %894 = vmatpush1.msra.mxu0 0.0
    %895 = vmatprep.subr.mxu0 0.0
    %896 = vmatpush1.msra.mxu0 0.0
    %897 = vmatprep.mubr.f32.mxu0 0.0
    %898 = vmatmul.mubr.f32.gmra.mrb[0].mxu0 %v831
    %v899 = vpop.f32.mrb[0].mxu0
    %v900 = vadd.f32 %v823, %v899
    %v901 = vpop.f32.mrb[0].mxu0
    %v902 = vadd.f32 %v827, %v901
    %903 = vdwg.mxu0
    %v906 = vcombine.low %v900, %v902
    %v908 = vunpack.c.l.s4 1983009808
    %v909 = vunpack.c.0.s8 %v908
    %v910 = vlaneseq
    %v911 = vshrl.u32 %v910, 7
    %v912 = vsub.s32 %v909, %v911
    %v913 = vrot.slane %v906, %v912
    %s915 = scalar_lea.vmem [#allocation2], 28
    %916 = vst [vmem:[%s915] sm:$0xf] %v913
    %v917 = vld [vmem:[#allocation5] sm:$0xff]
    %v918 = vld [vmem:[#allocation5 + $0x8] sm:$0xff]
    %v919 = vld [vmem:[#allocation5 + $0x10] sm:$0xff]
    %v920 = vld [vmem:[#allocation5 + $0x18] sm:$0xff]
    %v921 = vld [vmem:[#allocation5 + $0x20] sm:$0xff]
    %v922 = vld [vmem:[#allocation5 + $0x28] sm:$0xff]
    %v923 = vld [vmem:[#allocation5 + $0x30] sm:$0xff]
    %v924 = vld [vmem:[#allocation5 + $0x38] sm:$0xff]
    %v925 = vld [vmem:[#allocation5 + $0x40] sm:$0xff]
    %v926 = vld [vmem:[#allocation5 + $0x48] sm:$0xff]
    %v927 = vld [vmem:[#allocation5 + $0x50] sm:$0xff]
    %v928 = vld [vmem:[#allocation5 + $0x58] sm:$0xff]
    %v929 = vld [vmem:[#allocation5 + $0x60] sm:$0xff]
    %v930 = vld [vmem:[#allocation5 + $0x68] sm:$0xff]
    %v931 = vld [vmem:[#allocation5 + $0x70] sm:$0xff]
    %v932 = vld [vmem:[#allocation5 + $0x78] sm:$0xff]
    %vm933 = vcmask 523264
    %v935 = vsel %vm933, 0.0, 0
    %937 = vmatprep.subr.mxu0 %v918
    %938 = vmatpush1.msra.mxu0 %v917
    %939 = vmatprep.subr.mxu0 %v920
    %940 = vmatpush1.msra.mxu0 %v919
    %941 = vmatprep.subr.mxu0 %v922
    %942 = vmatpush1.msra.mxu0 %v921
    %943 = vmatprep.subr.mxu0 %v924
    %944 = vmatpush1.msra.mxu0 %v923
    %945 = vmatprep.subr.mxu0 %v926
    %946 = vmatpush1.msra.mxu0 %v925
    %947 = vmatprep.subr.mxu0 %v928
    %948 = vmatpush1.msra.mxu0 %v927
    %949 = vmatprep.subr.mxu0 %v930
    %950 = vmatpush1.msra.mxu0 %v929
    %951 = vmatprep.subr.mxu0 %v932
    %952 = vmatpush1.msra.mxu0 %v931
    %953 = vmatprep.subr.mxu0 0.0
    %954 = vmatpush1.msra.mxu0 0.0
    %955 = vmatprep.subr.mxu0 0.0
    %956 = vmatpush1.msra.mxu0 0.0
    %957 = vmatprep.subr.mxu0 0.0
    %958 = vmatpush1.msra.mxu0 0.0
    %959 = vmatprep.subr.mxu0 0.0
    %960 = vmatpush1.msra.mxu0 0.0
    %961 = vmatprep.subr.mxu0 0.0
    %962 = vmatpush1.msra.mxu0 0.0
    %963 = vmatprep.subr.mxu0 0.0
    %964 = vmatpush1.msra.mxu0 0.0
    %965 = vmatprep.subr.mxu0 0.0
    %966 = vmatpush1.msra.mxu0 0.0
    %967 = vmatprep.subr.mxu0 0.0
    %968 = vmatpush1.msra.mxu0 0.0
    %969 = vmatprep.subr.mxu0 0.0
    %970 = vmatpush1.msra.mxu0 0.0
    %971 = vmatprep.subr.mxu0 0.0
    %972 = vmatpush1.msra.mxu0 0.0
    %973 = vmatprep.subr.mxu0 0.0
    %974 = vmatpush1.msra.mxu0 0.0
    %975 = vmatprep.subr.mxu0 0.0
    %976 = vmatpush1.msra.mxu0 0.0
    %977 = vmatprep.subr.mxu0 0.0
    %978 = vmatpush1.msra.mxu0 0.0
    %979 = vmatprep.subr.mxu0 0.0
    %980 = vmatpush1.msra.mxu0 0.0
    %981 = vmatprep.subr.mxu0 0.0
    %982 = vmatpush1.msra.mxu0 0.0
    %983 = vmatprep.subr.mxu0 0.0
    %984 = vmatpush1.msra.mxu0 0.0
    %985 = vmatprep.subr.mxu0 0.0
    %986 = vmatpush1.msra.mxu0 0.0
    %987 = vmatprep.subr.mxu0 0.0
    %988 = vmatpush1.msra.mxu0 0.0
    %989 = vmatprep.subr.mxu0 0.0
    %990 = vmatpush1.msra.mxu0 0.0
    %991 = vmatprep.subr.mxu0 0.0
    %992 = vmatpush1.msra.mxu0 0.0
    %993 = vmatprep.subr.mxu0 0.0
    %994 = vmatpush1.msra.mxu0 0.0
    %995 = vmatprep.subr.mxu0 0.0
    %996 = vmatpush1.msra.mxu0 0.0
    %997 = vmatprep.subr.mxu0 0.0
    %998 = vmatpush1.msra.mxu0 0.0
    %999 = vmatprep.subr.mxu0 0.0
    %1000 = vmatpush1.msra.mxu0 0.0
    %1001 = vmatprep.mubr.f32.mxu0 0.0
    %1002 = vmatmul.mubr.f32.gmra.mrb[0].mxu0 %v935
    %v1003 = vpop.f32.mrb[0].mxu0
    %v1004 = vadd.f32 0.0, %v1003
    %v1005 = vpop.f32.mrb[0].mxu0
    %v1006 = vadd.f32 0.0, %v1005
    %1007 = vdwg.mxu0
    %v1008 = vld [vmem:[#allocation2] sm:$0x3]
    %v1009 = vadd.f32 %v1008, %v1004
    %v1010 = vld [vmem:[%s915 + $0x2] sm:$0x3]
    %v1011 = vadd.f32 %v1010, %v1006
    %v1012 = vxor.u32 %v1009, 2147483648
    %v1013 = vmul.f32 %v1012, 1.442695
    %v1014 = vpow.pop %v1013
    %v1015 = vadd.f32 %v1014, 1.0
    %v1016 = vrcp.pop %v1015
    %v1017 = vmul.f32 1.0, %v1016
    %v1018 = vtanh.pop %v1009
    %v1019 = vmul.f32 %v1017, 0.0
    %1021 = vrot.lane.b32.xlu0 %v1018, 64
    %v1022 = vpop.permute.xlu0 %1021
    %v1024 = vmul.f32 %v1017, %v1022
    %1026 = vrot.lane.b32.xlu0 %v1024, 32
    %v1027 = vpop.permute.xlu0 %1026
    %v1029 = vadd.f32 %v1019, %v1027
    %v1030 = vtanh.pop %v1029
    %1032 = vrot.lane.b32.xlu0 %v1030, 64
    %v1033 = vpop.permute.xlu0 %1032
    %v1035 = vmul.f32 %v1017, %v1033
    %v1036 = vxor.u32 %v1011, 2147483648
    %v1037 = vmul.f32 %v1036, 1.442695
    %v1038 = vpow.pop %v1037
    %v1039 = vadd.f32 %v1038, 1.0
    %v1040 = vrcp.pop %v1039
    %v1041 = vmul.f32 1.0, %v1040
    %v1042 = vtanh.pop %v1011
    %v1043 = vmul.f32 %v1041, 0.0
    %1045 = vrot.lane.b32.xlu0 %v1042, 64
    %v1046 = vpop.permute.xlu0 %1045
    %v1048 = vmul.f32 %v1041, %v1046
    %1050 = vrot.lane.b32.xlu0 %v1048, 32
    %v1051 = vpop.permute.xlu0 %1050
    %v1053 = vadd.f32 %v1043, %v1051
    %v1054 = vtanh.pop %v1053
    %1056 = vrot.lane.b32.xlu0 %v1054, 64
    %v1057 = vpop.permute.xlu0 %1056
    %v1059 = vmul.f32 %v1041, %v1057
    %v1060 = vld [vmem:[%s1] sm:$0x3]
    %vm1061 = vcmp.gt.f32.partialorder %v1060, 0.0
    %s1062 = scalar_lea.vmem %s1, 14
    %v1063 = vld [vmem:[%s1062] sm:$0x3]
    %vm1064 = vcmp.gt.f32.partialorder %v1063, 0.0
    %v1065 = vsel %vm1061, 1, 0
    %1066 = vset.pattern.permute.xlu0 0
    %1067 = vperm.xlu0 %1066, %v1065
    %v1068 = vpop.permute.xlu0 %1067
    %vm1069 = vcmp.eq.s32.totalorder %v1068, 1
    %v1072 = vunpack.c.l.s4 1983009808
    %v1073 = vunpack.c.0.s8 %v1072
    %v1074 = vlaneseq
    %v1075 = vshrl.u32 %v1074, 7
    %v1076 = vsub.s32 %v1073, %v1075
    %v1077 = vrot.slane %v1035, %v1076
    %1078 = vrot.lane.b32.xlu0 %v1077, 32
    %v1079 = vpop.permute.xlu0 %1078
    %v1081 = vsel %vm1069, %v1079, 0.0
    %v1084 = vunpack.c.l.s4 1983009808
    %v1085 = vunpack.c.0.s8 %v1084
    %v1086 = vlaneseq
    %v1087 = vshrl.u32 %v1086, 7
    %v1088 = vsub.s32 %v1085, %v1087
    %v1089 = vrot.slane %v1029, %v1088
    %1090 = vrot.lane.b32.xlu0 %v1089, 96
    %v1091 = vpop.permute.xlu0 %1090
    %v1093 = vsel %vm1069, %v1091, 0.0
    %v1094 = vsel %vm1064, 1, 0
    %1095 = vset.pattern.permute.xlu0 0
    %1096 = vperm.xlu0 %1095, %v1094
    %v1097 = vpop.permute.xlu0 %1096
    %vm1098 = vcmp.eq.s32.totalorder %v1097, 1
    %v1101 = vunpack.c.l.s4 1983009808
    %v1102 = vunpack.c.0.s8 %v1101
    %v1103 = vlaneseq
    %v1104 = vshrl.u32 %v1103, 7
    %v1105 = vsub.s32 %v1102, %v1104
    %v1106 = vrot.slane %v1059, %v1105
    %1107 = vrot.lane.b32.xlu0 %v1106, 32
    %v1108 = vpop.permute.xlu0 %1107
    %v1110 = vsel %vm1098, %v1108, 0.0
    %v1113 = vunpack.c.l.s4 1983009808
    %v1114 = vunpack.c.0.s8 %v1113
    %v1115 = vlaneseq
    %v1116 = vshrl.u32 %v1115, 7
    %v1117 = vsub.s32 %v1114, %v1116
    %v1118 = vrot.slane %v1053, %v1117
    %1119 = vrot.lane.b32.xlu0 %v1118, 96
    %v1120 = vpop.permute.xlu0 %1119
    %v1122 = vsel %vm1098, %v1120, 0.0
    %vm1123 = vcmask 254976
    %1124 = vst.msk [vmem:[#allocation3] sm:$0x3] %vm1123, %v1081
    %1126 = vrot.lane.b32.xlu0 %v1110, 32
    %v1127 = vpop.permute.xlu0 %1126
    %s1129 = scalar_lea.vmem [#allocation3], 14
    %vm1130 = vcmask 517376
    %1131 = vst.msk [vmem:[%s1129] sm:$0x3] %vm1130, %v1127
    %vm1132 = vcmask 261120
    %v1133 = vsel %vm1132, %v1081, %v1127
    %1135 = vrot.lane.b32.xlu0 %v1122, 32
    %v1136 = vpop.permute.xlu0 %1135
    %v1138 = vsel %vm1132, %v1093, %v1136
    %v1139 = vld [vmem:[#allocation5] sm:$0xff]
    %v1140 = vld [vmem:[#allocation5 + $0x8] sm:$0xff]
    %v1141 = vld [vmem:[#allocation5 + $0x10] sm:$0xff]
    %v1142 = vld [vmem:[#allocation5 + $0x18] sm:$0xff]
    %v1143 = vld [vmem:[#allocation5 + $0x20] sm:$0xff]
    %v1144 = vld [vmem:[#allocation5 + $0x28] sm:$0xff]
    %v1145 = vld [vmem:[#allocation5 + $0x30] sm:$0xff]
    %v1146 = vld [vmem:[#allocation5 + $0x38] sm:$0xff]
    %v1147 = vld [vmem:[#allocation5 + $0x40] sm:$0xff]
    %v1148 = vld [vmem:[#allocation5 + $0x48] sm:$0xff]
    %v1149 = vld [vmem:[#allocation5 + $0x50] sm:$0xff]
    %v1150 = vld [vmem:[#allocation5 + $0x58] sm:$0xff]
    %v1151 = vld [vmem:[#allocation5 + $0x60] sm:$0xff]
    %v1152 = vld [vmem:[#allocation5 + $0x68] sm:$0xff]
    %v1153 = vld [vmem:[#allocation5 + $0x70] sm:$0xff]
    %v1154 = vld [vmem:[#allocation5 + $0x78] sm:$0xff]
    %v1156 = vsel %vm933, %v1133, 0
    %1158 = vmatprep.subr.mxu0 %v1140
    %1159 = vmatpush1.msra.mxu0 %v1139
    %1160 = vmatprep.subr.mxu0 %v1142
    %1161 = vmatpush1.msra.mxu0 %v1141
    %1162 = vmatprep.subr.mxu0 %v1144
    %1163 = vmatpush1.msra.mxu0 %v1143
    %1164 = vmatprep.subr.mxu0 %v1146
    %1165 = vmatpush1.msra.mxu0 %v1145
    %1166 = vmatprep.subr.mxu0 %v1148
    %1167 = vmatpush1.msra.mxu0 %v1147
    %1168 = vmatprep.subr.mxu0 %v1150
    %1169 = vmatpush1.msra.mxu0 %v1149
    %1170 = vmatprep.subr.mxu0 %v1152
    %1171 = vmatpush1.msra.mxu0 %v1151
    %1172 = vmatprep.subr.mxu0 %v1154
    %1173 = vmatpush1.msra.mxu0 %v1153
    %1174 = vmatprep.subr.mxu0 0.0
    %1175 = vmatpush1.msra.mxu0 0.0
    %1176 = vmatprep.subr.mxu0 0.0
    %1177 = vmatpush1.msra.mxu0 0.0
    %1178 = vmatprep.subr.mxu0 0.0
    %1179 = vmatpush1.msra.mxu0 0.0
    %1180 = vmatprep.subr.mxu0 0.0
    %1181 = vmatpush1.msra.mxu0 0.0
    %1182 = vmatprep.subr.mxu0 0.0
    %1183 = vmatpush1.msra.mxu0 0.0
    %1184 = vmatprep.subr.mxu0 0.0
    %1185 = vmatpush1.msra.mxu0 0.0
    %1186 = vmatprep.subr.mxu0 0.0
    %1187 = vmatpush1.msra.mxu0 0.0
    %1188 = vmatprep.subr.mxu0 0.0
    %1189 = vmatpush1.msra.mxu0 0.0
    %1190 = vmatprep.subr.mxu0 0.0
    %1191 = vmatpush1.msra.mxu0 0.0
    %1192 = vmatprep.subr.mxu0 0.0
    %1193 = vmatpush1.msra.mxu0 0.0
    %1194 = vmatprep.subr.mxu0 0.0
    %1195 = vmatpush1.msra.mxu0 0.0
    %1196 = vmatprep.subr.mxu0 0.0
    %1197 = vmatpush1.msra.mxu0 0.0
    %1198 = vmatprep.subr.mxu0 0.0
    %1199 = vmatpush1.msra.mxu0 0.0
    %1200 = vmatprep.subr.mxu0 0.0
    %1201 = vmatpush1.msra.mxu0 0.0
    %1202 = vmatprep.subr.mxu0 0.0
    %1203 = vmatpush1.msra.mxu0 0.0
    %1204 = vmatprep.subr.mxu0 0.0
    %1205 = vmatpush1.msra.mxu0 0.0
    %1206 = vmatprep.subr.mxu0 0.0
    %1207 = vmatpush1.msra.mxu0 0.0
    %1208 = vmatprep.subr.mxu0 0.0
    %1209 = vmatpush1.msra.mxu0 0.0
    %1210 = vmatprep.subr.mxu0 0.0
    %1211 = vmatpush1.msra.mxu0 0.0
    %1212 = vmatprep.subr.mxu0 0.0
    %1213 = vmatpush1.msra.mxu0 0.0
    %1214 = vmatprep.subr.mxu0 0.0
    %1215 = vmatpush1.msra.mxu0 0.0
    %1216 = vmatprep.subr.mxu0 0.0
    %1217 = vmatpush1.msra.mxu0 0.0
    %1218 = vmatprep.subr.mxu0 0.0
    %1219 = vmatpush1.msra.mxu0 0.0
    %1220 = vmatprep.subr.mxu0 0.0
    %1221 = vmatpush1.msra.mxu0 0.0
    %1222 = vmatprep.mubr.f32.mxu0 0.0
    %1223 = vmatmul.mubr.f32.gmra.mrb[0].mxu0 %v1156
    %v1224 = vpop.f32.mrb[0].mxu0
    %v1225 = vadd.f32 0.0, %v1224
    %v1226 = vpop.f32.mrb[0].mxu0
    %v1227 = vadd.f32 0.0, %v1226
    %1228 = vdwg.mxu0
    %v1229 = vld [vmem:[%s285] sm:$0x3]
    %v1230 = vadd.f32 %v1229, %v1225
    %v1231 = vld [vmem:[%s810 + $0x2] sm:$0x3]
    %v1232 = vadd.f32 %v1231, %v1227
    %v1233 = vxor.u32 %v1230, 2147483648
    %v1234 = vmul.f32 %v1233, 1.442695
    %v1235 = vpow.pop %v1234
    %v1236 = vadd.f32 %v1235, 1.0
    %v1237 = vrcp.pop %v1236
    %v1238 = vmul.f32 1.0, %v1237
    %v1239 = vtanh.pop %v1230
    %v1242 = vunpack.c.l.s4 1983009808
    %v1243 = vunpack.c.0.s8 %v1242
    %v1244 = vlaneseq
    %v1245 = vshrl.u32 %v1244, 7
    %v1246 = vsub.s32 %v1243, %v1245
    %v1247 = vrot.slane %v1138, %v1246
    %1248 = vrot.lane.b32.xlu0 %v1247, 32
    %v1249 = vpop.permute.xlu0 %1248
    %v1251 = vmul.f32 %v1238, %v1249
    %1253 = vrot.lane.b32.xlu0 %v1239, 64
    %v1254 = vpop.permute.xlu0 %1253
    %v1256 = vmul.f32 %v1238, %v1254
    %1258 = vrot.lane.b32.xlu0 %v1256, 32
    %v1259 = vpop.permute.xlu0 %1258
    %v1261 = vadd.f32 %v1251, %v1259
    %v1262 = vtanh.pop %v1261
    %1264 = vrot.lane.b32.xlu0 %v1262, 64
    %v1265 = vpop.permute.xlu0 %1264
    %v1267 = vmul.f32 %v1238, %v1265
    %v1268 = vxor.u32 %v1232, 2147483648
    %v1269 = vmul.f32 %v1268, 1.442695
    %v1270 = vpow.pop %v1269
    %v1271 = vadd.f32 %v1270, 1.0
    %v1272 = vrcp.pop %v1271
    %v1273 = vmul.f32 1.0, %v1272
    %v1274 = vtanh.pop %v1232
    %v1275 = vmul.f32 %v1273, %v1138
    %1277 = vrot.lane.b32.xlu0 %v1274, 64
    %v1278 = vpop.permute.xlu0 %1277
    %v1280 = vmul.f32 %v1273, %v1278
    %1282 = vrot.lane.b32.xlu0 %v1280, 32
    %v1283 = vpop.permute.xlu0 %1282
    %v1285 = vadd.f32 %v1275, %v1283
    %v1286 = vtanh.pop %v1285
    %1288 = vrot.lane.b32.xlu0 %v1286, 64
    %v1289 = vpop.permute.xlu0 %1288
    %v1291 = vmul.f32 %v1273, %v1289
    %s1292 = scalar_lea.vmem %s1, 2
    %v1293 = vld [vmem:[%s1292] sm:$0x3]
    %vm1294 = vcmp.gt.f32.partialorder %v1293, 0.0
    %s1295 = scalar_lea.vmem %s1, 12
    %v1296 = vld [vmem:[%s1295] sm:$0x3]
    %vm1297 = vcmp.gt.f32.partialorder %v1296, 0.0
    %v1298 = vsel %vm1294, 1, 0
    %1299 = vset.pattern.permute.xlu0 0
    %1300 = vperm.xlu0 %1299, %v1298
    %v1301 = vpop.permute.xlu0 %1300
    %vm1302 = vcmp.eq.s32.totalorder %v1301, 1
    %v1305 = vunpack.c.l.s4 1983009808
    %v1306 = vunpack.c.0.s8 %v1305
    %v1307 = vlaneseq
    %v1308 = vshrl.u32 %v1307, 7
    %v1309 = vsub.s32 %v1306, %v1308
    %v1310 = vrot.slane %v1267, %v1309
    %1311 = vrot.lane.b32.xlu0 %v1310, 32
    %v1312 = vpop.permute.xlu0 %1311
    %v1314 = vsel %vm1302, %v1312, %v1133
    %v1317 = vunpack.c.l.s4 1983009808
    %v1318 = vunpack.c.0.s8 %v1317
    %v1319 = vlaneseq
    %v1320 = vshrl.u32 %v1319, 7
    %v1321 = vsub.s32 %v1318, %v1320
    %v1322 = vrot.slane %v1261, %v1321
    %1323 = vrot.lane.b32.xlu0 %v1322, 96
    %v1324 = vpop.permute.xlu0 %1323
    %v1326 = vsel %vm1302, %v1324, %v1138
    %v1327 = vsel %vm1297, 1, 0
    %1328 = vset.pattern.permute.xlu0 0
    %1329 = vperm.xlu0 %1328, %v1327
    %v1330 = vpop.permute.xlu0 %1329
    %vm1331 = vcmp.eq.s32.totalorder %v1330, 1
    %v1334 = vunpack.c.l.s4 1983009808
    %v1335 = vunpack.c.0.s8 %v1334
    %v1336 = vlaneseq
    %v1337 = vshrl.u32 %v1336, 7
    %v1338 = vsub.s32 %v1335, %v1337
    %v1339 = vrot.slane %v1291, %v1338
    %1340 = vrot.lane.b32.xlu0 %v1339, 32
    %v1341 = vpop.permute.xlu0 %1340
    %1343 = vrot.lane.b32.xlu0 %v1133, 96
    %v1344 = vpop.permute.xlu0 %1343
    %v1346 = vsel %vm1331, %v1341, %v1344
    %v1349 = vunpack.c.l.s4 1983009808
    %v1350 = vunpack.c.0.s8 %v1349
    %v1351 = vlaneseq
    %v1352 = vshrl.u32 %v1351, 7
    %v1353 = vsub.s32 %v1350, %v1352
    %v1354 = vrot.slane %v1285, %v1353
    %1355 = vrot.lane.b32.xlu0 %v1354, 96
    %v1356 = vpop.permute.xlu0 %1355
    %1358 = vrot.lane.b32.xlu0 %v1138, 96
    %v1359 = vpop.permute.xlu0 %1358
    %v1361 = vsel %vm1331, %v1356, %v1359
    %s1362 = scalar_lea.vmem [#allocation3], 2
    %1363 = vst.msk [vmem:[%s1362] sm:$0x3] %vm1123, %v1314
    %1365 = vrot.lane.b32.xlu0 %v1346, 32
    %v1366 = vpop.permute.xlu0 %1365
    %s1368 = scalar_lea.vmem [#allocation3], 12
    %1369 = vst.msk [vmem:[%s1368] sm:$0x3] %vm1130, %v1366
    %v1370 = vsel %vm1132, %v1314, %v1366
    %1372 = vrot.lane.b32.xlu0 %v1361, 32
    %v1373 = vpop.permute.xlu0 %1372
    %v1375 = vsel %vm1132, %v1326, %v1373
    %v1376 = vld [vmem:[#allocation5] sm:$0xff]
    %v1377 = vld [vmem:[#allocation5 + $0x8] sm:$0xff]
    %v1378 = vld [vmem:[#allocation5 + $0x10] sm:$0xff]
    %v1379 = vld [vmem:[#allocation5 + $0x18] sm:$0xff]
    %v1380 = vld [vmem:[#allocation5 + $0x20] sm:$0xff]
    %v1381 = vld [vmem:[#allocation5 + $0x28] sm:$0xff]
    %v1382 = vld [vmem:[#allocation5 + $0x30] sm:$0xff]
    %v1383 = vld [vmem:[#allocation5 + $0x38] sm:$0xff]
    %v1384 = vld [vmem:[#allocation5 + $0x40] sm:$0xff]
    %v1385 = vld [vmem:[#allocation5 + $0x48] sm:$0xff]
    %v1386 = vld [vmem:[#allocation5 + $0x50] sm:$0xff]
    %v1387 = vld [vmem:[#allocation5 + $0x58] sm:$0xff]
    %v1388 = vld [vmem:[#allocation5 + $0x60] sm:$0xff]
    %v1389 = vld [vmem:[#allocation5 + $0x68] sm:$0xff]
    %v1390 = vld [vmem:[#allocation5 + $0x70] sm:$0xff]
    %v1391 = vld [vmem:[#allocation5 + $0x78] sm:$0xff]
    %v1393 = vsel %vm933, %v1370, 0
    %1395 = vmatprep.subr.mxu0 %v1377
    %1396 = vmatpush1.msra.mxu0 %v1376
    %1397 = vmatprep.subr.mxu0 %v1379
    %1398 = vmatpush1.msra.mxu0 %v1378
    %1399 = vmatprep.subr.mxu0 %v1381
    %1400 = vmatpush1.msra.mxu0 %v1380
    %1401 = vmatprep.subr.mxu0 %v1383
    %1402 = vmatpush1.msra.mxu0 %v1382
    %1403 = vmatprep.subr.mxu0 %v1385
    %1404 = vmatpush1.msra.mxu0 %v1384
    %1405 = vmatprep.subr.mxu0 %v1387
    %1406 = vmatpush1.msra.mxu0 %v1386
    %1407 = vmatprep.subr.mxu0 %v1389
    %1408 = vmatpush1.msra.mxu0 %v1388
    %1409 = vmatprep.subr.mxu0 %v1391
    %1410 = vmatpush1.msra.mxu0 %v1390
    %1411 = vmatprep.subr.mxu0 0.0
    %1412 = vmatpush1.msra.mxu0 0.0
    %1413 = vmatprep.subr.mxu0 0.0
    %1414 = vmatpush1.msra.mxu0 0.0
    %1415 = vmatprep.subr.mxu0 0.0
    %1416 = vmatpush1.msra.mxu0 0.0
    %1417 = vmatprep.subr.mxu0 0.0
    %1418 = vmatpush1.msra.mxu0 0.0
    %1419 = vmatprep.subr.mxu0 0.0
    %1420 = vmatpush1.msra.mxu0 0.0
    %1421 = vmatprep.subr.mxu0 0.0
    %1422 = vmatpush1.msra.mxu0 0.0
    %1423 = vmatprep.subr.mxu0 0.0
    %1424 = vmatpush1.msra.mxu0 0.0
    %1425 = vmatprep.subr.mxu0 0.0
    %1426 = vmatpush1.msra.mxu0 0.0
    %1427 = vmatprep.subr.mxu0 0.0
    %1428 = vmatpush1.msra.mxu0 0.0
    %1429 = vmatprep.subr.mxu0 0.0
    %1430 = vmatpush1.msra.mxu0 0.0
    %1431 = vmatprep.subr.mxu0 0.0
    %1432 = vmatpush1.msra.mxu0 0.0
    %1433 = vmatprep.subr.mxu0 0.0
    %1434 = vmatpush1.msra.mxu0 0.0
    %1435 = vmatprep.subr.mxu0 0.0
    %1436 = vmatpush1.msra.mxu0 0.0
    %1437 = vmatprep.subr.mxu0 0.0
    %1438 = vmatpush1.msra.mxu0 0.0
    %1439 = vmatprep.subr.mxu0 0.0
    %1440 = vmatpush1.msra.mxu0 0.0
    %1441 = vmatprep.subr.mxu0 0.0
    %1442 = vmatpush1.msra.mxu0 0.0
    %1443 = vmatprep.subr.mxu0 0.0
    %1444 = vmatpush1.msra.mxu0 0.0
    %1445 = vmatprep.subr.mxu0 0.0
    %1446 = vmatpush1.msra.mxu0 0.0
    %1447 = vmatprep.subr.mxu0 0.0
    %1448 = vmatpush1.msra.mxu0 0.0
    %1449 = vmatprep.subr.mxu0 0.0
    %1450 = vmatpush1.msra.mxu0 0.0
    %1451 = vmatprep.subr.mxu0 0.0
    %1452 = vmatpush1.msra.mxu0 0.0
    %1453 = vmatprep.subr.mxu0 0.0
    %1454 = vmatpush1.msra.mxu0 0.0
    %1455 = vmatprep.subr.mxu0 0.0
    %1456 = vmatpush1.msra.mxu0 0.0
    %1457 = vmatprep.subr.mxu0 0.0
    %1458 = vmatpush1.msra.mxu0 0.0
    %1459 = vmatprep.mubr.f32.mxu0 0.0
    %1460 = vmatmul.mubr.f32.gmra.mrb[0].mxu0 %v1393
    %v1461 = vpop.f32.mrb[0].mxu0
    %v1462 = vadd.f32 0.0, %v1461
    %v1463 = vpop.f32.mrb[0].mxu0
    %v1464 = vadd.f32 0.0, %v1463
    %1465 = vdwg.mxu0
    %v1466 = vld [vmem:[%s390] sm:$0x3]
    %v1467 = vadd.f32 %v1466, %v1462
    %v1468 = vld [vmem:[%s705 + $0x2] sm:$0x3]
    %v1469 = vadd.f32 %v1468, %v1464
    %v1470 = vxor.u32 %v1467, 2147483648
    %v1471 = vmul.f32 %v1470, 1.442695
    %v1472 = vpow.pop %v1471
    %v1473 = vadd.f32 %v1472, 1.0
    %v1474 = vrcp.pop %v1473
    %v1475 = vmul.f32 1.0, %v1474
    %v1476 = vtanh.pop %v1467
    %v1479 = vunpack.c.l.s4 1983009808
    %v1480 = vunpack.c.0.s8 %v1479
    %v1481 = vlaneseq
    %v1482 = vshrl.u32 %v1481, 7
    %v1483 = vsub.s32 %v1480, %v1482
    %v1484 = vrot.slane %v1375, %v1483
    %1485 = vrot.lane.b32.xlu0 %v1484, 32
    %v1486 = vpop.permute.xlu0 %1485
    %v1488 = vmul.f32 %v1475, %v1486
    %1490 = vrot.lane.b32.xlu0 %v1476, 64
    %v1491 = vpop.permute.xlu0 %1490
    %v1493 = vmul.f32 %v1475, %v1491
    %1495 = vrot.lane.b32.xlu0 %v1493, 32
    %v1496 = vpop.permute.xlu0 %1495
    %v1498 = vadd.f32 %v1488, %v1496
    %v1499 = vtanh.pop %v1498
    %1501 = vrot.lane.b32.xlu0 %v1499, 64
    %v1502 = vpop.permute.xlu0 %1501
    %v1504 = vmul.f32 %v1475, %v1502
    %v1505 = vxor.u32 %v1469, 2147483648
    %v1506 = vmul.f32 %v1505, 1.442695
    %v1507 = vpow.pop %v1506
    %v1508 = vadd.f32 %v1507, 1.0
    %v1509 = vrcp.pop %v1508
    %v1510 = vmul.f32 1.0, %v1509
    %v1511 = vtanh.pop %v1469
    %v1512 = vmul.f32 %v1510, %v1375
    %1514 = vrot.lane.b32.xlu0 %v1511, 64
    %v1515 = vpop.permute.xlu0 %1514
    %v1517 = vmul.f32 %v1510, %v1515
    %1519 = vrot.lane.b32.xlu0 %v1517, 32
    %v1520 = vpop.permute.xlu0 %1519
    %v1522 = vadd.f32 %v1512, %v1520
    %v1523 = vtanh.pop %v1522
    %1525 = vrot.lane.b32.xlu0 %v1523, 64
    %v1526 = vpop.permute.xlu0 %1525
    %v1528 = vmul.f32 %v1510, %v1526
    %s1529 = scalar_lea.vmem %s1, 4
    %v1530 = vld [vmem:[%s1529] sm:$0x3]
    %vm1531 = vcmp.gt.f32.partialorder %v1530, 0.0
    %s1532 = scalar_lea.vmem %s1, 10
    %v1533 = vld [vmem:[%s1532] sm:$0x3]
    %vm1534 = vcmp.gt.f32.partialorder %v1533, 0.0
    %v1535 = vsel %vm1531, 1, 0
    %1536 = vset.pattern.permute.xlu0 0
    %1537 = vperm.xlu0 %1536, %v1535
    %v1538 = vpop.permute.xlu0 %1537
    %vm1539 = vcmp.eq.s32.totalorder %v1538, 1
    %v1542 = vunpack.c.l.s4 1983009808
    %v1543 = vunpack.c.0.s8 %v1542
    %v1544 = vlaneseq
    %v1545 = vshrl.u32 %v1544, 7
    %v1546 = vsub.s32 %v1543, %v1545
    %v1547 = vrot.slane %v1504, %v1546
    %1548 = vrot.lane.b32.xlu0 %v1547, 32
    %v1549 = vpop.permute.xlu0 %1548
    %v1551 = vsel %vm1539, %v1549, %v1370
    %v1554 = vunpack.c.l.s4 1983009808
    %v1555 = vunpack.c.0.s8 %v1554
    %v1556 = vlaneseq
    %v1557 = vshrl.u32 %v1556, 7
    %v1558 = vsub.s32 %v1555, %v1557
    %v1559 = vrot.slane %v1498, %v1558
    %1560 = vrot.lane.b32.xlu0 %v1559, 96
    %v1561 = vpop.permute.xlu0 %1560
    %v1563 = vsel %vm1539, %v1561, %v1375
    %v1564 = vsel %vm1534, 1, 0
    %1565 = vset.pattern.permute.xlu0 0
    %1566 = vperm.xlu0 %1565, %v1564
    %v1567 = vpop.permute.xlu0 %1566
    %vm1568 = vcmp.eq.s32.totalorder %v1567, 1
    %v1571 = vunpack.c.l.s4 1983009808
    %v1572 = vunpack.c.0.s8 %v1571
    %v1573 = vlaneseq
    %v1574 = vshrl.u32 %v1573, 7
    %v1575 = vsub.s32 %v1572, %v1574
    %v1576 = vrot.slane %v1528, %v1575
    %1577 = vrot.lane.b32.xlu0 %v1576, 32
    %v1578 = vpop.permute.xlu0 %1577
    %1580 = vrot.lane.b32.xlu0 %v1370, 96
    %v1581 = vpop.permute.xlu0 %1580
    %v1583 = vsel %vm1568, %v1578, %v1581
    %v1586 = vunpack.c.l.s4 1983009808
    %v1587 = vunpack.c.0.s8 %v1586
    %v1588 = vlaneseq
    %v1589 = vshrl.u32 %v1588, 7
    %v1590 = vsub.s32 %v1587, %v1589
    %v1591 = vrot.slane %v1522, %v1590
    %1592 = vrot.lane.b32.xlu0 %v1591, 96
    %v1593 = vpop.permute.xlu0 %1592
    %1595 = vrot.lane.b32.xlu0 %v1375, 96
    %v1596 = vpop.permute.xlu0 %1595
    %v1598 = vsel %vm1568, %v1593, %v1596
    %s1599 = scalar_lea.vmem [#allocation3], 4
    %1600 = vst.msk [vmem:[%s1599] sm:$0x3] %vm1123, %v1551
    %1602 = vrot.lane.b32.xlu0 %v1583, 32
    %v1603 = vpop.permute.xlu0 %1602
    %s1605 = scalar_lea.vmem [#allocation3], 10
    %1606 = vst.msk [vmem:[%s1605] sm:$0x3] %vm1130, %v1603
    %v1607 = vsel %vm1132, %v1551, %v1603
    %1609 = vrot.lane.b32.xlu0 %v1598, 32
    %v1610 = vpop.permute.xlu0 %1609
    %v1612 = vsel %vm1132, %v1563, %v1610
    %v1613 = vld [vmem:[#allocation5] sm:$0xff]
    %v1614 = vld [vmem:[#allocation5 + $0x8] sm:$0xff]
    %v1615 = vld [vmem:[#allocation5 + $0x10] sm:$0xff]
    %v1616 = vld [vmem:[#allocation5 + $0x18] sm:$0xff]
    %v1617 = vld [vmem:[#allocation5 + $0x20] sm:$0xff]
    %v1618 = vld [vmem:[#allocation5 + $0x28] sm:$0xff]
    %v1619 = vld [vmem:[#allocation5 + $0x30] sm:$0xff]
    %v1620 = vld [vmem:[#allocation5 + $0x38] sm:$0xff]
    %v1621 = vld [vmem:[#allocation5 + $0x40] sm:$0xff]
    %v1622 = vld [vmem:[#allocation5 + $0x48] sm:$0xff]
    %v1623 = vld [vmem:[#allocation5 + $0x50] sm:$0xff]
    %v1624 = vld [vmem:[#allocation5 + $0x58] sm:$0xff]
    %v1625 = vld [vmem:[#allocation5 + $0x60] sm:$0xff]
    %v1626 = vld [vmem:[#allocation5 + $0x68] sm:$0xff]
    %v1627 = vld [vmem:[#allocation5 + $0x70] sm:$0xff]
    %v1628 = vld [vmem:[#allocation5 + $0x78] sm:$0xff]
    %v1630 = vsel %vm933, %v1607, 0
    %1632 = vmatprep.subr.mxu0 %v1614
    %1633 = vmatpush1.msra.mxu0 %v1613
    %1634 = vmatprep.subr.mxu0 %v1616
    %1635 = vmatpush1.msra.mxu0 %v1615
    %1636 = vmatprep.subr.mxu0 %v1618
    %1637 = vmatpush1.msra.mxu0 %v1617
    %1638 = vmatprep.subr.mxu0 %v1620
    %1639 = vmatpush1.msra.mxu0 %v1619
    %1640 = vmatprep.subr.mxu0 %v1622
    %1641 = vmatpush1.msra.mxu0 %v1621
    %1642 = vmatprep.subr.mxu0 %v1624
    %1643 = vmatpush1.msra.mxu0 %v1623
    %1644 = vmatprep.subr.mxu0 %v1626
    %1645 = vmatpush1.msra.mxu0 %v1625
    %1646 = vmatprep.subr.mxu0 %v1628
    %1647 = vmatpush1.msra.mxu0 %v1627
    %1648 = vmatprep.subr.mxu0 0.0
    %1649 = vmatpush1.msra.mxu0 0.0
    %1650 = vmatprep.subr.mxu0 0.0
    %1651 = vmatpush1.msra.mxu0 0.0
    %1652 = vmatprep.subr.mxu0 0.0
    %1653 = vmatpush1.msra.mxu0 0.0
    %1654 = vmatprep.subr.mxu0 0.0
    %1655 = vmatpush1.msra.mxu0 0.0
    %1656 = vmatprep.subr.mxu0 0.0
    %1657 = vmatpush1.msra.mxu0 0.0
    %1658 = vmatprep.subr.mxu0 0.0
    %1659 = vmatpush1.msra.mxu0 0.0
    %1660 = vmatprep.subr.mxu0 0.0
    %1661 = vmatpush1.msra.mxu0 0.0
    %1662 = vmatprep.subr.mxu0 0.0
    %1663 = vmatpush1.msra.mxu0 0.0
    %1664 = vmatprep.subr.mxu0 0.0
    %1665 = vmatpush1.msra.mxu0 0.0
    %1666 = vmatprep.subr.mxu0 0.0
    %1667 = vmatpush1.msra.mxu0 0.0
    %1668 = vmatprep.subr.mxu0 0.0
    %1669 = vmatpush1.msra.mxu0 0.0
    %1670 = vmatprep.subr.mxu0 0.0
    %1671 = vmatpush1.msra.mxu0 0.0
    %1672 = vmatprep.subr.mxu0 0.0
    %1673 = vmatpush1.msra.mxu0 0.0
    %1674 = vmatprep.subr.mxu0 0.0
    %1675 = vmatpush1.msra.mxu0 0.0
    %1676 = vmatprep.subr.mxu0 0.0
    %1677 = vmatpush1.msra.mxu0 0.0
    %1678 = vmatprep.subr.mxu0 0.0
    %1679 = vmatpush1.msra.mxu0 0.0
    %1680 = vmatprep.subr.mxu0 0.0
    %1681 = vmatpush1.msra.mxu0 0.0
    %1682 = vmatprep.subr.mxu0 0.0
    %1683 = vmatpush1.msra.mxu0 0.0
    %1684 = vmatprep.subr.mxu0 0.0
    %1685 = vmatpush1.msra.mxu0 0.0
    %1686 = vmatprep.subr.mxu0 0.0
    %1687 = vmatpush1.msra.mxu0 0.0
    %1688 = vmatprep.subr.mxu0 0.0
    %1689 = vmatpush1.msra.mxu0 0.0
    %1690 = vmatprep.subr.mxu0 0.0
    %1691 = vmatpush1.msra.mxu0 0.0
    %1692 = vmatprep.subr.mxu0 0.0
    %1693 = vmatpush1.msra.mxu0 0.0
    %1694 = vmatprep.subr.mxu0 0.0
    %1695 = vmatpush1.msra.mxu0 0.0
    %1696 = vmatprep.mubr.f32.mxu0 0.0
    %1697 = vmatmul.mubr.f32.gmra.mrb[0].mxu0 %v1630
    %v1698 = vpop.f32.mrb[0].mxu0
    %v1699 = vadd.f32 0.0, %v1698
    %v1700 = vpop.f32.mrb[0].mxu0
    %v1701 = vadd.f32 0.0, %v1700
    %1702 = vdwg.mxu0
    %v1703 = vld [vmem:[%s495] sm:$0x3]
    %v1704 = vadd.f32 %v1703, %v1699
    %v1705 = vld [vmem:[%s600 + $0x2] sm:$0x3]
    %v1706 = vadd.f32 %v1705, %v1701
    %v1707 = vxor.u32 %v1704, 2147483648
    %v1708 = vmul.f32 %v1707, 1.442695
    %v1709 = vpow.pop %v1708
    %v1710 = vadd.f32 %v1709, 1.0
    %v1711 = vrcp.pop %v1710
    %v1712 = vmul.f32 1.0, %v1711
    %v1713 = vtanh.pop %v1704
    %v1716 = vunpack.c.l.s4 1983009808
    %v1717 = vunpack.c.0.s8 %v1716
    %v1718 = vlaneseq
    %v1719 = vshrl.u32 %v1718, 7
    %v1720 = vsub.s32 %v1717, %v1719
    %v1721 = vrot.slane %v1612, %v1720
    %1722 = vrot.lane.b32.xlu0 %v1721, 32
    %v1723 = vpop.permute.xlu0 %1722
    %v1725 = vmul.f32 %v1712, %v1723
    %1727 = vrot.lane.b32.xlu0 %v1713, 64
    %v1728 = vpop.permute.xlu0 %1727
    %v1730 = vmul.f32 %v1712, %v1728
    %1732 = vrot.lane.b32.xlu0 %v1730, 32
    %v1733 = vpop.permute.xlu0 %1732
    %v1735 = vadd.f32 %v1725, %v1733
    %v1736 = vtanh.pop %v1735
    %1738 = vrot.lane.b32.xlu0 %v1736, 64
    %v1739 = vpop.permute.xlu0 %1738
    %v1741 = vmul.f32 %v1712, %v1739
    %v1742 = vxor.u32 %v1706, 2147483648
    %v1743 = vmul.f32 %v1742, 1.442695
    %v1744 = vpow.pop %v1743
    %v1745 = vadd.f32 %v1744, 1.0
    %v1746 = vrcp.pop %v1745
    %v1747 = vmul.f32 1.0, %v1746
    %v1748 = vtanh.pop %v1706
    %v1749 = vmul.f32 %v1747, %v1612
    %1751 = vrot.lane.b32.xlu0 %v1748, 64
    %v1752 = vpop.permute.xlu0 %1751
    %v1754 = vmul.f32 %v1747, %v1752
    %1756 = vrot.lane.b32.xlu0 %v1754, 32
    %v1757 = vpop.permute.xlu0 %1756
    %v1759 = vadd.f32 %v1749, %v1757
    %v1760 = vtanh.pop %v1759
    %1762 = vrot.lane.b32.xlu0 %v1760, 64
    %v1763 = vpop.permute.xlu0 %1762
    %v1765 = vmul.f32 %v1747, %v1763
    %s1766 = scalar_lea.vmem %s1, 6
    %v1767 = vld [vmem:[%s1766] sm:$0x3]
    %vm1768 = vcmp.gt.f32.partialorder %v1767, 0.0
    %s1769 = scalar_lea.vmem %s1, 8
    %v1770 = vld [vmem:[%s1769] sm:$0x3]
    %vm1771 = vcmp.gt.f32.partialorder %v1770, 0.0
    %v1772 = vsel %vm1768, 1, 0
    %1773 = vset.pattern.permute.xlu0 0
    %1774 = vperm.xlu0 %1773, %v1772
    %v1775 = vpop.permute.xlu0 %1774
    %vm1776 = vcmp.eq.s32.totalorder %v1775, 1
    %v1779 = vunpack.c.l.s4 1983009808
    %v1780 = vunpack.c.0.s8 %v1779
    %v1781 = vlaneseq
    %v1782 = vshrl.u32 %v1781, 7
    %v1783 = vsub.s32 %v1780, %v1782
    %v1784 = vrot.slane %v1741, %v1783
    %1785 = vrot.lane.b32.xlu0 %v1784, 32
    %v1786 = vpop.permute.xlu0 %1785
    %v1788 = vsel %vm1776, %v1786, %v1607
    %v1791 = vunpack.c.l.s4 1983009808
    %v1792 = vunpack.c.0.s8 %v1791
    %v1793 = vlaneseq
    %v1794 = vshrl.u32 %v1793, 7
    %v1795 = vsub.s32 %v1792, %v1794
    %v1796 = vrot.slane %v1735, %v1795
    %1797 = vrot.lane.b32.xlu0 %v1796, 96
    %v1798 = vpop.permute.xlu0 %1797
    %v1800 = vsel %vm1776, %v1798, %v1612
    %v1801 = vsel %vm1771, 1, 0
    %1802 = vset.pattern.permute.xlu0 0
    %1803 = vperm.xlu0 %1802, %v1801
    %v1804 = vpop.permute.xlu0 %1803
    %vm1805 = vcmp.eq.s32.totalorder %v1804, 1
    %v1808 = vunpack.c.l.s4 1983009808
    %v1809 = vunpack.c.0.s8 %v1808
    %v1810 = vlaneseq
    %v1811 = vshrl.u32 %v1810, 7
    %v1812 = vsub.s32 %v1809, %v1811
    %v1813 = vrot.slane %v1765, %v1812
    %1814 = vrot.lane.b32.xlu0 %v1813, 32
    %v1815 = vpop.permute.xlu0 %1814
    %1817 = vrot.lane.b32.xlu0 %v1607, 96
    %v1818 = vpop.permute.xlu0 %1817
    %v1820 = vsel %vm1805, %v1815, %v1818
    %v1823 = vunpack.c.l.s4 1983009808
    %v1824 = vunpack.c.0.s8 %v1823
    %v1825 = vlaneseq
    %v1826 = vshrl.u32 %v1825, 7
    %v1827 = vsub.s32 %v1824, %v1826
    %v1828 = vrot.slane %v1759, %v1827
    %1829 = vrot.lane.b32.xlu0 %v1828, 96
    %v1830 = vpop.permute.xlu0 %1829
    %1832 = vrot.lane.b32.xlu0 %v1612, 96
    %v1833 = vpop.permute.xlu0 %1832
    %v1835 = vsel %vm1805, %v1830, %v1833
    %s1836 = scalar_lea.vmem [#allocation3], 6
    %1837 = vst.msk [vmem:[%s1836] sm:$0x3] %vm1123, %v1788
    %1839 = vrot.lane.b32.xlu0 %v1820, 32
    %v1840 = vpop.permute.xlu0 %1839
    %s1842 = scalar_lea.vmem [#allocation3], 8
    %1843 = vst.msk [vmem:[%s1842] sm:$0x3] %vm1130, %v1840
    %v1844 = vsel %vm1132, %v1788, %v1840
    %1846 = vrot.lane.b32.xlu0 %v1835, 32
    %v1847 = vpop.permute.xlu0 %1846
    %v1849 = vsel %vm1132, %v1800, %v1847
    %v1850 = vld [vmem:[#allocation5] sm:$0xff]
    %v1851 = vld [vmem:[#allocation5 + $0x8] sm:$0xff]
    %v1852 = vld [vmem:[#allocation5 + $0x10] sm:$0xff]
    %v1853 = vld [vmem:[#allocation5 + $0x18] sm:$0xff]
    %v1854 = vld [vmem:[#allocation5 + $0x20] sm:$0xff]
    %v1855 = vld [vmem:[#allocation5 + $0x28] sm:$0xff]
    %v1856 = vld [vmem:[#allocation5 + $0x30] sm:$0xff]
    %v1857 = vld [vmem:[#allocation5 + $0x38] sm:$0xff]
    %v1858 = vld [vmem:[#allocation5 + $0x40] sm:$0xff]
    %v1859 = vld [vmem:[#allocation5 + $0x48] sm:$0xff]
    %v1860 = vld [vmem:[#allocation5 + $0x50] sm:$0xff]
    %v1861 = vld [vmem:[#allocation5 + $0x58] sm:$0xff]
    %v1862 = vld [vmem:[#allocation5 + $0x60] sm:$0xff]
    %v1863 = vld [vmem:[#allocation5 + $0x68] sm:$0xff]
    %v1864 = vld [vmem:[#allocation5 + $0x70] sm:$0xff]
    %v1865 = vld [vmem:[#allocation5 + $0x78] sm:$0xff]
    %v1867 = vsel %vm933, %v1844, 0
    %1869 = vmatprep.subr.mxu0 %v1851
    %1870 = vmatpush1.msra.mxu0 %v1850
    %1871 = vmatprep.subr.mxu0 %v1853
    %1872 = vmatpush1.msra.mxu0 %v1852
    %1873 = vmatprep.subr.mxu0 %v1855
    %1874 = vmatpush1.msra.mxu0 %v1854
    %1875 = vmatprep.subr.mxu0 %v1857
    %1876 = vmatpush1.msra.mxu0 %v1856
    %1877 = vmatprep.subr.mxu0 %v1859
    %1878 = vmatpush1.msra.mxu0 %v1858
    %1879 = vmatprep.subr.mxu0 %v1861
    %1880 = vmatpush1.msra.mxu0 %v1860
    %1881 = vmatprep.subr.mxu0 %v1863
    %1882 = vmatpush1.msra.mxu0 %v1862
    %1883 = vmatprep.subr.mxu0 %v1865
    %1884 = vmatpush1.msra.mxu0 %v1864
    %1885 = vmatprep.subr.mxu0 0.0
    %1886 = vmatpush1.msra.mxu0 0.0
    %1887 = vmatprep.subr.mxu0 0.0
    %1888 = vmatpush1.msra.mxu0 0.0
    %1889 = vmatprep.subr.mxu0 0.0
    %1890 = vmatpush1.msra.mxu0 0.0
    %1891 = vmatprep.subr.mxu0 0.0
    %1892 = vmatpush1.msra.mxu0 0.0
    %1893 = vmatprep.subr.mxu0 0.0
    %1894 = vmatpush1.msra.mxu0 0.0
    %1895 = vmatprep.subr.mxu0 0.0
    %1896 = vmatpush1.msra.mxu0 0.0
    %1897 = vmatprep.subr.mxu0 0.0
    %1898 = vmatpush1.msra.mxu0 0.0
    %1899 = vmatprep.subr.mxu0 0.0
    %1900 = vmatpush1.msra.mxu0 0.0
    %1901 = vmatprep.subr.mxu0 0.0
    %1902 = vmatpush1.msra.mxu0 0.0
    %1903 = vmatprep.subr.mxu0 0.0
    %1904 = vmatpush1.msra.mxu0 0.0
    %1905 = vmatprep.subr.mxu0 0.0
    %1906 = vmatpush1.msra.mxu0 0.0
    %1907 = vmatprep.subr.mxu0 0.0
    %1908 = vmatpush1.msra.mxu0 0.0
    %1909 = vmatprep.subr.mxu0 0.0
    %1910 = vmatpush1.msra.mxu0 0.0
    %1911 = vmatprep.subr.mxu0 0.0
    %1912 = vmatpush1.msra.mxu0 0.0
    %1913 = vmatprep.subr.mxu0 0.0
    %1914 = vmatpush1.msra.mxu0 0.0
    %1915 = vmatprep.subr.mxu0 0.0
    %1916 = vmatpush1.msra.mxu0 0.0
    %1917 = vmatprep.subr.mxu0 0.0
    %1918 = vmatpush1.msra.mxu0 0.0
    %1919 = vmatprep.subr.mxu0 0.0
    %1920 = vmatpush1.msra.mxu0 0.0
    %1921 = vmatprep.subr.mxu0 0.0
    %1922 = vmatpush1.msra.mxu0 0.0
    %1923 = vmatprep.subr.mxu0 0.0
    %1924 = vmatpush1.msra.mxu0 0.0
    %1925 = vmatprep.subr.mxu0 0.0
    %1926 = vmatpush1.msra.mxu0 0.0
    %1927 = vmatprep.subr.mxu0 0.0
    %1928 = vmatpush1.msra.mxu0 0.0
    %1929 = vmatprep.subr.mxu0 0.0
    %1930 = vmatpush1.msra.mxu0 0.0
    %1931 = vmatprep.subr.mxu0 0.0
    %1932 = vmatpush1.msra.mxu0 0.0
    %1933 = vmatprep.mubr.f32.mxu0 0.0
    %1934 = vmatmul.mubr.f32.gmra.mrb[0].mxu0 %v1867
    %v1935 = vpop.f32.mrb[0].mxu0
    %v1936 = vadd.f32 0.0, %v1935
    %v1937 = vpop.f32.mrb[0].mxu0
    %v1938 = vadd.f32 0.0, %v1937
    %1939 = vdwg.mxu0
    %v1940 = vld [vmem:[%s600] sm:$0x3]
    %v1941 = vadd.f32 %v1940, %v1936
    %v1942 = vld [vmem:[%s495 + $0x2] sm:$0x3]
    %v1943 = vadd.f32 %v1942, %v1938
    %v1944 = vxor.u32 %v1941, 2147483648
    %v1945 = vmul.f32 %v1944, 1.442695
    %v1946 = vpow.pop %v1945
    %v1947 = vadd.f32 %v1946, 1.0
    %v1948 = vrcp.pop %v1947
    %v1949 = vmul.f32 1.0, %v1948
    %v1950 = vtanh.pop %v1941
    %v1953 = vunpack.c.l.s4 1983009808
    %v1954 = vunpack.c.0.s8 %v1953
    %v1955 = vlaneseq
    %v1956 = vshrl.u32 %v1955, 7
    %v1957 = vsub.s32 %v1954, %v1956
    %v1958 = vrot.slane %v1849, %v1957
    %1959 = vrot.lane.b32.xlu0 %v1958, 32
    %v1960 = vpop.permute.xlu0 %1959
    %v1962 = vmul.f32 %v1949, %v1960
    %1964 = vrot.lane.b32.xlu0 %v1950, 64
    %v1965 = vpop.permute.xlu0 %1964
    %v1967 = vmul.f32 %v1949, %v1965
    %1969 = vrot.lane.b32.xlu0 %v1967, 32
    %v1970 = vpop.permute.xlu0 %1969
    %v1972 = vadd.f32 %v1962, %v1970
    %v1973 = vtanh.pop %v1972
    %1975 = vrot.lane.b32.xlu0 %v1973, 64
    %v1976 = vpop.permute.xlu0 %1975
    %v1978 = vmul.f32 %v1949, %v1976
    %v1979 = vxor.u32 %v1943, 2147483648
    %v1980 = vmul.f32 %v1979, 1.442695
    %v1981 = vpow.pop %v1980
    %v1982 = vadd.f32 %v1981, 1.0
    %v1983 = vrcp.pop %v1982
    %v1984 = vmul.f32 1.0, %v1983
    %v1985 = vtanh.pop %v1943
    %v1986 = vmul.f32 %v1984, %v1849
    %1988 = vrot.lane.b32.xlu0 %v1985, 64
    %v1989 = vpop.permute.xlu0 %1988
    %v1991 = vmul.f32 %v1984, %v1989
    %1993 = vrot.lane.b32.xlu0 %v1991, 32
    %v1994 = vpop.permute.xlu0 %1993
    %v1996 = vadd.f32 %v1986, %v1994
    %v1997 = vtanh.pop %v1996
    %1999 = vrot.lane.b32.xlu0 %v1997, 64
    %v2000 = vpop.permute.xlu0 %1999
    %v2002 = vmul.f32 %v1984, %v2000
    %v2003 = vld [vmem:[%s1769] sm:$0x3]
    %vm2004 = vcmp.gt.f32.partialorder %v2003, 0.0
    %v2005 = vld [vmem:[%s1766] sm:$0x3]
    %vm2006 = vcmp.gt.f32.partialorder %v2005, 0.0
    %v2007 = vsel %vm2004, 1, 0
    %2008 = vset.pattern.permute.xlu0 0
    %2009 = vperm.xlu0 %2008, %v2007
    %v2010 = vpop.permute.xlu0 %2009
    %vm2011 = vcmp.eq.s32.totalorder %v2010, 1
    %v2014 = vunpack.c.l.s4 1983009808
    %v2015 = vunpack.c.0.s8 %v2014
    %v2016 = vlaneseq
    %v2017 = vshrl.u32 %v2016, 7
    %v2018 = vsub.s32 %v2015, %v2017
    %v2019 = vrot.slane %v1978, %v2018
    %2020 = vrot.lane.b32.xlu0 %v2019, 32
    %v2021 = vpop.permute.xlu0 %2020
    %v2023 = vsel %vm2011, %v2021, %v1844
    %v2026 = vunpack.c.l.s4 1983009808
    %v2027 = vunpack.c.0.s8 %v2026
    %v2028 = vlaneseq
    %v2029 = vshrl.u32 %v2028, 7
    %v2030 = vsub.s32 %v2027, %v2029
    %v2031 = vrot.slane %v1972, %v2030
    %2032 = vrot.lane.b32.xlu0 %v2031, 96
    %v2033 = vpop.permute.xlu0 %2032
    %v2035 = vsel %vm2011, %v2033, %v1849
    %v2036 = vsel %vm2006, 1, 0
    %2037 = vset.pattern.permute.xlu0 0
    %2038 = vperm.xlu0 %2037, %v2036
    %v2039 = vpop.permute.xlu0 %2038
    %vm2040 = vcmp.eq.s32.totalorder %v2039, 1
    %v2043 = vunpack.c.l.s4 1983009808
    %v2044 = vunpack.c.0.s8 %v2043
    %v2045 = vlaneseq
    %v2046 = vshrl.u32 %v2045, 7
    %v2047 = vsub.s32 %v2044, %v2046
    %v2048 = vrot.slane %v2002, %v2047
    %2049 = vrot.lane.b32.xlu0 %v2048, 32
    %v2050 = vpop.permute.xlu0 %2049
    %2052 = vrot.lane.b32.xlu0 %v1844, 96
    %v2053 = vpop.permute.xlu0 %2052
    %v2055 = vsel %vm2040, %v2050, %v2053
    %v2058 = vunpack.c.l.s4 1983009808
    %v2059 = vunpack.c.0.s8 %v2058
    %v2060 = vlaneseq
    %v2061 = vshrl.u32 %v2060, 7
    %v2062 = vsub.s32 %v2059, %v2061
    %v2063 = vrot.slane %v1996, %v2062
    %2064 = vrot.lane.b32.xlu0 %v2063, 96
    %v2065 = vpop.permute.xlu0 %2064
    %2067 = vrot.lane.b32.xlu0 %v1849, 96
    %v2068 = vpop.permute.xlu0 %2067
    %v2070 = vsel %vm2040, %v2065, %v2068
    %2071 = vst.msk [vmem:[%s1842] sm:$0x3] %vm1123, %v2023
    %2073 = vrot.lane.b32.xlu0 %v2055, 32
    %v2074 = vpop.permute.xlu0 %2073
    %2076 = vst.msk [vmem:[%s1836] sm:$0x3] %vm1130, %v2074
    %v2077 = vsel %vm1132, %v2023, %v2074
    %2079 = vrot.lane.b32.xlu0 %v2070, 32
    %v2080 = vpop.permute.xlu0 %2079
    %v2082 = vsel %vm1132, %v2035, %v2080
    %v2083 = vld [vmem:[#allocation5] sm:$0xff]
    %v2084 = vld [vmem:[#allocation5 + $0x8] sm:$0xff]
    %v2085 = vld [vmem:[#allocation5 + $0x10] sm:$0xff]
    %v2086 = vld [vmem:[#allocation5 + $0x18] sm:$0xff]
    %v2087 = vld [vmem:[#allocation5 + $0x20] sm:$0xff]
    %v2088 = vld [vmem:[#allocation5 + $0x28] sm:$0xff]
    %v2089 = vld [vmem:[#allocation5 + $0x30] sm:$0xff]
    %v2090 = vld [vmem:[#allocation5 + $0x38] sm:$0xff]
    %v2091 = vld [vmem:[#allocation5 + $0x40] sm:$0xff]
    %v2092 = vld [vmem:[#allocation5 + $0x48] sm:$0xff]
    %v2093 = vld [vmem:[#allocation5 + $0x50] sm:$0xff]
    %v2094 = vld [vmem:[#allocation5 + $0x58] sm:$0xff]
    %v2095 = vld [vmem:[#allocation5 + $0x60] sm:$0xff]
    %v2096 = vld [vmem:[#allocation5 + $0x68] sm:$0xff]
    %v2097 = vld [vmem:[#allocation5 + $0x70] sm:$0xff]
    %v2098 = vld [vmem:[#allocation5 + $0x78] sm:$0xff]
    %v2100 = vsel %vm933, %v2077, 0
    %2102 = vmatprep.subr.mxu0 %v2084
    %2103 = vmatpush1.msra.mxu0 %v2083
    %2104 = vmatprep.subr.mxu0 %v2086
    %2105 = vmatpush1.msra.mxu0 %v2085
    %2106 = vmatprep.subr.mxu0 %v2088
    %2107 = vmatpush1.msra.mxu0 %v2087
    %2108 = vmatprep.subr.mxu0 %v2090
    %2109 = vmatpush1.msra.mxu0 %v2089
    %2110 = vmatprep.subr.mxu0 %v2092
    %2111 = vmatpush1.msra.mxu0 %v2091
    %2112 = vmatprep.subr.mxu0 %v2094
    %2113 = vmatpush1.msra.mxu0 %v2093
    %2114 = vmatprep.subr.mxu0 %v2096
    %2115 = vmatpush1.msra.mxu0 %v2095
    %2116 = vmatprep.subr.mxu0 %v2098
    %2117 = vmatpush1.msra.mxu0 %v2097
    %2118 = vmatprep.subr.mxu0 0.0
    %2119 = vmatpush1.msra.mxu0 0.0
    %2120 = vmatprep.subr.mxu0 0.0
    %2121 = vmatpush1.msra.mxu0 0.0
    %2122 = vmatprep.subr.mxu0 0.0
    %2123 = vmatpush1.msra.mxu0 0.0
    %2124 = vmatprep.subr.mxu0 0.0
    %2125 = vmatpush1.msra.mxu0 0.0
    %2126 = vmatprep.subr.mxu0 0.0
    %2127 = vmatpush1.msra.mxu0 0.0
    %2128 = vmatprep.subr.mxu0 0.0
    %2129 = vmatpush1.msra.mxu0 0.0
    %2130 = vmatprep.subr.mxu0 0.0
    %2131 = vmatpush1.msra.mxu0 0.0
    %2132 = vmatprep.subr.mxu0 0.0
    %2133 = vmatpush1.msra.mxu0 0.0
    %2134 = vmatprep.subr.mxu0 0.0
    %2135 = vmatpush1.msra.mxu0 0.0
    %2136 = vmatprep.subr.mxu0 0.0
    %2137 = vmatpush1.msra.mxu0 0.0
    %2138 = vmatprep.subr.mxu0 0.0
    %2139 = vmatpush1.msra.mxu0 0.0
    %2140 = vmatprep.subr.mxu0 0.0
    %2141 = vmatpush1.msra.mxu0 0.0
    %2142 = vmatprep.subr.mxu0 0.0
    %2143 = vmatpush1.msra.mxu0 0.0
    %2144 = vmatprep.subr.mxu0 0.0
    %2145 = vmatpush1.msra.mxu0 0.0
    %2146 = vmatprep.subr.mxu0 0.0
    %2147 = vmatpush1.msra.mxu0 0.0
    %2148 = vmatprep.subr.mxu0 0.0
    %2149 = vmatpush1.msra.mxu0 0.0
    %2150 = vmatprep.subr.mxu0 0.0
    %2151 = vmatpush1.msra.mxu0 0.0
    %2152 = vmatprep.subr.mxu0 0.0
    %2153 = vmatpush1.msra.mxu0 0.0
    %2154 = vmatprep.subr.mxu0 0.0
    %2155 = vmatpush1.msra.mxu0 0.0
    %2156 = vmatprep.subr.mxu0 0.0
    %2157 = vmatpush1.msra.mxu0 0.0
    %2158 = vmatprep.subr.mxu0 0.0
    %2159 = vmatpush1.msra.mxu0 0.0
    %2160 = vmatprep.subr.mxu0 0.0
    %2161 = vmatpush1.msra.mxu0 0.0
    %2162 = vmatprep.subr.mxu0 0.0
    %2163 = vmatpush1.msra.mxu0 0.0
    %2164 = vmatprep.subr.mxu0 0.0
    %2165 = vmatpush1.msra.mxu0 0.0
    %2166 = vmatprep.mubr.f32.mxu0 0.0
    %2167 = vmatmul.mubr.f32.gmra.mrb[0].mxu0 %v2100
    %v2168 = vpop.f32.mrb[0].mxu0
    %v2169 = vadd.f32 0.0, %v2168
    %v2170 = vpop.f32.mrb[0].mxu0
    %v2171 = vadd.f32 0.0, %v2170
    %2172 = vdwg.mxu0
    %v2173 = vld [vmem:[%s705] sm:$0x3]
    %v2174 = vadd.f32 %v2173, %v2169
    %v2175 = vld [vmem:[%s390 + $0x2] sm:$0x3]
    %v2176 = vadd.f32 %v2175, %v2171
    %v2177 = vxor.u32 %v2174, 2147483648
    %v2178 = vmul.f32 %v2177, 1.442695
    %v2179 = vpow.pop %v2178
    %v2180 = vadd.f32 %v2179, 1.0
    %v2181 = vrcp.pop %v2180
    %v2182 = vmul.f32 1.0, %v2181
    %v2183 = vtanh.pop %v2174
    %v2186 = vunpack.c.l.s4 1983009808
    %v2187 = vunpack.c.0.s8 %v2186
    %v2188 = vlaneseq
    %v2189 = vshrl.u32 %v2188, 7
    %v2190 = vsub.s32 %v2187, %v2189
    %v2191 = vrot.slane %v2082, %v2190
    %2192 = vrot.lane.b32.xlu0 %v2191, 32
    %v2193 = vpop.permute.xlu0 %2192
    %v2195 = vmul.f32 %v2182, %v2193
    %2197 = vrot.lane.b32.xlu0 %v2183, 64
    %v2198 = vpop.permute.xlu0 %2197
    %v2200 = vmul.f32 %v2182, %v2198
    %2202 = vrot.lane.b32.xlu0 %v2200, 32
    %v2203 = vpop.permute.xlu0 %2202
    %v2205 = vadd.f32 %v2195, %v2203
    %v2206 = vtanh.pop %v2205
    %2208 = vrot.lane.b32.xlu0 %v2206, 64
    %v2209 = vpop.permute.xlu0 %2208
    %v2211 = vmul.f32 %v2182, %v2209
    %v2212 = vxor.u32 %v2176, 2147483648
    %v2213 = vmul.f32 %v2212, 1.442695
    %v2214 = vpow.pop %v2213
    %v2215 = vadd.f32 %v2214, 1.0
    %v2216 = vrcp.pop %v2215
    %v2217 = vmul.f32 1.0, %v2216
    %v2218 = vtanh.pop %v2176
    %v2219 = vmul.f32 %v2217, %v2082
    %2221 = vrot.lane.b32.xlu0 %v2218, 64
    %v2222 = vpop.permute.xlu0 %2221
    %v2224 = vmul.f32 %v2217, %v2222
    %2226 = vrot.lane.b32.xlu0 %v2224, 32
    %v2227 = vpop.permute.xlu0 %2226
    %v2229 = vadd.f32 %v2219, %v2227
    %v2230 = vtanh.pop %v2229
    %2232 = vrot.lane.b32.xlu0 %v2230, 64
    %v2233 = vpop.permute.xlu0 %2232
    %v2235 = vmul.f32 %v2217, %v2233
    %v2236 = vld [vmem:[%s1532] sm:$0x3]
    %vm2237 = vcmp.gt.f32.partialorder %v2236, 0.0
    %v2238 = vld [vmem:[%s1529] sm:$0x3]
    %vm2239 = vcmp.gt.f32.partialorder %v2238, 0.0
    %v2240 = vsel %vm2237, 1, 0
    %2241 = vset.pattern.permute.xlu0 0
    %2242 = vperm.xlu0 %2241, %v2240
    %v2243 = vpop.permute.xlu0 %2242
    %vm2244 = vcmp.eq.s32.totalorder %v2243, 1
    %v2247 = vunpack.c.l.s4 1983009808
    %v2248 = vunpack.c.0.s8 %v2247
    %v2249 = vlaneseq
    %v2250 = vshrl.u32 %v2249, 7
    %v2251 = vsub.s32 %v2248, %v2250
    %v2252 = vrot.slane %v2211, %v2251
    %2253 = vrot.lane.b32.xlu0 %v2252, 32
    %v2254 = vpop.permute.xlu0 %2253
    %v2256 = vsel %vm2244, %v2254, %v2077
    %v2259 = vunpack.c.l.s4 1983009808
    %v2260 = vunpack.c.0.s8 %v2259
    %v2261 = vlaneseq
    %v2262 = vshrl.u32 %v2261, 7
    %v2263 = vsub.s32 %v2260, %v2262
    %v2264 = vrot.slane %v2205, %v2263
    %2265 = vrot.lane.b32.xlu0 %v2264, 96
    %v2266 = vpop.permute.xlu0 %2265
    %v2268 = vsel %vm2244, %v2266, %v2082
    %v2269 = vsel %vm2239, 1, 0
    %2270 = vset.pattern.permute.xlu0 0
    %2271 = vperm.xlu0 %2270, %v2269
    %v2272 = vpop.permute.xlu0 %2271
    %vm2273 = vcmp.eq.s32.totalorder %v2272, 1
    %v2276 = vunpack.c.l.s4 1983009808
    %v2277 = vunpack.c.0.s8 %v2276
    %v2278 = vlaneseq
    %v2279 = vshrl.u32 %v2278, 7
    %v2280 = vsub.s32 %v2277, %v2279
    %v2281 = vrot.slane %v2235, %v2280
    %2282 = vrot.lane.b32.xlu0 %v2281, 32
    %v2283 = vpop.permute.xlu0 %2282
    %2285 = vrot.lane.b32.xlu0 %v2077, 96
    %v2286 = vpop.permute.xlu0 %2285
    %v2288 = vsel %vm2273, %v2283, %v2286
    %v2291 = vunpack.c.l.s4 1983009808
    %v2292 = vunpack.c.0.s8 %v2291
    %v2293 = vlaneseq
    %v2294 = vshrl.u32 %v2293, 7
    %v2295 = vsub.s32 %v2292, %v2294
    %v2296 = vrot.slane %v2229, %v2295
    %2297 = vrot.lane.b32.xlu0 %v2296, 96
    %v2298 = vpop.permute.xlu0 %2297
    %2300 = vrot.lane.b32.xlu0 %v2082, 96
    %v2301 = vpop.permute.xlu0 %2300
    %v2303 = vsel %vm2273, %v2298, %v2301
    %2304 = vst.msk [vmem:[%s1605] sm:$0x3] %vm1123, %v2256
    %2306 = vrot.lane.b32.xlu0 %v2288, 32
    %v2307 = vpop.permute.xlu0 %2306
    %2309 = vst.msk [vmem:[%s1599] sm:$0x3] %vm1130, %v2307
    %v2310 = vsel %vm1132, %v2256, %v2307
    %2312 = vrot.lane.b32.xlu0 %v2303, 32
    %v2313 = vpop.permute.xlu0 %2312
    %v2315 = vsel %vm1132, %v2268, %v2313
    %v2316 = vld [vmem:[#allocation5] sm:$0xff]
    %v2317 = vld [vmem:[#allocation5 + $0x8] sm:$0xff]
    %v2318 = vld [vmem:[#allocation5 + $0x10] sm:$0xff]
    %v2319 = vld [vmem:[#allocation5 + $0x18] sm:$0xff]
    %v2320 = vld [vmem:[#allocation5 + $0x20] sm:$0xff]
    %v2321 = vld [vmem:[#allocation5 + $0x28] sm:$0xff]
    %v2322 = vld [vmem:[#allocation5 + $0x30] sm:$0xff]
    %v2323 = vld [vmem:[#allocation5 + $0x38] sm:$0xff]
    %v2324 = vld [vmem:[#allocation5 + $0x40] sm:$0xff]
    %v2325 = vld [vmem:[#allocation5 + $0x48] sm:$0xff]
    %v2326 = vld [vmem:[#allocation5 + $0x50] sm:$0xff]
    %v2327 = vld [vmem:[#allocation5 + $0x58] sm:$0xff]
    %v2328 = vld [vmem:[#allocation5 + $0x60] sm:$0xff]
    %v2329 = vld [vmem:[#allocation5 + $0x68] sm:$0xff]
    %v2330 = vld [vmem:[#allocation5 + $0x70] sm:$0xff]
    %v2331 = vld [vmem:[#allocation5 + $0x78] sm:$0xff]
    %v2333 = vsel %vm933, %v2310, 0
    %2335 = vmatprep.subr.mxu0 %v2317
    %2336 = vmatpush1.msra.mxu0 %v2316
    %2337 = vmatprep.subr.mxu0 %v2319
    %2338 = vmatpush1.msra.mxu0 %v2318
    %2339 = vmatprep.subr.mxu0 %v2321
    %2340 = vmatpush1.msra.mxu0 %v2320
    %2341 = vmatprep.subr.mxu0 %v2323
    %2342 = vmatpush1.msra.mxu0 %v2322
    %2343 = vmatprep.subr.mxu0 %v2325
    %2344 = vmatpush1.msra.mxu0 %v2324
    %2345 = vmatprep.subr.mxu0 %v2327
    %2346 = vmatpush1.msra.mxu0 %v2326
    %2347 = vmatprep.subr.mxu0 %v2329
    %2348 = vmatpush1.msra.mxu0 %v2328
    %2349 = vmatprep.subr.mxu0 %v2331
    %2350 = vmatpush1.msra.mxu0 %v2330
    %2351 = vmatprep.subr.mxu0 0.0
    %2352 = vmatpush1.msra.mxu0 0.0
    %2353 = vmatprep.subr.mxu0 0.0
    %2354 = vmatpush1.msra.mxu0 0.0
    %2355 = vmatprep.subr.mxu0 0.0
    %2356 = vmatpush1.msra.mxu0 0.0
    %2357 = vmatprep.subr.mxu0 0.0
    %2358 = vmatpush1.msra.mxu0 0.0
    %2359 = vmatprep.subr.mxu0 0.0
    %2360 = vmatpush1.msra.mxu0 0.0
    %2361 = vmatprep.subr.mxu0 0.0
    %2362 = vmatpush1.msra.mxu0 0.0
    %2363 = vmatprep.subr.mxu0 0.0
    %2364 = vmatpush1.msra.mxu0 0.0
    %2365 = vmatprep.subr.mxu0 0.0
    %2366 = vmatpush1.msra.mxu0 0.0
    %2367 = vmatprep.subr.mxu0 0.0
    %2368 = vmatpush1.msra.mxu0 0.0
    %2369 = vmatprep.subr.mxu0 0.0
    %2370 = vmatpush1.msra.mxu0 0.0
    %2371 = vmatprep.subr.mxu0 0.0
    %2372 = vmatpush1.msra.mxu0 0.0
    %2373 = vmatprep.subr.mxu0 0.0
    %2374 = vmatpush1.msra.mxu0 0.0
    %2375 = vmatprep.subr.mxu0 0.0
    %2376 = vmatpush1.msra.mxu0 0.0
    %2377 = vmatprep.subr.mxu0 0.0
    %2378 = vmatpush1.msra.mxu0 0.0
    %2379 = vmatprep.subr.mxu0 0.0
    %2380 = vmatpush1.msra.mxu0 0.0
    %2381 = vmatprep.subr.mxu0 0.0
    %2382 = vmatpush1.msra.mxu0 0.0
    %2383 = vmatprep.subr.mxu0 0.0
    %2384 = vmatpush1.msra.mxu0 0.0
    %2385 = vmatprep.subr.mxu0 0.0
    %2386 = vmatpush1.msra.mxu0 0.0
    %2387 = vmatprep.subr.mxu0 0.0
    %2388 = vmatpush1.msra.mxu0 0.0
    %2389 = vmatprep.subr.mxu0 0.0
    %2390 = vmatpush1.msra.mxu0 0.0
    %2391 = vmatprep.subr.mxu0 0.0
    %2392 = vmatpush1.msra.mxu0 0.0
    %2393 = vmatprep.subr.mxu0 0.0
    %2394 = vmatpush1.msra.mxu0 0.0
    %2395 = vmatprep.subr.mxu0 0.0
    %2396 = vmatpush1.msra.mxu0 0.0
    %2397 = vmatprep.subr.mxu0 0.0
    %2398 = vmatpush1.msra.mxu0 0.0
    %2399 = vmatprep.mubr.f32.mxu0 0.0
    %2400 = vmatmul.mubr.f32.gmra.mrb[0].mxu0 %v2333
    %v2401 = vpop.f32.mrb[0].mxu0
    %v2402 = vadd.f32 0.0, %v2401
    %v2403 = vpop.f32.mrb[0].mxu0
    %v2404 = vadd.f32 0.0, %v2403
    %2405 = vdwg.mxu0
    %v2406 = vld [vmem:[%s810] sm:$0x3]
    %v2407 = vadd.f32 %v2406, %v2402
    %v2408 = vld [vmem:[%s285 + $0x2] sm:$0x3]
    %v2409 = vadd.f32 %v2408, %v2404
    %v2410 = vxor.u32 %v2407, 2147483648
    %v2411 = vmul.f32 %v2410, 1.442695
    %v2412 = vpow.pop %v2411
    %v2413 = vadd.f32 %v2412, 1.0
    %v2414 = vrcp.pop %v2413
    %v2415 = vmul.f32 1.0, %v2414
    %v2416 = vtanh.pop %v2407
    %v2419 = vunpack.c.l.s4 1983009808
    %v2420 = vunpack.c.0.s8 %v2419
    %v2421 = vlaneseq
    %v2422 = vshrl.u32 %v2421, 7
    %v2423 = vsub.s32 %v2420, %v2422
    %v2424 = vrot.slane %v2315, %v2423
    %2425 = vrot.lane.b32.xlu0 %v2424, 32
    %v2426 = vpop.permute.xlu0 %2425
    %v2428 = vmul.f32 %v2415, %v2426
    %2430 = vrot.lane.b32.xlu0 %v2416, 64
    %v2431 = vpop.permute.xlu0 %2430
    %v2433 = vmul.f32 %v2415, %v2431
    %2435 = vrot.lane.b32.xlu0 %v2433, 32
    %v2436 = vpop.permute.xlu0 %2435
    %v2438 = vadd.f32 %v2428, %v2436
    %v2439 = vtanh.pop %v2438
    %2441 = vrot.lane.b32.xlu0 %v2439, 64
    %v2442 = vpop.permute.xlu0 %2441
    %v2444 = vmul.f32 %v2415, %v2442
    %v2445 = vxor.u32 %v2409, 2147483648
    %v2446 = vmul.f32 %v2445, 1.442695
    %v2447 = vpow.pop %v2446
    %v2448 = vadd.f32 %v2447, 1.0
    %v2449 = vrcp.pop %v2448
    %v2450 = vmul.f32 1.0, %v2449
    %v2451 = vtanh.pop %v2409
    %v2452 = vmul.f32 %v2450, %v2315
    %2454 = vrot.lane.b32.xlu0 %v2451, 64
    %v2455 = vpop.permute.xlu0 %2454
    %v2457 = vmul.f32 %v2450, %v2455
    %2459 = vrot.lane.b32.xlu0 %v2457, 32
    %v2460 = vpop.permute.xlu0 %2459
    %v2462 = vadd.f32 %v2452, %v2460
    %v2463 = vtanh.pop %v2462
    %2465 = vrot.lane.b32.xlu0 %v2463, 64
    %v2466 = vpop.permute.xlu0 %2465
    %v2468 = vmul.f32 %v2450, %v2466
    %v2469 = vld [vmem:[%s1295] sm:$0x3]
    %vm2470 = vcmp.gt.f32.partialorder %v2469, 0.0
    %v2471 = vld [vmem:[%s1292] sm:$0x3]
    %vm2472 = vcmp.gt.f32.partialorder %v2471, 0.0
    %v2473 = vsel %vm2470, 1, 0
    %2474 = vset.pattern.permute.xlu0 0
    %2475 = vperm.xlu0 %2474, %v2473
    %v2476 = vpop.permute.xlu0 %2475
    %vm2477 = vcmp.eq.s32.totalorder %v2476, 1
    %v2480 = vunpack.c.l.s4 1983009808
    %v2481 = vunpack.c.0.s8 %v2480
    %v2482 = vlaneseq
    %v2483 = vshrl.u32 %v2482, 7
    %v2484 = vsub.s32 %v2481, %v2483
    %v2485 = vrot.slane %v2444, %v2484
    %2486 = vrot.lane.b32.xlu0 %v2485, 32
    %v2487 = vpop.permute.xlu0 %2486
    %v2489 = vsel %vm2477, %v2487, %v2310
    %v2492 = vunpack.c.l.s4 1983009808
    %v2493 = vunpack.c.0.s8 %v2492
    %v2494 = vlaneseq
    %v2495 = vshrl.u32 %v2494, 7
    %v2496 = vsub.s32 %v2493, %v2495
    %v2497 = vrot.slane %v2438, %v2496
    %2498 = vrot.lane.b32.xlu0 %v2497, 96
    %v2499 = vpop.permute.xlu0 %2498
    %v2501 = vsel %vm2477, %v2499, %v2315
    %v2502 = vsel %vm2472, 1, 0
    %2503 = vset.pattern.permute.xlu0 0
    %2504 = vperm.xlu0 %2503, %v2502
    %v2505 = vpop.permute.xlu0 %2504
    %vm2506 = vcmp.eq.s32.totalorder %v2505, 1
    %v2509 = vunpack.c.l.s4 1983009808
    %v2510 = vunpack.c.0.s8 %v2509
    %v2511 = vlaneseq
    %v2512 = vshrl.u32 %v2511, 7
    %v2513 = vsub.s32 %v2510, %v2512
    %v2514 = vrot.slane %v2468, %v2513
    %2515 = vrot.lane.b32.xlu0 %v2514, 32
    %v2516 = vpop.permute.xlu0 %2515
    %2518 = vrot.lane.b32.xlu0 %v2310, 96
    %v2519 = vpop.permute.xlu0 %2518
    %v2521 = vsel %vm2506, %v2516, %v2519
    %v2524 = vunpack.c.l.s4 1983009808
    %v2525 = vunpack.c.0.s8 %v2524
    %v2526 = vlaneseq
    %v2527 = vshrl.u32 %v2526, 7
    %v2528 = vsub.s32 %v2525, %v2527
    %v2529 = vrot.slane %v2462, %v2528
    %2530 = vrot.lane.b32.xlu0 %v2529, 96
    %v2531 = vpop.permute.xlu0 %2530
    %2533 = vrot.lane.b32.xlu0 %v2315, 96
    %v2534 = vpop.permute.xlu0 %2533
    %v2536 = vsel %vm2506, %v2531, %v2534
    %2537 = vst.msk [vmem:[%s1368] sm:$0x3] %vm1123, %v2489
    %2539 = vrot.lane.b32.xlu0 %v2521, 32
    %v2540 = vpop.permute.xlu0 %2539
    %2542 = vst.msk [vmem:[%s1362] sm:$0x3] %vm1130, %v2540
    %v2543 = vsel %vm1132, %v2489, %v2540
    %2545 = vrot.lane.b32.xlu0 %v2536, 32
    %v2546 = vpop.permute.xlu0 %2545
    %v2548 = vsel %vm1132, %v2501, %v2546
    %v2549 = vld [vmem:[#allocation5] sm:$0xff]
    %v2550 = vld [vmem:[#allocation5 + $0x8] sm:$0xff]
    %v2551 = vld [vmem:[#allocation5 + $0x10] sm:$0xff]
    %v2552 = vld [vmem:[#allocation5 + $0x18] sm:$0xff]
    %v2553 = vld [vmem:[#allocation5 + $0x20] sm:$0xff]
    %v2554 = vld [vmem:[#allocation5 + $0x28] sm:$0xff]
    %v2555 = vld [vmem:[#allocation5 + $0x30] sm:$0xff]
    %v2556 = vld [vmem:[#allocation5 + $0x38] sm:$0xff]
    %v2557 = vld [vmem:[#allocation5 + $0x40] sm:$0xff]
    %v2558 = vld [vmem:[#allocation5 + $0x48] sm:$0xff]
    %v2559 = vld [vmem:[#allocation5 + $0x50] sm:$0xff]
    %v2560 = vld [vmem:[#allocation5 + $0x58] sm:$0xff]
    %v2561 = vld [vmem:[#allocation5 + $0x60] sm:$0xff]
    %v2562 = vld [vmem:[#allocation5 + $0x68] sm:$0xff]
    %v2563 = vld [vmem:[#allocation5 + $0x70] sm:$0xff]
    %v2564 = vld [vmem:[#allocation5 + $0x78] sm:$0xff]
    %v2566 = vsel %vm933, %v2543, 0
    %2568 = vmatprep.subr.mxu0 %v2550
    %2569 = vmatpush1.msra.mxu0 %v2549
    %2570 = vmatprep.subr.mxu0 %v2552
    %2571 = vmatpush1.msra.mxu0 %v2551
    %2572 = vmatprep.subr.mxu0 %v2554
    %2573 = vmatpush1.msra.mxu0 %v2553
    %2574 = vmatprep.subr.mxu0 %v2556
    %2575 = vmatpush1.msra.mxu0 %v2555
    %2576 = vmatprep.subr.mxu0 %v2558
    %2577 = vmatpush1.msra.mxu0 %v2557
    %2578 = vmatprep.subr.mxu0 %v2560
    %2579 = vmatpush1.msra.mxu0 %v2559
    %2580 = vmatprep.subr.mxu0 %v2562
    %2581 = vmatpush1.msra.mxu0 %v2561
    %2582 = vmatprep.subr.mxu0 %v2564
    %2583 = vmatpush1.msra.mxu0 %v2563
    %2584 = vmatprep.subr.mxu0 0.0
    %2585 = vmatpush1.msra.mxu0 0.0
    %2586 = vmatprep.subr.mxu0 0.0
    %2587 = vmatpush1.msra.mxu0 0.0
    %2588 = vmatprep.subr.mxu0 0.0
    %2589 = vmatpush1.msra.mxu0 0.0
    %2590 = vmatprep.subr.mxu0 0.0
    %2591 = vmatpush1.msra.mxu0 0.0
    %2592 = vmatprep.subr.mxu0 0.0
    %2593 = vmatpush1.msra.mxu0 0.0
    %2594 = vmatprep.subr.mxu0 0.0
    %2595 = vmatpush1.msra.mxu0 0.0
    %2596 = vmatprep.subr.mxu0 0.0
    %2597 = vmatpush1.msra.mxu0 0.0
    %2598 = vmatprep.subr.mxu0 0.0
    %2599 = vmatpush1.msra.mxu0 0.0
    %2600 = vmatprep.subr.mxu0 0.0
    %2601 = vmatpush1.msra.mxu0 0.0
    %2602 = vmatprep.subr.mxu0 0.0
    %2603 = vmatpush1.msra.mxu0 0.0
    %2604 = vmatprep.subr.mxu0 0.0
    %2605 = vmatpush1.msra.mxu0 0.0
    %2606 = vmatprep.subr.mxu0 0.0
    %2607 = vmatpush1.msra.mxu0 0.0
    %2608 = vmatprep.subr.mxu0 0.0
    %2609 = vmatpush1.msra.mxu0 0.0
    %2610 = vmatprep.subr.mxu0 0.0
    %2611 = vmatpush1.msra.mxu0 0.0
    %2612 = vmatprep.subr.mxu0 0.0
    %2613 = vmatpush1.msra.mxu0 0.0
    %2614 = vmatprep.subr.mxu0 0.0
    %2615 = vmatpush1.msra.mxu0 0.0
    %2616 = vmatprep.subr.mxu0 0.0
    %2617 = vmatpush1.msra.mxu0 0.0
    %2618 = vmatprep.subr.mxu0 0.0
    %2619 = vmatpush1.msra.mxu0 0.0
    %2620 = vmatprep.subr.mxu0 0.0
    %2621 = vmatpush1.msra.mxu0 0.0
    %2622 = vmatprep.subr.mxu0 0.0
    %2623 = vmatpush1.msra.mxu0 0.0
    %2624 = vmatprep.subr.mxu0 0.0
    %2625 = vmatpush1.msra.mxu0 0.0
    %2626 = vmatprep.subr.mxu0 0.0
    %2627 = vmatpush1.msra.mxu0 0.0
    %2628 = vmatprep.subr.mxu0 0.0
    %2629 = vmatpush1.msra.mxu0 0.0
    %2630 = vmatprep.subr.mxu0 0.0
    %2631 = vmatpush1.msra.mxu0 0.0
    %2632 = vmatprep.mubr.f32.mxu0 0.0
    %2633 = vmatmul.mubr.f32.gmra.mrb[0].mxu0 %v2566
    %v2634 = vpop.f32.mrb[0].mxu0
    %v2635 = vadd.f32 0.0, %v2634
    %v2636 = vpop.f32.mrb[0].mxu0
    %v2637 = vadd.f32 0.0, %v2636
    %2638 = vdwg.mxu0
    %v2639 = vld [vmem:[%s915] sm:$0x3]
    %v2640 = vadd.f32 %v2639, %v2635
    %v2641 = vld [vmem:[#allocation2 + $0x2] sm:$0x3]
    %v2642 = vadd.f32 %v2641, %v2637
    %v2643 = vxor.u32 %v2640, 2147483648
    %v2644 = vmul.f32 %v2643, 1.442695
    %v2645 = vpow.pop %v2644
    %v2646 = vadd.f32 %v2645, 1.0
    %v2647 = vrcp.pop %v2646
    %v2648 = vmul.f32 1.0, %v2647
    %v2649 = vtanh.pop %v2640
    %v2652 = vunpack.c.l.s4 1983009808
    %v2653 = vunpack.c.0.s8 %v2652
    %v2654 = vlaneseq
    %v2655 = vshrl.u32 %v2654, 7
    %v2656 = vsub.s32 %v2653, %v2655
    %v2657 = vrot.slane %v2548, %v2656
    %2658 = vrot.lane.b32.xlu0 %v2657, 32
    %v2659 = vpop.permute.xlu0 %2658
    %v2661 = vmul.f32 %v2648, %v2659
    %2663 = vrot.lane.b32.xlu0 %v2649, 64
    %v2664 = vpop.permute.xlu0 %2663
    %v2666 = vmul.f32 %v2648, %v2664
    %2668 = vrot.lane.b32.xlu0 %v2666, 32
    %v2669 = vpop.permute.xlu0 %2668
    %v2671 = vadd.f32 %v2661, %v2669
    %v2672 = vtanh.pop %v2671
    %2674 = vrot.lane.b32.xlu0 %v2672, 64
    %v2675 = vpop.permute.xlu0 %2674
    %v2677 = vmul.f32 %v2648, %v2675
    %v2678 = vxor.u32 %v2642, 2147483648
    %v2679 = vmul.f32 %v2678, 1.442695
    %v2680 = vpow.pop %v2679
    %v2681 = vadd.f32 %v2680, 1.0
    %v2682 = vrcp.pop %v2681
    %v2683 = vmul.f32 1.0, %v2682
    %v2684 = vtanh.pop %v2642
    %v2685 = vmul.f32 %v2683, %v2548
    %2687 = vrot.lane.b32.xlu0 %v2684, 64
    %v2688 = vpop.permute.xlu0 %2687
    %v2690 = vmul.f32 %v2683, %v2688
    %2692 = vrot.lane.b32.xlu0 %v2690, 32
    %v2693 = vpop.permute.xlu0 %2692
    %v2695 = vadd.f32 %v2685, %v2693
    %v2696 = vtanh.pop %v2695
    %2698 = vrot.lane.b32.xlu0 %v2696, 64
    %v2699 = vpop.permute.xlu0 %2698
    %v2701 = vmul.f32 %v2683, %v2699
    %v2702 = vld [vmem:[%s1062] sm:$0x3]
    %vm2703 = vcmp.gt.f32.partialorder %v2702, 0.0
    %v2704 = vld [vmem:[%s1] sm:$0x3]
    %vm2705 = vcmp.gt.f32.partialorder %v2704, 0.0
    %v2706 = vsel %vm2703, 1, 0
    %2707 = vset.pattern.permute.xlu0 0
    %2708 = vperm.xlu0 %2707, %v2706
    %v2709 = vpop.permute.xlu0 %2708
    %vm2710 = vcmp.eq.s32.totalorder %v2709, 1
    %v2713 = vunpack.c.l.s4 1983009808
    %v2714 = vunpack.c.0.s8 %v2713
    %v2715 = vlaneseq
    %v2716 = vshrl.u32 %v2715, 7
    %v2717 = vsub.s32 %v2714, %v2716
    %v2718 = vrot.slane %v2677, %v2717
    %2719 = vrot.lane.b32.xlu0 %v2718, 32
    %v2720 = vpop.permute.xlu0 %2719
    %v2722 = vsel %vm2710, %v2720, %v2543
    %v2723 = vsel %vm2705, 1, 0
    %2724 = vset.pattern.permute.xlu0 0
    %2725 = vperm.xlu0 %2724, %v2723
    %v2726 = vpop.permute.xlu0 %2725
    %vm2727 = vcmp.eq.s32.totalorder %v2726, 1
    %v2730 = vunpack.c.l.s4 1983009808
    %v2731 = vunpack.c.0.s8 %v2730
    %v2732 = vlaneseq
    %v2733 = vshrl.u32 %v2732, 7
    %v2734 = vsub.s32 %v2731, %v2733
    %v2735 = vrot.slane %v2701, %v2734
    %2736 = vrot.lane.b32.xlu0 %v2735, 32
    %v2737 = vpop.permute.xlu0 %2736
    %2739 = vrot.lane.b32.xlu0 %v2543, 96
    %v2740 = vpop.permute.xlu0 %2739
    %v2742 = vsel %vm2727, %v2737, %v2740
    %2743 = vst.msk [vmem:[%s1129] sm:$0x3] %vm1123, %v2722
    %2745 = vrot.lane.b32.xlu0 %v2742, 32
    %v2746 = vpop.permute.xlu0 %2745
    %2748 = vst.msk [vmem:[#allocation3] sm:$0x3] %vm1130, %v2746
    %v2749 = vld [vmem:[#allocation3] sm:$0x3]
    %v2750 = vld [vmem:[#allocation7] sm:$0xff]
    %v2751 = vld [vmem:[#allocation7 + $0x8] sm:$0xff]
    %v2752 = vld [vmem:[#allocation7 + $0x10] sm:$0xff]
    %v2753 = vld [vmem:[#allocation7 + $0x18] sm:$0xff]
    %v2754 = vld [vmem:[#allocation7 + $0x20] sm:$0xff]
    %v2755 = vld [vmem:[#allocation7 + $0x28] sm:$0xff]
    %v2756 = vld [vmem:[#allocation7 + $0x30] sm:$0xff]
    %v2757 = vld [vmem:[#allocation7 + $0x38] sm:$0xff]
    %v2758 = vld [vmem:[#allocation7 + $0x40] sm:$0xff]
    %v2759 = vld [vmem:[#allocation7 + $0x48] sm:$0xff]
    %v2760 = vld [vmem:[#allocation7 + $0x50] sm:$0xff]
    %v2761 = vld [vmem:[#allocation7 + $0x58] sm:$0xff]
    %v2762 = vld [vmem:[#allocation7 + $0x60] sm:$0xff]
    %v2763 = vld [vmem:[#allocation7 + $0x68] sm:$0xff]
    %v2764 = vld [vmem:[#allocation7 + $0x70] sm:$0xff]
    %v2765 = vld [vmem:[#allocation7 + $0x78] sm:$0xff]
    %v2766 = vld [vmem:[%s6] sm:$0x3]
    %v2768 = vlaneseq
    %v2769 = vshrl.u32 %v2768, 7
    %v2770 = vsub.s32 0, %v2769
    %v2771 = vrot.slane %v2766, %v2770
    %v2772 = vlaneseq
    %v2773 = vshrl.u32 %v2772, 7
    %v2774 = vsub.s32 1, %v2773
    %v2775 = vrot.slane %v2766, %v2774
    %v2779 = vsel %vm933, %v2749, 0
    %2781 = vmatprep.subr.mxu0 %v2751
    %2782 = vmatpush1.msra.mxu0 %v2750
    %2783 = vmatprep.subr.mxu0 %v2753
    %2784 = vmatpush1.msra.mxu0 %v2752
    %2785 = vmatprep.subr.mxu0 %v2755
    %2786 = vmatpush1.msra.mxu0 %v2754
    %2787 = vmatprep.subr.mxu0 %v2757
    %2788 = vmatpush1.msra.mxu0 %v2756
    %2789 = vmatprep.subr.mxu0 %v2759
    %2790 = vmatpush1.msra.mxu0 %v2758
    %2791 = vmatprep.subr.mxu0 %v2761
    %2792 = vmatpush1.msra.mxu0 %v2760
    %2793 = vmatprep.subr.mxu0 %v2763
    %2794 = vmatpush1.msra.mxu0 %v2762
    %2795 = vmatprep.subr.mxu0 %v2765
    %2796 = vmatpush1.msra.mxu0 %v2764
    %2797 = vmatprep.subr.mxu0 0.0
    %2798 = vmatpush1.msra.mxu0 0.0
    %2799 = vmatprep.subr.mxu0 0.0
    %2800 = vmatpush1.msra.mxu0 0.0
    %2801 = vmatprep.subr.mxu0 0.0
    %2802 = vmatpush1.msra.mxu0 0.0
    %2803 = vmatprep.subr.mxu0 0.0
    %2804 = vmatpush1.msra.mxu0 0.0
    %2805 = vmatprep.subr.mxu0 0.0
    %2806 = vmatpush1.msra.mxu0 0.0
    %2807 = vmatprep.subr.mxu0 0.0
    %2808 = vmatpush1.msra.mxu0 0.0
    %2809 = vmatprep.subr.mxu0 0.0
    %2810 = vmatpush1.msra.mxu0 0.0
    %2811 = vmatprep.subr.mxu0 0.0
    %2812 = vmatpush1.msra.mxu0 0.0
    %2813 = vmatprep.subr.mxu0 0.0
    %2814 = vmatpush1.msra.mxu0 0.0
    %2815 = vmatprep.subr.mxu0 0.0
    %2816 = vmatpush1.msra.mxu0 0.0
    %2817 = vmatprep.subr.mxu0 0.0
    %2818 = vmatpush1.msra.mxu0 0.0
    %2819 = vmatprep.subr.mxu0 0.0
    %2820 = vmatpush1.msra.mxu0 0.0
    %2821 = vmatprep.subr.mxu0 0.0
    %2822 = vmatpush1.msra.mxu0 0.0
    %2823 = vmatprep.subr.mxu0 0.0
    %2824 = vmatpush1.msra.mxu0 0.0
    %2825 = vmatprep.subr.mxu0 0.0
    %2826 = vmatpush1.msra.mxu0 0.0
    %2827 = vmatprep.subr.mxu0 0.0
    %2828 = vmatpush1.msra.mxu0 0.0
    %2829 = vmatprep.subr.mxu0 0.0
    %2830 = vmatpush1.msra.mxu0 0.0
    %2831 = vmatprep.subr.mxu0 0.0
    %2832 = vmatpush1.msra.mxu0 0.0
    %2833 = vmatprep.subr.mxu0 0.0
    %2834 = vmatpush1.msra.mxu0 0.0
    %2835 = vmatprep.subr.mxu0 0.0
    %2836 = vmatpush1.msra.mxu0 0.0
    %2837 = vmatprep.subr.mxu0 0.0
    %2838 = vmatpush1.msra.mxu0 0.0
    %2839 = vmatprep.subr.mxu0 0.0
    %2840 = vmatpush1.msra.mxu0 0.0
    %2841 = vmatprep.subr.mxu0 0.0
    %2842 = vmatpush1.msra.mxu0 0.0
    %2843 = vmatprep.subr.mxu0 0.0
    %2844 = vmatpush1.msra.mxu0 0.0
    %2845 = vmatprep.mubr.f32.mxu0 0.0
    %2846 = vmatmul.mubr.f32.gmra.mrb[0].mxu0 %v2779
    %v2847 = vpop.f32.mrb[0].mxu0
    %v2848 = vadd.f32 %v2771, %v2847
    %v2849 = vpop.f32.mrb[0].mxu0
    %v2850 = vadd.f32 %v2775, %v2849
    %2851 = vdwg.mxu0
    %v2854 = vcombine.low %v2848, %v2850
    %v2856 = vunpack.c.l.s4 1983009808
    %v2857 = vunpack.c.0.s8 %v2856
    %v2858 = vlaneseq
    %v2859 = vshrl.u32 %v2858, 7
    %v2860 = vsub.s32 %v2857, %v2859
    %v2861 = vrot.slane %v2854, %v2860
    %2863 = vst [vmem:[#allocation2] sm:$0xf] %v2861
    %v2864 = vld [vmem:[%s1362] sm:$0x3]
    %v2865 = vld [vmem:[#allocation7] sm:$0xff]
    %v2866 = vld [vmem:[#allocation7 + $0x8] sm:$0xff]
    %v2867 = vld [vmem:[#allocation7 + $0x10] sm:$0xff]
    %v2868 = vld [vmem:[#allocation7 + $0x18] sm:$0xff]
    %v2869 = vld [vmem:[#allocation7 + $0x20] sm:$0xff]
    %v2870 = vld [vmem:[#allocation7 + $0x28] sm:$0xff]
    %v2871 = vld [vmem:[#allocation7 + $0x30] sm:$0xff]
    %v2872 = vld [vmem:[#allocation7 + $0x38] sm:$0xff]
    %v2873 = vld [vmem:[#allocation7 + $0x40] sm:$0xff]
    %v2874 = vld [vmem:[#allocation7 + $0x48] sm:$0xff]
    %v2875 = vld [vmem:[#allocation7 + $0x50] sm:$0xff]
    %v2876 = vld [vmem:[#allocation7 + $0x58] sm:$0xff]
    %v2877 = vld [vmem:[#allocation7 + $0x60] sm:$0xff]
    %v2878 = vld [vmem:[#allocation7 + $0x68] sm:$0xff]
    %v2879 = vld [vmem:[#allocation7 + $0x70] sm:$0xff]
    %v2880 = vld [vmem:[#allocation7 + $0x78] sm:$0xff]
    %v2881 = vld [vmem:[%s6] sm:$0x3]
    %v2883 = vlaneseq
    %v2884 = vshrl.u32 %v2883, 7
    %v2885 = vsub.s32 0, %v2884
    %v2886 = vrot.slane %v2881, %v2885
    %v2887 = vlaneseq
    %v2888 = vshrl.u32 %v2887, 7
    %v2889 = vsub.s32 1, %v2888
    %v2890 = vrot.slane %v2881, %v2889
    %v2894 = vsel %vm933, %v2864, 0
    %2896 = vmatprep.subr.mxu0 %v2866
    %2897 = vmatpush1.msra.mxu0 %v2865
    %2898 = vmatprep.subr.mxu0 %v2868
    %2899 = vmatpush1.msra.mxu0 %v2867
    %2900 = vmatprep.subr.mxu0 %v2870
    %2901 = vmatpush1.msra.mxu0 %v2869
    %2902 = vmatprep.subr.mxu0 %v2872
    %2903 = vmatpush1.msra.mxu0 %v2871
    %2904 = vmatprep.subr.mxu0 %v2874
    %2905 = vmatpush1.msra.mxu0 %v2873
    %2906 = vmatprep.subr.mxu0 %v2876
    %2907 = vmatpush1.msra.mxu0 %v2875
    %2908 = vmatprep.subr.mxu0 %v2878
    %2909 = vmatpush1.msra.mxu0 %v2877
    %2910 = vmatprep.subr.mxu0 %v2880
    %2911 = vmatpush1.msra.mxu0 %v2879
    %2912 = vmatprep.subr.mxu0 0.0
    %2913 = vmatpush1.msra.mxu0 0.0
    %2914 = vmatprep.subr.mxu0 0.0
    %2915 = vmatpush1.msra.mxu0 0.0
    %2916 = vmatprep.subr.mxu0 0.0
    %2917 = vmatpush1.msra.mxu0 0.0
    %2918 = vmatprep.subr.mxu0 0.0
    %2919 = vmatpush1.msra.mxu0 0.0
    %2920 = vmatprep.subr.mxu0 0.0
    %2921 = vmatpush1.msra.mxu0 0.0
    %2922 = vmatprep.subr.mxu0 0.0
    %2923 = vmatpush1.msra.mxu0 0.0
    %2924 = vmatprep.subr.mxu0 0.0
    %2925 = vmatpush1.msra.mxu0 0.0
    %2926 = vmatprep.subr.mxu0 0.0
    %2927 = vmatpush1.msra.mxu0 0.0
    %2928 = vmatprep.subr.mxu0 0.0
    %2929 = vmatpush1.msra.mxu0 0.0
    %2930 = vmatprep.subr.mxu0 0.0
    %2931 = vmatpush1.msra.mxu0 0.0
    %2932 = vmatprep.subr.mxu0 0.0
    %2933 = vmatpush1.msra.mxu0 0.0
    %2934 = vmatprep.subr.mxu0 0.0
    %2935 = vmatpush1.msra.mxu0 0.0
    %2936 = vmatprep.subr.mxu0 0.0
    %2937 = vmatpush1.msra.mxu0 0.0
    %2938 = vmatprep.subr.mxu0 0.0
    %2939 = vmatpush1.msra.mxu0 0.0
    %2940 = vmatprep.subr.mxu0 0.0
    %2941 = vmatpush1.msra.mxu0 0.0
    %2942 = vmatprep.subr.mxu0 0.0
    %2943 = vmatpush1.msra.mxu0 0.0
    %2944 = vmatprep.subr.mxu0 0.0
    %2945 = vmatpush1.msra.mxu0 0.0
    %2946 = vmatprep.subr.mxu0 0.0
    %2947 = vmatpush1.msra.mxu0 0.0
    %2948 = vmatprep.subr.mxu0 0.0
    %2949 = vmatpush1.msra.mxu0 0.0
    %2950 = vmatprep.subr.mxu0 0.0
    %2951 = vmatpush1.msra.mxu0 0.0
    %2952 = vmatprep.subr.mxu0 0.0
    %2953 = vmatpush1.msra.mxu0 0.0
    %2954 = vmatprep.subr.mxu0 0.0
    %2955 = vmatpush1.msra.mxu0 0.0
    %2956 = vmatprep.subr.mxu0 0.0
    %2957 = vmatpush1.msra.mxu0 0.0
    %2958 = vmatprep.subr.mxu0 0.0
    %2959 = vmatpush1.msra.mxu0 0.0
    %2960 = vmatprep.mubr.f32.mxu0 0.0
    %2961 = vmatmul.mubr.f32.gmra.mrb[0].mxu0 %v2894
    %v2962 = vpop.f32.mrb[0].mxu0
    %v2963 = vadd.f32 %v2886, %v2962
    %v2964 = vpop.f32.mrb[0].mxu0
    %v2965 = vadd.f32 %v2890, %v2964
    %2966 = vdwg.mxu0
    %v2969 = vcombine.low %v2963, %v2965
    %v2971 = vunpack.c.l.s4 1983009808
    %v2972 = vunpack.c.0.s8 %v2971
    %v2973 = vlaneseq
    %v2974 = vshrl.u32 %v2973, 7
    %v2975 = vsub.s32 %v2972, %v2974
    %v2976 = vrot.slane %v2969, %v2975
    %2978 = vst [vmem:[%s285] sm:$0xf] %v2976
    %v2979 = vld [vmem:[%s1599] sm:$0x3]
    %v2980 = vld [vmem:[#allocation7] sm:$0xff]
    %v2981 = vld [vmem:[#allocation7 + $0x8] sm:$0xff]
    %v2982 = vld [vmem:[#allocation7 + $0x10] sm:$0xff]
    %v2983 = vld [vmem:[#allocation7 + $0x18] sm:$0xff]
    %v2984 = vld [vmem:[#allocation7 + $0x20] sm:$0xff]
    %v2985 = vld [vmem:[#allocation7 + $0x28] sm:$0xff]
    %v2986 = vld [vmem:[#allocation7 + $0x30] sm:$0xff]
    %v2987 = vld [vmem:[#allocation7 + $0x38] sm:$0xff]
    %v2988 = vld [vmem:[#allocation7 + $0x40] sm:$0xff]
    %v2989 = vld [vmem:[#allocation7 + $0x48] sm:$0xff]
    %v2990 = vld [vmem:[#allocation7 + $0x50] sm:$0xff]
    %v2991 = vld [vmem:[#allocation7 + $0x58] sm:$0xff]
    %v2992 = vld [vmem:[#allocation7 + $0x60] sm:$0xff]
    %v2993 = vld [vmem:[#allocation7 + $0x68] sm:$0xff]
    %v2994 = vld [vmem:[#allocation7 + $0x70] sm:$0xff]
    %v2995 = vld [vmem:[#allocation7 + $0x78] sm:$0xff]
    %v2996 = vld [vmem:[%s6] sm:$0x3]
    %v2998 = vlaneseq
    %v2999 = vshrl.u32 %v2998, 7
    %v3000 = vsub.s32 0, %v2999
    %v3001 = vrot.slane %v2996, %v3000
    %v3002 = vlaneseq
    %v3003 = vshrl.u32 %v3002, 7
    %v3004 = vsub.s32 1, %v3003
    %v3005 = vrot.slane %v2996, %v3004
    %v3009 = vsel %vm933, %v2979, 0
    %3011 = vmatprep.subr.mxu0 %v2981
    %3012 = vmatpush1.msra.mxu0 %v2980
    %3013 = vmatprep.subr.mxu0 %v2983
    %3014 = vmatpush1.msra.mxu0 %v2982
    %3015 = vmatprep.subr.mxu0 %v2985
    %3016 = vmatpush1.msra.mxu0 %v2984
    %3017 = vmatprep.subr.mxu0 %v2987
    %3018 = vmatpush1.msra.mxu0 %v2986
    %3019 = vmatprep.subr.mxu0 %v2989
    %3020 = vmatpush1.msra.mxu0 %v2988
    %3021 = vmatprep.subr.mxu0 %v2991
    %3022 = vmatpush1.msra.mxu0 %v2990
    %3023 = vmatprep.subr.mxu0 %v2993
    %3024 = vmatpush1.msra.mxu0 %v2992
    %3025 = vmatprep.subr.mxu0 %v2995
    %3026 = vmatpush1.msra.mxu0 %v2994
    %3027 = vmatprep.subr.mxu0 0.0
    %3028 = vmatpush1.msra.mxu0 0.0
    %3029 = vmatprep.subr.mxu0 0.0
    %3030 = vmatpush1.msra.mxu0 0.0
    %3031 = vmatprep.subr.mxu0 0.0
    %3032 = vmatpush1.msra.mxu0 0.0
    %3033 = vmatprep.subr.mxu0 0.0
    %3034 = vmatpush1.msra.mxu0 0.0
    %3035 = vmatprep.subr.mxu0 0.0
    %3036 = vmatpush1.msra.mxu0 0.0
    %3037 = vmatprep.subr.mxu0 0.0
    %3038 = vmatpush1.msra.mxu0 0.0
    %3039 = vmatprep.subr.mxu0 0.0
    %3040 = vmatpush1.msra.mxu0 0.0
    %3041 = vmatprep.subr.mxu0 0.0
    %3042 = vmatpush1.msra.mxu0 0.0
    %3043 = vmatprep.subr.mxu0 0.0
    %3044 = vmatpush1.msra.mxu0 0.0
    %3045 = vmatprep.subr.mxu0 0.0
    %3046 = vmatpush1.msra.mxu0 0.0
    %3047 = vmatprep.subr.mxu0 0.0
    %3048 = vmatpush1.msra.mxu0 0.0
    %3049 = vmatprep.subr.mxu0 0.0
    %3050 = vmatpush1.msra.mxu0 0.0
    %3051 = vmatprep.subr.mxu0 0.0
    %3052 = vmatpush1.msra.mxu0 0.0
    %3053 = vmatprep.subr.mxu0 0.0
    %3054 = vmatpush1.msra.mxu0 0.0
    %3055 = vmatprep.subr.mxu0 0.0
    %3056 = vmatpush1.msra.mxu0 0.0
    %3057 = vmatprep.subr.mxu0 0.0
    %3058 = vmatpush1.msra.mxu0 0.0
    %3059 = vmatprep.subr.mxu0 0.0
    %3060 = vmatpush1.msra.mxu0 0.0
    %3061 = vmatprep.subr.mxu0 0.0
    %3062 = vmatpush1.msra.mxu0 0.0
    %3063 = vmatprep.subr.mxu0 0.0
    %3064 = vmatpush1.msra.mxu0 0.0
    %3065 = vmatprep.subr.mxu0 0.0
    %3066 = vmatpush1.msra.mxu0 0.0
    %3067 = vmatprep.subr.mxu0 0.0
    %3068 = vmatpush1.msra.mxu0 0.0
    %3069 = vmatprep.subr.mxu0 0.0
    %3070 = vmatpush1.msra.mxu0 0.0
    %3071 = vmatprep.subr.mxu0 0.0
    %3072 = vmatpush1.msra.mxu0 0.0
    %3073 = vmatprep.subr.mxu0 0.0
    %3074 = vmatpush1.msra.mxu0 0.0
    %3075 = vmatprep.mubr.f32.mxu0 0.0
    %3076 = vmatmul.mubr.f32.gmra.mrb[0].mxu0 %v3009
    %v3077 = vpop.f32.mrb[0].mxu0
    %v3078 = vadd.f32 %v3001, %v3077
    %v3079 = vpop.f32.mrb[0].mxu0
    %v3080 = vadd.f32 %v3005, %v3079
    %3081 = vdwg.mxu0
    %v3084 = vcombine.low %v3078, %v3080
    %v3086 = vunpack.c.l.s4 1983009808
    %v3087 = vunpack.c.0.s8 %v3086
    %v3088 = vlaneseq
    %v3089 = vshrl.u32 %v3088, 7
    %v3090 = vsub.s32 %v3087, %v3089
    %v3091 = vrot.slane %v3084, %v3090
    %3093 = vst [vmem:[%s390] sm:$0xf] %v3091
    %v3094 = vld [vmem:[%s1836] sm:$0x3]
    %v3095 = vld [vmem:[#allocation7] sm:$0xff]
    %v3096 = vld [vmem:[#allocation7 + $0x8] sm:$0xff]
    %v3097 = vld [vmem:[#allocation7 + $0x10] sm:$0xff]
    %v3098 = vld [vmem:[#allocation7 + $0x18] sm:$0xff]
    %v3099 = vld [vmem:[#allocation7 + $0x20] sm:$0xff]
    %v3100 = vld [vmem:[#allocation7 + $0x28] sm:$0xff]
    %v3101 = vld [vmem:[#allocation7 + $0x30] sm:$0xff]
    %v3102 = vld [vmem:[#allocation7 + $0x38] sm:$0xff]
    %v3103 = vld [vmem:[#allocation7 + $0x40] sm:$0xff]
    %v3104 = vld [vmem:[#allocation7 + $0x48] sm:$0xff]
    %v3105 = vld [vmem:[#allocation7 + $0x50] sm:$0xff]
    %v3106 = vld [vmem:[#allocation7 + $0x58] sm:$0xff]
    %v3107 = vld [vmem:[#allocation7 + $0x60] sm:$0xff]
    %v3108 = vld [vmem:[#allocation7 + $0x68] sm:$0xff]
    %v3109 = vld [vmem:[#allocation7 + $0x70] sm:$0xff]
    %v3110 = vld [vmem:[#allocation7 + $0x78] sm:$0xff]
    %v3111 = vld [vmem:[%s6] sm:$0x3]
    %v3113 = vlaneseq
    %v3114 = vshrl.u32 %v3113, 7
    %v3115 = vsub.s32 0, %v3114
    %v3116 = vrot.slane %v3111, %v3115
    %v3117 = vlaneseq
    %v3118 = vshrl.u32 %v3117, 7
    %v3119 = vsub.s32 1, %v3118
    %v3120 = vrot.slane %v3111, %v3119
    %v3124 = vsel %vm933, %v3094, 0
    %3126 = vmatprep.subr.mxu0 %v3096
    %3127 = vmatpush1.msra.mxu0 %v3095
    %3128 = vmatprep.subr.mxu0 %v3098
    %3129 = vmatpush1.msra.mxu0 %v3097
    %3130 = vmatprep.subr.mxu0 %v3100
    %3131 = vmatpush1.msra.mxu0 %v3099
    %3132 = vmatprep.subr.mxu0 %v3102
    %3133 = vmatpush1.msra.mxu0 %v3101
    %3134 = vmatprep.subr.mxu0 %v3104
    %3135 = vmatpush1.msra.mxu0 %v3103
    %3136 = vmatprep.subr.mxu0 %v3106
    %3137 = vmatpush1.msra.mxu0 %v3105
    %3138 = vmatprep.subr.mxu0 %v3108
    %3139 = vmatpush1.msra.mxu0 %v3107
    %3140 = vmatprep.subr.mxu0 %v3110
    %3141 = vmatpush1.msra.mxu0 %v3109
    %3142 = vmatprep.subr.mxu0 0.0
    %3143 = vmatpush1.msra.mxu0 0.0
    %3144 = vmatprep.subr.mxu0 0.0
    %3145 = vmatpush1.msra.mxu0 0.0
    %3146 = vmatprep.subr.mxu0 0.0
    %3147 = vmatpush1.msra.mxu0 0.0
    %3148 = vmatprep.subr.mxu0 0.0
    %3149 = vmatpush1.msra.mxu0 0.0
    %3150 = vmatprep.subr.mxu0 0.0
    %3151 = vmatpush1.msra.mxu0 0.0
    %3152 = vmatprep.subr.mxu0 0.0
    %3153 = vmatpush1.msra.mxu0 0.0
    %3154 = vmatprep.subr.mxu0 0.0
    %3155 = vmatpush1.msra.mxu0 0.0
    %3156 = vmatprep.subr.mxu0 0.0
    %3157 = vmatpush1.msra.mxu0 0.0
    %3158 = vmatprep.subr.mxu0 0.0
    %3159 = vmatpush1.msra.mxu0 0.0
    %3160 = vmatprep.subr.mxu0 0.0
    %3161 = vmatpush1.msra.mxu0 0.0
    %3162 = vmatprep.subr.mxu0 0.0
    %3163 = vmatpush1.msra.mxu0 0.0
    %3164 = vmatprep.subr.mxu0 0.0
    %3165 = vmatpush1.msra.mxu0 0.0
    %3166 = vmatprep.subr.mxu0 0.0
    %3167 = vmatpush1.msra.mxu0 0.0
    %3168 = vmatprep.subr.mxu0 0.0
    %3169 = vmatpush1.msra.mxu0 0.0
    %3170 = vmatprep.subr.mxu0 0.0
    %3171 = vmatpush1.msra.mxu0 0.0
    %3172 = vmatprep.subr.mxu0 0.0
    %3173 = vmatpush1.msra.mxu0 0.0
    %3174 = vmatprep.subr.mxu0 0.0
    %3175 = vmatpush1.msra.mxu0 0.0
    %3176 = vmatprep.subr.mxu0 0.0
    %3177 = vmatpush1.msra.mxu0 0.0
    %3178 = vmatprep.subr.mxu0 0.0
    %3179 = vmatpush1.msra.mxu0 0.0
    %3180 = vmatprep.subr.mxu0 0.0
    %3181 = vmatpush1.msra.mxu0 0.0
    %3182 = vmatprep.subr.mxu0 0.0
    %3183 = vmatpush1.msra.mxu0 0.0
    %3184 = vmatprep.subr.mxu0 0.0
    %3185 = vmatpush1.msra.mxu0 0.0
    %3186 = vmatprep.subr.mxu0 0.0
    %3187 = vmatpush1.msra.mxu0 0.0
    %3188 = vmatprep.subr.mxu0 0.0
    %3189 = vmatpush1.msra.mxu0 0.0
    %3190 = vmatprep.mubr.f32.mxu0 0.0
    %3191 = vmatmul.mubr.f32.gmra.mrb[0].mxu0 %v3124
    %v3192 = vpop.f32.mrb[0].mxu0
    %v3193 = vadd.f32 %v3116, %v3192
    %v3194 = vpop.f32.mrb[0].mxu0
    %v3195 = vadd.f32 %v3120, %v3194
    %3196 = vdwg.mxu0
    %v3199 = vcombine.low %v3193, %v3195
    %v3201 = vunpack.c.l.s4 1983009808
    %v3202 = vunpack.c.0.s8 %v3201
    %v3203 = vlaneseq
    %v3204 = vshrl.u32 %v3203, 7
    %v3205 = vsub.s32 %v3202, %v3204
    %v3206 = vrot.slane %v3199, %v3205
    %3208 = vst [vmem:[%s495] sm:$0xf] %v3206
    %v3209 = vld [vmem:[%s1842] sm:$0x3]
    %v3210 = vld [vmem:[#allocation7] sm:$0xff]
    %v3211 = vld [vmem:[#allocation7 + $0x8] sm:$0xff]
    %v3212 = vld [vmem:[#allocation7 + $0x10] sm:$0xff]
    %v3213 = vld [vmem:[#allocation7 + $0x18] sm:$0xff]
    %v3214 = vld [vmem:[#allocation7 + $0x20] sm:$0xff]
    %v3215 = vld [vmem:[#allocation7 + $0x28] sm:$0xff]
    %v3216 = vld [vmem:[#allocation7 + $0x30] sm:$0xff]
    %v3217 = vld [vmem:[#allocation7 + $0x38] sm:$0xff]
    %v3218 = vld [vmem:[#allocation7 + $0x40] sm:$0xff]
    %v3219 = vld [vmem:[#allocation7 + $0x48] sm:$0xff]
    %v3220 = vld [vmem:[#allocation7 + $0x50] sm:$0xff]
    %v3221 = vld [vmem:[#allocation7 + $0x58] sm:$0xff]
    %v3222 = vld [vmem:[#allocation7 + $0x60] sm:$0xff]
    %v3223 = vld [vmem:[#allocation7 + $0x68] sm:$0xff]
    %v3224 = vld [vmem:[#allocation7 + $0x70] sm:$0xff]
    %v3225 = vld [vmem:[#allocation7 + $0x78] sm:$0xff]
    %v3226 = vld [vmem:[%s6] sm:$0x3]
    %v3228 = vlaneseq
    %v3229 = vshrl.u32 %v3228, 7
    %v3230 = vsub.s32 0, %v3229
    %v3231 = vrot.slane %v3226, %v3230
    %v3232 = vlaneseq
    %v3233 = vshrl.u32 %v3232, 7
    %v3234 = vsub.s32 1, %v3233
    %v3235 = vrot.slane %v3226, %v3234
    %v3239 = vsel %vm933, %v3209, 0
    %3241 = vmatprep.subr.mxu0 %v3211
    %3242 = vmatpush1.msra.mxu0 %v3210
    %3243 = vmatprep.subr.mxu0 %v3213
    %3244 = vmatpush1.msra.mxu0 %v3212
    %3245 = vmatprep.subr.mxu0 %v3215
    %3246 = vmatpush1.msra.mxu0 %v3214
    %3247 = vmatprep.subr.mxu0 %v3217
    %3248 = vmatpush1.msra.mxu0 %v3216
    %3249 = vmatprep.subr.mxu0 %v3219
    %3250 = vmatpush1.msra.mxu0 %v3218
    %3251 = vmatprep.subr.mxu0 %v3221
    %3252 = vmatpush1.msra.mxu0 %v3220
    %3253 = vmatprep.subr.mxu0 %v3223
    %3254 = vmatpush1.msra.mxu0 %v3222
    %3255 = vmatprep.subr.mxu0 %v3225
    %3256 = vmatpush1.msra.mxu0 %v3224
    %3257 = vmatprep.subr.mxu0 0.0
    %3258 = vmatpush1.msra.mxu0 0.0
    %3259 = vmatprep.subr.mxu0 0.0
    %3260 = vmatpush1.msra.mxu0 0.0
    %3261 = vmatprep.subr.mxu0 0.0
    %3262 = vmatpush1.msra.mxu0 0.0
    %3263 = vmatprep.subr.mxu0 0.0
    %3264 = vmatpush1.msra.mxu0 0.0
    %3265 = vmatprep.subr.mxu0 0.0
    %3266 = vmatpush1.msra.mxu0 0.0
    %3267 = vmatprep.subr.mxu0 0.0
    %3268 = vmatpush1.msra.mxu0 0.0
    %3269 = vmatprep.subr.mxu0 0.0
    %3270 = vmatpush1.msra.mxu0 0.0
    %3271 = vmatprep.subr.mxu0 0.0
    %3272 = vmatpush1.msra.mxu0 0.0
    %3273 = vmatprep.subr.mxu0 0.0
    %3274 = vmatpush1.msra.mxu0 0.0
    %3275 = vmatprep.subr.mxu0 0.0
    %3276 = vmatpush1.msra.mxu0 0.0
    %3277 = vmatprep.subr.mxu0 0.0
    %3278 = vmatpush1.msra.mxu0 0.0
    %3279 = vmatprep.subr.mxu0 0.0
    %3280 = vmatpush1.msra.mxu0 0.0
    %3281 = vmatprep.subr.mxu0 0.0
    %3282 = vmatpush1.msra.mxu0 0.0
    %3283 = vmatprep.subr.mxu0 0.0
    %3284 = vmatpush1.msra.mxu0 0.0
    %3285 = vmatprep.subr.mxu0 0.0
    %3286 = vmatpush1.msra.mxu0 0.0
    %3287 = vmatprep.subr.mxu0 0.0
    %3288 = vmatpush1.msra.mxu0 0.0
    %3289 = vmatprep.subr.mxu0 0.0
    %3290 = vmatpush1.msra.mxu0 0.0
    %3291 = vmatprep.subr.mxu0 0.0
    %3292 = vmatpush1.msra.mxu0 0.0
    %3293 = vmatprep.subr.mxu0 0.0
    %3294 = vmatpush1.msra.mxu0 0.0
    %3295 = vmatprep.subr.mxu0 0.0
    %3296 = vmatpush1.msra.mxu0 0.0
    %3297 = vmatprep.subr.mxu0 0.0
    %3298 = vmatpush1.msra.mxu0 0.0
    %3299 = vmatprep.subr.mxu0 0.0
    %3300 = vmatpush1.msra.mxu0 0.0
    %3301 = vmatprep.subr.mxu0 0.0
    %3302 = vmatpush1.msra.mxu0 0.0
    %3303 = vmatprep.subr.mxu0 0.0
    %3304 = vmatpush1.msra.mxu0 0.0
    %3305 = vmatprep.mubr.f32.mxu0 0.0
    %3306 = vmatmul.mubr.f32.gmra.mrb[0].mxu0 %v3239
    %v3307 = vpop.f32.mrb[0].mxu0
    %v3308 = vadd.f32 %v3231, %v3307
    %v3309 = vpop.f32.mrb[0].mxu0
    %v3310 = vadd.f32 %v3235, %v3309
    %3311 = vdwg.mxu0
    %v3314 = vcombine.low %v3308, %v3310
    %v3316 = vunpack.c.l.s4 1983009808
    %v3317 = vunpack.c.0.s8 %v3316
    %v3318 = vlaneseq
    %v3319 = vshrl.u32 %v3318, 7
    %v3320 = vsub.s32 %v3317, %v3319
    %v3321 = vrot.slane %v3314, %v3320
    %3323 = vst [vmem:[%s600] sm:$0xf] %v3321
    %v3324 = vld [vmem:[%s1605] sm:$0x3]
    %v3325 = vld [vmem:[#allocation7] sm:$0xff]
    %v3326 = vld [vmem:[#allocation7 + $0x8] sm:$0xff]
    %v3327 = vld [vmem:[#allocation7 + $0x10] sm:$0xff]
    %v3328 = vld [vmem:[#allocation7 + $0x18] sm:$0xff]
    %v3329 = vld [vmem:[#allocation7 + $0x20] sm:$0xff]
    %v3330 = vld [vmem:[#allocation7 + $0x28] sm:$0xff]
    %v3331 = vld [vmem:[#allocation7 + $0x30] sm:$0xff]
    %v3332 = vld [vmem:[#allocation7 + $0x38] sm:$0xff]
    %v3333 = vld [vmem:[#allocation7 + $0x40] sm:$0xff]
    %v3334 = vld [vmem:[#allocation7 + $0x48] sm:$0xff]
    %v3335 = vld [vmem:[#allocation7 + $0x50] sm:$0xff]
    %v3336 = vld [vmem:[#allocation7 + $0x58] sm:$0xff]
    %v3337 = vld [vmem:[#allocation7 + $0x60] sm:$0xff]
    %v3338 = vld [vmem:[#allocation7 + $0x68] sm:$0xff]
    %v3339 = vld [vmem:[#allocation7 + $0x70] sm:$0xff]
    %v3340 = vld [vmem:[#allocation7 + $0x78] sm:$0xff]
    %v3341 = vld [vmem:[%s6] sm:$0x3]
    %v3343 = vlaneseq
    %v3344 = vshrl.u32 %v3343, 7
    %v3345 = vsub.s32 0, %v3344
    %v3346 = vrot.slane %v3341, %v3345
    %v3347 = vlaneseq
    %v3348 = vshrl.u32 %v3347, 7
    %v3349 = vsub.s32 1, %v3348
    %v3350 = vrot.slane %v3341, %v3349
    %v3354 = vsel %vm933, %v3324, 0
    %3356 = vmatprep.subr.mxu0 %v3326
    %3357 = vmatpush1.msra.mxu0 %v3325
    %3358 = vmatprep.subr.mxu0 %v3328
    %3359 = vmatpush1.msra.mxu0 %v3327
    %3360 = vmatprep.subr.mxu0 %v3330
    %3361 = vmatpush1.msra.mxu0 %v3329
    %3362 = vmatprep.subr.mxu0 %v3332
    %3363 = vmatpush1.msra.mxu0 %v3331
    %3364 = vmatprep.subr.mxu0 %v3334
    %3365 = vmatpush1.msra.mxu0 %v3333
    %3366 = vmatprep.subr.mxu0 %v3336
    %3367 = vmatpush1.msra.mxu0 %v3335
    %3368 = vmatprep.subr.mxu0 %v3338
    %3369 = vmatpush1.msra.mxu0 %v3337
    %3370 = vmatprep.subr.mxu0 %v3340
    %3371 = vmatpush1.msra.mxu0 %v3339
    %3372 = vmatprep.subr.mxu0 0.0
    %3373 = vmatpush1.msra.mxu0 0.0
    %3374 = vmatprep.subr.mxu0 0.0
    %3375 = vmatpush1.msra.mxu0 0.0
    %3376 = vmatprep.subr.mxu0 0.0
    %3377 = vmatpush1.msra.mxu0 0.0
    %3378 = vmatprep.subr.mxu0 0.0
    %3379 = vmatpush1.msra.mxu0 0.0
    %3380 = vmatprep.subr.mxu0 0.0
    %3381 = vmatpush1.msra.mxu0 0.0
    %3382 = vmatprep.subr.mxu0 0.0
    %3383 = vmatpush1.msra.mxu0 0.0
    %3384 = vmatprep.subr.mxu0 0.0
    %3385 = vmatpush1.msra.mxu0 0.0
    %3386 = vmatprep.subr.mxu0 0.0
    %3387 = vmatpush1.msra.mxu0 0.0
    %3388 = vmatprep.subr.mxu0 0.0
    %3389 = vmatpush1.msra.mxu0 0.0
    %3390 = vmatprep.subr.mxu0 0.0
    %3391 = vmatpush1.msra.mxu0 0.0
    %3392 = vmatprep.subr.mxu0 0.0
    %3393 = vmatpush1.msra.mxu0 0.0
    %3394 = vmatprep.subr.mxu0 0.0
    %3395 = vmatpush1.msra.mxu0 0.0
    %3396 = vmatprep.subr.mxu0 0.0
    %3397 = vmatpush1.msra.mxu0 0.0
    %3398 = vmatprep.subr.mxu0 0.0
    %3399 = vmatpush1.msra.mxu0 0.0
    %3400 = vmatprep.subr.mxu0 0.0
    %3401 = vmatpush1.msra.mxu0 0.0
    %3402 = vmatprep.subr.mxu0 0.0
    %3403 = vmatpush1.msra.mxu0 0.0
    %3404 = vmatprep.subr.mxu0 0.0
    %3405 = vmatpush1.msra.mxu0 0.0
    %3406 = vmatprep.subr.mxu0 0.0
    %3407 = vmatpush1.msra.mxu0 0.0
    %3408 = vmatprep.subr.mxu0 0.0
    %3409 = vmatpush1.msra.mxu0 0.0
    %3410 = vmatprep.subr.mxu0 0.0
    %3411 = vmatpush1.msra.mxu0 0.0
    %3412 = vmatprep.subr.mxu0 0.0
    %3413 = vmatpush1.msra.mxu0 0.0
    %3414 = vmatprep.subr.mxu0 0.0
    %3415 = vmatpush1.msra.mxu0 0.0
    %3416 = vmatprep.subr.mxu0 0.0
    %3417 = vmatpush1.msra.mxu0 0.0
    %3418 = vmatprep.subr.mxu0 0.0
    %3419 = vmatpush1.msra.mxu0 0.0
    %3420 = vmatprep.mubr.f32.mxu0 0.0
    %3421 = vmatmul.mubr.f32.gmra.mrb[0].mxu0 %v3354
    %v3422 = vpop.f32.mrb[0].mxu0
    %v3423 = vadd.f32 %v3346, %v3422
    %v3424 = vpop.f32.mrb[0].mxu0
    %v3425 = vadd.f32 %v3350, %v3424
    %3426 = vdwg.mxu0
    %v3429 = vcombine.low %v3423, %v3425
    %v3431 = vunpack.c.l.s4 1983009808
    %v3432 = vunpack.c.0.s8 %v3431
    %v3433 = vlaneseq
    %v3434 = vshrl.u32 %v3433, 7
    %v3435 = vsub.s32 %v3432, %v3434
    %v3436 = vrot.slane %v3429, %v3435
    %3438 = vst [vmem:[%s705] sm:$0xf] %v3436
    %v3439 = vld [vmem:[%s1368] sm:$0x3]
    %v3440 = vld [vmem:[#allocation7] sm:$0xff]
    %v3441 = vld [vmem:[#allocation7 + $0x8] sm:$0xff]
    %v3442 = vld [vmem:[#allocation7 + $0x10] sm:$0xff]
    %v3443 = vld [vmem:[#allocation7 + $0x18] sm:$0xff]
    %v3444 = vld [vmem:[#allocation7 + $0x20] sm:$0xff]
    %v3445 = vld [vmem:[#allocation7 + $0x28] sm:$0xff]
    %v3446 = vld [vmem:[#allocation7 + $0x30] sm:$0xff]
    %v3447 = vld [vmem:[#allocation7 + $0x38] sm:$0xff]
    %v3448 = vld [vmem:[#allocation7 + $0x40] sm:$0xff]
    %v3449 = vld [vmem:[#allocation7 + $0x48] sm:$0xff]
    %v3450 = vld [vmem:[#allocation7 + $0x50] sm:$0xff]
    %v3451 = vld [vmem:[#allocation7 + $0x58] sm:$0xff]
    %v3452 = vld [vmem:[#allocation7 + $0x60] sm:$0xff]
    %v3453 = vld [vmem:[#allocation7 + $0x68] sm:$0xff]
    %v3454 = vld [vmem:[#allocation7 + $0x70] sm:$0xff]
    %v3455 = vld [vmem:[#allocation7 + $0x78] sm:$0xff]
    %v3456 = vld [vmem:[%s6] sm:$0x3]
    %v3458 = vlaneseq
    %v3459 = vshrl.u32 %v3458, 7
    %v3460 = vsub.s32 0, %v3459
    %v3461 = vrot.slane %v3456, %v3460
    %v3462 = vlaneseq
    %v3463 = vshrl.u32 %v3462, 7
    %v3464 = vsub.s32 1, %v3463
    %v3465 = vrot.slane %v3456, %v3464
    %v3469 = vsel %vm933, %v3439, 0
    %3471 = vmatprep.subr.mxu0 %v3441
    %3472 = vmatpush1.msra.mxu0 %v3440
    %3473 = vmatprep.subr.mxu0 %v3443
    %3474 = vmatpush1.msra.mxu0 %v3442
    %3475 = vmatprep.subr.mxu0 %v3445
    %3476 = vmatpush1.msra.mxu0 %v3444
    %3477 = vmatprep.subr.mxu0 %v3447
    %3478 = vmatpush1.msra.mxu0 %v3446
    %3479 = vmatprep.subr.mxu0 %v3449
    %3480 = vmatpush1.msra.mxu0 %v3448
    %3481 = vmatprep.subr.mxu0 %v3451
    %3482 = vmatpush1.msra.mxu0 %v3450
    %3483 = vmatprep.subr.mxu0 %v3453
    %3484 = vmatpush1.msra.mxu0 %v3452
    %3485 = vmatprep.subr.mxu0 %v3455
    %3486 = vmatpush1.msra.mxu0 %v3454
    %3487 = vmatprep.subr.mxu0 0.0
    %3488 = vmatpush1.msra.mxu0 0.0
    %3489 = vmatprep.subr.mxu0 0.0
    %3490 = vmatpush1.msra.mxu0 0.0
    %3491 = vmatprep.subr.mxu0 0.0
    %3492 = vmatpush1.msra.mxu0 0.0
    %3493 = vmatprep.subr.mxu0 0.0
    %3494 = vmatpush1.msra.mxu0 0.0
    %3495 = vmatprep.subr.mxu0 0.0
    %3496 = vmatpush1.msra.mxu0 0.0
    %3497 = vmatprep.subr.mxu0 0.0
    %3498 = vmatpush1.msra.mxu0 0.0
    %3499 = vmatprep.subr.mxu0 0.0
    %3500 = vmatpush1.msra.mxu0 0.0
    %3501 = vmatprep.subr.mxu0 0.0
    %3502 = vmatpush1.msra.mxu0 0.0
    %3503 = vmatprep.subr.mxu0 0.0
    %3504 = vmatpush1.msra.mxu0 0.0
    %3505 = vmatprep.subr.mxu0 0.0
    %3506 = vmatpush1.msra.mxu0 0.0
    %3507 = vmatprep.subr.mxu0 0.0
    %3508 = vmatpush1.msra.mxu0 0.0
    %3509 = vmatprep.subr.mxu0 0.0
    %3510 = vmatpush1.msra.mxu0 0.0
    %3511 = vmatprep.subr.mxu0 0.0
    %3512 = vmatpush1.msra.mxu0 0.0
    %3513 = vmatprep.subr.mxu0 0.0
    %3514 = vmatpush1.msra.mxu0 0.0
    %3515 = vmatprep.subr.mxu0 0.0
    %3516 = vmatpush1.msra.mxu0 0.0
    %3517 = vmatprep.subr.mxu0 0.0
    %3518 = vmatpush1.msra.mxu0 0.0
    %3519 = vmatprep.subr.mxu0 0.0
    %3520 = vmatpush1.msra.mxu0 0.0
    %3521 = vmatprep.subr.mxu0 0.0
    %3522 = vmatpush1.msra.mxu0 0.0
    %3523 = vmatprep.subr.mxu0 0.0
    %3524 = vmatpush1.msra.mxu0 0.0
    %3525 = vmatprep.subr.mxu0 0.0
    %3526 = vmatpush1.msra.mxu0 0.0
    %3527 = vmatprep.subr.mxu0 0.0
    %3528 = vmatpush1.msra.mxu0 0.0
    %3529 = vmatprep.subr.mxu0 0.0
    %3530 = vmatpush1.msra.mxu0 0.0
    %3531 = vmatprep.subr.mxu0 0.0
    %3532 = vmatpush1.msra.mxu0 0.0
    %3533 = vmatprep.subr.mxu0 0.0
    %3534 = vmatpush1.msra.mxu0 0.0
    %3535 = vmatprep.mubr.f32.mxu0 0.0
    %3536 = vmatmul.mubr.f32.gmra.mrb[0].mxu0 %v3469
    %v3537 = vpop.f32.mrb[0].mxu0
    %v3538 = vadd.f32 %v3461, %v3537
    %v3539 = vpop.f32.mrb[0].mxu0
    %v3540 = vadd.f32 %v3465, %v3539
    %3541 = vdwg.mxu0
    %v3544 = vcombine.low %v3538, %v3540
    %v3546 = vunpack.c.l.s4 1983009808
    %v3547 = vunpack.c.0.s8 %v3546
    %v3548 = vlaneseq
    %v3549 = vshrl.u32 %v3548, 7
    %v3550 = vsub.s32 %v3547, %v3549
    %v3551 = vrot.slane %v3544, %v3550
    %3553 = vst [vmem:[%s810] sm:$0xf] %v3551
    %v3554 = vld [vmem:[%s1129] sm:$0x3]
    %v3555 = vld [vmem:[#allocation7] sm:$0xff]
    %v3556 = vld [vmem:[#allocation7 + $0x8] sm:$0xff]
    %v3557 = vld [vmem:[#allocation7 + $0x10] sm:$0xff]
    %v3558 = vld [vmem:[#allocation7 + $0x18] sm:$0xff]
    %v3559 = vld [vmem:[#allocation7 + $0x20] sm:$0xff]
    %v3560 = vld [vmem:[#allocation7 + $0x28] sm:$0xff]
    %v3561 = vld [vmem:[#allocation7 + $0x30] sm:$0xff]
    %v3562 = vld [vmem:[#allocation7 + $0x38] sm:$0xff]
    %v3563 = vld [vmem:[#allocation7 + $0x40] sm:$0xff]
    %v3564 = vld [vmem:[#allocation7 + $0x48] sm:$0xff]
    %v3565 = vld [vmem:[#allocation7 + $0x50] sm:$0xff]
    %v3566 = vld [vmem:[#allocation7 + $0x58] sm:$0xff]
    %v3567 = vld [vmem:[#allocation7 + $0x60] sm:$0xff]
    %v3568 = vld [vmem:[#allocation7 + $0x68] sm:$0xff]
    %v3569 = vld [vmem:[#allocation7 + $0x70] sm:$0xff]
    %v3570 = vld [vmem:[#allocation7 + $0x78] sm:$0xff]
    %v3571 = vld [vmem:[%s6] sm:$0x3]
    %v3573 = vlaneseq
    %v3574 = vshrl.u32 %v3573, 7
    %v3575 = vsub.s32 0, %v3574
    %v3576 = vrot.slane %v3571, %v3575
    %v3577 = vlaneseq
    %v3578 = vshrl.u32 %v3577, 7
    %v3579 = vsub.s32 1, %v3578
    %v3580 = vrot.slane %v3571, %v3579
    %v3584 = vsel %vm933, %v3554, 0
    %3586 = vmatprep.subr.mxu0 %v3556
    %3587 = vmatpush1.msra.mxu0 %v3555
    %3588 = vmatprep.subr.mxu0 %v3558
    %3589 = vmatpush1.msra.mxu0 %v3557
    %3590 = vmatprep.subr.mxu0 %v3560
    %3591 = vmatpush1.msra.mxu0 %v3559
    %3592 = vmatprep.subr.mxu0 %v3562
    %3593 = vmatpush1.msra.mxu0 %v3561
    %3594 = vmatprep.subr.mxu0 %v3564
    %3595 = vmatpush1.msra.mxu0 %v3563
    %3596 = vmatprep.subr.mxu0 %v3566
    %3597 = vmatpush1.msra.mxu0 %v3565
    %3598 = vmatprep.subr.mxu0 %v3568
    %3599 = vmatpush1.msra.mxu0 %v3567
    %3600 = vmatprep.subr.mxu0 %v3570
    %3601 = vmatpush1.msra.mxu0 %v3569
    %3602 = vmatprep.subr.mxu0 0.0
    %3603 = vmatpush1.msra.mxu0 0.0
    %3604 = vmatprep.subr.mxu0 0.0
    %3605 = vmatpush1.msra.mxu0 0.0
    %3606 = vmatprep.subr.mxu0 0.0
    %3607 = vmatpush1.msra.mxu0 0.0
    %3608 = vmatprep.subr.mxu0 0.0
    %3609 = vmatpush1.msra.mxu0 0.0
    %3610 = vmatprep.subr.mxu0 0.0
    %3611 = vmatpush1.msra.mxu0 0.0
    %3612 = vmatprep.subr.mxu0 0.0
    %3613 = vmatpush1.msra.mxu0 0.0
    %3614 = vmatprep.subr.mxu0 0.0
    %3615 = vmatpush1.msra.mxu0 0.0
    %3616 = vmatprep.subr.mxu0 0.0
    %3617 = vmatpush1.msra.mxu0 0.0
    %3618 = vmatprep.subr.mxu0 0.0
    %3619 = vmatpush1.msra.mxu0 0.0
    %3620 = vmatprep.subr.mxu0 0.0
    %3621 = vmatpush1.msra.mxu0 0.0
    %3622 = vmatprep.subr.mxu0 0.0
    %3623 = vmatpush1.msra.mxu0 0.0
    %3624 = vmatprep.subr.mxu0 0.0
    %3625 = vmatpush1.msra.mxu0 0.0
    %3626 = vmatprep.subr.mxu0 0.0
    %3627 = vmatpush1.msra.mxu0 0.0
    %3628 = vmatprep.subr.mxu0 0.0
    %3629 = vmatpush1.msra.mxu0 0.0
    %3630 = vmatprep.subr.mxu0 0.0
    %3631 = vmatpush1.msra.mxu0 0.0
    %3632 = vmatprep.subr.mxu0 0.0
    %3633 = vmatpush1.msra.mxu0 0.0
    %3634 = vmatprep.subr.mxu0 0.0
    %3635 = vmatpush1.msra.mxu0 0.0
    %3636 = vmatprep.subr.mxu0 0.0
    %3637 = vmatpush1.msra.mxu0 0.0
    %3638 = vmatprep.subr.mxu0 0.0
    %3639 = vmatpush1.msra.mxu0 0.0
    %3640 = vmatprep.subr.mxu0 0.0
    %3641 = vmatpush1.msra.mxu0 0.0
    %3642 = vmatprep.subr.mxu0 0.0
    %3643 = vmatpush1.msra.mxu0 0.0
    %3644 = vmatprep.subr.mxu0 0.0
    %3645 = vmatpush1.msra.mxu0 0.0
    %3646 = vmatprep.subr.mxu0 0.0
    %3647 = vmatpush1.msra.mxu0 0.0
    %3648 = vmatprep.subr.mxu0 0.0
    %3649 = vmatpush1.msra.mxu0 0.0
    %3650 = vmatprep.mubr.f32.mxu0 0.0
    %3651 = vmatmul.mubr.f32.gmra.mrb[0].mxu0 %v3584
    %v3652 = vpop.f32.mrb[0].mxu0
    %v3653 = vadd.f32 %v3576, %v3652
    %v3654 = vpop.f32.mrb[0].mxu0
    %v3655 = vadd.f32 %v3580, %v3654
    %3656 = vdwg.mxu0
    %v3659 = vcombine.low %v3653, %v3655
    %v3661 = vunpack.c.l.s4 1983009808
    %v3662 = vunpack.c.0.s8 %v3661
    %v3663 = vlaneseq
    %v3664 = vshrl.u32 %v3663, 7
    %v3665 = vsub.s32 %v3662, %v3664
    %v3666 = vrot.slane %v3659, %v3665
    %3668 = vst [vmem:[%s915] sm:$0xf] %v3666
    %v3669 = vld [vmem:[#allocation9] sm:$0xff]
    %v3670 = vld [vmem:[#allocation9 + $0x8] sm:$0xff]
    %v3671 = vld [vmem:[#allocation9 + $0x10] sm:$0xff]
    %v3672 = vld [vmem:[#allocation9 + $0x18] sm:$0xff]
    %v3673 = vld [vmem:[#allocation9 + $0x20] sm:$0xff]
    %v3674 = vld [vmem:[#allocation9 + $0x28] sm:$0xff]
    %v3675 = vld [vmem:[#allocation9 + $0x30] sm:$0xff]
    %v3676 = vld [vmem:[#allocation9 + $0x38] sm:$0xff]
    %v3677 = vld [vmem:[#allocation9 + $0x40] sm:$0xff]
    %v3678 = vld [vmem:[#allocation9 + $0x48] sm:$0xff]
    %v3679 = vld [vmem:[#allocation9 + $0x50] sm:$0xff]
    %v3680 = vld [vmem:[#allocation9 + $0x58] sm:$0xff]
    %v3681 = vld [vmem:[#allocation9 + $0x60] sm:$0xff]
    %v3682 = vld [vmem:[#allocation9 + $0x68] sm:$0xff]
    %v3683 = vld [vmem:[#allocation9 + $0x70] sm:$0xff]
    %v3684 = vld [vmem:[#allocation9 + $0x78] sm:$0xff]
    %3685 = vmatprep.subr.mxu0 %v3670
    %3686 = vmatpush1.msra.mxu0 %v3669
    %3687 = vmatprep.subr.mxu0 %v3672
    %3688 = vmatpush1.msra.mxu0 %v3671
    %3689 = vmatprep.subr.mxu0 %v3674
    %3690 = vmatpush1.msra.mxu0 %v3673
    %3691 = vmatprep.subr.mxu0 %v3676
    %3692 = vmatpush1.msra.mxu0 %v3675
    %3693 = vmatprep.subr.mxu0 %v3678
    %3694 = vmatpush1.msra.mxu0 %v3677
    %3695 = vmatprep.subr.mxu0 %v3680
    %3696 = vmatpush1.msra.mxu0 %v3679
    %3697 = vmatprep.subr.mxu0 %v3682
    %3698 = vmatpush1.msra.mxu0 %v3681
    %3699 = vmatprep.subr.mxu0 %v3684
    %3700 = vmatpush1.msra.mxu0 %v3683
    %3701 = vmatprep.subr.mxu0 0.0
    %3702 = vmatpush1.msra.mxu0 0.0
    %3703 = vmatprep.subr.mxu0 0.0
    %3704 = vmatpush1.msra.mxu0 0.0
    %3705 = vmatprep.subr.mxu0 0.0
    %3706 = vmatpush1.msra.mxu0 0.0
    %3707 = vmatprep.subr.mxu0 0.0
    %3708 = vmatpush1.msra.mxu0 0.0
    %3709 = vmatprep.subr.mxu0 0.0
    %3710 = vmatpush1.msra.mxu0 0.0
    %3711 = vmatprep.subr.mxu0 0.0
    %3712 = vmatpush1.msra.mxu0 0.0
    %3713 = vmatprep.subr.mxu0 0.0
    %3714 = vmatpush1.msra.mxu0 0.0
    %3715 = vmatprep.subr.mxu0 0.0
    %3716 = vmatpush1.msra.mxu0 0.0
    %3717 = vmatprep.subr.mxu0 0.0
    %3718 = vmatpush1.msra.mxu0 0.0
    %3719 = vmatprep.subr.mxu0 0.0
    %3720 = vmatpush1.msra.mxu0 0.0
    %3721 = vmatprep.subr.mxu0 0.0
    %3722 = vmatpush1.msra.mxu0 0.0
    %3723 = vmatprep.subr.mxu0 0.0
    %3724 = vmatpush1.msra.mxu0 0.0
    %3725 = vmatprep.subr.mxu0 0.0
    %3726 = vmatpush1.msra.mxu0 0.0
    %3727 = vmatprep.subr.mxu0 0.0
    %3728 = vmatpush1.msra.mxu0 0.0
    %3729 = vmatprep.subr.mxu0 0.0
    %3730 = vmatpush1.msra.mxu0 0.0
    %3731 = vmatprep.subr.mxu0 0.0
    %3732 = vmatpush1.msra.mxu0 0.0
    %3733 = vmatprep.subr.mxu0 0.0
    %3734 = vmatpush1.msra.mxu0 0.0
    %3735 = vmatprep.subr.mxu0 0.0
    %3736 = vmatpush1.msra.mxu0 0.0
    %3737 = vmatprep.subr.mxu0 0.0
    %3738 = vmatpush1.msra.mxu0 0.0
    %3739 = vmatprep.subr.mxu0 0.0
    %3740 = vmatpush1.msra.mxu0 0.0
    %3741 = vmatprep.subr.mxu0 0.0
    %3742 = vmatpush1.msra.mxu0 0.0
    %3743 = vmatprep.subr.mxu0 0.0
    %3744 = vmatpush1.msra.mxu0 0.0
    %3745 = vmatprep.subr.mxu0 0.0
    %3746 = vmatpush1.msra.mxu0 0.0
    %3747 = vmatprep.subr.mxu0 0.0
    %3748 = vmatpush1.msra.mxu0 0.0
    %3749 = vmatprep.mubr.f32.mxu0 0.0
    %3750 = vmatmul.mubr.f32.gmra.mrb[0].mxu0 %v935
    %v3751 = vpop.f32.mrb[0].mxu0
    %v3752 = vadd.f32 0.0, %v3751
    %v3753 = vpop.f32.mrb[0].mxu0
    %v3754 = vadd.f32 0.0, %v3753
    %3755 = vdwg.mxu0
    %v3756 = vld [vmem:[#allocation2] sm:$0x3]
    %v3757 = vadd.f32 %v3756, %v3752
    %v3758 = vld [vmem:[%s915 + $0x2] sm:$0x3]
    %v3759 = vadd.f32 %v3758, %v3754
    %v3760 = vxor.u32 %v3757, 2147483648
    %v3761 = vmul.f32 %v3760, 1.442695
    %v3762 = vpow.pop %v3761
    %v3763 = vadd.f32 %v3762, 1.0
    %v3764 = vrcp.pop %v3763
    %v3765 = vmul.f32 1.0, %v3764
    %v3766 = vtanh.pop %v3757
    %v3767 = vmul.f32 %v3765, 0.0
    %3769 = vrot.lane.b32.xlu0 %v3766, 64
    %v3770 = vpop.permute.xlu0 %3769
    %v3772 = vmul.f32 %v3765, %v3770
    %3774 = vrot.lane.b32.xlu0 %v3772, 32
    %v3775 = vpop.permute.xlu0 %3774
    %v3777 = vadd.f32 %v3767, %v3775
    %v3778 = vtanh.pop %v3777
    %3780 = vrot.lane.b32.xlu0 %v3778, 64
    %v3781 = vpop.permute.xlu0 %3780
    %v3783 = vmul.f32 %v3765, %v3781
    %v3784 = vxor.u32 %v3759, 2147483648
    %v3785 = vmul.f32 %v3784, 1.442695
    %v3786 = vpow.pop %v3785
    %v3787 = vadd.f32 %v3786, 1.0
    %v3788 = vrcp.pop %v3787
    %v3789 = vmul.f32 1.0, %v3788
    %v3790 = vtanh.pop %v3759
    %v3791 = vmul.f32 %v3789, 0.0
    %3793 = vrot.lane.b32.xlu0 %v3790, 64
    %v3794 = vpop.permute.xlu0 %3793
    %v3796 = vmul.f32 %v3789, %v3794
    %3798 = vrot.lane.b32.xlu0 %v3796, 32
    %v3799 = vpop.permute.xlu0 %3798
    %v3801 = vadd.f32 %v3791, %v3799
    %v3802 = vtanh.pop %v3801
    %3804 = vrot.lane.b32.xlu0 %v3802, 64
    %v3805 = vpop.permute.xlu0 %3804
    %v3807 = vmul.f32 %v3789, %v3805
    %v3808 = vld [vmem:[%s1] sm:$0x3]
    %vm3809 = vcmp.gt.f32.partialorder %v3808, 0.0
    %v3810 = vld [vmem:[%s1062] sm:$0x3]
    %vm3811 = vcmp.gt.f32.partialorder %v3810, 0.0
    %v3812 = vsel %vm3809, 1, 0
    %3813 = vset.pattern.permute.xlu0 0
    %3814 = vperm.xlu0 %3813, %v3812
    %v3815 = vpop.permute.xlu0 %3814
    %vm3816 = vcmp.eq.s32.totalorder %v3815, 1
    %v3819 = vunpack.c.l.s4 1983009808
    %v3820 = vunpack.c.0.s8 %v3819
    %v3821 = vlaneseq
    %v3822 = vshrl.u32 %v3821, 7
    %v3823 = vsub.s32 %v3820, %v3822
    %v3824 = vrot.slane %v3783, %v3823
    %3825 = vrot.lane.b32.xlu0 %v3824, 32
    %v3826 = vpop.permute.xlu0 %3825
    %v3828 = vsel %vm3816, %v3826, 0.0
    %v3831 = vunpack.c.l.s4 1983009808
    %v3832 = vunpack.c.0.s8 %v3831
    %v3833 = vlaneseq
    %v3834 = vshrl.u32 %v3833, 7
    %v3835 = vsub.s32 %v3832, %v3834
    %v3836 = vrot.slane %v3777, %v3835
    %3837 = vrot.lane.b32.xlu0 %v3836, 96
    %v3838 = vpop.permute.xlu0 %3837
    %v3840 = vsel %vm3816, %v3838, 0.0
    %v3841 = vsel %vm3811, 1, 0
    %3842 = vset.pattern.permute.xlu0 0
    %3843 = vperm.xlu0 %3842, %v3841
    %v3844 = vpop.permute.xlu0 %3843
    %vm3845 = vcmp.eq.s32.totalorder %v3844, 1
    %v3848 = vunpack.c.l.s4 1983009808
    %v3849 = vunpack.c.0.s8 %v3848
    %v3850 = vlaneseq
    %v3851 = vshrl.u32 %v3850, 7
    %v3852 = vsub.s32 %v3849, %v3851
    %v3853 = vrot.slane %v3807, %v3852
    %3854 = vrot.lane.b32.xlu0 %v3853, 32
    %v3855 = vpop.permute.xlu0 %3854
    %v3857 = vsel %vm3845, %v3855, 0.0
    %v3860 = vunpack.c.l.s4 1983009808
    %v3861 = vunpack.c.0.s8 %v3860
    %v3862 = vlaneseq
    %v3863 = vshrl.u32 %v3862, 7
    %v3864 = vsub.s32 %v3861, %v3863
    %v3865 = vrot.slane %v3801, %v3864
    %3866 = vrot.lane.b32.xlu0 %v3865, 96
    %v3867 = vpop.permute.xlu0 %3866
    %v3869 = vsel %vm3845, %v3867, 0.0
    %3871 = vrot.lane.b32.xlu0 %v3857, 32
    %v3872 = vpop.permute.xlu0 %3871
    %v3874 = vsel %vm1132, %v3828, %v3872
    %3876 = vrot.lane.b32.xlu0 %v3869, 32
    %v3877 = vpop.permute.xlu0 %3876
    %v3879 = vsel %vm1132, %v3840, %v3877
    %v3881 = vsel %vm933, %v3874, 0
    %3883 = vmatprep.subr.mxu0 %v3670
    %3884 = vmatpush1.msra.mxu0 %v3669
    %3885 = vmatprep.subr.mxu0 %v3672
    %3886 = vmatpush1.msra.mxu0 %v3671
    %3887 = vmatprep.subr.mxu0 %v3674
    %3888 = vmatpush1.msra.mxu0 %v3673
    %3889 = vmatprep.subr.mxu0 %v3676
    %3890 = vmatpush1.msra.mxu0 %v3675
    %3891 = vmatprep.subr.mxu0 %v3678
    %3892 = vmatpush1.msra.mxu0 %v3677
    %3893 = vmatprep.subr.mxu0 %v3680
    %3894 = vmatpush1.msra.mxu0 %v3679
    %3895 = vmatprep.subr.mxu0 %v3682
    %3896 = vmatpush1.msra.mxu0 %v3681
    %3897 = vmatprep.subr.mxu0 %v3684
    %3898 = vmatpush1.msra.mxu0 %v3683
    %3899 = vmatprep.subr.mxu0 0.0
    %3900 = vmatpush1.msra.mxu0 0.0
    %3901 = vmatprep.subr.mxu0 0.0
    %3902 = vmatpush1.msra.mxu0 0.0
    %3903 = vmatprep.subr.mxu0 0.0
    %3904 = vmatpush1.msra.mxu0 0.0
    %3905 = vmatprep.subr.mxu0 0.0
    %3906 = vmatpush1.msra.mxu0 0.0
    %3907 = vmatprep.subr.mxu0 0.0
    %3908 = vmatpush1.msra.mxu0 0.0
    %3909 = vmatprep.subr.mxu0 0.0
    %3910 = vmatpush1.msra.mxu0 0.0
    %3911 = vmatprep.subr.mxu0 0.0
    %3912 = vmatpush1.msra.mxu0 0.0
    %3913 = vmatprep.subr.mxu0 0.0
    %3914 = vmatpush1.msra.mxu0 0.0
    %3915 = vmatprep.subr.mxu0 0.0
    %3916 = vmatpush1.msra.mxu0 0.0
    %3917 = vmatprep.subr.mxu0 0.0
    %3918 = vmatpush1.msra.mxu0 0.0
    %3919 = vmatprep.subr.mxu0 0.0
    %3920 = vmatpush1.msra.mxu0 0.0
    %3921 = vmatprep.subr.mxu0 0.0
    %3922 = vmatpush1.msra.mxu0 0.0
    %3923 = vmatprep.subr.mxu0 0.0
    %3924 = vmatpush1.msra.mxu0 0.0
    %3925 = vmatprep.subr.mxu0 0.0
    %3926 = vmatpush1.msra.mxu0 0.0
    %3927 = vmatprep.subr.mxu0 0.0
    %3928 = vmatpush1.msra.mxu0 0.0
    %3929 = vmatprep.subr.mxu0 0.0
    %3930 = vmatpush1.msra.mxu0 0.0
    %3931 = vmatprep.subr.mxu0 0.0
    %3932 = vmatpush1.msra.mxu0 0.0
    %3933 = vmatprep.subr.mxu0 0.0
    %3934 = vmatpush1.msra.mxu0 0.0
    %3935 = vmatprep.subr.mxu0 0.0
    %3936 = vmatpush1.msra.mxu0 0.0
    %3937 = vmatprep.subr.mxu0 0.0
    %3938 = vmatpush1.msra.mxu0 0.0
    %3939 = vmatprep.subr.mxu0 0.0
    %3940 = vmatpush1.msra.mxu0 0.0
    %3941 = vmatprep.subr.mxu0 0.0
    %3942 = vmatpush1.msra.mxu0 0.0
    %3943 = vmatprep.subr.mxu0 0.0
    %3944 = vmatpush1.msra.mxu0 0.0
    %3945 = vmatprep.subr.mxu0 0.0
    %3946 = vmatpush1.msra.mxu0 0.0
    %3947 = vmatprep.mubr.f32.mxu0 0.0
    %3948 = vmatmul.mubr.f32.gmra.mrb[0].mxu0 %v3881
    %v3949 = vpop.f32.mrb[0].mxu0
    %v3950 = vadd.f32 0.0, %v3949
    %v3951 = vpop.f32.mrb[0].mxu0
    %v3952 = vadd.f32 0.0, %v3951
    %3953 = vdwg.mxu0
    %v3954 = vld [vmem:[%s285] sm:$0x3]
    %v3955 = vadd.f32 %v3954, %v3950
    %v3956 = vld [vmem:[%s810 + $0x2] sm:$0x3]
    %v3957 = vadd.f32 %v3956, %v3952
    %v3958 = vxor.u32 %v3955, 2147483648
    %v3959 = vmul.f32 %v3958, 1.442695
    %v3960 = vpow.pop %v3959
    %v3961 = vadd.f32 %v3960, 1.0
    %v3962 = vrcp.pop %v3961
    %v3963 = vmul.f32 1.0, %v3962
    %v3964 = vtanh.pop %v3955
    %v3967 = vunpack.c.l.s4 1983009808
    %v3968 = vunpack.c.0.s8 %v3967
    %v3969 = vlaneseq
    %v3970 = vshrl.u32 %v3969, 7
    %v3971 = vsub.s32 %v3968, %v3970
    %v3972 = vrot.slane %v3879, %v3971
    %3973 = vrot.lane.b32.xlu0 %v3972, 32
    %v3974 = vpop.permute.xlu0 %3973
    %v3976 = vmul.f32 %v3963, %v3974
    %3978 = vrot.lane.b32.xlu0 %v3964, 64
    %v3979 = vpop.permute.xlu0 %3978
    %v3981 = vmul.f32 %v3963, %v3979
    %3983 = vrot.lane.b32.xlu0 %v3981, 32
    %v3984 = vpop.permute.xlu0 %3983
    %v3986 = vadd.f32 %v3976, %v3984
    %v3987 = vtanh.pop %v3986
    %3989 = vrot.lane.b32.xlu0 %v3987, 64
    %v3990 = vpop.permute.xlu0 %3989
    %v3992 = vmul.f32 %v3963, %v3990
    %v3993 = vxor.u32 %v3957, 2147483648
    %v3994 = vmul.f32 %v3993, 1.442695
    %v3995 = vpow.pop %v3994
    %v3996 = vadd.f32 %v3995, 1.0
    %v3997 = vrcp.pop %v3996
    %v3998 = vmul.f32 1.0, %v3997
    %v3999 = vtanh.pop %v3957
    %v4000 = vmul.f32 %v3998, %v3879
    %4002 = vrot.lane.b32.xlu0 %v3999, 64
    %v4003 = vpop.permute.xlu0 %4002
    %v4005 = vmul.f32 %v3998, %v4003
    %4007 = vrot.lane.b32.xlu0 %v4005, 32
    %v4008 = vpop.permute.xlu0 %4007
    %v4010 = vadd.f32 %v4000, %v4008
    %v4011 = vtanh.pop %v4010
    %4013 = vrot.lane.b32.xlu0 %v4011, 64
    %v4014 = vpop.permute.xlu0 %4013
    %v4016 = vmul.f32 %v3998, %v4014
    %v4017 = vld [vmem:[%s1292] sm:$0x3]
    %vm4018 = vcmp.gt.f32.partialorder %v4017, 0.0
    %v4019 = vld [vmem:[%s1295] sm:$0x3]
    %vm4020 = vcmp.gt.f32.partialorder %v4019, 0.0
    %v4021 = vsel %vm4018, 1, 0
    %4022 = vset.pattern.permute.xlu0 0
    %4023 = vperm.xlu0 %4022, %v4021
    %v4024 = vpop.permute.xlu0 %4023
    %vm4025 = vcmp.eq.s32.totalorder %v4024, 1
    %v4028 = vunpack.c.l.s4 1983009808
    %v4029 = vunpack.c.0.s8 %v4028
    %v4030 = vlaneseq
    %v4031 = vshrl.u32 %v4030, 7
    %v4032 = vsub.s32 %v4029, %v4031
    %v4033 = vrot.slane %v3992, %v4032
    %4034 = vrot.lane.b32.xlu0 %v4033, 32
    %v4035 = vpop.permute.xlu0 %4034
    %v4037 = vsel %vm4025, %v4035, %v3874
    %v4040 = vunpack.c.l.s4 1983009808
    %v4041 = vunpack.c.0.s8 %v4040
    %v4042 = vlaneseq
    %v4043 = vshrl.u32 %v4042, 7
    %v4044 = vsub.s32 %v4041, %v4043
    %v4045 = vrot.slane %v3986, %v4044
    %4046 = vrot.lane.b32.xlu0 %v4045, 96
    %v4047 = vpop.permute.xlu0 %4046
    %v4049 = vsel %vm4025, %v4047, %v3879
    %v4050 = vsel %vm4020, 1, 0
    %4051 = vset.pattern.permute.xlu0 0
    %4052 = vperm.xlu0 %4051, %v4050
    %v4053 = vpop.permute.xlu0 %4052
    %vm4054 = vcmp.eq.s32.totalorder %v4053, 1
    %v4057 = vunpack.c.l.s4 1983009808
    %v4058 = vunpack.c.0.s8 %v4057
    %v4059 = vlaneseq
    %v4060 = vshrl.u32 %v4059, 7
    %v4061 = vsub.s32 %v4058, %v4060
    %v4062 = vrot.slane %v4016, %v4061
    %4063 = vrot.lane.b32.xlu0 %v4062, 32
    %v4064 = vpop.permute.xlu0 %4063
    %4066 = vrot.lane.b32.xlu0 %v3874, 96
    %v4067 = vpop.permute.xlu0 %4066
    %v4069 = vsel %vm4054, %v4064, %v4067
    %v4072 = vunpack.c.l.s4 1983009808
    %v4073 = vunpack.c.0.s8 %v4072
    %v4074 = vlaneseq
    %v4075 = vshrl.u32 %v4074, 7
    %v4076 = vsub.s32 %v4073, %v4075
    %v4077 = vrot.slane %v4010, %v4076
    %4078 = vrot.lane.b32.xlu0 %v4077, 96
    %v4079 = vpop.permute.xlu0 %4078
    %4081 = vrot.lane.b32.xlu0 %v3879, 96
    %v4082 = vpop.permute.xlu0 %4081
    %v4084 = vsel %vm4054, %v4079, %v4082
    %4086 = vrot.lane.b32.xlu0 %v4069, 32
    %v4087 = vpop.permute.xlu0 %4086
    %v4089 = vsel %vm1132, %v4037, %v4087
    %4091 = vrot.lane.b32.xlu0 %v4084, 32
    %v4092 = vpop.permute.xlu0 %4091
    %v4094 = vsel %vm1132, %v4049, %v4092
    %v4096 = vsel %vm933, %v4089, 0
    %4098 = vmatprep.subr.mxu0 %v3670
    %4099 = vmatpush1.msra.mxu0 %v3669
    %4100 = vmatprep.subr.mxu0 %v3672
    %4101 = vmatpush1.msra.mxu0 %v3671
    %4102 = vmatprep.subr.mxu0 %v3674
    %4103 = vmatpush1.msra.mxu0 %v3673
    %4104 = vmatprep.subr.mxu0 %v3676
    %4105 = vmatpush1.msra.mxu0 %v3675
    %4106 = vmatprep.subr.mxu0 %v3678
    %4107 = vmatpush1.msra.mxu0 %v3677
    %4108 = vmatprep.subr.mxu0 %v3680
    %4109 = vmatpush1.msra.mxu0 %v3679
    %4110 = vmatprep.subr.mxu0 %v3682
    %4111 = vmatpush1.msra.mxu0 %v3681
    %4112 = vmatprep.subr.mxu0 %v3684
    %4113 = vmatpush1.msra.mxu0 %v3683
    %4114 = vmatprep.subr.mxu0 0.0
    %4115 = vmatpush1.msra.mxu0 0.0
    %4116 = vmatprep.subr.mxu0 0.0
    %4117 = vmatpush1.msra.mxu0 0.0
    %4118 = vmatprep.subr.mxu0 0.0
    %4119 = vmatpush1.msra.mxu0 0.0
    %4120 = vmatprep.subr.mxu0 0.0
    %4121 = vmatpush1.msra.mxu0 0.0
    %4122 = vmatprep.subr.mxu0 0.0
    %4123 = vmatpush1.msra.mxu0 0.0
    %4124 = vmatprep.subr.mxu0 0.0
    %4125 = vmatpush1.msra.mxu0 0.0
    %4126 = vmatprep.subr.mxu0 0.0
    %4127 = vmatpush1.msra.mxu0 0.0
    %4128 = vmatprep.subr.mxu0 0.0
    %4129 = vmatpush1.msra.mxu0 0.0
    %4130 = vmatprep.subr.mxu0 0.0
    %4131 = vmatpush1.msra.mxu0 0.0
    %4132 = vmatprep.subr.mxu0 0.0
    %4133 = vmatpush1.msra.mxu0 0.0
    %4134 = vmatprep.subr.mxu0 0.0
    %4135 = vmatpush1.msra.mxu0 0.0
    %4136 = vmatprep.subr.mxu0 0.0
    %4137 = vmatpush1.msra.mxu0 0.0
    %4138 = vmatprep.subr.mxu0 0.0
    %4139 = vmatpush1.msra.mxu0 0.0
    %4140 = vmatprep.subr.mxu0 0.0
    %4141 = vmatpush1.msra.mxu0 0.0
    %4142 = vmatprep.subr.mxu0 0.0
    %4143 = vmatpush1.msra.mxu0 0.0
    %4144 = vmatprep.subr.mxu0 0.0
    %4145 = vmatpush1.msra.mxu0 0.0
    %4146 = vmatprep.subr.mxu0 0.0
    %4147 = vmatpush1.msra.mxu0 0.0
    %4148 = vmatprep.subr.mxu0 0.0
    %4149 = vmatpush1.msra.mxu0 0.0
    %4150 = vmatprep.subr.mxu0 0.0
    %4151 = vmatpush1.msra.mxu0 0.0
    %4152 = vmatprep.subr.mxu0 0.0
    %4153 = vmatpush1.msra.mxu0 0.0
    %4154 = vmatprep.subr.mxu0 0.0
    %4155 = vmatpush1.msra.mxu0 0.0
    %4156 = vmatprep.subr.mxu0 0.0
    %4157 = vmatpush1.msra.mxu0 0.0
    %4158 = vmatprep.subr.mxu0 0.0
    %4159 = vmatpush1.msra.mxu0 0.0
    %4160 = vmatprep.subr.mxu0 0.0
    %4161 = vmatpush1.msra.mxu0 0.0
    %4162 = vmatprep.mubr.f32.mxu0 0.0
    %4163 = vmatmul.mubr.f32.gmra.mrb[0].mxu0 %v4096
    %v4164 = vpop.f32.mrb[0].mxu0
    %v4165 = vadd.f32 0.0, %v4164
    %v4166 = vpop.f32.mrb[0].mxu0
    %v4167 = vadd.f32 0.0, %v4166
    %4168 = vdwg.mxu0
    %v4169 = vld [vmem:[%s390] sm:$0x3]
    %v4170 = vadd.f32 %v4169, %v4165
    %v4171 = vld [vmem:[%s705 + $0x2] sm:$0x3]
    %v4172 = vadd.f32 %v4171, %v4167
    %v4173 = vxor.u32 %v4170, 2147483648
    %v4174 = vmul.f32 %v4173, 1.442695
    %v4175 = vpow.pop %v4174
    %v4176 = vadd.f32 %v4175, 1.0
    %v4177 = vrcp.pop %v4176
    %v4178 = vmul.f32 1.0, %v4177
    %v4179 = vtanh.pop %v4170
    %v4182 = vunpack.c.l.s4 1983009808
    %v4183 = vunpack.c.0.s8 %v4182
    %v4184 = vlaneseq
    %v4185 = vshrl.u32 %v4184, 7
    %v4186 = vsub.s32 %v4183, %v4185
    %v4187 = vrot.slane %v4094, %v4186
    %4188 = vrot.lane.b32.xlu0 %v4187, 32
    %v4189 = vpop.permute.xlu0 %4188
    %v4191 = vmul.f32 %v4178, %v4189
    %4193 = vrot.lane.b32.xlu0 %v4179, 64
    %v4194 = vpop.permute.xlu0 %4193
    %v4196 = vmul.f32 %v4178, %v4194
    %4198 = vrot.lane.b32.xlu0 %v4196, 32
    %v4199 = vpop.permute.xlu0 %4198
    %v4201 = vadd.f32 %v4191, %v4199
    %v4202 = vtanh.pop %v4201
    %4204 = vrot.lane.b32.xlu0 %v4202, 64
    %v4205 = vpop.permute.xlu0 %4204
    %v4207 = vmul.f32 %v4178, %v4205
    %v4208 = vxor.u32 %v4172, 2147483648
    %v4209 = vmul.f32 %v4208, 1.442695
    %v4210 = vpow.pop %v4209
    %v4211 = vadd.f32 %v4210, 1.0
    %v4212 = vrcp.pop %v4211
    %v4213 = vmul.f32 1.0, %v4212
    %v4214 = vtanh.pop %v4172
    %v4215 = vmul.f32 %v4213, %v4094
    %4217 = vrot.lane.b32.xlu0 %v4214, 64
    %v4218 = vpop.permute.xlu0 %4217
    %v4220 = vmul.f32 %v4213, %v4218
    %4222 = vrot.lane.b32.xlu0 %v4220, 32
    %v4223 = vpop.permute.xlu0 %4222
    %v4225 = vadd.f32 %v4215, %v4223
    %v4226 = vtanh.pop %v4225
    %4228 = vrot.lane.b32.xlu0 %v4226, 64
    %v4229 = vpop.permute.xlu0 %4228
    %v4231 = vmul.f32 %v4213, %v4229
    %v4232 = vld [vmem:[%s1529] sm:$0x3]
    %vm4233 = vcmp.gt.f32.partialorder %v4232, 0.0
    %v4234 = vld [vmem:[%s1532] sm:$0x3]
    %vm4235 = vcmp.gt.f32.partialorder %v4234, 0.0
    %v4236 = vsel %vm4233, 1, 0
    %4237 = vset.pattern.permute.xlu0 0
    %4238 = vperm.xlu0 %4237, %v4236
    %v4239 = vpop.permute.xlu0 %4238
    %vm4240 = vcmp.eq.s32.totalorder %v4239, 1
    %v4243 = vunpack.c.l.s4 1983009808
    %v4244 = vunpack.c.0.s8 %v4243
    %v4245 = vlaneseq
    %v4246 = vshrl.u32 %v4245, 7
    %v4247 = vsub.s32 %v4244, %v4246
    %v4248 = vrot.slane %v4207, %v4247
    %4249 = vrot.lane.b32.xlu0 %v4248, 32
    %v4250 = vpop.permute.xlu0 %4249
    %v4252 = vsel %vm4240, %v4250, %v4089
    %v4255 = vunpack.c.l.s4 1983009808
    %v4256 = vunpack.c.0.s8 %v4255
    %v4257 = vlaneseq
    %v4258 = vshrl.u32 %v4257, 7
    %v4259 = vsub.s32 %v4256, %v4258
    %v4260 = vrot.slane %v4201, %v4259
    %4261 = vrot.lane.b32.xlu0 %v4260, 96
    %v4262 = vpop.permute.xlu0 %4261
    %v4264 = vsel %vm4240, %v4262, %v4094
    %v4265 = vsel %vm4235, 1, 0
    %4266 = vset.pattern.permute.xlu0 0
    %4267 = vperm.xlu0 %4266, %v4265
    %v4268 = vpop.permute.xlu0 %4267
    %vm4269 = vcmp.eq.s32.totalorder %v4268, 1
    %v4272 = vunpack.c.l.s4 1983009808
    %v4273 = vunpack.c.0.s8 %v4272
    %v4274 = vlaneseq
    %v4275 = vshrl.u32 %v4274, 7
    %v4276 = vsub.s32 %v4273, %v4275
    %v4277 = vrot.slane %v4231, %v4276
    %4278 = vrot.lane.b32.xlu0 %v4277, 32
    %v4279 = vpop.permute.xlu0 %4278
    %4281 = vrot.lane.b32.xlu0 %v4089, 96
    %v4282 = vpop.permute.xlu0 %4281
    %v4284 = vsel %vm4269, %v4279, %v4282
    %v4287 = vunpack.c.l.s4 1983009808
    %v4288 = vunpack.c.0.s8 %v4287
    %v4289 = vlaneseq
    %v4290 = vshrl.u32 %v4289, 7
    %v4291 = vsub.s32 %v4288, %v4290
    %v4292 = vrot.slane %v4225, %v4291
    %4293 = vrot.lane.b32.xlu0 %v4292, 96
    %v4294 = vpop.permute.xlu0 %4293
    %4296 = vrot.lane.b32.xlu0 %v4094, 96
    %v4297 = vpop.permute.xlu0 %4296
    %v4299 = vsel %vm4269, %v4294, %v4297
    %4301 = vrot.lane.b32.xlu0 %v4284, 32
    %v4302 = vpop.permute.xlu0 %4301
    %v4304 = vsel %vm1132, %v4252, %v4302
    %4306 = vrot.lane.b32.xlu0 %v4299, 32
    %v4307 = vpop.permute.xlu0 %4306
    %v4309 = vsel %vm1132, %v4264, %v4307
    %v4311 = vsel %vm933, %v4304, 0
    %4313 = vmatprep.subr.mxu0 %v3670
    %4314 = vmatpush1.msra.mxu0 %v3669
    %4315 = vmatprep.subr.mxu0 %v3672
    %4316 = vmatpush1.msra.mxu0 %v3671
    %4317 = vmatprep.subr.mxu0 %v3674
    %4318 = vmatpush1.msra.mxu0 %v3673
    %4319 = vmatprep.subr.mxu0 %v3676
    %4320 = vmatpush1.msra.mxu0 %v3675
    %4321 = vmatprep.subr.mxu0 %v3678
    %4322 = vmatpush1.msra.mxu0 %v3677
    %4323 = vmatprep.subr.mxu0 %v3680
    %4324 = vmatpush1.msra.mxu0 %v3679
    %4325 = vmatprep.subr.mxu0 %v3682
    %4326 = vmatpush1.msra.mxu0 %v3681
    %4327 = vmatprep.subr.mxu0 %v3684
    %4328 = vmatpush1.msra.mxu0 %v3683
    %4329 = vmatprep.subr.mxu0 0.0
    %4330 = vmatpush1.msra.mxu0 0.0
    %4331 = vmatprep.subr.mxu0 0.0
    %4332 = vmatpush1.msra.mxu0 0.0
    %4333 = vmatprep.subr.mxu0 0.0
    %4334 = vmatpush1.msra.mxu0 0.0
    %4335 = vmatprep.subr.mxu0 0.0
    %4336 = vmatpush1.msra.mxu0 0.0
    %4337 = vmatprep.subr.mxu0 0.0
    %4338 = vmatpush1.msra.mxu0 0.0
    %4339 = vmatprep.subr.mxu0 0.0
    %4340 = vmatpush1.msra.mxu0 0.0
    %4341 = vmatprep.subr.mxu0 0.0
    %4342 = vmatpush1.msra.mxu0 0.0
    %4343 = vmatprep.subr.mxu0 0.0
    %4344 = vmatpush1.msra.mxu0 0.0
    %4345 = vmatprep.subr.mxu0 0.0
    %4346 = vmatpush1.msra.mxu0 0.0
    %4347 = vmatprep.subr.mxu0 0.0
    %4348 = vmatpush1.msra.mxu0 0.0
    %4349 = vmatprep.subr.mxu0 0.0
    %4350 = vmatpush1.msra.mxu0 0.0
    %4351 = vmatprep.subr.mxu0 0.0
    %4352 = vmatpush1.msra.mxu0 0.0
    %4353 = vmatprep.subr.mxu0 0.0
    %4354 = vmatpush1.msra.mxu0 0.0
    %4355 = vmatprep.subr.mxu0 0.0
    %4356 = vmatpush1.msra.mxu0 0.0
    %4357 = vmatprep.subr.mxu0 0.0
    %4358 = vmatpush1.msra.mxu0 0.0
    %4359 = vmatprep.subr.mxu0 0.0
    %4360 = vmatpush1.msra.mxu0 0.0
    %4361 = vmatprep.subr.mxu0 0.0
    %4362 = vmatpush1.msra.mxu0 0.0
    %4363 = vmatprep.subr.mxu0 0.0
    %4364 = vmatpush1.msra.mxu0 0.0
    %4365 = vmatprep.subr.mxu0 0.0
    %4366 = vmatpush1.msra.mxu0 0.0
    %4367 = vmatprep.subr.mxu0 0.0
    %4368 = vmatpush1.msra.mxu0 0.0
    %4369 = vmatprep.subr.mxu0 0.0
    %4370 = vmatpush1.msra.mxu0 0.0
    %4371 = vmatprep.subr.mxu0 0.0
    %4372 = vmatpush1.msra.mxu0 0.0
    %4373 = vmatprep.subr.mxu0 0.0
    %4374 = vmatpush1.msra.mxu0 0.0
    %4375 = vmatprep.subr.mxu0 0.0
    %4376 = vmatpush1.msra.mxu0 0.0
    %4377 = vmatprep.mubr.f32.mxu0 0.0
    %4378 = vmatmul.mubr.f32.gmra.mrb[0].mxu0 %v4311
    %v4379 = vpop.f32.mrb[0].mxu0
    %v4380 = vadd.f32 0.0, %v4379
    %v4381 = vpop.f32.mrb[0].mxu0
    %v4382 = vadd.f32 0.0, %v4381
    %4383 = vdwg.mxu0
    %v4384 = vld [vmem:[%s495] sm:$0x3]
    %v4385 = vadd.f32 %v4384, %v4380
    %v4386 = vld [vmem:[%s600 + $0x2] sm:$0x3]
    %v4387 = vadd.f32 %v4386, %v4382
    %v4388 = vxor.u32 %v4385, 2147483648
    %v4389 = vmul.f32 %v4388, 1.442695
    %v4390 = vpow.pop %v4389
    %v4391 = vadd.f32 %v4390, 1.0
    %v4392 = vrcp.pop %v4391
    %v4393 = vmul.f32 1.0, %v4392
    %v4394 = vtanh.pop %v4385
    %v4397 = vunpack.c.l.s4 1983009808
    %v4398 = vunpack.c.0.s8 %v4397
    %v4399 = vlaneseq
    %v4400 = vshrl.u32 %v4399, 7
    %v4401 = vsub.s32 %v4398, %v4400
    %v4402 = vrot.slane %v4309, %v4401
    %4403 = vrot.lane.b32.xlu0 %v4402, 32
    %v4404 = vpop.permute.xlu0 %4403
    %v4406 = vmul.f32 %v4393, %v4404
    %4408 = vrot.lane.b32.xlu0 %v4394, 64
    %v4409 = vpop.permute.xlu0 %4408
    %v4411 = vmul.f32 %v4393, %v4409
    %4413 = vrot.lane.b32.xlu0 %v4411, 32
    %v4414 = vpop.permute.xlu0 %4413
    %v4416 = vadd.f32 %v4406, %v4414
    %v4417 = vtanh.pop %v4416
    %4419 = vrot.lane.b32.xlu0 %v4417, 64
    %v4420 = vpop.permute.xlu0 %4419
    %v4422 = vmul.f32 %v4393, %v4420
    %v4423 = vxor.u32 %v4387, 2147483648
    %v4424 = vmul.f32 %v4423, 1.442695
    %v4425 = vpow.pop %v4424
    %v4426 = vadd.f32 %v4425, 1.0
    %v4427 = vrcp.pop %v4426
    %v4428 = vmul.f32 1.0, %v4427
    %v4429 = vtanh.pop %v4387
    %v4430 = vmul.f32 %v4428, %v4309
    %4432 = vrot.lane.b32.xlu0 %v4429, 64
    %v4433 = vpop.permute.xlu0 %4432
    %v4435 = vmul.f32 %v4428, %v4433
    %4437 = vrot.lane.b32.xlu0 %v4435, 32
    %v4438 = vpop.permute.xlu0 %4437
    %v4440 = vadd.f32 %v4430, %v4438
    %v4441 = vtanh.pop %v4440
    %4443 = vrot.lane.b32.xlu0 %v4441, 64
    %v4444 = vpop.permute.xlu0 %4443
    %v4446 = vmul.f32 %v4428, %v4444
    %v4447 = vld [vmem:[%s1766] sm:$0x3]
    %vm4448 = vcmp.gt.f32.partialorder %v4447, 0.0
    %v4449 = vld [vmem:[%s1769] sm:$0x3]
    %vm4450 = vcmp.gt.f32.partialorder %v4449, 0.0
    %v4451 = vsel %vm4448, 1, 0
    %4452 = vset.pattern.permute.xlu0 0
    %4453 = vperm.xlu0 %4452, %v4451
    %v4454 = vpop.permute.xlu0 %4453
    %vm4455 = vcmp.eq.s32.totalorder %v4454, 1
    %v4458 = vunpack.c.l.s4 1983009808
    %v4459 = vunpack.c.0.s8 %v4458
    %v4460 = vlaneseq
    %v4461 = vshrl.u32 %v4460, 7
    %v4462 = vsub.s32 %v4459, %v4461
    %v4463 = vrot.slane %v4422, %v4462
    %4464 = vrot.lane.b32.xlu0 %v4463, 32
    %v4465 = vpop.permute.xlu0 %4464
    %v4467 = vsel %vm4455, %v4465, %v4304
    %v4470 = vunpack.c.l.s4 1983009808
    %v4471 = vunpack.c.0.s8 %v4470
    %v4472 = vlaneseq
    %v4473 = vshrl.u32 %v4472, 7
    %v4474 = vsub.s32 %v4471, %v4473
    %v4475 = vrot.slane %v4416, %v4474
    %4476 = vrot.lane.b32.xlu0 %v4475, 96
    %v4477 = vpop.permute.xlu0 %4476
    %v4479 = vsel %vm4455, %v4477, %v4309
    %v4480 = vsel %vm4450, 1, 0
    %4481 = vset.pattern.permute.xlu0 0
    %4482 = vperm.xlu0 %4481, %v4480
    %v4483 = vpop.permute.xlu0 %4482
    %vm4484 = vcmp.eq.s32.totalorder %v4483, 1
    %v4487 = vunpack.c.l.s4 1983009808
    %v4488 = vunpack.c.0.s8 %v4487
    %v4489 = vlaneseq
    %v4490 = vshrl.u32 %v4489, 7
    %v4491 = vsub.s32 %v4488, %v4490
    %v4492 = vrot.slane %v4446, %v4491
    %4493 = vrot.lane.b32.xlu0 %v4492, 32
    %v4494 = vpop.permute.xlu0 %4493
    %4496 = vrot.lane.b32.xlu0 %v4304, 96
    %v4497 = vpop.permute.xlu0 %4496
    %v4499 = vsel %vm4484, %v4494, %v4497
    %v4502 = vunpack.c.l.s4 1983009808
    %v4503 = vunpack.c.0.s8 %v4502
    %v4504 = vlaneseq
    %v4505 = vshrl.u32 %v4504, 7
    %v4506 = vsub.s32 %v4503, %v4505
    %v4507 = vrot.slane %v4440, %v4506
    %4508 = vrot.lane.b32.xlu0 %v4507, 96
    %v4509 = vpop.permute.xlu0 %4508
    %4511 = vrot.lane.b32.xlu0 %v4309, 96
    %v4512 = vpop.permute.xlu0 %4511
    %v4514 = vsel %vm4484, %v4509, %v4512
    %4516 = vrot.lane.b32.xlu0 %v4499, 32
    %v4517 = vpop.permute.xlu0 %4516
    %v4519 = vsel %vm1132, %v4467, %v4517
    %4521 = vrot.lane.b32.xlu0 %v4514, 32
    %v4522 = vpop.permute.xlu0 %4521
    %v4524 = vsel %vm1132, %v4479, %v4522
    %v4526 = vsel %vm933, %v4519, 0
    %4528 = vmatprep.subr.mxu0 %v3670
    %4529 = vmatpush1.msra.mxu0 %v3669
    %4530 = vmatprep.subr.mxu0 %v3672
    %4531 = vmatpush1.msra.mxu0 %v3671
    %4532 = vmatprep.subr.mxu0 %v3674
    %4533 = vmatpush1.msra.mxu0 %v3673
    %4534 = vmatprep.subr.mxu0 %v3676
    %4535 = vmatpush1.msra.mxu0 %v3675
    %4536 = vmatprep.subr.mxu0 %v3678
    %4537 = vmatpush1.msra.mxu0 %v3677
    %4538 = vmatprep.subr.mxu0 %v3680
    %4539 = vmatpush1.msra.mxu0 %v3679
    %4540 = vmatprep.subr.mxu0 %v3682
    %4541 = vmatpush1.msra.mxu0 %v3681
    %4542 = vmatprep.subr.mxu0 %v3684
    %4543 = vmatpush1.msra.mxu0 %v3683
    %4544 = vmatprep.subr.mxu0 0.0
    %4545 = vmatpush1.msra.mxu0 0.0
    %4546 = vmatprep.subr.mxu0 0.0
    %4547 = vmatpush1.msra.mxu0 0.0
    %4548 = vmatprep.subr.mxu0 0.0
    %4549 = vmatpush1.msra.mxu0 0.0
    %4550 = vmatprep.subr.mxu0 0.0
    %4551 = vmatpush1.msra.mxu0 0.0
    %4552 = vmatprep.subr.mxu0 0.0
    %4553 = vmatpush1.msra.mxu0 0.0
    %4554 = vmatprep.subr.mxu0 0.0
    %4555 = vmatpush1.msra.mxu0 0.0
    %4556 = vmatprep.subr.mxu0 0.0
    %4557 = vmatpush1.msra.mxu0 0.0
    %4558 = vmatprep.subr.mxu0 0.0
    %4559 = vmatpush1.msra.mxu0 0.0
    %4560 = vmatprep.subr.mxu0 0.0
    %4561 = vmatpush1.msra.mxu0 0.0
    %4562 = vmatprep.subr.mxu0 0.0
    %4563 = vmatpush1.msra.mxu0 0.0
    %4564 = vmatprep.subr.mxu0 0.0
    %4565 = vmatpush1.msra.mxu0 0.0
    %4566 = vmatprep.subr.mxu0 0.0
    %4567 = vmatpush1.msra.mxu0 0.0
    %4568 = vmatprep.subr.mxu0 0.0
    %4569 = vmatpush1.msra.mxu0 0.0
    %4570 = vmatprep.subr.mxu0 0.0
    %4571 = vmatpush1.msra.mxu0 0.0
    %4572 = vmatprep.subr.mxu0 0.0
    %4573 = vmatpush1.msra.mxu0 0.0
    %4574 = vmatprep.subr.mxu0 0.0
    %4575 = vmatpush1.msra.mxu0 0.0
    %4576 = vmatprep.subr.mxu0 0.0
    %4577 = vmatpush1.msra.mxu0 0.0
    %4578 = vmatprep.subr.mxu0 0.0
    %4579 = vmatpush1.msra.mxu0 0.0
    %4580 = vmatprep.subr.mxu0 0.0
    %4581 = vmatpush1.msra.mxu0 0.0
    %4582 = vmatprep.subr.mxu0 0.0
    %4583 = vmatpush1.msra.mxu0 0.0
    %4584 = vmatprep.subr.mxu0 0.0
    %4585 = vmatpush1.msra.mxu0 0.0
    %4586 = vmatprep.subr.mxu0 0.0
    %4587 = vmatpush1.msra.mxu0 0.0
    %4588 = vmatprep.subr.mxu0 0.0
    %4589 = vmatpush1.msra.mxu0 0.0
    %4590 = vmatprep.subr.mxu0 0.0
    %4591 = vmatpush1.msra.mxu0 0.0
    %4592 = vmatprep.mubr.f32.mxu0 0.0
    %4593 = vmatmul.mubr.f32.gmra.mrb[0].mxu0 %v4526
    %v4594 = vpop.f32.mrb[0].mxu0
    %v4595 = vadd.f32 0.0, %v4594
    %v4596 = vpop.f32.mrb[0].mxu0
    %v4597 = vadd.f32 0.0, %v4596
    %4598 = vdwg.mxu0
    %v4599 = vld [vmem:[%s600] sm:$0x3]
    %v4600 = vadd.f32 %v4599, %v4595
    %v4601 = vld [vmem:[%s495 + $0x2] sm:$0x3]
    %v4602 = vadd.f32 %v4601, %v4597
    %v4603 = vxor.u32 %v4600, 2147483648
    %v4604 = vmul.f32 %v4603, 1.442695
    %v4605 = vpow.pop %v4604
    %v4606 = vadd.f32 %v4605, 1.0
    %v4607 = vrcp.pop %v4606
    %v4608 = vmul.f32 1.0, %v4607
    %v4609 = vtanh.pop %v4600
    %v4612 = vunpack.c.l.s4 1983009808
    %v4613 = vunpack.c.0.s8 %v4612
    %v4614 = vlaneseq
    %v4615 = vshrl.u32 %v4614, 7
    %v4616 = vsub.s32 %v4613, %v4615
    %v4617 = vrot.slane %v4524, %v4616
    %4618 = vrot.lane.b32.xlu0 %v4617, 32
    %v4619 = vpop.permute.xlu0 %4618
    %v4621 = vmul.f32 %v4608, %v4619
    %4623 = vrot.lane.b32.xlu0 %v4609, 64
    %v4624 = vpop.permute.xlu0 %4623
    %v4626 = vmul.f32 %v4608, %v4624
    %4628 = vrot.lane.b32.xlu0 %v4626, 32
    %v4629 = vpop.permute.xlu0 %4628
    %v4631 = vadd.f32 %v4621, %v4629
    %v4632 = vtanh.pop %v4631
    %4634 = vrot.lane.b32.xlu0 %v4632, 64
    %v4635 = vpop.permute.xlu0 %4634
    %v4637 = vmul.f32 %v4608, %v4635
    %v4638 = vxor.u32 %v4602, 2147483648
    %v4639 = vmul.f32 %v4638, 1.442695
    %v4640 = vpow.pop %v4639
    %v4641 = vadd.f32 %v4640, 1.0
    %v4642 = vrcp.pop %v4641
    %v4643 = vmul.f32 1.0, %v4642
    %v4644 = vtanh.pop %v4602
    %v4645 = vmul.f32 %v4643, %v4524
    %4647 = vrot.lane.b32.xlu0 %v4644, 64
    %v4648 = vpop.permute.xlu0 %4647
    %v4650 = vmul.f32 %v4643, %v4648
    %4652 = vrot.lane.b32.xlu0 %v4650, 32
    %v4653 = vpop.permute.xlu0 %4652
    %v4655 = vadd.f32 %v4645, %v4653
    %v4656 = vtanh.pop %v4655
    %4658 = vrot.lane.b32.xlu0 %v4656, 64
    %v4659 = vpop.permute.xlu0 %4658
    %v4661 = vmul.f32 %v4643, %v4659
    %v4664 = vunpack.c.l.s4 1983009808
    %v4665 = vunpack.c.0.s8 %v4664
    %v4666 = vlaneseq
    %v4667 = vshrl.u32 %v4666, 7
    %v4668 = vsub.s32 %v4665, %v4667
    %v4669 = vrot.slane %v4637, %v4668
    %4670 = vrot.lane.b32.xlu0 %v4669, 32
    %v4671 = vpop.permute.xlu0 %4670
    %v4673 = vsel %vm4484, %v4671, %v4519
    %v4676 = vunpack.c.l.s4 1983009808
    %v4677 = vunpack.c.0.s8 %v4676
    %v4678 = vlaneseq
    %v4679 = vshrl.u32 %v4678, 7
    %v4680 = vsub.s32 %v4677, %v4679
    %v4681 = vrot.slane %v4631, %v4680
    %4682 = vrot.lane.b32.xlu0 %v4681, 96
    %v4683 = vpop.permute.xlu0 %4682
    %v4685 = vsel %vm4484, %v4683, %v4524
    %v4688 = vunpack.c.l.s4 1983009808
    %v4689 = vunpack.c.0.s8 %v4688
    %v4690 = vlaneseq
    %v4691 = vshrl.u32 %v4690, 7
    %v4692 = vsub.s32 %v4689, %v4691
    %v4693 = vrot.slane %v4661, %v4692
    %4694 = vrot.lane.b32.xlu0 %v4693, 32
    %v4695 = vpop.permute.xlu0 %4694
    %4697 = vrot.lane.b32.xlu0 %v4519, 96
    %v4698 = vpop.permute.xlu0 %4697
    %v4700 = vsel %vm4455, %v4695, %v4698
    %v4703 = vunpack.c.l.s4 1983009808
    %v4704 = vunpack.c.0.s8 %v4703
    %v4705 = vlaneseq
    %v4706 = vshrl.u32 %v4705, 7
    %v4707 = vsub.s32 %v4704, %v4706
    %v4708 = vrot.slane %v4655, %v4707
    %4709 = vrot.lane.b32.xlu0 %v4708, 96
    %v4710 = vpop.permute.xlu0 %4709
    %4712 = vrot.lane.b32.xlu0 %v4524, 96
    %v4713 = vpop.permute.xlu0 %4712
    %v4715 = vsel %vm4455, %v4710, %v4713
    %4717 = vrot.lane.b32.xlu0 %v4700, 32
    %v4718 = vpop.permute.xlu0 %4717
    %v4720 = vsel %vm1132, %v4673, %v4718
    %4722 = vrot.lane.b32.xlu0 %v4715, 32
    %v4723 = vpop.permute.xlu0 %4722
    %v4725 = vsel %vm1132, %v4685, %v4723
    %v4727 = vsel %vm933, %v4720, 0
    %4729 = vmatprep.subr.mxu0 %v3670
    %4730 = vmatpush1.msra.mxu0 %v3669
    %4731 = vmatprep.subr.mxu0 %v3672
    %4732 = vmatpush1.msra.mxu0 %v3671
    %4733 = vmatprep.subr.mxu0 %v3674
    %4734 = vmatpush1.msra.mxu0 %v3673
    %4735 = vmatprep.subr.mxu0 %v3676
    %4736 = vmatpush1.msra.mxu0 %v3675
    %4737 = vmatprep.subr.mxu0 %v3678
    %4738 = vmatpush1.msra.mxu0 %v3677
    %4739 = vmatprep.subr.mxu0 %v3680
    %4740 = vmatpush1.msra.mxu0 %v3679
    %4741 = vmatprep.subr.mxu0 %v3682
    %4742 = vmatpush1.msra.mxu0 %v3681
    %4743 = vmatprep.subr.mxu0 %v3684
    %4744 = vmatpush1.msra.mxu0 %v3683
    %4745 = vmatprep.subr.mxu0 0.0
    %4746 = vmatpush1.msra.mxu0 0.0
    %4747 = vmatprep.subr.mxu0 0.0
    %4748 = vmatpush1.msra.mxu0 0.0
    %4749 = vmatprep.subr.mxu0 0.0
    %4750 = vmatpush1.msra.mxu0 0.0
    %4751 = vmatprep.subr.mxu0 0.0
    %4752 = vmatpush1.msra.mxu0 0.0
    %4753 = vmatprep.subr.mxu0 0.0
    %4754 = vmatpush1.msra.mxu0 0.0
    %4755 = vmatprep.subr.mxu0 0.0
    %4756 = vmatpush1.msra.mxu0 0.0
    %4757 = vmatprep.subr.mxu0 0.0
    %4758 = vmatpush1.msra.mxu0 0.0
    %4759 = vmatprep.subr.mxu0 0.0
    %4760 = vmatpush1.msra.mxu0 0.0
    %4761 = vmatprep.subr.mxu0 0.0
    %4762 = vmatpush1.msra.mxu0 0.0
    %4763 = vmatprep.subr.mxu0 0.0
    %4764 = vmatpush1.msra.mxu0 0.0
    %4765 = vmatprep.subr.mxu0 0.0
    %4766 = vmatpush1.msra.mxu0 0.0
    %4767 = vmatprep.subr.mxu0 0.0
    %4768 = vmatpush1.msra.mxu0 0.0
    %4769 = vmatprep.subr.mxu0 0.0
    %4770 = vmatpush1.msra.mxu0 0.0
    %4771 = vmatprep.subr.mxu0 0.0
    %4772 = vmatpush1.msra.mxu0 0.0
    %4773 = vmatprep.subr.mxu0 0.0
    %4774 = vmatpush1.msra.mxu0 0.0
    %4775 = vmatprep.subr.mxu0 0.0
    %4776 = vmatpush1.msra.mxu0 0.0
    %4777 = vmatprep.subr.mxu0 0.0
    %4778 = vmatpush1.msra.mxu0 0.0
    %4779 = vmatprep.subr.mxu0 0.0
    %4780 = vmatpush1.msra.mxu0 0.0
    %4781 = vmatprep.subr.mxu0 0.0
    %4782 = vmatpush1.msra.mxu0 0.0
    %4783 = vmatprep.subr.mxu0 0.0
    %4784 = vmatpush1.msra.mxu0 0.0
    %4785 = vmatprep.subr.mxu0 0.0
    %4786 = vmatpush1.msra.mxu0 0.0
    %4787 = vmatprep.subr.mxu0 0.0
    %4788 = vmatpush1.msra.mxu0 0.0
    %4789 = vmatprep.subr.mxu0 0.0
    %4790 = vmatpush1.msra.mxu0 0.0
    %4791 = vmatprep.subr.mxu0 0.0
    %4792 = vmatpush1.msra.mxu0 0.0
    %4793 = vmatprep.mubr.f32.mxu0 0.0
    %4794 = vmatmul.mubr.f32.gmra.mrb[0].mxu0 %v4727
    %v4795 = vpop.f32.mrb[0].mxu0
    %v4796 = vadd.f32 0.0, %v4795
    %v4797 = vpop.f32.mrb[0].mxu0
    %v4798 = vadd.f32 0.0, %v4797
    %4799 = vdwg.mxu0
    %v4800 = vld [vmem:[%s705] sm:$0x3]
    %v4801 = vadd.f32 %v4800, %v4796
    %v4802 = vld [vmem:[%s390 + $0x2] sm:$0x3]
    %v4803 = vadd.f32 %v4802, %v4798
    %v4804 = vxor.u32 %v4801, 2147483648
    %v4805 = vmul.f32 %v4804, 1.442695
    %v4806 = vpow.pop %v4805
    %v4807 = vadd.f32 %v4806, 1.0
    %v4808 = vrcp.pop %v4807
    %v4809 = vmul.f32 1.0, %v4808
    %v4810 = vtanh.pop %v4801
    %v4813 = vunpack.c.l.s4 1983009808
    %v4814 = vunpack.c.0.s8 %v4813
    %v4815 = vlaneseq
    %v4816 = vshrl.u32 %v4815, 7
    %v4817 = vsub.s32 %v4814, %v4816
    %v4818 = vrot.slane %v4725, %v4817
    %4819 = vrot.lane.b32.xlu0 %v4818, 32
    %v4820 = vpop.permute.xlu0 %4819
    %v4822 = vmul.f32 %v4809, %v4820
    %4824 = vrot.lane.b32.xlu0 %v4810, 64
    %v4825 = vpop.permute.xlu0 %4824
    %v4827 = vmul.f32 %v4809, %v4825
    %4829 = vrot.lane.b32.xlu0 %v4827, 32
    %v4830 = vpop.permute.xlu0 %4829
    %v4832 = vadd.f32 %v4822, %v4830
    %v4833 = vtanh.pop %v4832
    %4835 = vrot.lane.b32.xlu0 %v4833, 64
    %v4836 = vpop.permute.xlu0 %4835
    %v4838 = vmul.f32 %v4809, %v4836
    %v4839 = vxor.u32 %v4803, 2147483648
    %v4840 = vmul.f32 %v4839, 1.442695
    %v4841 = vpow.pop %v4840
    %v4842 = vadd.f32 %v4841, 1.0
    %v4843 = vrcp.pop %v4842
    %v4844 = vmul.f32 1.0, %v4843
    %v4845 = vtanh.pop %v4803
    %v4846 = vmul.f32 %v4844, %v4725
    %4848 = vrot.lane.b32.xlu0 %v4845, 64
    %v4849 = vpop.permute.xlu0 %4848
    %v4851 = vmul.f32 %v4844, %v4849
    %4853 = vrot.lane.b32.xlu0 %v4851, 32
    %v4854 = vpop.permute.xlu0 %4853
    %v4856 = vadd.f32 %v4846, %v4854
    %v4857 = vtanh.pop %v4856
    %4859 = vrot.lane.b32.xlu0 %v4857, 64
    %v4860 = vpop.permute.xlu0 %4859
    %v4862 = vmul.f32 %v4844, %v4860
    %v4865 = vunpack.c.l.s4 1983009808
    %v4866 = vunpack.c.0.s8 %v4865
    %v4867 = vlaneseq
    %v4868 = vshrl.u32 %v4867, 7
    %v4869 = vsub.s32 %v4866, %v4868
    %v4870 = vrot.slane %v4838, %v4869
    %4871 = vrot.lane.b32.xlu0 %v4870, 32
    %v4872 = vpop.permute.xlu0 %4871
    %v4874 = vsel %vm4269, %v4872, %v4720
    %v4877 = vunpack.c.l.s4 1983009808
    %v4878 = vunpack.c.0.s8 %v4877
    %v4879 = vlaneseq
    %v4880 = vshrl.u32 %v4879, 7
    %v4881 = vsub.s32 %v4878, %v4880
    %v4882 = vrot.slane %v4832, %v4881
    %4883 = vrot.lane.b32.xlu0 %v4882, 96
    %v4884 = vpop.permute.xlu0 %4883
    %v4886 = vsel %vm4269, %v4884, %v4725
    %v4889 = vunpack.c.l.s4 1983009808
    %v4890 = vunpack.c.0.s8 %v4889
    %v4891 = vlaneseq
    %v4892 = vshrl.u32 %v4891, 7
    %v4893 = vsub.s32 %v4890, %v4892
    %v4894 = vrot.slane %v4862, %v4893
    %4895 = vrot.lane.b32.xlu0 %v4894, 32
    %v4896 = vpop.permute.xlu0 %4895
    %4898 = vrot.lane.b32.xlu0 %v4720, 96
    %v4899 = vpop.permute.xlu0 %4898
    %v4901 = vsel %vm4240, %v4896, %v4899
    %v4904 = vunpack.c.l.s4 1983009808
    %v4905 = vunpack.c.0.s8 %v4904
    %v4906 = vlaneseq
    %v4907 = vshrl.u32 %v4906, 7
    %v4908 = vsub.s32 %v4905, %v4907
    %v4909 = vrot.slane %v4856, %v4908
    %4910 = vrot.lane.b32.xlu0 %v4909, 96
    %v4911 = vpop.permute.xlu0 %4910
    %4913 = vrot.lane.b32.xlu0 %v4725, 96
    %v4914 = vpop.permute.xlu0 %4913
    %v4916 = vsel %vm4240, %v4911, %v4914
    %4918 = vrot.lane.b32.xlu0 %v4901, 32
    %v4919 = vpop.permute.xlu0 %4918
    %v4921 = vsel %vm1132, %v4874, %v4919
    %4923 = vrot.lane.b32.xlu0 %v4916, 32
    %v4924 = vpop.permute.xlu0 %4923
    %v4926 = vsel %vm1132, %v4886, %v4924
    %v4928 = vsel %vm933, %v4921, 0
    %4930 = vmatprep.subr.mxu0 %v3670
    %4931 = vmatpush1.msra.mxu0 %v3669
    %4932 = vmatprep.subr.mxu0 %v3672
    %4933 = vmatpush1.msra.mxu0 %v3671
    %4934 = vmatprep.subr.mxu0 %v3674
    %4935 = vmatpush1.msra.mxu0 %v3673
    %4936 = vmatprep.subr.mxu0 %v3676
    %4937 = vmatpush1.msra.mxu0 %v3675
    %4938 = vmatprep.subr.mxu0 %v3678
    %4939 = vmatpush1.msra.mxu0 %v3677
    %4940 = vmatprep.subr.mxu0 %v3680
    %4941 = vmatpush1.msra.mxu0 %v3679
    %4942 = vmatprep.subr.mxu0 %v3682
    %4943 = vmatpush1.msra.mxu0 %v3681
    %4944 = vmatprep.subr.mxu0 %v3684
    %4945 = vmatpush1.msra.mxu0 %v3683
    %4946 = vmatprep.subr.mxu0 0.0
    %4947 = vmatpush1.msra.mxu0 0.0
    %4948 = vmatprep.subr.mxu0 0.0
    %4949 = vmatpush1.msra.mxu0 0.0
    %4950 = vmatprep.subr.mxu0 0.0
    %4951 = vmatpush1.msra.mxu0 0.0
    %4952 = vmatprep.subr.mxu0 0.0
    %4953 = vmatpush1.msra.mxu0 0.0
    %4954 = vmatprep.subr.mxu0 0.0
    %4955 = vmatpush1.msra.mxu0 0.0
    %4956 = vmatprep.subr.mxu0 0.0
    %4957 = vmatpush1.msra.mxu0 0.0
    %4958 = vmatprep.subr.mxu0 0.0
    %4959 = vmatpush1.msra.mxu0 0.0
    %4960 = vmatprep.subr.mxu0 0.0
    %4961 = vmatpush1.msra.mxu0 0.0
    %4962 = vmatprep.subr.mxu0 0.0
    %4963 = vmatpush1.msra.mxu0 0.0
    %4964 = vmatprep.subr.mxu0 0.0
    %4965 = vmatpush1.msra.mxu0 0.0
    %4966 = vmatprep.subr.mxu0 0.0
    %4967 = vmatpush1.msra.mxu0 0.0
    %4968 = vmatprep.subr.mxu0 0.0
    %4969 = vmatpush1.msra.mxu0 0.0
    %4970 = vmatprep.subr.mxu0 0.0
    %4971 = vmatpush1.msra.mxu0 0.0
    %4972 = vmatprep.subr.mxu0 0.0
    %4973 = vmatpush1.msra.mxu0 0.0
    %4974 = vmatprep.subr.mxu0 0.0
    %4975 = vmatpush1.msra.mxu0 0.0
    %4976 = vmatprep.subr.mxu0 0.0
    %4977 = vmatpush1.msra.mxu0 0.0
    %4978 = vmatprep.subr.mxu0 0.0
    %4979 = vmatpush1.msra.mxu0 0.0
    %4980 = vmatprep.subr.mxu0 0.0
    %4981 = vmatpush1.msra.mxu0 0.0
    %4982 = vmatprep.subr.mxu0 0.0
    %4983 = vmatpush1.msra.mxu0 0.0
    %4984 = vmatprep.subr.mxu0 0.0
    %4985 = vmatpush1.msra.mxu0 0.0
    %4986 = vmatprep.subr.mxu0 0.0
    %4987 = vmatpush1.msra.mxu0 0.0
    %4988 = vmatprep.subr.mxu0 0.0
    %4989 = vmatpush1.msra.mxu0 0.0
    %4990 = vmatprep.subr.mxu0 0.0
    %4991 = vmatpush1.msra.mxu0 0.0
    %4992 = vmatprep.subr.mxu0 0.0
    %4993 = vmatpush1.msra.mxu0 0.0
    %4994 = vmatprep.mubr.f32.mxu0 0.0
    %4995 = vmatmul.mubr.f32.gmra.mrb[0].mxu0 %v4928
    %v4996 = vpop.f32.mrb[0].mxu0
    %v4997 = vadd.f32 0.0, %v4996
    %v4998 = vpop.f32.mrb[0].mxu0
    %v4999 = vadd.f32 0.0, %v4998
    %5000 = vdwg.mxu0
    %v5001 = vld [vmem:[%s810] sm:$0x3]
    %v5002 = vadd.f32 %v5001, %v4997
    %v5003 = vld [vmem:[%s285 + $0x2] sm:$0x3]
    %v5004 = vadd.f32 %v5003, %v4999
    %v5005 = vxor.u32 %v5002, 2147483648
    %v5006 = vmul.f32 %v5005, 1.442695
    %v5007 = vpow.pop %v5006
    %v5008 = vadd.f32 %v5007, 1.0
    %v5009 = vrcp.pop %v5008
    %v5010 = vmul.f32 1.0, %v5009
    %v5011 = vtanh.pop %v5002
    %v5014 = vunpack.c.l.s4 1983009808
    %v5015 = vunpack.c.0.s8 %v5014
    %v5016 = vlaneseq
    %v5017 = vshrl.u32 %v5016, 7
    %v5018 = vsub.s32 %v5015, %v5017
    %v5019 = vrot.slane %v4926, %v5018
    %5020 = vrot.lane.b32.xlu0 %v5019, 32
    %v5021 = vpop.permute.xlu0 %5020
    %v5023 = vmul.f32 %v5010, %v5021
    %5025 = vrot.lane.b32.xlu0 %v5011, 64
    %v5026 = vpop.permute.xlu0 %5025
    %v5028 = vmul.f32 %v5010, %v5026
    %5030 = vrot.lane.b32.xlu0 %v5028, 32
    %v5031 = vpop.permute.xlu0 %5030
    %v5033 = vadd.f32 %v5023, %v5031
    %v5034 = vtanh.pop %v5033
    %5036 = vrot.lane.b32.xlu0 %v5034, 64
    %v5037 = vpop.permute.xlu0 %5036
    %v5039 = vmul.f32 %v5010, %v5037
    %v5040 = vxor.u32 %v5004, 2147483648
    %v5041 = vmul.f32 %v5040, 1.442695
    %v5042 = vpow.pop %v5041
    %v5043 = vadd.f32 %v5042, 1.0
    %v5044 = vrcp.pop %v5043
    %v5045 = vmul.f32 1.0, %v5044
    %v5046 = vtanh.pop %v5004
    %v5047 = vmul.f32 %v5045, %v4926
    %5049 = vrot.lane.b32.xlu0 %v5046, 64
    %v5050 = vpop.permute.xlu0 %5049
    %v5052 = vmul.f32 %v5045, %v5050
    %5054 = vrot.lane.b32.xlu0 %v5052, 32
    %v5055 = vpop.permute.xlu0 %5054
    %v5057 = vadd.f32 %v5047, %v5055
    %v5058 = vtanh.pop %v5057
    %5060 = vrot.lane.b32.xlu0 %v5058, 64
    %v5061 = vpop.permute.xlu0 %5060
    %v5063 = vmul.f32 %v5045, %v5061
    %v5066 = vunpack.c.l.s4 1983009808
    %v5067 = vunpack.c.0.s8 %v5066
    %v5068 = vlaneseq
    %v5069 = vshrl.u32 %v5068, 7
    %v5070 = vsub.s32 %v5067, %v5069
    %v5071 = vrot.slane %v5039, %v5070
    %5072 = vrot.lane.b32.xlu0 %v5071, 32
    %v5073 = vpop.permute.xlu0 %5072
    %v5075 = vsel %vm4054, %v5073, %v4921
    %v5078 = vunpack.c.l.s4 1983009808
    %v5079 = vunpack.c.0.s8 %v5078
    %v5080 = vlaneseq
    %v5081 = vshrl.u32 %v5080, 7
    %v5082 = vsub.s32 %v5079, %v5081
    %v5083 = vrot.slane %v5033, %v5082
    %5084 = vrot.lane.b32.xlu0 %v5083, 96
    %v5085 = vpop.permute.xlu0 %5084
    %v5087 = vsel %vm4054, %v5085, %v4926
    %v5090 = vunpack.c.l.s4 1983009808
    %v5091 = vunpack.c.0.s8 %v5090
    %v5092 = vlaneseq
    %v5093 = vshrl.u32 %v5092, 7
    %v5094 = vsub.s32 %v5091, %v5093
    %v5095 = vrot.slane %v5063, %v5094
    %5096 = vrot.lane.b32.xlu0 %v5095, 32
    %v5097 = vpop.permute.xlu0 %5096
    %5099 = vrot.lane.b32.xlu0 %v4921, 96
    %v5100 = vpop.permute.xlu0 %5099
    %v5102 = vsel %vm4025, %v5097, %v5100
    %v5105 = vunpack.c.l.s4 1983009808
    %v5106 = vunpack.c.0.s8 %v5105
    %v5107 = vlaneseq
    %v5108 = vshrl.u32 %v5107, 7
    %v5109 = vsub.s32 %v5106, %v5108
    %v5110 = vrot.slane %v5057, %v5109
    %5111 = vrot.lane.b32.xlu0 %v5110, 96
    %v5112 = vpop.permute.xlu0 %5111
    %5114 = vrot.lane.b32.xlu0 %v4926, 96
    %v5115 = vpop.permute.xlu0 %5114
    %v5117 = vsel %vm4025, %v5112, %v5115
    %5119 = vrot.lane.b32.xlu0 %v5102, 32
    %v5120 = vpop.permute.xlu0 %5119
    %v5122 = vsel %vm1132, %v5075, %v5120
    %5124 = vrot.lane.b32.xlu0 %v5117, 32
    %v5125 = vpop.permute.xlu0 %5124
    %v5127 = vsel %vm1132, %v5087, %v5125
    %v5129 = vsel %vm933, %v5122, 0
    %5131 = vmatprep.subr.mxu0 %v3670
    %5132 = vmatpush1.msra.mxu0 %v3669
    %5133 = vmatprep.subr.mxu0 %v3672
    %5134 = vmatpush1.msra.mxu0 %v3671
    %5135 = vmatprep.subr.mxu0 %v3674
    %5136 = vmatpush1.msra.mxu0 %v3673
    %5137 = vmatprep.subr.mxu0 %v3676
    %5138 = vmatpush1.msra.mxu0 %v3675
    %5139 = vmatprep.subr.mxu0 %v3678
    %5140 = vmatpush1.msra.mxu0 %v3677
    %5141 = vmatprep.subr.mxu0 %v3680
    %5142 = vmatpush1.msra.mxu0 %v3679
    %5143 = vmatprep.subr.mxu0 %v3682
    %5144 = vmatpush1.msra.mxu0 %v3681
    %5145 = vmatprep.subr.mxu0 %v3684
    %5146 = vmatpush1.msra.mxu0 %v3683
    %5147 = vmatprep.subr.mxu0 0.0
    %5148 = vmatpush1.msra.mxu0 0.0
    %5149 = vmatprep.subr.mxu0 0.0
    %5150 = vmatpush1.msra.mxu0 0.0
    %5151 = vmatprep.subr.mxu0 0.0
    %5152 = vmatpush1.msra.mxu0 0.0
    %5153 = vmatprep.subr.mxu0 0.0
    %5154 = vmatpush1.msra.mxu0 0.0
    %5155 = vmatprep.subr.mxu0 0.0
    %5156 = vmatpush1.msra.mxu0 0.0
    %5157 = vmatprep.subr.mxu0 0.0
    %5158 = vmatpush1.msra.mxu0 0.0
    %5159 = vmatprep.subr.mxu0 0.0
    %5160 = vmatpush1.msra.mxu0 0.0
    %5161 = vmatprep.subr.mxu0 0.0
    %5162 = vmatpush1.msra.mxu0 0.0
    %5163 = vmatprep.subr.mxu0 0.0
    %5164 = vmatpush1.msra.mxu0 0.0
    %5165 = vmatprep.subr.mxu0 0.0
    %5166 = vmatpush1.msra.mxu0 0.0
    %5167 = vmatprep.subr.mxu0 0.0
    %5168 = vmatpush1.msra.mxu0 0.0
    %5169 = vmatprep.subr.mxu0 0.0
    %5170 = vmatpush1.msra.mxu0 0.0
    %5171 = vmatprep.subr.mxu0 0.0
    %5172 = vmatpush1.msra.mxu0 0.0
    %5173 = vmatprep.subr.mxu0 0.0
    %5174 = vmatpush1.msra.mxu0 0.0
    %5175 = vmatprep.subr.mxu0 0.0
    %5176 = vmatpush1.msra.mxu0 0.0
    %5177 = vmatprep.subr.mxu0 0.0
    %5178 = vmatpush1.msra.mxu0 0.0
    %5179 = vmatprep.subr.mxu0 0.0
    %5180 = vmatpush1.msra.mxu0 0.0
    %5181 = vmatprep.subr.mxu0 0.0
    %5182 = vmatpush1.msra.mxu0 0.0
    %5183 = vmatprep.subr.mxu0 0.0
    %5184 = vmatpush1.msra.mxu0 0.0
    %5185 = vmatprep.subr.mxu0 0.0
    %5186 = vmatpush1.msra.mxu0 0.0
    %5187 = vmatprep.subr.mxu0 0.0
    %5188 = vmatpush1.msra.mxu0 0.0
    %5189 = vmatprep.subr.mxu0 0.0
    %5190 = vmatpush1.msra.mxu0 0.0
    %5191 = vmatprep.subr.mxu0 0.0
    %5192 = vmatpush1.msra.mxu0 0.0
    %5193 = vmatprep.subr.mxu0 0.0
    %5194 = vmatpush1.msra.mxu0 0.0
    %5195 = vmatprep.mubr.f32.mxu0 0.0
    %5196 = vmatmul.mubr.f32.gmra.mrb[0].mxu0 %v5129
    %v5197 = vpop.f32.mrb[0].mxu0
    %v5198 = vadd.f32 0.0, %v5197
    %v5199 = vpop.f32.mrb[0].mxu0
    %v5200 = vadd.f32 0.0, %v5199
    %5201 = vdwg.mxu0
    %v5202 = vld [vmem:[%s915] sm:$0x3]
    %v5203 = vadd.f32 %v5202, %v5198
    %v5204 = vld [vmem:[#allocation2 + $0x2] sm:$0x3]
    %v5205 = vadd.f32 %v5204, %v5200
    %v5206 = vxor.u32 %v5203, 2147483648
    %v5207 = vmul.f32 %v5206, 1.442695
    %v5208 = vpow.pop %v5207
    %v5209 = vadd.f32 %v5208, 1.0
    %v5210 = vrcp.pop %v5209
    %v5211 = vmul.f32 1.0, %v5210
    %v5212 = vtanh.pop %v5203
    %v5215 = vunpack.c.l.s4 1983009808
    %v5216 = vunpack.c.0.s8 %v5215
    %v5217 = vlaneseq
    %v5218 = vshrl.u32 %v5217, 7
    %v5219 = vsub.s32 %v5216, %v5218
    %v5220 = vrot.slane %v5127, %v5219
    %5221 = vrot.lane.b32.xlu0 %v5220, 32
    %v5222 = vpop.permute.xlu0 %5221
    %v5224 = vmul.f32 %v5211, %v5222
    %5226 = vrot.lane.b32.xlu0 %v5212, 64
    %v5227 = vpop.permute.xlu0 %5226
    %v5229 = vmul.f32 %v5211, %v5227
    %5231 = vrot.lane.b32.xlu0 %v5229, 32
    %v5232 = vpop.permute.xlu0 %5231
    %v5234 = vadd.f32 %v5224, %v5232
    %v5235 = vtanh.pop %v5234
    %5237 = vrot.lane.b32.xlu0 %v5235, 64
    %v5238 = vpop.permute.xlu0 %5237
    %v5240 = vmul.f32 %v5211, %v5238
    %v5241 = vxor.u32 %v5205, 2147483648
    %v5242 = vmul.f32 %v5241, 1.442695
    %v5243 = vpow.pop %v5242
    %v5244 = vadd.f32 %v5243, 1.0
    %v5245 = vrcp.pop %v5244
    %v5246 = vmul.f32 1.0, %v5245
    %v5247 = vtanh.pop %v5205
    %v5248 = vmul.f32 %v5246, %v5127
    %5250 = vrot.lane.b32.xlu0 %v5247, 64
    %v5251 = vpop.permute.xlu0 %5250
    %v5253 = vmul.f32 %v5246, %v5251
    %5255 = vrot.lane.b32.xlu0 %v5253, 32
    %v5256 = vpop.permute.xlu0 %5255
    %v5258 = vadd.f32 %v5248, %v5256
    %v5259 = vtanh.pop %v5258
    %5261 = vrot.lane.b32.xlu0 %v5259, 64
    %v5262 = vpop.permute.xlu0 %5261
    %v5264 = vmul.f32 %v5246, %v5262
    %v5267 = vunpack.c.l.s4 1983009808
    %v5268 = vunpack.c.0.s8 %v5267
    %v5269 = vlaneseq
    %v5270 = vshrl.u32 %v5269, 7
    %v5271 = vsub.s32 %v5268, %v5270
    %v5272 = vrot.slane %v5240, %v5271
    %5273 = vrot.lane.b32.xlu0 %v5272, 32
    %v5274 = vpop.permute.xlu0 %5273
    %v5276 = vsel %vm3845, %v5274, %v5122
    %v5279 = vunpack.c.l.s4 1983009808
    %v5280 = vunpack.c.0.s8 %v5279
    %v5281 = vlaneseq
    %v5282 = vshrl.u32 %v5281, 7
    %v5283 = vsub.s32 %v5280, %v5282
    %v5284 = vrot.slane %v5264, %v5283
    %5285 = vrot.lane.b32.xlu0 %v5284, 32
    %v5286 = vpop.permute.xlu0 %5285
    %5288 = vrot.lane.b32.xlu0 %v5122, 96
    %v5289 = vpop.permute.xlu0 %5288
    %v5291 = vsel %vm3816, %v5286, %v5289
    %5293 = vrot.lane.b32.xlu0 %v5291, 32
    %v5294 = vpop.permute.xlu0 %5293
    %v5296 = vsel %vm1132, %v5276, %v5294
    %v5297 = vld [vmem:[%s8] sm:$0xff]
    %v5298 = vld [vmem:[%s8 + $0x8] sm:$0xff]
    %v5299 = vld [vmem:[%s8 + $0x10] sm:$0xff]
    %v5300 = vld [vmem:[%s8 + $0x18] sm:$0xff]
    %v5301 = vld [vmem:[%s8 + $0x20] sm:$0xff]
    %v5302 = vld [vmem:[%s8 + $0x28] sm:$0xff]
    %v5303 = vld [vmem:[%s8 + $0x30] sm:$0xff]
    %v5304 = vld [vmem:[%s8 + $0x38] sm:$0xff]
    %v5305 = vld [vmem:[#allocation4] sm:$0x1]
    %v5307 = vlaneseq
    %v5308 = vshrl.u32 %v5307, 7
    %v5309 = vsub.s32 0, %v5308
    %v5310 = vrot.slane %v5305, %v5309
    %v5313 = vsel %vm933, %v5296, 0
    %5315 = vmatprep.subr.mxu0 0.0
    %5316 = vmatpush1.msra.mxu0 %v5297
    %5317 = vmatprep.subr.mxu0 0.0
    %5318 = vmatpush1.msra.mxu0 %v5298
    %5319 = vmatprep.subr.mxu0 0.0
    %5320 = vmatpush1.msra.mxu0 %v5299
    %5321 = vmatprep.subr.mxu0 0.0
    %5322 = vmatpush1.msra.mxu0 %v5300
    %5323 = vmatprep.subr.mxu0 0.0
    %5324 = vmatpush1.msra.mxu0 %v5301
    %5325 = vmatprep.subr.mxu0 0.0
    %5326 = vmatpush1.msra.mxu0 %v5302
    %5327 = vmatprep.subr.mxu0 0.0
    %5328 = vmatpush1.msra.mxu0 %v5303
    %5329 = vmatprep.subr.mxu0 0.0
    %5330 = vmatpush1.msra.mxu0 %v5304
    %5331 = vmatprep.subr.mxu0 0.0
    %5332 = vmatpush1.msra.mxu0 0.0
    %5333 = vmatprep.subr.mxu0 0.0
    %5334 = vmatpush1.msra.mxu0 0.0
    %5335 = vmatprep.subr.mxu0 0.0
    %5336 = vmatpush1.msra.mxu0 0.0
    %5337 = vmatprep.subr.mxu0 0.0
    %5338 = vmatpush1.msra.mxu0 0.0
    %5339 = vmatprep.subr.mxu0 0.0
    %5340 = vmatpush1.msra.mxu0 0.0
    %5341 = vmatprep.subr.mxu0 0.0
    %5342 = vmatpush1.msra.mxu0 0.0
    %5343 = vmatprep.subr.mxu0 0.0
    %5344 = vmatpush1.msra.mxu0 0.0
    %5345 = vmatprep.subr.mxu0 0.0
    %5346 = vmatpush1.msra.mxu0 0.0
    %5347 = vmatprep.subr.mxu0 0.0
    %5348 = vmatpush1.msra.mxu0 0.0
    %5349 = vmatprep.subr.mxu0 0.0
    %5350 = vmatpush1.msra.mxu0 0.0
    %5351 = vmatprep.subr.mxu0 0.0
    %5352 = vmatpush1.msra.mxu0 0.0
    %5353 = vmatprep.subr.mxu0 0.0
    %5354 = vmatpush1.msra.mxu0 0.0
    %5355 = vmatprep.subr.mxu0 0.0
    %5356 = vmatpush1.msra.mxu0 0.0
    %5357 = vmatprep.subr.mxu0 0.0
    %5358 = vmatpush1.msra.mxu0 0.0
    %5359 = vmatprep.subr.mxu0 0.0
    %5360 = vmatpush1.msra.mxu0 0.0
    %5361 = vmatprep.subr.mxu0 0.0
    %5362 = vmatpush1.msra.mxu0 0.0
    %5363 = vmatprep.subr.mxu0 0.0
    %5364 = vmatpush1.msra.mxu0 0.0
    %5365 = vmatprep.subr.mxu0 0.0
    %5366 = vmatpush1.msra.mxu0 0.0
    %5367 = vmatprep.subr.mxu0 0.0
    %5368 = vmatpush1.msra.mxu0 0.0
    %5369 = vmatprep.subr.mxu0 0.0
    %5370 = vmatpush1.msra.mxu0 0.0
    %5371 = vmatprep.subr.mxu0 0.0
    %5372 = vmatpush1.msra.mxu0 0.0
    %5373 = vmatprep.subr.mxu0 0.0
    %5374 = vmatpush1.msra.mxu0 0.0
    %5375 = vmatprep.subr.mxu0 0.0
    %5376 = vmatpush1.msra.mxu0 0.0
    %5377 = vmatprep.subr.mxu0 0.0
    %5378 = vmatpush1.msra.mxu0 0.0
    %5379 = vmatprep.mubr.f32.mxu0 0.0
    %5380 = vmatmul.mubr.f32.gmra.mrb[0].mxu0 %v5313
    %v5381 = vpop.f32.mrb[0].mxu0
    %v5382 = vadd.f32 %v5310, %v5381
    %v5383 = vpop.f32.mrb[0].mxu0
    %5384 = vdwg.mxu0
    %vm5385 = vcmask 1024
    %5386 = vst.msk [vmem:[%s10] sm:$0x3] %vm5385, %v5382
    // Predicated region
    $region54: #{tpu_custom_call.1} parent=1 // pred_check
      _
    $region55: #{tpu_custom_call.1} parent=1 // pred_check_branch
      %5388 = sbr.rel (0) target = $region57
    $region56: #{tpu_custom_call.1} parent=1 // pred_region
      _
    $region57: #{tpu_custom_call.1} parent=1 // pred_fallthru
      _
    // Predicated region
    $region58: #{tpu_custom_call.1} parent=1 // pred_check
      _
    $region59: #{tpu_custom_call.1} parent=1 // pred_check_branch
      %5390 = sbr.rel (0) target = $region61
    $region60: #{tpu_custom_call.1} parent=1 // pred_region
      _
    $region61: #{tpu_custom_call.1} parent=1 // pred_fallthru
      _
    %5391 = vsyncpa [#allocation6], 1
    %5392 = vsyncpa [#allocation8], 1

</llo_original>
